<compile_context>
chip_gen: v6e
topology: v6e:2x2x1
jax: 0.10.0
libtpu: 0.0.40
codegen_flags: <defaults>
</compile_context>

<pallas_src>
import functools

import jax
import jax.numpy as jnp
from jax.experimental import pallas as pl
from jax.experimental.pallas import tpu as pltpu


# ---------------------------------------------------------------------------
# Pallas kernels
# ---------------------------------------------------------------------------

def _linear_kernel(x_ref, w_ref, b_ref, o_ref):
    """o = x @ w + b with the full K contraction in one step (no accumulate path)."""
    o_ref[...] = (jnp.dot(x_ref[...], w_ref[...],
                          preferred_element_type=jnp.float32)
                  + b_ref[...]).astype(o_ref.dtype)


def _vit_transformer_kernel(h_ref, ln1g_ref, ln1b_ref, qkvw_ref, qkvb_ref,
                            projw_ref, projb_ref, ln2g_ref, ln2b_ref,
                            fc1w_ref, fc1b_ref, fc2w_ref, fc2b_ref,
                            lnfg_ref, lnfb_ref, o_ref, xres_ref, *, heads, eps):
    """One grid step == one pre-norm transformer block for one batch element.

    grid = (B, depth); the residual stream lives in `xres_ref` (f32 VMEM scratch)
    across the whole depth loop.  The per-layer weight refs are streamed in by the
    BlockSpec pipeline.  The final LayerNorm is applied on the last layer step and
    only then is the output block written back to HBM (in bf16).
    """
    layer = pl.program_id(1)

    @pl.when(layer == 0)
    def _():
        xres_ref[...] = h_ref[0]                           # (S, D) f32

    x = xres_ref[...]                                      # (S, D) f32
    S, D = x.shape
    Dh = D // heads

    def layer_norm(v, g, b):
        mean = jnp.mean(v, axis=-1, keepdims=True)
        var = jnp.mean((v - mean) ** 2, axis=-1, keepdims=True)
        return (v - mean) * jax.lax.rsqrt(var + eps) * g + b

    # --- attention sub-block (pre-norm) ---
    y = layer_norm(x, ln1g_ref[0], ln1b_ref[0])
    # 1/sqrt(Dh) is already baked into the Q columns of qkv_w / qkv_b at init.
    qkv = jnp.dot(y.astype(jnp.bfloat16), qkvw_ref[0],
                  preferred_element_type=jnp.float32) + qkvb_ref[0]       # (S, 3D) f32

    # TODO(synk): per-head 32-lane slices of qkv still lower to masked lane selects;
    # at the real kornia config (heads=12) a single up-front head re-layout and a
    # lax.fori_loop(..., unroll=True) over heads would bound live ranges better.
    head_out = []
    for hh in range(heads):                                # static unroll, heads small
        q = qkv[:, hh * Dh:(hh + 1) * Dh].astype(jnp.bfloat16)            # (S, Dh)
        kk = qkv[:, D + hh * Dh:D + (hh + 1) * Dh].astype(jnp.bfloat16)   # (S, Dh)
        vv = qkv[:, 2 * D + hh * Dh:2 * D + (hh + 1) * Dh].astype(jnp.bfloat16)
        s = jax.lax.dot_general(q, kk, (((1,), (1,)), ((), ())),
                                preferred_element_type=jnp.float32)       # (S, S)
        s = s - jnp.max(s, axis=-1, keepdims=True)
        p = jnp.exp(s)
        p = p * pl.reciprocal(jnp.sum(p, axis=-1, keepdims=True), approx=True)
        head_out.append(jnp.dot(p.astype(jnp.bfloat16), vv,
                                preferred_element_type=jnp.float32))      # (S, Dh)

    # One lane-dense (S, D) context, then a SINGLE K=D projection matmul
    # (instead of `heads` K=Dh fold-in matmuls).
    ctx = jnp.concatenate(head_out, axis=-1)                              # (S, D) f32
    attn = jnp.dot(ctx.astype(jnp.bfloat16), projw_ref[0],
                   preferred_element_type=jnp.float32) + projb_ref[0]     # (S, D)
    x = x + attn

    # --- MLP sub-block (pre-norm) ---
    y = layer_norm(x, ln2g_ref[0], ln2b_ref[0])
    hdn = jnp.dot(y.astype(jnp.bfloat16), fc1w_ref[0],
                  preferred_element_type=jnp.float32) + fc1b_ref[0]       # (S, hidden)
    # TODO(synk): PyTorch nn.GELU default is exact erf-GELU; tanh approximation used
    # here (erf lowering in Mosaic is not guaranteed).
    hdn = 0.5 * hdn * (1.0 + jnp.tanh(0.7978845608028654 *
                                      (hdn + 0.044715 * hdn * hdn * hdn)))
    mlp = jnp.dot(hdn.astype(jnp.bfloat16), fc2w_ref[0],
                  preferred_element_type=jnp.float32) + fc2b_ref[0]       # (S, D)
    x = x + mlp

    xres_ref[...] = x                                     # carry residual in f32 VMEM

    @pl.when(layer == pl.num_programs(1) - 1)
    def _():
        # Fused final LayerNorm; bf16 store (fp16 cast happens in the wrapper).
        o_ref[0] = layer_norm(x, lnfg_ref[...], lnfb_ref[...]).astype(o_ref.dtype)


# ---------------------------------------------------------------------------
# Pallas wrappers
# ---------------------------------------------------------------------------

def pallas_linear(x, w, b, *, tm=256, tn=512, out_dtype=jnp.bfloat16):
    """Y = X @ W + b with the full K per step; grid tiles only M and N (both parallel).
    x / w expected bf16, bias f32; output bf16 by default."""
    M, K = x.shape
    Kw, N = w.shape
    assert K == Kw
    tm, tn = min(tm, M), min(tn, N)
    assert M % tm == 0 and N % tn == 0
    return pl.pallas_call(
        _linear_kernel,
        out_shape=jax.ShapeDtypeStruct((M, N), out_dtype),
        grid_spec=pltpu.PrefetchScalarGridSpec(
            num_scalar_prefetch=0,
            grid=(M // tm, N // tn),
            in_specs=[pl.BlockSpec((tm, K), lambda i, j: (i, 0)),
                      pl.BlockSpec((K, tn), lambda i, j: (0, j)),
                      pl.BlockSpec((1, tn), lambda i, j: (0, j))],
            out_specs=pl.BlockSpec((tm, tn), lambda i, j: (i, j)),
        ),
        compiler_params=pltpu.CompilerParams(
            dimension_semantics=("parallel", "parallel"),
            vmem_limit_bytes=32 * 1024 * 1024),
    )(x, w, b.reshape(1, N))


def pallas_vit_transformer(h, params, *, heads, eps=1e-5):
    """All depth blocks + final LayerNorm in ONE pallas_call.

    grid = (B, depth); B is "parallel" (feeds both v7x TensorCores when B >= 2),
    depth is "arbitrary" and streams the stacked per-layer weights.  The residual
    activation is carried in an f32 VMEM scratch for the whole depth loop.
    """
    B, S, D = h.shape
    depth = params["qkv_w"].shape[0]
    hidden = params["fc1_w"].shape[2]

    act = lambda bi, li: (bi, 0, 0)     # activation / output blocks: keyed on batch only
    lyr = lambda bi, li: (li, 0, 0)     # stacked per-layer weights: keyed on layer only
    cst = lambda bi, li: (0, 0)         # final-LN params: constant

    in_specs = [
        pl.BlockSpec((1, S, D), act),                        # h (initial residual)
        pl.BlockSpec((1, 1, D), lyr), pl.BlockSpec((1, 1, D), lyr),          # ln1 g/b
        pl.BlockSpec((1, D, 3 * D), lyr), pl.BlockSpec((1, 1, 3 * D), lyr),  # qkv w/b
        pl.BlockSpec((1, D, D), lyr), pl.BlockSpec((1, 1, D), lyr),          # proj w/b
        pl.BlockSpec((1, 1, D), lyr), pl.BlockSpec((1, 1, D), lyr),          # ln2 g/b
        pl.BlockSpec((1, D, hidden), lyr), pl.BlockSpec((1, 1, hidden), lyr),  # fc1 w/b
        pl.BlockSpec((1, hidden, D), lyr), pl.BlockSpec((1, 1, D), lyr),       # fc2 w/b
        pl.BlockSpec((1, D), cst), pl.BlockSpec((1, D), cst),                  # final LN
    ]
    return pl.pallas_call(
        functools.partial(_vit_transformer_kernel, heads=heads, eps=eps),
        out_shape=jax.ShapeDtypeStruct((B, S, D), jnp.bfloat16),
        grid_spec=pltpu.PrefetchScalarGridSpec(
            num_scalar_prefetch=0,
            grid=(B, depth),
            in_specs=in_specs,
            out_specs=pl.BlockSpec((1, S, D), act),
            scratch_shapes=[pltpu.VMEM((S, D), jnp.float32)],   # resident residual stream
        ),
        compiler_params=pltpu.CompilerParams(
            dimension_semantics=("parallel", "arbitrary"),
            # 40 MiB: headroom under v7x's 64 MiB core even with double-buffered
            # per-layer weight blocks at the real kornia config.
            vmem_limit_bytes=40 * 1024 * 1024),
    )(h,
      params["ln1_g"], params["ln1_b"],
      params["qkv_w"], params["qkv_b"],
      params["proj_w"], params["proj_b"],
      params["ln2_g"], params["ln2_b"],
      params["fc1_w"], params["fc1_b"],
      params["fc2_w"], params["fc2_b"],
      params["lnf_g"], params["lnf_b"])


# ---------------------------------------------------------------------------
# Parameters + forward pass (glue in plain JAX, compute in Pallas)
# ---------------------------------------------------------------------------

def init_params(key, *, in_ch, patch, img, embed, depth, hidden, heads):
    n_patches = (img // patch) ** 2
    keys = jax.random.split(key, 4 + depth)
    scale = float(embed // heads) ** -0.5

    def nrm(k, shape, s=0.02):
        return jax.random.normal(k, shape, jnp.float32) * s

    # torch conv layout (D, C, P, P) -> im2col matmul layout (K, D), bf16 for MXU
    patch_w = nrm(keys[0], (embed, in_ch, patch, patch))

    def make_block(k):
        kb = jax.random.split(k, 4)
        qkv_w = nrm(kb[0], (embed, 3 * embed))
        # Bake the 1/sqrt(Dh) attention scale into the Q columns (and Q bias).
        qkv_w = qkv_w.at[:, :embed].multiply(scale)
        qkv_b = jnp.zeros((3 * embed,), jnp.float32).at[:embed].multiply(scale)
        return {
            "ln1_g": jnp.ones((1, embed), jnp.float32),
            "ln1_b": jnp.zeros((1, embed), jnp.float32),
            "qkv_w": qkv_w.astype(jnp.bfloat16),
            "qkv_b": qkv_b.reshape(1, 3 * embed),
            "proj_w": nrm(kb[1], (embed, embed)).astype(jnp.bfloat16),
            "proj_b": jnp.zeros((1, embed), jnp.float32),
            "ln2_g": jnp.ones((1, embed), jnp.float32),
            "ln2_b": jnp.zeros((1, embed), jnp.float32),
            "fc1_w": nrm(kb[2], (embed, hidden)).astype(jnp.bfloat16),
            "fc1_b": jnp.zeros((1, hidden), jnp.float32),
            "fc2_w": nrm(kb[3], (hidden, embed)).astype(jnp.bfloat16),
            "fc2_b": jnp.zeros((1, embed), jnp.float32),
        }

    blocks = [make_block(keys[4 + i]) for i in range(depth)]
    stacked = {name: jnp.stack([blk[name] for blk in blocks]) for name in blocks[0]}

    p = {
        "patch_wm": patch_w.reshape(embed, in_ch * patch * patch).T.astype(jnp.bfloat16),
        "patch_b": jnp.zeros((embed,), jnp.float32),
        "cls": nrm(keys[1], (1, 1, embed)),
        "pos": nrm(keys[2], (n_patches + 1, embed)),
        "lnf_g": jnp.ones((1, embed), jnp.float32),
        "lnf_b": jnp.zeros((1, embed), jnp.float32),
    }
    p.update(stacked)
    return p


def localizer_vit_forward(x, params, *, patch, heads):
    """x: (B, 2*C, H, W) float32 NCHW  ->  (B, num_patches+1, embed) float16."""
    B, C, H, W = x.shape
    D = params["patch_wm"].shape[1]
    Hp, Wp = H // patch, W // patch
    N = Hp * Wp

    # --- patch embedding: conv(kernel=stride=patch) == im2col + matmul ---
    xp = (x.reshape(B, C, Hp, patch, Wp, patch)
            .transpose(0, 2, 4, 1, 3, 5)
            .reshape(B * N, C * patch * patch)).astype(jnp.bfloat16)
    tokens = pallas_linear(xp, params["patch_wm"], params["patch_b"]).reshape(B, N, D)

    cls = jnp.broadcast_to(params["cls"], (B, 1, D))
    h = (jnp.concatenate([cls, tokens.astype(jnp.float32)], axis=1)
         + params["pos"][None])                                   # (B, S, D) f32

    # --- all transformer blocks + final LN in a single fused pallas_call ---
    out = pallas_vit_transformer(h, params, heads=heads)

    # autocast + .type(HalfTensor): final output is float16.  The fp16 convert is a
    # tiny XLA pass kept outside the kernel (bf16 store inside) for dtype-support safety.
    return out.astype(jnp.float16)


# ---------------------------------------------------------------------------
# Demo
# ---------------------------------------------------------------------------

if __name__ == "__main__":
    # img_shape = (channels, h, w); the module stacks two images -> in_channels = 2*channels
    CHANNELS, H, W = 2, 128, 128
    PATCH = 64                       # hardcoded in LocalizerVIT
    EMBED, DEPTH, HEADS = 128, 2, 4  # small synthetic ViT config (kornia default is 768/12/12)
    HIDDEN = 4 * EMBED
    B = 2

    key = jax.random.PRNGKey(0)
    k_in, k_par = jax.random.split(key)

    x = jax.random.normal(k_in, (B, 2 * CHANNELS, H, W), jnp.float32)
    params = init_params(k_par, in_ch=2 * CHANNELS, patch=PATCH, img=H,
                         embed=EMBED, depth=DEPTH, hidden=HIDDEN, heads=HEADS)

    out = localizer_vit_forward(x, params, patch=PATCH, heads=HEADS)
    out = jax.block_until_ready(out)

    expected_seq = (H // PATCH) ** 2 + 1
    assert out.shape == (B, expected_seq, EMBED), out.shape
    assert out.dtype == jnp.float16, out.dtype
    print("KERNEL_OK")
</pallas_src>

<mosaic_0001>
module attributes {stable_mosaic.version = 11 : i64} {
  func.func @_linear_kernel(%arg0: i32, %arg1: i32, %arg2: memref<8x16384xbf16, #tpu.memory_space<vmem>>, %arg3: memref<16384x128xbf16, #tpu.memory_space<vmem>>, %arg4: memref<1x128xf32, #tpu.memory_space<vmem>>, %arg5: memref<8x128xbf16, #tpu.memory_space<vmem>>) attributes {dimension_semantics = [#tpu.dimension_semantics<parallel>, #tpu.dimension_semantics<parallel>], iteration_bounds = array<i64: 1, 1>, scalar_prefetch = 0 : i64, scratch_operands = 0 : i64, tpu.core_type = #tpu.core_type<tc>, window_params = [{transform_indices = @transform_0, window_bounds = array<i64: 8, 16384>}, {transform_indices = @transform_1, window_bounds = array<i64: 16384, 128>}, {transform_indices = @transform_2, window_bounds = array<i64: 1, 128>}, {transform_indices = @transform_3, window_bounds = array<i64: 8, 128>}]} {
    %c0 = arith.constant 0 : index
    %c0_0 = arith.constant 0 : index
    %0 = vector.load %arg2[%c0, %c0_0] : memref<8x16384xbf16, #tpu.memory_space<vmem>>, vector<8x16384xbf16>
    %c0_1 = arith.constant 0 : index
    %c0_2 = arith.constant 0 : index
    %1 = vector.load %arg3[%c0_1, %c0_2] : memref<16384x128xbf16, #tpu.memory_space<vmem>>, vector<16384x128xbf16>
    %cst = arith.constant dense<0.000000e+00> : vector<8x128xf32>
    %2 = tpu.matmul %0, %1, %cst {dimension_numbers = #tpu.dot_dimension_numbers<[1], [0], [0], [1], [0, 0, 1, 1], [], []>} : vector<8x16384xbf16>, vector<16384x128xbf16>, vector<8x128xf32> -> vector<8x128xf32>
    %c0_3 = arith.constant 0 : index
    %c0_4 = arith.constant 0 : index
    %3 = vector.load %arg4[%c0_3, %c0_4] : memref<1x128xf32, #tpu.memory_space<vmem>>, vector<1x128xf32>
    %4 = vector.broadcast %3 : vector<1x128xf32> to vector<8x128xf32>
    %5 = arith.addf %2, %4 : vector<8x128xf32>
    %6 = arith.truncf %5 : vector<8x128xf32> to vector<8x128xbf16>
    %c0_5 = arith.constant 0 : index
    %c0_6 = arith.constant 0 : index
    %7 = vector.load %arg5[%c0_5, %c0_6] : memref<8x128xbf16, #tpu.memory_space<vmem>>, vector<8x128xbf16>
    tpu.vector_store %arg5[%c0_5, %c0_6], %6 {strides = array<i32>} : memref<8x128xbf16, #tpu.memory_space<vmem>>, vector<8x128xbf16>,
    return
  }
  func.func @transform_0(%arg0: i32, %arg1: i32) -> (i32, i32) {
    %c0_i32 = arith.constant 0 : i32
    %c0_i32_0 = arith.constant 0 : i32
    return %arg0, %c0_i32 : i32, i32
  }
  func.func @transform_1(%arg0: i32, %arg1: i32) -> (i32, i32) {
    %c0_i32 = arith.constant 0 : i32
    %c0_i32_0 = arith.constant 0 : i32
    return %c0_i32, %arg1 : i32, i32
  }
  func.func @transform_2(%arg0: i32, %arg1: i32) -> (i32, i32) {
    %c0_i32 = arith.constant 0 : i32
    %c0_i32_0 = arith.constant 0 : i32
    return %c0_i32, %arg1 : i32, i32
  }
  func.func @transform_3(%arg0: i32, %arg1: i32) -> (i32, i32) {
    %c0_i32 = arith.constant 0 : i32
    return %arg0, %arg1 : i32, i32
  }
}

</mosaic_0001>

<llo_original>
// kernel: tpu_custom_call.1
$region0: #{tpu_custom_call.1}
  #allocation0 [shape = 'u32[]', space=smem, size = 0x4, offset = 0x4, fixed_abs, tag = 'smem constant byte address 0x4 - core index']
  #allocation1 [shape = 'u32[144,128]{1,0:T(1,128)}', space=vmem, size = 0x12000, scoped, tag = 'internal scratch']
  %s0 = inlined_call_operand.hbm [shape: bf16[8,16384], index: 0, kind: input, shape index: {}]
  %s1 = inlined_call_operand.hbm [shape: bf16[16384,128], index: 1, kind: input, shape index: {}]
  %s2 = inlined_call_operand.hbm [shape: f32[1,128], index: 2, kind: input, shape index: {}]
  %s3 = inlined_call_operand.hbm [shape: bf16[8,128], index: 3, kind: output, shape index: {}]
  %s4 = sld [smem:[#allocation0]]
  $region34: #{tpu_custom_call.1} parent=0
    _
  %s6 = ssub.s32 1, %s4
  %s7 = scalar_select 0, %s6, %s4
  $region1: #{tpu_custom_call.1} parent=0
    #allocation2 [shape = 'u8[262144]{0}', space=vmem, size = 0x40000, scoped, tag = 'input window, operand 0, single buffered']
    #allocation3 [shape = 's32[1]{0}', space=sflag, size = 0x4, scoped, tag = 'scoped memory for tpu_custom_call.1']
    #allocation4 [shape = 's32[1]{0}', space=sflag, size = 0x4, scoped, tag = 'scoped memory for tpu_custom_call.1']
    #allocation5 [shape = 'u8[4194304]{0}', space=vmem, size = 0x400000, scoped, tag = 'input window, operand 1, single buffered']
    #allocation6 [shape = 's32[1]{0}', space=sflag, size = 0x4, scoped, tag = 'scoped memory for tpu_custom_call.1']
    #allocation7 [shape = 'u8[512]{0}', space=vmem, size = 0x400, scoped, tag = 'input window, operand 2, single buffered']
    #allocation8 [shape = 'u8[2048]{0}', space=vmem, size = 0x800, scoped, tag = 'output window, operand 0, single buffered']
    %8 = vsyncpa [#allocation3], 0
    %9 = vsyncpa [#allocation6], 0
    %10 = vsyncpa [#allocation4], 0
    // Predicated region
    $region2: #{tpu_custom_call.1} parent=1 // pred_check
      _
    $region3: #{tpu_custom_call.1} parent=1 // pred_check_branch
      %12 = sbr.rel (0) target = $region5
    $region4: #{tpu_custom_call.1} parent=1 // pred_region
      %s14 = ssub.s32 8192, 8192
      %15 = vsyncadd [#allocation3], %s14
      %s17 = sshll.u32 [#allocation2], 4
      %s18 = int_to_ptr.vmem [resolvable:$true] %s17
      %20 = dma.hbm_to_vmem [thread:$0]  %s0, 8192, %s18, [#allocation3]
    $region5: #{tpu_custom_call.1} parent=1 // pred_fallthru
      _
    // Predicated region
    $region6: #{tpu_custom_call.1} parent=1 // pred_check
      _
    $region7: #{tpu_custom_call.1} parent=1 // pred_check_branch
      %22 = sbr.rel (0) target = $region9
    $region8: #{tpu_custom_call.1} parent=1 // pred_region
      %s24 = ssub.s32 131072, 131072
      %25 = vsyncadd [#allocation6], %s24
      %s26 = sshll.u32 [#allocation5], 4
      %s27 = int_to_ptr.vmem [resolvable:$true] %s26
      %32 = dma.hbm_to_vmem [thread:$0]  %s1, 131072, %s27, [#allocation6], 64, 64, 4
    $region9: #{tpu_custom_call.1} parent=1 // pred_fallthru
      _
    // Predicated region
    $region10: #{tpu_custom_call.1} parent=1 // pred_check
      _
    $region11: #{tpu_custom_call.1} parent=1 // pred_check_branch
      %34 = sbr.rel (0) target = $region13
    $region12: #{tpu_custom_call.1} parent=1 // pred_region
      %s36 = ssub.s32 16, 16
      %37 = vsyncadd [#allocation6], %s36
      %s39 = sshll.u32 [#allocation7], 4
      %s40 = int_to_ptr.vmem [resolvable:$true] %s39
      %42 = dma.hbm_to_vmem [thread:$0]  %s2, 16, %s40, [#allocation6]
    $region13: #{tpu_custom_call.1} parent=1 // pred_fallthru
      _
    // Predicated region
    $region14: #{tpu_custom_call.1} parent=1 // pred_check
      _
    $region15: #{tpu_custom_call.1} parent=1 // pred_check_branch
      %44 = sbr.rel (0) target = $region17
    $region16: #{tpu_custom_call.1} parent=1 // pred_region
      %45 = dma.done [#allocation3], 8192
    $region17: #{tpu_custom_call.1} parent=1 // pred_fallthru
      _
    // Predicated region
    $region18: #{tpu_custom_call.1} parent=1 // pred_check
      _
    $region19: #{tpu_custom_call.1} parent=1 // pred_check_branch
      %47 = sbr.rel (0) target = $region21
    $region20: #{tpu_custom_call.1} parent=1 // pred_region
      %48 = dma.done [#allocation6], 131072
    $region21: #{tpu_custom_call.1} parent=1 // pred_fallthru
      _
    // Predicated region
    $region22: #{tpu_custom_call.1} parent=1 // pred_check
      _
    $region23: #{tpu_custom_call.1} parent=1 // pred_check_branch
      %50 = sbr.rel (0) target = $region25
    $region24: #{tpu_custom_call.1} parent=1 // pred_region
      %51 = dma.done [#allocation6], 16
    $region25: #{tpu_custom_call.1} parent=1 // pred_fallthru
      _
    %v53 = vld [vmem:[#allocation2] sm:$0xff]
    %v54 = vld [vmem:[#allocation2 + $0x8] sm:$0xff]
    %v55 = vld [vmem:[#allocation2 + $0x10] sm:$0xff]
    %v56 = vld [vmem:[#allocation2 + $0x18] sm:$0xff]
    %v57 = vld [vmem:[#allocation2 + $0x20] sm:$0xff]
    %v58 = vld [vmem:[#allocation2 + $0x28] sm:$0xff]
    %v59 = vld [vmem:[#allocation2 + $0x30] sm:$0xff]
    %v60 = vld [vmem:[#allocation2 + $0x38] sm:$0xff]
    %v61 = vld [vmem:[#allocation2 + $0x40] sm:$0xff]
    %v62 = vld [vmem:[#allocation2 + $0x48] sm:$0xff]
    %v63 = vld [vmem:[#allocation2 + $0x50] sm:$0xff]
    %v64 = vld [vmem:[#allocation2 + $0x58] sm:$0xff]
    %v65 = vld [vmem:[#allocation2 + $0x60] sm:$0xff]
    %v66 = vld [vmem:[#allocation2 + $0x68] sm:$0xff]
    %v67 = vld [vmem:[#allocation2 + $0x70] sm:$0xff]
    %v68 = vld [vmem:[#allocation2 + $0x78] sm:$0xff]
    %v69 = vld [vmem:[#allocation2 + $0x80] sm:$0xff]
    %v70 = vld [vmem:[#allocation2 + $0x88] sm:$0xff]
    %v71 = vld [vmem:[#allocation2 + $0x90] sm:$0xff]
    %v72 = vld [vmem:[#allocation2 + $0x98] sm:$0xff]
    %v73 = vld [vmem:[#allocation2 + $0xa0] sm:$0xff]
    %v74 = vld [vmem:[#allocation2 + $0xa8] sm:$0xff]
    %v75 = vld [vmem:[#allocation2 + $0xb0] sm:$0xff]
    %v76 = vld [vmem:[#allocation2 + $0xb8] sm:$0xff]
    %v77 = vld [vmem:[#allocation2 + $0xc0] sm:$0xff]
    %v78 = vld [vmem:[#allocation2 + $0xc8] sm:$0xff]
    %v79 = vld [vmem:[#allocation2 + $0xd0] sm:$0xff]
    %v80 = vld [vmem:[#allocation2 + $0xd8] sm:$0xff]
    %v81 = vld [vmem:[#allocation2 + $0xe0] sm:$0xff]
    %v82 = vld [vmem:[#allocation2 + $0xe8] sm:$0xff]
    %v83 = vld [vmem:[#allocation2 + $0xf0] sm:$0xff]
    %v84 = vld [vmem:[#allocation2 + $0xf8] sm:$0xff]
    %v85 = vld [vmem:[#allocation2 + $0x100] sm:$0xff]
    %v86 = vld [vmem:[#allocation2 + $0x108] sm:$0xff]
    %v87 = vld [vmem:[#allocation2 + $0x110] sm:$0xff]
    %v88 = vld [vmem:[#allocation2 + $0x118] sm:$0xff]
    %v89 = vld [vmem:[#allocation2 + $0x120] sm:$0xff]
    %v90 = vld [vmem:[#allocation2 + $0x128] sm:$0xff]
    %v91 = vld [vmem:[#allocation2 + $0x130] sm:$0xff]
    %v92 = vld [vmem:[#allocation2 + $0x138] sm:$0xff]
    %v93 = vld [vmem:[#allocation2 + $0x140] sm:$0xff]
    %v94 = vld [vmem:[#allocation2 + $0x148] sm:$0xff]
    %v95 = vld [vmem:[#allocation2 + $0x150] sm:$0xff]
    %v96 = vld [vmem:[#allocation2 + $0x158] sm:$0xff]
    %v97 = vld [vmem:[#allocation2 + $0x160] sm:$0xff]
    %v98 = vld [vmem:[#allocation2 + $0x168] sm:$0xff]
    %v99 = vld [vmem:[#allocation2 + $0x170] sm:$0xff]
    %v100 = vld [vmem:[#allocation2 + $0x178] sm:$0xff]
    %v101 = vld [vmem:[#allocation2 + $0x180] sm:$0xff]
    %v102 = vld [vmem:[#allocation2 + $0x188] sm:$0xff]
    %v103 = vld [vmem:[#allocation2 + $0x190] sm:$0xff]
    %v104 = vld [vmem:[#allocation2 + $0x198] sm:$0xff]
    %v105 = vld [vmem:[#allocation2 + $0x1a0] sm:$0xff]
    %v106 = vld [vmem:[#allocation2 + $0x1a8] sm:$0xff]
    %v107 = vld [vmem:[#allocation2 + $0x1b0] sm:$0xff]
    %v108 = vld [vmem:[#allocation2 + $0x1b8] sm:$0xff]
    %v109 = vld [vmem:[#allocation2 + $0x1c0] sm:$0xff]
    %v110 = vld [vmem:[#allocation2 + $0x1c8] sm:$0xff]
    %v111 = vld [vmem:[#allocation2 + $0x1d0] sm:$0xff]
    %v112 = vld [vmem:[#allocation2 + $0x1d8] sm:$0xff]
    %v113 = vld [vmem:[#allocation2 + $0x1e0] sm:$0xff]
    %v114 = vld [vmem:[#allocation2 + $0x1e8] sm:$0xff]
    %v115 = vld [vmem:[#allocation2 + $0x1f0] sm:$0xff]
    %v116 = vld [vmem:[#allocation2 + $0x1f8] sm:$0xff]
    %v117 = vld [vmem:[#allocation5] sm:$0xf]
    %v118 = vld [vmem:[#allocation5 + $0x4] sm:$0xf]
    %v119 = vld [vmem:[#allocation5 + $0x8] sm:$0xf]
    %v120 = vld [vmem:[#allocation5 + $0xc] sm:$0xf]
    %v121 = vld [vmem:[#allocation5 + $0x10] sm:$0xf]
    %v122 = vld [vmem:[#allocation5 + $0x14] sm:$0xf]
    %v123 = vld [vmem:[#allocation5 + $0x18] sm:$0xf]
    %v124 = vld [vmem:[#allocation5 + $0x1c] sm:$0xf]
    %v125 = vld [vmem:[#allocation5 + $0x20] sm:$0xf]
    %v126 = vld [vmem:[#allocation5 + $0x24] sm:$0xf]
    %v127 = vld [vmem:[#allocation5 + $0x28] sm:$0xf]
    %v128 = vld [vmem:[#allocation5 + $0x2c] sm:$0xf]
    %v129 = vld [vmem:[#allocation5 + $0x30] sm:$0xf]
    %v130 = vld [vmem:[#allocation5 + $0x34] sm:$0xf]
    %v131 = vld [vmem:[#allocation5 + $0x38] sm:$0xf]
    %v132 = vld [vmem:[#allocation5 + $0x3c] sm:$0xf]
    %v133 = vld [vmem:[#allocation5 + $0x40] sm:$0xf]
    %v134 = vld [vmem:[#allocation5 + $0x44] sm:$0xf]
    %v135 = vld [vmem:[#allocation5 + $0x48] sm:$0xf]
    %v136 = vld [vmem:[#allocation5 + $0x4c] sm:$0xf]
    %v137 = vld [vmem:[#allocation5 + $0x50] sm:$0xf]
    %v138 = vld [vmem:[#allocation5 + $0x54] sm:$0xf]
    %v139 = vld [vmem:[#allocation5 + $0x58] sm:$0xf]
    %v140 = vld [vmem:[#allocation5 + $0x5c] sm:$0xf]
    %v141 = vld [vmem:[#allocation5 + $0x60] sm:$0xf]
    %v142 = vld [vmem:[#allocation5 + $0x64] sm:$0xf]
    %v143 = vld [vmem:[#allocation5 + $0x68] sm:$0xf]
    %v144 = vld [vmem:[#allocation5 + $0x6c] sm:$0xf]
    %v145 = vld [vmem:[#allocation5 + $0x70] sm:$0xf]
    %v146 = vld [vmem:[#allocation5 + $0x74] sm:$0xf]
    %v147 = vld [vmem:[#allocation5 + $0x78] sm:$0xf]
    %v148 = vld [vmem:[#allocation5 + $0x7c] sm:$0xf]
    %v149 = vld [vmem:[#allocation5 + $0x80] sm:$0xf]
    %v150 = vld [vmem:[#allocation5 + $0x84] sm:$0xf]
    %v151 = vld [vmem:[#allocation5 + $0x88] sm:$0xf]
    %v152 = vld [vmem:[#allocation5 + $0x8c] sm:$0xf]
    %v153 = vld [vmem:[#allocation5 + $0x90] sm:$0xf]
    %v154 = vld [vmem:[#allocation5 + $0x94] sm:$0xf]
    %v155 = vld [vmem:[#allocation5 + $0x98] sm:$0xf]
    %v156 = vld [vmem:[#allocation5 + $0x9c] sm:$0xf]
    %v157 = vld [vmem:[#allocation5 + $0xa0] sm:$0xf]
    %v158 = vld [vmem:[#allocation5 + $0xa4] sm:$0xf]
    %v159 = vld [vmem:[#allocation5 + $0xa8] sm:$0xf]
    %v160 = vld [vmem:[#allocation5 + $0xac] sm:$0xf]
    %v161 = vld [vmem:[#allocation5 + $0xb0] sm:$0xf]
    %v162 = vld [vmem:[#allocation5 + $0xb4] sm:$0xf]
    %v163 = vld [vmem:[#allocation5 + $0xb8] sm:$0xf]
    %v164 = vld [vmem:[#allocation5 + $0xbc] sm:$0xf]
    %v165 = vld [vmem:[#allocation5 + $0xc0] sm:$0xf]
    %v166 = vld [vmem:[#allocation5 + $0xc4] sm:$0xf]
    %v167 = vld [vmem:[#allocation5 + $0xc8] sm:$0xf]
    %v168 = vld [vmem:[#allocation5 + $0xcc] sm:$0xf]
    %v169 = vld [vmem:[#allocation5 + $0xd0] sm:$0xf]
    %v170 = vld [vmem:[#allocation5 + $0xd4] sm:$0xf]
    %v171 = vld [vmem:[#allocation5 + $0xd8] sm:$0xf]
    %v172 = vld [vmem:[#allocation5 + $0xdc] sm:$0xf]
    %v173 = vld [vmem:[#allocation5 + $0xe0] sm:$0xf]
    %v174 = vld [vmem:[#allocation5 + $0xe4] sm:$0xf]
    %v175 = vld [vmem:[#allocation5 + $0xe8] sm:$0xf]
    %v176 = vld [vmem:[#allocation5 + $0xec] sm:$0xf]
    %v177 = vld [vmem:[#allocation5 + $0xf0] sm:$0xf]
    %v178 = vld [vmem:[#allocation5 + $0xf4] sm:$0xf]
    %v179 = vld [vmem:[#allocation5 + $0xf8] sm:$0xf]
    %v180 = vld [vmem:[#allocation5 + $0xfc] sm:$0xf]
    %v181 = vld [vmem:[#allocation5 + $0x100] sm:$0xf]
    %v182 = vld [vmem:[#allocation5 + $0x104] sm:$0xf]
    %v183 = vld [vmem:[#allocation5 + $0x108] sm:$0xf]
    %v184 = vld [vmem:[#allocation5 + $0x10c] sm:$0xf]
    %v185 = vld [vmem:[#allocation5 + $0x110] sm:$0xf]
    %v186 = vld [vmem:[#allocation5 + $0x114] sm:$0xf]
    %v187 = vld [vmem:[#allocation5 + $0x118] sm:$0xf]
    %v188 = vld [vmem:[#allocation5 + $0x11c] sm:$0xf]
    %v189 = vld [vmem:[#allocation5 + $0x120] sm:$0xf]
    %v190 = vld [vmem:[#allocation5 + $0x124] sm:$0xf]
    %v191 = vld [vmem:[#allocation5 + $0x128] sm:$0xf]
    %v192 = vld [vmem:[#allocation5 + $0x12c] sm:$0xf]
    %v193 = vld [vmem:[#allocation5 + $0x130] sm:$0xf]
    %v194 = vld [vmem:[#allocation5 + $0x134] sm:$0xf]
    %v195 = vld [vmem:[#allocation5 + $0x138] sm:$0xf]
    %v196 = vld [vmem:[#allocation5 + $0x13c] sm:$0xf]
    %v197 = vld [vmem:[#allocation5 + $0x140] sm:$0xf]
    %v198 = vld [vmem:[#allocation5 + $0x144] sm:$0xf]
    %v199 = vld [vmem:[#allocation5 + $0x148] sm:$0xf]
    %v200 = vld [vmem:[#allocation5 + $0x14c] sm:$0xf]
    %v201 = vld [vmem:[#allocation5 + $0x150] sm:$0xf]
    %v202 = vld [vmem:[#allocation5 + $0x154] sm:$0xf]
    %v203 = vld [vmem:[#allocation5 + $0x158] sm:$0xf]
    %v204 = vld [vmem:[#allocation5 + $0x15c] sm:$0xf]
    %v205 = vld [vmem:[#allocation5 + $0x160] sm:$0xf]
    %v206 = vld [vmem:[#allocation5 + $0x164] sm:$0xf]
    %v207 = vld [vmem:[#allocation5 + $0x168] sm:$0xf]
    %v208 = vld [vmem:[#allocation5 + $0x16c] sm:$0xf]
    %v209 = vld [vmem:[#allocation5 + $0x170] sm:$0xf]
    %v210 = vld [vmem:[#allocation5 + $0x174] sm:$0xf]
    %v211 = vld [vmem:[#allocation5 + $0x178] sm:$0xf]
    %v212 = vld [vmem:[#allocation5 + $0x17c] sm:$0xf]
    %v213 = vld [vmem:[#allocation5 + $0x180] sm:$0xf]
    %v214 = vld [vmem:[#allocation5 + $0x184] sm:$0xf]
    %v215 = vld [vmem:[#allocation5 + $0x188] sm:$0xf]
    %v216 = vld [vmem:[#allocation5 + $0x18c] sm:$0xf]
    %v217 = vld [vmem:[#allocation5 + $0x190] sm:$0xf]
    %v218 = vld [vmem:[#allocation5 + $0x194] sm:$0xf]
    %v219 = vld [vmem:[#allocation5 + $0x198] sm:$0xf]
    %v220 = vld [vmem:[#allocation5 + $0x19c] sm:$0xf]
    %v221 = vld [vmem:[#allocation5 + $0x1a0] sm:$0xf]
    %v222 = vld [vmem:[#allocation5 + $0x1a4] sm:$0xf]
    %v223 = vld [vmem:[#allocation5 + $0x1a8] sm:$0xf]
    %v224 = vld [vmem:[#allocation5 + $0x1ac] sm:$0xf]
    %v225 = vld [vmem:[#allocation5 + $0x1b0] sm:$0xf]
    %v226 = vld [vmem:[#allocation5 + $0x1b4] sm:$0xf]
    %v227 = vld [vmem:[#allocation5 + $0x1b8] sm:$0xf]
    %v228 = vld [vmem:[#allocation5 + $0x1bc] sm:$0xf]
    %v229 = vld [vmem:[#allocation5 + $0x1c0] sm:$0xf]
    %v230 = vld [vmem:[#allocation5 + $0x1c4] sm:$0xf]
    %v231 = vld [vmem:[#allocation5 + $0x1c8] sm:$0xf]
    %v232 = vld [vmem:[#allocation5 + $0x1cc] sm:$0xf]
    %v233 = vld [vmem:[#allocation5 + $0x1d0] sm:$0xf]
    %v234 = vld [vmem:[#allocation5 + $0x1d4] sm:$0xf]
    %v235 = vld [vmem:[#allocation5 + $0x1d8] sm:$0xf]
    %v236 = vld [vmem:[#allocation5 + $0x1dc] sm:$0xf]
    %v237 = vld [vmem:[#allocation5 + $0x1e0] sm:$0xf]
    %v238 = vld [vmem:[#allocation5 + $0x1e4] sm:$0xf]
    %v239 = vld [vmem:[#allocation5 + $0x1e8] sm:$0xf]
    %v240 = vld [vmem:[#allocation5 + $0x1ec] sm:$0xf]
    %v241 = vld [vmem:[#allocation5 + $0x1f0] sm:$0xf]
    %v242 = vld [vmem:[#allocation5 + $0x1f4] sm:$0xf]
    %v243 = vld [vmem:[#allocation5 + $0x1f8] sm:$0xf]
    %v244 = vld [vmem:[#allocation5 + $0x1fc] sm:$0xf]
    %v245 = vld [vmem:[#allocation5 + $0x200] sm:$0xf]
    %v246 = vld [vmem:[#allocation5 + $0x204] sm:$0xf]
    %v247 = vld [vmem:[#allocation5 + $0x208] sm:$0xf]
    %v248 = vld [vmem:[#allocation5 + $0x20c] sm:$0xf]
    %v249 = vld [vmem:[#allocation5 + $0x210] sm:$0xf]
    %v250 = vld [vmem:[#allocation5 + $0x214] sm:$0xf]
    %v251 = vld [vmem:[#allocation5 + $0x218] sm:$0xf]
    %v252 = vld [vmem:[#allocation5 + $0x21c] sm:$0xf]
    %v253 = vld [vmem:[#allocation5 + $0x220] sm:$0xf]
    %v254 = vld [vmem:[#allocation5 + $0x224] sm:$0xf]
    %v255 = vld [vmem:[#allocation5 + $0x228] sm:$0xf]
    %v256 = vld [vmem:[#allocation5 + $0x22c] sm:$0xf]
    %v257 = vld [vmem:[#allocation5 + $0x230] sm:$0xf]
    %v258 = vld [vmem:[#allocation5 + $0x234] sm:$0xf]
    %v259 = vld [vmem:[#allocation5 + $0x238] sm:$0xf]
    %v260 = vld [vmem:[#allocation5 + $0x23c] sm:$0xf]
    %v261 = vld [vmem:[#allocation5 + $0x240] sm:$0xf]
    %v262 = vld [vmem:[#allocation5 + $0x244] sm:$0xf]
    %v263 = vld [vmem:[#allocation5 + $0x248] sm:$0xf]
    %v264 = vld [vmem:[#allocation5 + $0x24c] sm:$0xf]
    %v265 = vld [vmem:[#allocation5 + $0x250] sm:$0xf]
    %v266 = vld [vmem:[#allocation5 + $0x254] sm:$0xf]
    %v267 = vld [vmem:[#allocation5 + $0x258] sm:$0xf]
    %v268 = vld [vmem:[#allocation5 + $0x25c] sm:$0xf]
    %v269 = vld [vmem:[#allocation5 + $0x260] sm:$0xf]
    %v270 = vld [vmem:[#allocation5 + $0x264] sm:$0xf]
    %v271 = vld [vmem:[#allocation5 + $0x268] sm:$0xf]
    %v272 = vld [vmem:[#allocation5 + $0x26c] sm:$0xf]
    %v273 = vld [vmem:[#allocation5 + $0x270] sm:$0xf]
    %v274 = vld [vmem:[#allocation5 + $0x274] sm:$0xf]
    %v275 = vld [vmem:[#allocation5 + $0x278] sm:$0xf]
    %v276 = vld [vmem:[#allocation5 + $0x27c] sm:$0xf]
    %v277 = vld [vmem:[#allocation5 + $0x280] sm:$0xf]
    %v278 = vld [vmem:[#allocation5 + $0x284] sm:$0xf]
    %v279 = vld [vmem:[#allocation5 + $0x288] sm:$0xf]
    %v280 = vld [vmem:[#allocation5 + $0x28c] sm:$0xf]
    %v281 = vld [vmem:[#allocation5 + $0x290] sm:$0xf]
    %v282 = vld [vmem:[#allocation5 + $0x294] sm:$0xf]
    %v283 = vld [vmem:[#allocation5 + $0x298] sm:$0xf]
    %v284 = vld [vmem:[#allocation5 + $0x29c] sm:$0xf]
    %v285 = vld [vmem:[#allocation5 + $0x2a0] sm:$0xf]
    %v286 = vld [vmem:[#allocation5 + $0x2a4] sm:$0xf]
    %v287 = vld [vmem:[#allocation5 + $0x2a8] sm:$0xf]
    %v288 = vld [vmem:[#allocation5 + $0x2ac] sm:$0xf]
    %v289 = vld [vmem:[#allocation5 + $0x2b0] sm:$0xf]
    %v290 = vld [vmem:[#allocation5 + $0x2b4] sm:$0xf]
    %v291 = vld [vmem:[#allocation5 + $0x2b8] sm:$0xf]
    %v292 = vld [vmem:[#allocation5 + $0x2bc] sm:$0xf]
    %v293 = vld [vmem:[#allocation5 + $0x2c0] sm:$0xf]
    %v294 = vld [vmem:[#allocation5 + $0x2c4] sm:$0xf]
    %v295 = vld [vmem:[#allocation5 + $0x2c8] sm:$0xf]
    %v296 = vld [vmem:[#allocation5 + $0x2cc] sm:$0xf]
    %v297 = vld [vmem:[#allocation5 + $0x2d0] sm:$0xf]
    %v298 = vld [vmem:[#allocation5 + $0x2d4] sm:$0xf]
    %v299 = vld [vmem:[#allocation5 + $0x2d8] sm:$0xf]
    %v300 = vld [vmem:[#allocation5 + $0x2dc] sm:$0xf]
    %v301 = vld [vmem:[#allocation5 + $0x2e0] sm:$0xf]
    %v302 = vld [vmem:[#allocation5 + $0x2e4] sm:$0xf]
    %v303 = vld [vmem:[#allocation5 + $0x2e8] sm:$0xf]
    %v304 = vld [vmem:[#allocation5 + $0x2ec] sm:$0xf]
    %v305 = vld [vmem:[#allocation5 + $0x2f0] sm:$0xf]
    %v306 = vld [vmem:[#allocation5 + $0x2f4] sm:$0xf]
    %v307 = vld [vmem:[#allocation5 + $0x2f8] sm:$0xf]
    %v308 = vld [vmem:[#allocation5 + $0x2fc] sm:$0xf]
    %v309 = vld [vmem:[#allocation5 + $0x300] sm:$0xf]
    %v310 = vld [vmem:[#allocation5 + $0x304] sm:$0xf]
    %v311 = vld [vmem:[#allocation5 + $0x308] sm:$0xf]
    %v312 = vld [vmem:[#allocation5 + $0x30c] sm:$0xf]
    %v313 = vld [vmem:[#allocation5 + $0x310] sm:$0xf]
    %v314 = vld [vmem:[#allocation5 + $0x314] sm:$0xf]
    %v315 = vld [vmem:[#allocation5 + $0x318] sm:$0xf]
    %v316 = vld [vmem:[#allocation5 + $0x31c] sm:$0xf]
    %v317 = vld [vmem:[#allocation5 + $0x320] sm:$0xf]
    %v318 = vld [vmem:[#allocation5 + $0x324] sm:$0xf]
    %v319 = vld [vmem:[#allocation5 + $0x328] sm:$0xf]
    %v320 = vld [vmem:[#allocation5 + $0x32c] sm:$0xf]
    %v321 = vld [vmem:[#allocation5 + $0x330] sm:$0xf]
    %v322 = vld [vmem:[#allocation5 + $0x334] sm:$0xf]
    %v323 = vld [vmem:[#allocation5 + $0x338] sm:$0xf]
    %v324 = vld [vmem:[#allocation5 + $0x33c] sm:$0xf]
    %v325 = vld [vmem:[#allocation5 + $0x340] sm:$0xf]
    %v326 = vld [vmem:[#allocation5 + $0x344] sm:$0xf]
    %v327 = vld [vmem:[#allocation5 + $0x348] sm:$0xf]
    %v328 = vld [vmem:[#allocation5 + $0x34c] sm:$0xf]
    %v329 = vld [vmem:[#allocation5 + $0x350] sm:$0xf]
    %v330 = vld [vmem:[#allocation5 + $0x354] sm:$0xf]
    %v331 = vld [vmem:[#allocation5 + $0x358] sm:$0xf]
    %v332 = vld [vmem:[#allocation5 + $0x35c] sm:$0xf]
    %v333 = vld [vmem:[#allocation5 + $0x360] sm:$0xf]
    %v334 = vld [vmem:[#allocation5 + $0x364] sm:$0xf]
    %v335 = vld [vmem:[#allocation5 + $0x368] sm:$0xf]
    %v336 = vld [vmem:[#allocation5 + $0x36c] sm:$0xf]
    %v337 = vld [vmem:[#allocation5 + $0x370] sm:$0xf]
    %v338 = vld [vmem:[#allocation5 + $0x374] sm:$0xf]
    %v339 = vld [vmem:[#allocation5 + $0x378] sm:$0xf]
    %v340 = vld [vmem:[#allocation5 + $0x37c] sm:$0xf]
    %v341 = vld [vmem:[#allocation5 + $0x380] sm:$0xf]
    %v342 = vld [vmem:[#allocation5 + $0x384] sm:$0xf]
    %v343 = vld [vmem:[#allocation5 + $0x388] sm:$0xf]
    %v344 = vld [vmem:[#allocation5 + $0x38c] sm:$0xf]
    %v345 = vld [vmem:[#allocation5 + $0x390] sm:$0xf]
    %v346 = vld [vmem:[#allocation5 + $0x394] sm:$0xf]
    %v347 = vld [vmem:[#allocation5 + $0x398] sm:$0xf]
    %v348 = vld [vmem:[#allocation5 + $0x39c] sm:$0xf]
    %v349 = vld [vmem:[#allocation5 + $0x3a0] sm:$0xf]
    %v350 = vld [vmem:[#allocation5 + $0x3a4] sm:$0xf]
    %v351 = vld [vmem:[#allocation5 + $0x3a8] sm:$0xf]
    %v352 = vld [vmem:[#allocation5 + $0x3ac] sm:$0xf]
    %v353 = vld [vmem:[#allocation5 + $0x3b0] sm:$0xf]
    %v354 = vld [vmem:[#allocation5 + $0x3b4] sm:$0xf]
    %v355 = vld [vmem:[#allocation5 + $0x3b8] sm:$0xf]
    %v356 = vld [vmem:[#allocation5 + $0x3bc] sm:$0xf]
    %v357 = vld [vmem:[#allocation5 + $0x3c0] sm:$0xf]
    %v358 = vld [vmem:[#allocation5 + $0x3c4] sm:$0xf]
    %v359 = vld [vmem:[#allocation5 + $0x3c8] sm:$0xf]
    %v360 = vld [vmem:[#allocation5 + $0x3cc] sm:$0xf]
    %v361 = vld [vmem:[#allocation5 + $0x3d0] sm:$0xf]
    %v362 = vld [vmem:[#allocation5 + $0x3d4] sm:$0xf]
    %v363 = vld [vmem:[#allocation5 + $0x3d8] sm:$0xf]
    %v364 = vld [vmem:[#allocation5 + $0x3dc] sm:$0xf]
    %v365 = vld [vmem:[#allocation5 + $0x3e0] sm:$0xf]
    %v366 = vld [vmem:[#allocation5 + $0x3e4] sm:$0xf]
    %v367 = vld [vmem:[#allocation5 + $0x3e8] sm:$0xf]
    %v368 = vld [vmem:[#allocation5 + $0x3ec] sm:$0xf]
    %v369 = vld [vmem:[#allocation5 + $0x3f0] sm:$0xf]
    %v370 = vld [vmem:[#allocation5 + $0x3f4] sm:$0xf]
    %v371 = vld [vmem:[#allocation5 + $0x3f8] sm:$0xf]
    %v372 = vld [vmem:[#allocation5 + $0x3fc] sm:$0xf]
    %v373 = vld [vmem:[#allocation5 + $0x400] sm:$0xf]
    %v374 = vld [vmem:[#allocation5 + $0x404] sm:$0xf]
    %v375 = vld [vmem:[#allocation5 + $0x408] sm:$0xf]
    %v376 = vld [vmem:[#allocation5 + $0x40c] sm:$0xf]
    %v377 = vld [vmem:[#allocation5 + $0x410] sm:$0xf]
    %v378 = vld [vmem:[#allocation5 + $0x414] sm:$0xf]
    %v379 = vld [vmem:[#allocation5 + $0x418] sm:$0xf]
    %v380 = vld [vmem:[#allocation5 + $0x41c] sm:$0xf]
    %v381 = vld [vmem:[#allocation5 + $0x420] sm:$0xf]
    %v382 = vld [vmem:[#allocation5 + $0x424] sm:$0xf]
    %v383 = vld [vmem:[#allocation5 + $0x428] sm:$0xf]
    %v384 = vld [vmem:[#allocation5 + $0x42c] sm:$0xf]
    %v385 = vld [vmem:[#allocation5 + $0x430] sm:$0xf]
    %v386 = vld [vmem:[#allocation5 + $0x434] sm:$0xf]
    %v387 = vld [vmem:[#allocation5 + $0x438] sm:$0xf]
    %v388 = vld [vmem:[#allocation5 + $0x43c] sm:$0xf]
    %v389 = vld [vmem:[#allocation5 + $0x440] sm:$0xf]
    %v390 = vld [vmem:[#allocation5 + $0x444] sm:$0xf]
    %v391 = vld [vmem:[#allocation5 + $0x448] sm:$0xf]
    %v392 = vld [vmem:[#allocation5 + $0x44c] sm:$0xf]
    %v393 = vld [vmem:[#allocation5 + $0x450] sm:$0xf]
    %v394 = vld [vmem:[#allocation5 + $0x454] sm:$0xf]
    %v395 = vld [vmem:[#allocation5 + $0x458] sm:$0xf]
    %v396 = vld [vmem:[#allocation5 + $0x45c] sm:$0xf]
    %v397 = vld [vmem:[#allocation5 + $0x460] sm:$0xf]
    %v398 = vld [vmem:[#allocation5 + $0x464] sm:$0xf]
    %v399 = vld [vmem:[#allocation5 + $0x468] sm:$0xf]
    %v400 = vld [vmem:[#allocation5 + $0x46c] sm:$0xf]
    %v401 = vld [vmem:[#allocation5 + $0x470] sm:$0xf]
    %v402 = vld [vmem:[#allocation5 + $0x474] sm:$0xf]
    %v403 = vld [vmem:[#allocation5 + $0x478] sm:$0xf]
    %v404 = vld [vmem:[#allocation5 + $0x47c] sm:$0xf]
    %v405 = vld [vmem:[#allocation5 + $0x480] sm:$0xf]
    %v406 = vld [vmem:[#allocation5 + $0x484] sm:$0xf]
    %v407 = vld [vmem:[#allocation5 + $0x488] sm:$0xf]
    %v408 = vld [vmem:[#allocation5 + $0x48c] sm:$0xf]
    %v409 = vld [vmem:[#allocation5 + $0x490] sm:$0xf]
    %v410 = vld [vmem:[#allocation5 + $0x494] sm:$0xf]
    %v411 = vld [vmem:[#allocation5 + $0x498] sm:$0xf]
    %v412 = vld [vmem:[#allocation5 + $0x49c] sm:$0xf]
    %v413 = vld [vmem:[#allocation5 + $0x4a0] sm:$0xf]
    %v414 = vld [vmem:[#allocation5 + $0x4a4] sm:$0xf]
    %v415 = vld [vmem:[#allocation5 + $0x4a8] sm:$0xf]
    %v416 = vld [vmem:[#allocation5 + $0x4ac] sm:$0xf]
    %v417 = vld [vmem:[#allocation5 + $0x4b0] sm:$0xf]
    %v418 = vld [vmem:[#allocation5 + $0x4b4] sm:$0xf]
    %v419 = vld [vmem:[#allocation5 + $0x4b8] sm:$0xf]
    %v420 = vld [vmem:[#allocation5 + $0x4bc] sm:$0xf]
    %v421 = vld [vmem:[#allocation5 + $0x4c0] sm:$0xf]
    %v422 = vld [vmem:[#allocation5 + $0x4c4] sm:$0xf]
    %v423 = vld [vmem:[#allocation5 + $0x4c8] sm:$0xf]
    %v424 = vld [vmem:[#allocation5 + $0x4cc] sm:$0xf]
    %v425 = vld [vmem:[#allocation5 + $0x4d0] sm:$0xf]
    %v426 = vld [vmem:[#allocation5 + $0x4d4] sm:$0xf]
    %v427 = vld [vmem:[#allocation5 + $0x4d8] sm:$0xf]
    %v428 = vld [vmem:[#allocation5 + $0x4dc] sm:$0xf]
    %v429 = vld [vmem:[#allocation5 + $0x4e0] sm:$0xf]
    %v430 = vld [vmem:[#allocation5 + $0x4e4] sm:$0xf]
    %v431 = vld [vmem:[#allocation5 + $0x4e8] sm:$0xf]
    %v432 = vld [vmem:[#allocation5 + $0x4ec] sm:$0xf]
    %v433 = vld [vmem:[#allocation5 + $0x4f0] sm:$0xf]
    %v434 = vld [vmem:[#allocation5 + $0x4f4] sm:$0xf]
    %v435 = vld [vmem:[#allocation5 + $0x4f8] sm:$0xf]
    %v436 = vld [vmem:[#allocation5 + $0x4fc] sm:$0xf]
    %v437 = vld [vmem:[#allocation5 + $0x500] sm:$0xf]
    %v438 = vld [vmem:[#allocation5 + $0x504] sm:$0xf]
    %v439 = vld [vmem:[#allocation5 + $0x508] sm:$0xf]
    %v440 = vld [vmem:[#allocation5 + $0x50c] sm:$0xf]
    %v441 = vld [vmem:[#allocation5 + $0x510] sm:$0xf]
    %v442 = vld [vmem:[#allocation5 + $0x514] sm:$0xf]
    %v443 = vld [vmem:[#allocation5 + $0x518] sm:$0xf]
    %v444 = vld [vmem:[#allocation5 + $0x51c] sm:$0xf]
    %v445 = vld [vmem:[#allocation5 + $0x520] sm:$0xf]
    %v446 = vld [vmem:[#allocation5 + $0x524] sm:$0xf]
    %v447 = vld [vmem:[#allocation5 + $0x528] sm:$0xf]
    %v448 = vld [vmem:[#allocation5 + $0x52c] sm:$0xf]
    %v449 = vld [vmem:[#allocation5 + $0x530] sm:$0xf]
    %v450 = vld [vmem:[#allocation5 + $0x534] sm:$0xf]
    %v451 = vld [vmem:[#allocation5 + $0x538] sm:$0xf]
    %v452 = vld [vmem:[#allocation5 + $0x53c] sm:$0xf]
    %v453 = vld [vmem:[#allocation5 + $0x540] sm:$0xf]
    %v454 = vld [vmem:[#allocation5 + $0x544] sm:$0xf]
    %v455 = vld [vmem:[#allocation5 + $0x548] sm:$0xf]
    %v456 = vld [vmem:[#allocation5 + $0x54c] sm:$0xf]
    %v457 = vld [vmem:[#allocation5 + $0x550] sm:$0xf]
    %v458 = vld [vmem:[#allocation5 + $0x554] sm:$0xf]
    %v459 = vld [vmem:[#allocation5 + $0x558] sm:$0xf]
    %v460 = vld [vmem:[#allocation5 + $0x55c] sm:$0xf]
    %v461 = vld [vmem:[#allocation5 + $0x560] sm:$0xf]
    %v462 = vld [vmem:[#allocation5 + $0x564] sm:$0xf]
    %v463 = vld [vmem:[#allocation5 + $0x568] sm:$0xf]
    %v464 = vld [vmem:[#allocation5 + $0x56c] sm:$0xf]
    %v465 = vld [vmem:[#allocation5 + $0x570] sm:$0xf]
    %v466 = vld [vmem:[#allocation5 + $0x574] sm:$0xf]
    %v467 = vld [vmem:[#allocation5 + $0x578] sm:$0xf]
    %v468 = vld [vmem:[#allocation5 + $0x57c] sm:$0xf]
    %v469 = vld [vmem:[#allocation5 + $0x580] sm:$0xf]
    %v470 = vld [vmem:[#allocation5 + $0x584] sm:$0xf]
    %v471 = vld [vmem:[#allocation5 + $0x588] sm:$0xf]
    %v472 = vld [vmem:[#allocation5 + $0x58c] sm:$0xf]
    %v473 = vld [vmem:[#allocation5 + $0x590] sm:$0xf]
    %v474 = vld [vmem:[#allocation5 + $0x594] sm:$0xf]
    %v475 = vld [vmem:[#allocation5 + $0x598] sm:$0xf]
    %v476 = vld [vmem:[#allocation5 + $0x59c] sm:$0xf]
    %v477 = vld [vmem:[#allocation5 + $0x5a0] sm:$0xf]
    %v478 = vld [vmem:[#allocation5 + $0x5a4] sm:$0xf]
    %v479 = vld [vmem:[#allocation5 + $0x5a8] sm:$0xf]
    %v480 = vld [vmem:[#allocation5 + $0x5ac] sm:$0xf]
    %v481 = vld [vmem:[#allocation5 + $0x5b0] sm:$0xf]
    %v482 = vld [vmem:[#allocation5 + $0x5b4] sm:$0xf]
    %v483 = vld [vmem:[#allocation5 + $0x5b8] sm:$0xf]
    %v484 = vld [vmem:[#allocation5 + $0x5bc] sm:$0xf]
    %v485 = vld [vmem:[#allocation5 + $0x5c0] sm:$0xf]
    %v486 = vld [vmem:[#allocation5 + $0x5c4] sm:$0xf]
    %v487 = vld [vmem:[#allocation5 + $0x5c8] sm:$0xf]
    %v488 = vld [vmem:[#allocation5 + $0x5cc] sm:$0xf]
    %v489 = vld [vmem:[#allocation5 + $0x5d0] sm:$0xf]
    %v490 = vld [vmem:[#allocation5 + $0x5d4] sm:$0xf]
    %v491 = vld [vmem:[#allocation5 + $0x5d8] sm:$0xf]
    %v492 = vld [vmem:[#allocation5 + $0x5dc] sm:$0xf]
    %v493 = vld [vmem:[#allocation5 + $0x5e0] sm:$0xf]
    %v494 = vld [vmem:[#allocation5 + $0x5e4] sm:$0xf]
    %v495 = vld [vmem:[#allocation5 + $0x5e8] sm:$0xf]
    %v496 = vld [vmem:[#allocation5 + $0x5ec] sm:$0xf]
    %v497 = vld [vmem:[#allocation5 + $0x5f0] sm:$0xf]
    %v498 = vld [vmem:[#allocation5 + $0x5f4] sm:$0xf]
    %v499 = vld [vmem:[#allocation5 + $0x5f8] sm:$0xf]
    %v500 = vld [vmem:[#allocation5 + $0x5fc] sm:$0xf]
    %v501 = vld [vmem:[#allocation5 + $0x600] sm:$0xf]
    %v502 = vld [vmem:[#allocation5 + $0x604] sm:$0xf]
    %v503 = vld [vmem:[#allocation5 + $0x608] sm:$0xf]
    %v504 = vld [vmem:[#allocation5 + $0x60c] sm:$0xf]
    %v505 = vld [vmem:[#allocation5 + $0x610] sm:$0xf]
    %v506 = vld [vmem:[#allocation5 + $0x614] sm:$0xf]
    %v507 = vld [vmem:[#allocation5 + $0x618] sm:$0xf]
    %v508 = vld [vmem:[#allocation5 + $0x61c] sm:$0xf]
    %v509 = vld [vmem:[#allocation5 + $0x620] sm:$0xf]
    %v510 = vld [vmem:[#allocation5 + $0x624] sm:$0xf]
    %v511 = vld [vmem:[#allocation5 + $0x628] sm:$0xf]
    %v512 = vld [vmem:[#allocation5 + $0x62c] sm:$0xf]
    %v513 = vld [vmem:[#allocation5 + $0x630] sm:$0xf]
    %v514 = vld [vmem:[#allocation5 + $0x634] sm:$0xf]
    %v515 = vld [vmem:[#allocation5 + $0x638] sm:$0xf]
    %v516 = vld [vmem:[#allocation5 + $0x63c] sm:$0xf]
    %v517 = vld [vmem:[#allocation5 + $0x640] sm:$0xf]
    %v518 = vld [vmem:[#allocation5 + $0x644] sm:$0xf]
    %v519 = vld [vmem:[#allocation5 + $0x648] sm:$0xf]
    %v520 = vld [vmem:[#allocation5 + $0x64c] sm:$0xf]
    %v521 = vld [vmem:[#allocation5 + $0x650] sm:$0xf]
    %v522 = vld [vmem:[#allocation5 + $0x654] sm:$0xf]
    %v523 = vld [vmem:[#allocation5 + $0x658] sm:$0xf]
    %v524 = vld [vmem:[#allocation5 + $0x65c] sm:$0xf]
    %v525 = vld [vmem:[#allocation5 + $0x660] sm:$0xf]
    %v526 = vld [vmem:[#allocation5 + $0x664] sm:$0xf]
    %v527 = vld [vmem:[#allocation5 + $0x668] sm:$0xf]
    %v528 = vld [vmem:[#allocation5 + $0x66c] sm:$0xf]
    %v529 = vld [vmem:[#allocation5 + $0x670] sm:$0xf]
    %v530 = vld [vmem:[#allocation5 + $0x674] sm:$0xf]
    %v531 = vld [vmem:[#allocation5 + $0x678] sm:$0xf]
    %v532 = vld [vmem:[#allocation5 + $0x67c] sm:$0xf]
    %v533 = vld [vmem:[#allocation5 + $0x680] sm:$0xf]
    %v534 = vld [vmem:[#allocation5 + $0x684] sm:$0xf]
    %v535 = vld [vmem:[#allocation5 + $0x688] sm:$0xf]
    %v536 = vld [vmem:[#allocation5 + $0x68c] sm:$0xf]
    %v537 = vld [vmem:[#allocation5 + $0x690] sm:$0xf]
    %v538 = vld [vmem:[#allocation5 + $0x694] sm:$0xf]
    %v539 = vld [vmem:[#allocation5 + $0x698] sm:$0xf]
    %v540 = vld [vmem:[#allocation5 + $0x69c] sm:$0xf]
    %v541 = vld [vmem:[#allocation5 + $0x6a0] sm:$0xf]
    %v542 = vld [vmem:[#allocation5 + $0x6a4] sm:$0xf]
    %v543 = vld [vmem:[#allocation5 + $0x6a8] sm:$0xf]
    %v544 = vld [vmem:[#allocation5 + $0x6ac] sm:$0xf]
    %v545 = vld [vmem:[#allocation5 + $0x6b0] sm:$0xf]
    %v546 = vld [vmem:[#allocation5 + $0x6b4] sm:$0xf]
    %v547 = vld [vmem:[#allocation5 + $0x6b8] sm:$0xf]
    %v548 = vld [vmem:[#allocation5 + $0x6bc] sm:$0xf]
    %v549 = vld [vmem:[#allocation5 + $0x6c0] sm:$0xf]
    %v550 = vld [vmem:[#allocation5 + $0x6c4] sm:$0xf]
    %v551 = vld [vmem:[#allocation5 + $0x6c8] sm:$0xf]
    %v552 = vld [vmem:[#allocation5 + $0x6cc] sm:$0xf]
    %v553 = vld [vmem:[#allocation5 + $0x6d0] sm:$0xf]
    %v554 = vld [vmem:[#allocation5 + $0x6d4] sm:$0xf]
    %v555 = vld [vmem:[#allocation5 + $0x6d8] sm:$0xf]
    %v556 = vld [vmem:[#allocation5 + $0x6dc] sm:$0xf]
    %v557 = vld [vmem:[#allocation5 + $0x6e0] sm:$0xf]
    %v558 = vld [vmem:[#allocation5 + $0x6e4] sm:$0xf]
    %v559 = vld [vmem:[#allocation5 + $0x6e8] sm:$0xf]
    %v560 = vld [vmem:[#allocation5 + $0x6ec] sm:$0xf]
    %v561 = vld [vmem:[#allocation5 + $0x6f0] sm:$0xf]
    %v562 = vld [vmem:[#allocation5 + $0x6f4] sm:$0xf]
    %v563 = vld [vmem:[#allocation5 + $0x6f8] sm:$0xf]
    %v564 = vld [vmem:[#allocation5 + $0x6fc] sm:$0xf]
    %v565 = vld [vmem:[#allocation5 + $0x700] sm:$0xf]
    %v566 = vld [vmem:[#allocation5 + $0x704] sm:$0xf]
    %v567 = vld [vmem:[#allocation5 + $0x708] sm:$0xf]
    %v568 = vld [vmem:[#allocation5 + $0x70c] sm:$0xf]
    %v569 = vld [vmem:[#allocation5 + $0x710] sm:$0xf]
    %v570 = vld [vmem:[#allocation5 + $0x714] sm:$0xf]
    %v571 = vld [vmem:[#allocation5 + $0x718] sm:$0xf]
    %v572 = vld [vmem:[#allocation5 + $0x71c] sm:$0xf]
    %v573 = vld [vmem:[#allocation5 + $0x720] sm:$0xf]
    %v574 = vld [vmem:[#allocation5 + $0x724] sm:$0xf]
    %v575 = vld [vmem:[#allocation5 + $0x728] sm:$0xf]
    %v576 = vld [vmem:[#allocation5 + $0x72c] sm:$0xf]
    %v577 = vld [vmem:[#allocation5 + $0x730] sm:$0xf]
    %v578 = vld [vmem:[#allocation5 + $0x734] sm:$0xf]
    %v579 = vld [vmem:[#allocation5 + $0x738] sm:$0xf]
    %v580 = vld [vmem:[#allocation5 + $0x73c] sm:$0xf]
    %v581 = vld [vmem:[#allocation5 + $0x740] sm:$0xf]
    %v582 = vld [vmem:[#allocation5 + $0x744] sm:$0xf]
    %v583 = vld [vmem:[#allocation5 + $0x748] sm:$0xf]
    %v584 = vld [vmem:[#allocation5 + $0x74c] sm:$0xf]
    %v585 = vld [vmem:[#allocation5 + $0x750] sm:$0xf]
    %v586 = vld [vmem:[#allocation5 + $0x754] sm:$0xf]
    %v587 = vld [vmem:[#allocation5 + $0x758] sm:$0xf]
    %v588 = vld [vmem:[#allocation5 + $0x75c] sm:$0xf]
    %v589 = vld [vmem:[#allocation5 + $0x760] sm:$0xf]
    %v590 = vld [vmem:[#allocation5 + $0x764] sm:$0xf]
    %v591 = vld [vmem:[#allocation5 + $0x768] sm:$0xf]
    %v592 = vld [vmem:[#allocation5 + $0x76c] sm:$0xf]
    %v593 = vld [vmem:[#allocation5 + $0x770] sm:$0xf]
    %v594 = vld [vmem:[#allocation5 + $0x774] sm:$0xf]
    %v595 = vld [vmem:[#allocation5 + $0x778] sm:$0xf]
    %v596 = vld [vmem:[#allocation5 + $0x77c] sm:$0xf]
    %v597 = vld [vmem:[#allocation5 + $0x780] sm:$0xf]
    %v598 = vld [vmem:[#allocation5 + $0x784] sm:$0xf]
    %v599 = vld [vmem:[#allocation5 + $0x788] sm:$0xf]
    %v600 = vld [vmem:[#allocation5 + $0x78c] sm:$0xf]
    %v601 = vld [vmem:[#allocation5 + $0x790] sm:$0xf]
    %v602 = vld [vmem:[#allocation5 + $0x794] sm:$0xf]
    %v603 = vld [vmem:[#allocation5 + $0x798] sm:$0xf]
    %v604 = vld [vmem:[#allocation5 + $0x79c] sm:$0xf]
    %v605 = vld [vmem:[#allocation5 + $0x7a0] sm:$0xf]
    %v606 = vld [vmem:[#allocation5 + $0x7a4] sm:$0xf]
    %v607 = vld [vmem:[#allocation5 + $0x7a8] sm:$0xf]
    %v608 = vld [vmem:[#allocation5 + $0x7ac] sm:$0xf]
    %v609 = vld [vmem:[#allocation5 + $0x7b0] sm:$0xf]
    %v610 = vld [vmem:[#allocation5 + $0x7b4] sm:$0xf]
    %v611 = vld [vmem:[#allocation5 + $0x7b8] sm:$0xf]
    %v612 = vld [vmem:[#allocation5 + $0x7bc] sm:$0xf]
    %v613 = vld [vmem:[#allocation5 + $0x7c0] sm:$0xf]
    %v614 = vld [vmem:[#allocation5 + $0x7c4] sm:$0xf]
    %v615 = vld [vmem:[#allocation5 + $0x7c8] sm:$0xf]
    %v616 = vld [vmem:[#allocation5 + $0x7cc] sm:$0xf]
    %v617 = vld [vmem:[#allocation5 + $0x7d0] sm:$0xf]
    %v618 = vld [vmem:[#allocation5 + $0x7d4] sm:$0xf]
    %v619 = vld [vmem:[#allocation5 + $0x7d8] sm:$0xf]
    %v620 = vld [vmem:[#allocation5 + $0x7dc] sm:$0xf]
    %v621 = vld [vmem:[#allocation5 + $0x7e0] sm:$0xf]
    %v622 = vld [vmem:[#allocation5 + $0x7e4] sm:$0xf]
    %v623 = vld [vmem:[#allocation5 + $0x7e8] sm:$0xf]
    %v624 = vld [vmem:[#allocation5 + $0x7ec] sm:$0xf]
    %v625 = vld [vmem:[#allocation5 + $0x7f0] sm:$0xf]
    %v626 = vld [vmem:[#allocation5 + $0x7f4] sm:$0xf]
    %v627 = vld [vmem:[#allocation5 + $0x7f8] sm:$0xf]
    %v628 = vld [vmem:[#allocation5 + $0x7fc] sm:$0xf]
    %v629 = vld [vmem:[#allocation5 + $0x800] sm:$0xf]
    %v630 = vld [vmem:[#allocation5 + $0x804] sm:$0xf]
    %v631 = vld [vmem:[#allocation5 + $0x808] sm:$0xf]
    %v632 = vld [vmem:[#allocation5 + $0x80c] sm:$0xf]
    %v633 = vld [vmem:[#allocation5 + $0x810] sm:$0xf]
    %v634 = vld [vmem:[#allocation5 + $0x814] sm:$0xf]
    %v635 = vld [vmem:[#allocation5 + $0x818] sm:$0xf]
    %v636 = vld [vmem:[#allocation5 + $0x81c] sm:$0xf]
    %v637 = vld [vmem:[#allocation5 + $0x820] sm:$0xf]
    %v638 = vld [vmem:[#allocation5 + $0x824] sm:$0xf]
    %v639 = vld [vmem:[#allocation5 + $0x828] sm:$0xf]
    %v640 = vld [vmem:[#allocation5 + $0x82c] sm:$0xf]
    %v641 = vld [vmem:[#allocation5 + $0x830] sm:$0xf]
    %v642 = vld [vmem:[#allocation5 + $0x834] sm:$0xf]
    %v643 = vld [vmem:[#allocation5 + $0x838] sm:$0xf]
    %v644 = vld [vmem:[#allocation5 + $0x83c] sm:$0xf]
    %v645 = vld [vmem:[#allocation5 + $0x840] sm:$0xf]
    %v646 = vld [vmem:[#allocation5 + $0x844] sm:$0xf]
    %v647 = vld [vmem:[#allocation5 + $0x848] sm:$0xf]
    %v648 = vld [vmem:[#allocation5 + $0x84c] sm:$0xf]
    %v649 = vld [vmem:[#allocation5 + $0x850] sm:$0xf]
    %v650 = vld [vmem:[#allocation5 + $0x854] sm:$0xf]
    %v651 = vld [vmem:[#allocation5 + $0x858] sm:$0xf]
    %v652 = vld [vmem:[#allocation5 + $0x85c] sm:$0xf]
    %v653 = vld [vmem:[#allocation5 + $0x860] sm:$0xf]
    %v654 = vld [vmem:[#allocation5 + $0x864] sm:$0xf]
    %v655 = vld [vmem:[#allocation5 + $0x868] sm:$0xf]
    %v656 = vld [vmem:[#allocation5 + $0x86c] sm:$0xf]
    %v657 = vld [vmem:[#allocation5 + $0x870] sm:$0xf]
    %v658 = vld [vmem:[#allocation5 + $0x874] sm:$0xf]
    %v659 = vld [vmem:[#allocation5 + $0x878] sm:$0xf]
    %v660 = vld [vmem:[#allocation5 + $0x87c] sm:$0xf]
    %v661 = vld [vmem:[#allocation5 + $0x880] sm:$0xf]
    %v662 = vld [vmem:[#allocation5 + $0x884] sm:$0xf]
    %v663 = vld [vmem:[#allocation5 + $0x888] sm:$0xf]
    %v664 = vld [vmem:[#allocation5 + $0x88c] sm:$0xf]
    %v665 = vld [vmem:[#allocation5 + $0x890] sm:$0xf]
    %v666 = vld [vmem:[#allocation5 + $0x894] sm:$0xf]
    %v667 = vld [vmem:[#allocation5 + $0x898] sm:$0xf]
    %v668 = vld [vmem:[#allocation5 + $0x89c] sm:$0xf]
    %v669 = vld [vmem:[#allocation5 + $0x8a0] sm:$0xf]
    %v670 = vld [vmem:[#allocation5 + $0x8a4] sm:$0xf]
    %v671 = vld [vmem:[#allocation5 + $0x8a8] sm:$0xf]
    %v672 = vld [vmem:[#allocation5 + $0x8ac] sm:$0xf]
    %v673 = vld [vmem:[#allocation5 + $0x8b0] sm:$0xf]
    %v674 = vld [vmem:[#allocation5 + $0x8b4] sm:$0xf]
    %v675 = vld [vmem:[#allocation5 + $0x8b8] sm:$0xf]
    %v676 = vld [vmem:[#allocation5 + $0x8bc] sm:$0xf]
    %v677 = vld [vmem:[#allocation5 + $0x8c0] sm:$0xf]
    %v678 = vld [vmem:[#allocation5 + $0x8c4] sm:$0xf]
    %v679 = vld [vmem:[#allocation5 + $0x8c8] sm:$0xf]
    %v680 = vld [vmem:[#allocation5 + $0x8cc] sm:$0xf]
    %v681 = vld [vmem:[#allocation5 + $0x8d0] sm:$0xf]
    %v682 = vld [vmem:[#allocation5 + $0x8d4] sm:$0xf]
    %v683 = vld [vmem:[#allocation5 + $0x8d8] sm:$0xf]
    %v684 = vld [vmem:[#allocation5 + $0x8dc] sm:$0xf]
    %v685 = vld [vmem:[#allocation5 + $0x8e0] sm:$0xf]
    %v686 = vld [vmem:[#allocation5 + $0x8e4] sm:$0xf]
    %v687 = vld [vmem:[#allocation5 + $0x8e8] sm:$0xf]
    %v688 = vld [vmem:[#allocation5 + $0x8ec] sm:$0xf]
    %v689 = vld [vmem:[#allocation5 + $0x8f0] sm:$0xf]
    %v690 = vld [vmem:[#allocation5 + $0x8f4] sm:$0xf]
    %v691 = vld [vmem:[#allocation5 + $0x8f8] sm:$0xf]
    %v692 = vld [vmem:[#allocation5 + $0x8fc] sm:$0xf]
    %v693 = vld [vmem:[#allocation5 + $0x900] sm:$0xf]
    %v694 = vld [vmem:[#allocation5 + $0x904] sm:$0xf]
    %v695 = vld [vmem:[#allocation5 + $0x908] sm:$0xf]
    %v696 = vld [vmem:[#allocation5 + $0x90c] sm:$0xf]
    %v697 = vld [vmem:[#allocation5 + $0x910] sm:$0xf]
    %v698 = vld [vmem:[#allocation5 + $0x914] sm:$0xf]
    %v699 = vld [vmem:[#allocation5 + $0x918] sm:$0xf]
    %v700 = vld [vmem:[#allocation5 + $0x91c] sm:$0xf]
    %v701 = vld [vmem:[#allocation5 + $0x920] sm:$0xf]
    %v702 = vld [vmem:[#allocation5 + $0x924] sm:$0xf]
    %v703 = vld [vmem:[#allocation5 + $0x928] sm:$0xf]
    %v704 = vld [vmem:[#allocation5 + $0x92c] sm:$0xf]
    %v705 = vld [vmem:[#allocation5 + $0x930] sm:$0xf]
    %v706 = vld [vmem:[#allocation5 + $0x934] sm:$0xf]
    %v707 = vld [vmem:[#allocation5 + $0x938] sm:$0xf]
    %v708 = vld [vmem:[#allocation5 + $0x93c] sm:$0xf]
    %v709 = vld [vmem:[#allocation5 + $0x940] sm:$0xf]
    %v710 = vld [vmem:[#allocation5 + $0x944] sm:$0xf]
    %v711 = vld [vmem:[#allocation5 + $0x948] sm:$0xf]
    %v712 = vld [vmem:[#allocation5 + $0x94c] sm:$0xf]
    %v713 = vld [vmem:[#allocation5 + $0x950] sm:$0xf]
    %v714 = vld [vmem:[#allocation5 + $0x954] sm:$0xf]
    %v715 = vld [vmem:[#allocation5 + $0x958] sm:$0xf]
    %v716 = vld [vmem:[#allocation5 + $0x95c] sm:$0xf]
    %v717 = vld [vmem:[#allocation5 + $0x960] sm:$0xf]
    %v718 = vld [vmem:[#allocation5 + $0x964] sm:$0xf]
    %v719 = vld [vmem:[#allocation5 + $0x968] sm:$0xf]
    %v720 = vld [vmem:[#allocation5 + $0x96c] sm:$0xf]
    %v721 = vld [vmem:[#allocation5 + $0x970] sm:$0xf]
    %v722 = vld [vmem:[#allocation5 + $0x974] sm:$0xf]
    %v723 = vld [vmem:[#allocation5 + $0x978] sm:$0xf]
    %v724 = vld [vmem:[#allocation5 + $0x97c] sm:$0xf]
    %v725 = vld [vmem:[#allocation5 + $0x980] sm:$0xf]
    %v726 = vld [vmem:[#allocation5 + $0x984] sm:$0xf]
    %v727 = vld [vmem:[#allocation5 + $0x988] sm:$0xf]
    %v728 = vld [vmem:[#allocation5 + $0x98c] sm:$0xf]
    %v729 = vld [vmem:[#allocation5 + $0x990] sm:$0xf]
    %v730 = vld [vmem:[#allocation5 + $0x994] sm:$0xf]
    %v731 = vld [vmem:[#allocation5 + $0x998] sm:$0xf]
    %v732 = vld [vmem:[#allocation5 + $0x99c] sm:$0xf]
    %v733 = vld [vmem:[#allocation5 + $0x9a0] sm:$0xf]
    %v734 = vld [vmem:[#allocation5 + $0x9a4] sm:$0xf]
    %v735 = vld [vmem:[#allocation5 + $0x9a8] sm:$0xf]
    %v736 = vld [vmem:[#allocation5 + $0x9ac] sm:$0xf]
    %v737 = vld [vmem:[#allocation5 + $0x9b0] sm:$0xf]
    %v738 = vld [vmem:[#allocation5 + $0x9b4] sm:$0xf]
    %v739 = vld [vmem:[#allocation5 + $0x9b8] sm:$0xf]
    %v740 = vld [vmem:[#allocation5 + $0x9bc] sm:$0xf]
    %v741 = vld [vmem:[#allocation5 + $0x9c0] sm:$0xf]
    %v742 = vld [vmem:[#allocation5 + $0x9c4] sm:$0xf]
    %v743 = vld [vmem:[#allocation5 + $0x9c8] sm:$0xf]
    %v744 = vld [vmem:[#allocation5 + $0x9cc] sm:$0xf]
    %v745 = vld [vmem:[#allocation5 + $0x9d0] sm:$0xf]
    %v746 = vld [vmem:[#allocation5 + $0x9d4] sm:$0xf]
    %v747 = vld [vmem:[#allocation5 + $0x9d8] sm:$0xf]
    %v748 = vld [vmem:[#allocation5 + $0x9dc] sm:$0xf]
    %v749 = vld [vmem:[#allocation5 + $0x9e0] sm:$0xf]
    %v750 = vld [vmem:[#allocation5 + $0x9e4] sm:$0xf]
    %v751 = vld [vmem:[#allocation5 + $0x9e8] sm:$0xf]
    %v752 = vld [vmem:[#allocation5 + $0x9ec] sm:$0xf]
    %v753 = vld [vmem:[#allocation5 + $0x9f0] sm:$0xf]
    %v754 = vld [vmem:[#allocation5 + $0x9f4] sm:$0xf]
    %v755 = vld [vmem:[#allocation5 + $0x9f8] sm:$0xf]
    %v756 = vld [vmem:[#allocation5 + $0x9fc] sm:$0xf]
    %v757 = vld [vmem:[#allocation5 + $0xa00] sm:$0xf]
    %v758 = vld [vmem:[#allocation5 + $0xa04] sm:$0xf]
    %v759 = vld [vmem:[#allocation5 + $0xa08] sm:$0xf]
    %v760 = vld [vmem:[#allocation5 + $0xa0c] sm:$0xf]
    %v761 = vld [vmem:[#allocation5 + $0xa10] sm:$0xf]
    %v762 = vld [vmem:[#allocation5 + $0xa14] sm:$0xf]
    %v763 = vld [vmem:[#allocation5 + $0xa18] sm:$0xf]
    %v764 = vld [vmem:[#allocation5 + $0xa1c] sm:$0xf]
    %v765 = vld [vmem:[#allocation5 + $0xa20] sm:$0xf]
    %v766 = vld [vmem:[#allocation5 + $0xa24] sm:$0xf]
    %v767 = vld [vmem:[#allocation5 + $0xa28] sm:$0xf]
    %v768 = vld [vmem:[#allocation5 + $0xa2c] sm:$0xf]
    %v769 = vld [vmem:[#allocation5 + $0xa30] sm:$0xf]
    %v770 = vld [vmem:[#allocation5 + $0xa34] sm:$0xf]
    %v771 = vld [vmem:[#allocation5 + $0xa38] sm:$0xf]
    %v772 = vld [vmem:[#allocation5 + $0xa3c] sm:$0xf]
    %v773 = vld [vmem:[#allocation5 + $0xa40] sm:$0xf]
    %v774 = vld [vmem:[#allocation5 + $0xa44] sm:$0xf]
    %v775 = vld [vmem:[#allocation5 + $0xa48] sm:$0xf]
    %v776 = vld [vmem:[#allocation5 + $0xa4c] sm:$0xf]
    %v777 = vld [vmem:[#allocation5 + $0xa50] sm:$0xf]
    %v778 = vld [vmem:[#allocation5 + $0xa54] sm:$0xf]
    %v779 = vld [vmem:[#allocation5 + $0xa58] sm:$0xf]
    %v780 = vld [vmem:[#allocation5 + $0xa5c] sm:$0xf]
    %v781 = vld [vmem:[#allocation5 + $0xa60] sm:$0xf]
    %v782 = vld [vmem:[#allocation5 + $0xa64] sm:$0xf]
    %v783 = vld [vmem:[#allocation5 + $0xa68] sm:$0xf]
    %v784 = vld [vmem:[#allocation5 + $0xa6c] sm:$0xf]
    %v785 = vld [vmem:[#allocation5 + $0xa70] sm:$0xf]
    %v786 = vld [vmem:[#allocation5 + $0xa74] sm:$0xf]
    %v787 = vld [vmem:[#allocation5 + $0xa78] sm:$0xf]
    %v788 = vld [vmem:[#allocation5 + $0xa7c] sm:$0xf]
    %v789 = vld [vmem:[#allocation5 + $0xa80] sm:$0xf]
    %v790 = vld [vmem:[#allocation5 + $0xa84] sm:$0xf]
    %v791 = vld [vmem:[#allocation5 + $0xa88] sm:$0xf]
    %v792 = vld [vmem:[#allocation5 + $0xa8c] sm:$0xf]
    %v793 = vld [vmem:[#allocation5 + $0xa90] sm:$0xf]
    %v794 = vld [vmem:[#allocation5 + $0xa94] sm:$0xf]
    %v795 = vld [vmem:[#allocation5 + $0xa98] sm:$0xf]
    %v796 = vld [vmem:[#allocation5 + $0xa9c] sm:$0xf]
    %v797 = vld [vmem:[#allocation5 + $0xaa0] sm:$0xf]
    %v798 = vld [vmem:[#allocation5 + $0xaa4] sm:$0xf]
    %v799 = vld [vmem:[#allocation5 + $0xaa8] sm:$0xf]
    %v800 = vld [vmem:[#allocation5 + $0xaac] sm:$0xf]
    %v801 = vld [vmem:[#allocation5 + $0xab0] sm:$0xf]
    %v802 = vld [vmem:[#allocation5 + $0xab4] sm:$0xf]
    %v803 = vld [vmem:[#allocation5 + $0xab8] sm:$0xf]
    %v804 = vld [vmem:[#allocation5 + $0xabc] sm:$0xf]
    %v805 = vld [vmem:[#allocation5 + $0xac0] sm:$0xf]
    %v806 = vld [vmem:[#allocation5 + $0xac4] sm:$0xf]
    %v807 = vld [vmem:[#allocation5 + $0xac8] sm:$0xf]
    %v808 = vld [vmem:[#allocation5 + $0xacc] sm:$0xf]
    %v809 = vld [vmem:[#allocation5 + $0xad0] sm:$0xf]
    %v810 = vld [vmem:[#allocation5 + $0xad4] sm:$0xf]
    %v811 = vld [vmem:[#allocation5 + $0xad8] sm:$0xf]
    %v812 = vld [vmem:[#allocation5 + $0xadc] sm:$0xf]
    %v813 = vld [vmem:[#allocation5 + $0xae0] sm:$0xf]
    %v814 = vld [vmem:[#allocation5 + $0xae4] sm:$0xf]
    %v815 = vld [vmem:[#allocation5 + $0xae8] sm:$0xf]
    %v816 = vld [vmem:[#allocation5 + $0xaec] sm:$0xf]
    %v817 = vld [vmem:[#allocation5 + $0xaf0] sm:$0xf]
    %v818 = vld [vmem:[#allocation5 + $0xaf4] sm:$0xf]
    %v819 = vld [vmem:[#allocation5 + $0xaf8] sm:$0xf]
    %v820 = vld [vmem:[#allocation5 + $0xafc] sm:$0xf]
    %v821 = vld [vmem:[#allocation5 + $0xb00] sm:$0xf]
    %v822 = vld [vmem:[#allocation5 + $0xb04] sm:$0xf]
    %v823 = vld [vmem:[#allocation5 + $0xb08] sm:$0xf]
    %v824 = vld [vmem:[#allocation5 + $0xb0c] sm:$0xf]
    %v825 = vld [vmem:[#allocation5 + $0xb10] sm:$0xf]
    %v826 = vld [vmem:[#allocation5 + $0xb14] sm:$0xf]
    %v827 = vld [vmem:[#allocation5 + $0xb18] sm:$0xf]
    %v828 = vld [vmem:[#allocation5 + $0xb1c] sm:$0xf]
    %v829 = vld [vmem:[#allocation5 + $0xb20] sm:$0xf]
    %v830 = vld [vmem:[#allocation5 + $0xb24] sm:$0xf]
    %v831 = vld [vmem:[#allocation5 + $0xb28] sm:$0xf]
    %v832 = vld [vmem:[#allocation5 + $0xb2c] sm:$0xf]
    %v833 = vld [vmem:[#allocation5 + $0xb30] sm:$0xf]
    %v834 = vld [vmem:[#allocation5 + $0xb34] sm:$0xf]
    %v835 = vld [vmem:[#allocation5 + $0xb38] sm:$0xf]
    %v836 = vld [vmem:[#allocation5 + $0xb3c] sm:$0xf]
    %v837 = vld [vmem:[#allocation5 + $0xb40] sm:$0xf]
    %v838 = vld [vmem:[#allocation5 + $0xb44] sm:$0xf]
    %v839 = vld [vmem:[#allocation5 + $0xb48] sm:$0xf]
    %v840 = vld [vmem:[#allocation5 + $0xb4c] sm:$0xf]
    %v841 = vld [vmem:[#allocation5 + $0xb50] sm:$0xf]
    %v842 = vld [vmem:[#allocation5 + $0xb54] sm:$0xf]
    %v843 = vld [vmem:[#allocation5 + $0xb58] sm:$0xf]
    %v844 = vld [vmem:[#allocation5 + $0xb5c] sm:$0xf]
    %v845 = vld [vmem:[#allocation5 + $0xb60] sm:$0xf]
    %v846 = vld [vmem:[#allocation5 + $0xb64] sm:$0xf]
    %v847 = vld [vmem:[#allocation5 + $0xb68] sm:$0xf]
    %v848 = vld [vmem:[#allocation5 + $0xb6c] sm:$0xf]
    %v849 = vld [vmem:[#allocation5 + $0xb70] sm:$0xf]
    %v850 = vld [vmem:[#allocation5 + $0xb74] sm:$0xf]
    %v851 = vld [vmem:[#allocation5 + $0xb78] sm:$0xf]
    %v852 = vld [vmem:[#allocation5 + $0xb7c] sm:$0xf]
    %v853 = vld [vmem:[#allocation5 + $0xb80] sm:$0xf]
    %v854 = vld [vmem:[#allocation5 + $0xb84] sm:$0xf]
    %v855 = vld [vmem:[#allocation5 + $0xb88] sm:$0xf]
    %v856 = vld [vmem:[#allocation5 + $0xb8c] sm:$0xf]
    %v857 = vld [vmem:[#allocation5 + $0xb90] sm:$0xf]
    %v858 = vld [vmem:[#allocation5 + $0xb94] sm:$0xf]
    %v859 = vld [vmem:[#allocation5 + $0xb98] sm:$0xf]
    %v860 = vld [vmem:[#allocation5 + $0xb9c] sm:$0xf]
    %v861 = vld [vmem:[#allocation5 + $0xba0] sm:$0xf]
    %v862 = vld [vmem:[#allocation5 + $0xba4] sm:$0xf]
    %v863 = vld [vmem:[#allocation5 + $0xba8] sm:$0xf]
    %v864 = vld [vmem:[#allocation5 + $0xbac] sm:$0xf]
    %v865 = vld [vmem:[#allocation5 + $0xbb0] sm:$0xf]
    %v866 = vld [vmem:[#allocation5 + $0xbb4] sm:$0xf]
    %v867 = vld [vmem:[#allocation5 + $0xbb8] sm:$0xf]
    %v868 = vld [vmem:[#allocation5 + $0xbbc] sm:$0xf]
    %v869 = vld [vmem:[#allocation5 + $0xbc0] sm:$0xf]
    %v870 = vld [vmem:[#allocation5 + $0xbc4] sm:$0xf]
    %v871 = vld [vmem:[#allocation5 + $0xbc8] sm:$0xf]
    %v872 = vld [vmem:[#allocation5 + $0xbcc] sm:$0xf]
    %v873 = vld [vmem:[#allocation5 + $0xbd0] sm:$0xf]
    %v874 = vld [vmem:[#allocation5 + $0xbd4] sm:$0xf]
    %v875 = vld [vmem:[#allocation5 + $0xbd8] sm:$0xf]
    %v876 = vld [vmem:[#allocation5 + $0xbdc] sm:$0xf]
    %v877 = vld [vmem:[#allocation5 + $0xbe0] sm:$0xf]
    %v878 = vld [vmem:[#allocation5 + $0xbe4] sm:$0xf]
    %v879 = vld [vmem:[#allocation5 + $0xbe8] sm:$0xf]
    %v880 = vld [vmem:[#allocation5 + $0xbec] sm:$0xf]
    %v881 = vld [vmem:[#allocation5 + $0xbf0] sm:$0xf]
    %v882 = vld [vmem:[#allocation5 + $0xbf4] sm:$0xf]
    %v883 = vld [vmem:[#allocation5 + $0xbf8] sm:$0xf]
    %v884 = vld [vmem:[#allocation5 + $0xbfc] sm:$0xf]
    %v885 = vld [vmem:[#allocation5 + $0xc00] sm:$0xf]
    %v886 = vld [vmem:[#allocation5 + $0xc04] sm:$0xf]
    %v887 = vld [vmem:[#allocation5 + $0xc08] sm:$0xf]
    %v888 = vld [vmem:[#allocation5 + $0xc0c] sm:$0xf]
    %v889 = vld [vmem:[#allocation5 + $0xc10] sm:$0xf]
    %v890 = vld [vmem:[#allocation5 + $0xc14] sm:$0xf]
    %v891 = vld [vmem:[#allocation5 + $0xc18] sm:$0xf]
    %v892 = vld [vmem:[#allocation5 + $0xc1c] sm:$0xf]
    %v893 = vld [vmem:[#allocation5 + $0xc20] sm:$0xf]
    %v894 = vld [vmem:[#allocation5 + $0xc24] sm:$0xf]
    %v895 = vld [vmem:[#allocation5 + $0xc28] sm:$0xf]
    %v896 = vld [vmem:[#allocation5 + $0xc2c] sm:$0xf]
    %v897 = vld [vmem:[#allocation5 + $0xc30] sm:$0xf]
    %v898 = vld [vmem:[#allocation5 + $0xc34] sm:$0xf]
    %v899 = vld [vmem:[#allocation5 + $0xc38] sm:$0xf]
    %v900 = vld [vmem:[#allocation5 + $0xc3c] sm:$0xf]
    %v901 = vld [vmem:[#allocation5 + $0xc40] sm:$0xf]
    %v902 = vld [vmem:[#allocation5 + $0xc44] sm:$0xf]
    %v903 = vld [vmem:[#allocation5 + $0xc48] sm:$0xf]
    %v904 = vld [vmem:[#allocation5 + $0xc4c] sm:$0xf]
    %v905 = vld [vmem:[#allocation5 + $0xc50] sm:$0xf]
    %v906 = vld [vmem:[#allocation5 + $0xc54] sm:$0xf]
    %v907 = vld [vmem:[#allocation5 + $0xc58] sm:$0xf]
    %v908 = vld [vmem:[#allocation5 + $0xc5c] sm:$0xf]
    %v909 = vld [vmem:[#allocation5 + $0xc60] sm:$0xf]
    %v910 = vld [vmem:[#allocation5 + $0xc64] sm:$0xf]
    %v911 = vld [vmem:[#allocation5 + $0xc68] sm:$0xf]
    %v912 = vld [vmem:[#allocation5 + $0xc6c] sm:$0xf]
    %v913 = vld [vmem:[#allocation5 + $0xc70] sm:$0xf]
    %v914 = vld [vmem:[#allocation5 + $0xc74] sm:$0xf]
    %v915 = vld [vmem:[#allocation5 + $0xc78] sm:$0xf]
    %v916 = vld [vmem:[#allocation5 + $0xc7c] sm:$0xf]
    %v917 = vld [vmem:[#allocation5 + $0xc80] sm:$0xf]
    %v918 = vld [vmem:[#allocation5 + $0xc84] sm:$0xf]
    %v919 = vld [vmem:[#allocation5 + $0xc88] sm:$0xf]
    %v920 = vld [vmem:[#allocation5 + $0xc8c] sm:$0xf]
    %v921 = vld [vmem:[#allocation5 + $0xc90] sm:$0xf]
    %v922 = vld [vmem:[#allocation5 + $0xc94] sm:$0xf]
    %v923 = vld [vmem:[#allocation5 + $0xc98] sm:$0xf]
    %v924 = vld [vmem:[#allocation5 + $0xc9c] sm:$0xf]
    %v925 = vld [vmem:[#allocation5 + $0xca0] sm:$0xf]
    %v926 = vld [vmem:[#allocation5 + $0xca4] sm:$0xf]
    %v927 = vld [vmem:[#allocation5 + $0xca8] sm:$0xf]
    %v928 = vld [vmem:[#allocation5 + $0xcac] sm:$0xf]
    %v929 = vld [vmem:[#allocation5 + $0xcb0] sm:$0xf]
    %v930 = vld [vmem:[#allocation5 + $0xcb4] sm:$0xf]
    %v931 = vld [vmem:[#allocation5 + $0xcb8] sm:$0xf]
    %v932 = vld [vmem:[#allocation5 + $0xcbc] sm:$0xf]
    %v933 = vld [vmem:[#allocation5 + $0xcc0] sm:$0xf]
    %v934 = vld [vmem:[#allocation5 + $0xcc4] sm:$0xf]
    %v935 = vld [vmem:[#allocation5 + $0xcc8] sm:$0xf]
    %v936 = vld [vmem:[#allocation5 + $0xccc] sm:$0xf]
    %v937 = vld [vmem:[#allocation5 + $0xcd0] sm:$0xf]
    %v938 = vld [vmem:[#allocation5 + $0xcd4] sm:$0xf]
    %v939 = vld [vmem:[#allocation5 + $0xcd8] sm:$0xf]
    %v940 = vld [vmem:[#allocation5 + $0xcdc] sm:$0xf]
    %v941 = vld [vmem:[#allocation5 + $0xce0] sm:$0xf]
    %v942 = vld [vmem:[#allocation5 + $0xce4] sm:$0xf]
    %v943 = vld [vmem:[#allocation5 + $0xce8] sm:$0xf]
    %v944 = vld [vmem:[#allocation5 + $0xcec] sm:$0xf]
    %v945 = vld [vmem:[#allocation5 + $0xcf0] sm:$0xf]
    %v946 = vld [vmem:[#allocation5 + $0xcf4] sm:$0xf]
    %v947 = vld [vmem:[#allocation5 + $0xcf8] sm:$0xf]
    %v948 = vld [vmem:[#allocation5 + $0xcfc] sm:$0xf]
    %v949 = vld [vmem:[#allocation5 + $0xd00] sm:$0xf]
    %v950 = vld [vmem:[#allocation5 + $0xd04] sm:$0xf]
    %v951 = vld [vmem:[#allocation5 + $0xd08] sm:$0xf]
    %v952 = vld [vmem:[#allocation5 + $0xd0c] sm:$0xf]
    %v953 = vld [vmem:[#allocation5 + $0xd10] sm:$0xf]
    %v954 = vld [vmem:[#allocation5 + $0xd14] sm:$0xf]
    %v955 = vld [vmem:[#allocation5 + $0xd18] sm:$0xf]
    %v956 = vld [vmem:[#allocation5 + $0xd1c] sm:$0xf]
    %v957 = vld [vmem:[#allocation5 + $0xd20] sm:$0xf]
    %v958 = vld [vmem:[#allocation5 + $0xd24] sm:$0xf]
    %v959 = vld [vmem:[#allocation5 + $0xd28] sm:$0xf]
    %v960 = vld [vmem:[#allocation5 + $0xd2c] sm:$0xf]
    %v961 = vld [vmem:[#allocation5 + $0xd30] sm:$0xf]
    %v962 = vld [vmem:[#allocation5 + $0xd34] sm:$0xf]
    %v963 = vld [vmem:[#allocation5 + $0xd38] sm:$0xf]
    %v964 = vld [vmem:[#allocation5 + $0xd3c] sm:$0xf]
    %v965 = vld [vmem:[#allocation5 + $0xd40] sm:$0xf]
    %v966 = vld [vmem:[#allocation5 + $0xd44] sm:$0xf]
    %v967 = vld [vmem:[#allocation5 + $0xd48] sm:$0xf]
    %v968 = vld [vmem:[#allocation5 + $0xd4c] sm:$0xf]
    %v969 = vld [vmem:[#allocation5 + $0xd50] sm:$0xf]
    %v970 = vld [vmem:[#allocation5 + $0xd54] sm:$0xf]
    %v971 = vld [vmem:[#allocation5 + $0xd58] sm:$0xf]
    %v972 = vld [vmem:[#allocation5 + $0xd5c] sm:$0xf]
    %v973 = vld [vmem:[#allocation5 + $0xd60] sm:$0xf]
    %v974 = vld [vmem:[#allocation5 + $0xd64] sm:$0xf]
    %v975 = vld [vmem:[#allocation5 + $0xd68] sm:$0xf]
    %v976 = vld [vmem:[#allocation5 + $0xd6c] sm:$0xf]
    %v977 = vld [vmem:[#allocation5 + $0xd70] sm:$0xf]
    %v978 = vld [vmem:[#allocation5 + $0xd74] sm:$0xf]
    %v979 = vld [vmem:[#allocation5 + $0xd78] sm:$0xf]
    %v980 = vld [vmem:[#allocation5 + $0xd7c] sm:$0xf]
    %v981 = vld [vmem:[#allocation5 + $0xd80] sm:$0xf]
    %v982 = vld [vmem:[#allocation5 + $0xd84] sm:$0xf]
    %v983 = vld [vmem:[#allocation5 + $0xd88] sm:$0xf]
    %v984 = vld [vmem:[#allocation5 + $0xd8c] sm:$0xf]
    %v985 = vld [vmem:[#allocation5 + $0xd90] sm:$0xf]
    %v986 = vld [vmem:[#allocation5 + $0xd94] sm:$0xf]
    %v987 = vld [vmem:[#allocation5 + $0xd98] sm:$0xf]
    %v988 = vld [vmem:[#allocation5 + $0xd9c] sm:$0xf]
    %v989 = vld [vmem:[#allocation5 + $0xda0] sm:$0xf]
    %v990 = vld [vmem:[#allocation5 + $0xda4] sm:$0xf]
    %v991 = vld [vmem:[#allocation5 + $0xda8] sm:$0xf]
    %v992 = vld [vmem:[#allocation5 + $0xdac] sm:$0xf]
    %v993 = vld [vmem:[#allocation5 + $0xdb0] sm:$0xf]
    %v994 = vld [vmem:[#allocation5 + $0xdb4] sm:$0xf]
    %v995 = vld [vmem:[#allocation5 + $0xdb8] sm:$0xf]
    %v996 = vld [vmem:[#allocation5 + $0xdbc] sm:$0xf]
    %v997 = vld [vmem:[#allocation5 + $0xdc0] sm:$0xf]
    %v998 = vld [vmem:[#allocation5 + $0xdc4] sm:$0xf]
    %v999 = vld [vmem:[#allocation5 + $0xdc8] sm:$0xf]
    %v1000 = vld [vmem:[#allocation5 + $0xdcc] sm:$0xf]
    %v1001 = vld [vmem:[#allocation5 + $0xdd0] sm:$0xf]
    %v1002 = vld [vmem:[#allocation5 + $0xdd4] sm:$0xf]
    %v1003 = vld [vmem:[#allocation5 + $0xdd8] sm:$0xf]
    %v1004 = vld [vmem:[#allocation5 + $0xddc] sm:$0xf]
    %v1005 = vld [vmem:[#allocation5 + $0xde0] sm:$0xf]
    %v1006 = vld [vmem:[#allocation5 + $0xde4] sm:$0xf]
    %v1007 = vld [vmem:[#allocation5 + $0xde8] sm:$0xf]
    %v1008 = vld [vmem:[#allocation5 + $0xdec] sm:$0xf]
    %v1009 = vld [vmem:[#allocation5 + $0xdf0] sm:$0xf]
    %v1010 = vld [vmem:[#allocation5 + $0xdf4] sm:$0xf]
    %v1011 = vld [vmem:[#allocation5 + $0xdf8] sm:$0xf]
    %v1012 = vld [vmem:[#allocation5 + $0xdfc] sm:$0xf]
    %v1013 = vld [vmem:[#allocation5 + $0xe00] sm:$0xf]
    %v1014 = vld [vmem:[#allocation5 + $0xe04] sm:$0xf]
    %v1015 = vld [vmem:[#allocation5 + $0xe08] sm:$0xf]
    %v1016 = vld [vmem:[#allocation5 + $0xe0c] sm:$0xf]
    %v1017 = vld [vmem:[#allocation5 + $0xe10] sm:$0xf]
    %v1018 = vld [vmem:[#allocation5 + $0xe14] sm:$0xf]
    %v1019 = vld [vmem:[#allocation5 + $0xe18] sm:$0xf]
    %v1020 = vld [vmem:[#allocation5 + $0xe1c] sm:$0xf]
    %v1021 = vld [vmem:[#allocation5 + $0xe20] sm:$0xf]
    %v1022 = vld [vmem:[#allocation5 + $0xe24] sm:$0xf]
    %v1023 = vld [vmem:[#allocation5 + $0xe28] sm:$0xf]
    %v1024 = vld [vmem:[#allocation5 + $0xe2c] sm:$0xf]
    %v1025 = vld [vmem:[#allocation5 + $0xe30] sm:$0xf]
    %v1026 = vld [vmem:[#allocation5 + $0xe34] sm:$0xf]
    %v1027 = vld [vmem:[#allocation5 + $0xe38] sm:$0xf]
    %v1028 = vld [vmem:[#allocation5 + $0xe3c] sm:$0xf]
    %v1029 = vld [vmem:[#allocation5 + $0xe40] sm:$0xf]
    %v1030 = vld [vmem:[#allocation5 + $0xe44] sm:$0xf]
    %v1031 = vld [vmem:[#allocation5 + $0xe48] sm:$0xf]
    %v1032 = vld [vmem:[#allocation5 + $0xe4c] sm:$0xf]
    %v1033 = vld [vmem:[#allocation5 + $0xe50] sm:$0xf]
    %v1034 = vld [vmem:[#allocation5 + $0xe54] sm:$0xf]
    %v1035 = vld [vmem:[#allocation5 + $0xe58] sm:$0xf]
    %v1036 = vld [vmem:[#allocation5 + $0xe5c] sm:$0xf]
    %v1037 = vld [vmem:[#allocation5 + $0xe60] sm:$0xf]
    %v1038 = vld [vmem:[#allocation5 + $0xe64] sm:$0xf]
    %v1039 = vld [vmem:[#allocation5 + $0xe68] sm:$0xf]
    %v1040 = vld [vmem:[#allocation5 + $0xe6c] sm:$0xf]
    %v1041 = vld [vmem:[#allocation5 + $0xe70] sm:$0xf]
    %v1042 = vld [vmem:[#allocation5 + $0xe74] sm:$0xf]
    %v1043 = vld [vmem:[#allocation5 + $0xe78] sm:$0xf]
    %v1044 = vld [vmem:[#allocation5 + $0xe7c] sm:$0xf]
    %v1045 = vld [vmem:[#allocation5 + $0xe80] sm:$0xf]
    %v1046 = vld [vmem:[#allocation5 + $0xe84] sm:$0xf]
    %v1047 = vld [vmem:[#allocation5 + $0xe88] sm:$0xf]
    %v1048 = vld [vmem:[#allocation5 + $0xe8c] sm:$0xf]
    %v1049 = vld [vmem:[#allocation5 + $0xe90] sm:$0xf]
    %v1050 = vld [vmem:[#allocation5 + $0xe94] sm:$0xf]
    %v1051 = vld [vmem:[#allocation5 + $0xe98] sm:$0xf]
    %v1052 = vld [vmem:[#allocation5 + $0xe9c] sm:$0xf]
    %v1053 = vld [vmem:[#allocation5 + $0xea0] sm:$0xf]
    %v1054 = vld [vmem:[#allocation5 + $0xea4] sm:$0xf]
    %v1055 = vld [vmem:[#allocation5 + $0xea8] sm:$0xf]
    %v1056 = vld [vmem:[#allocation5 + $0xeac] sm:$0xf]
    %v1057 = vld [vmem:[#allocation5 + $0xeb0] sm:$0xf]
    %v1058 = vld [vmem:[#allocation5 + $0xeb4] sm:$0xf]
    %v1059 = vld [vmem:[#allocation5 + $0xeb8] sm:$0xf]
    %v1060 = vld [vmem:[#allocation5 + $0xebc] sm:$0xf]
    %v1061 = vld [vmem:[#allocation5 + $0xec0] sm:$0xf]
    %v1062 = vld [vmem:[#allocation5 + $0xec4] sm:$0xf]
    %v1063 = vld [vmem:[#allocation5 + $0xec8] sm:$0xf]
    %v1064 = vld [vmem:[#allocation5 + $0xecc] sm:$0xf]
    %v1065 = vld [vmem:[#allocation5 + $0xed0] sm:$0xf]
    %v1066 = vld [vmem:[#allocation5 + $0xed4] sm:$0xf]
    %v1067 = vld [vmem:[#allocation5 + $0xed8] sm:$0xf]
    %v1068 = vld [vmem:[#allocation5 + $0xedc] sm:$0xf]
    %v1069 = vld [vmem:[#allocation5 + $0xee0] sm:$0xf]
    %v1070 = vld [vmem:[#allocation5 + $0xee4] sm:$0xf]
    %v1071 = vld [vmem:[#allocation5 + $0xee8] sm:$0xf]
    %v1072 = vld [vmem:[#allocation5 + $0xeec] sm:$0xf]
    %v1073 = vld [vmem:[#allocation5 + $0xef0] sm:$0xf]
    %v1074 = vld [vmem:[#allocation5 + $0xef4] sm:$0xf]
    %v1075 = vld [vmem:[#allocation5 + $0xef8] sm:$0xf]
    %v1076 = vld [vmem:[#allocation5 + $0xefc] sm:$0xf]
    %v1077 = vld [vmem:[#allocation5 + $0xf00] sm:$0xf]
    %v1078 = vld [vmem:[#allocation5 + $0xf04] sm:$0xf]
    %v1079 = vld [vmem:[#allocation5 + $0xf08] sm:$0xf]
    %v1080 = vld [vmem:[#allocation5 + $0xf0c] sm:$0xf]
    %v1081 = vld [vmem:[#allocation5 + $0xf10] sm:$0xf]
    %v1082 = vld [vmem:[#allocation5 + $0xf14] sm:$0xf]
    %v1083 = vld [vmem:[#allocation5 + $0xf18] sm:$0xf]
    %v1084 = vld [vmem:[#allocation5 + $0xf1c] sm:$0xf]
    %v1085 = vld [vmem:[#allocation5 + $0xf20] sm:$0xf]
    %v1086 = vld [vmem:[#allocation5 + $0xf24] sm:$0xf]
    %v1087 = vld [vmem:[#allocation5 + $0xf28] sm:$0xf]
    %v1088 = vld [vmem:[#allocation5 + $0xf2c] sm:$0xf]
    %v1089 = vld [vmem:[#allocation5 + $0xf30] sm:$0xf]
    %v1090 = vld [vmem:[#allocation5 + $0xf34] sm:$0xf]
    %v1091 = vld [vmem:[#allocation5 + $0xf38] sm:$0xf]
    %v1092 = vld [vmem:[#allocation5 + $0xf3c] sm:$0xf]
    %v1093 = vld [vmem:[#allocation5 + $0xf40] sm:$0xf]
    %v1094 = vld [vmem:[#allocation5 + $0xf44] sm:$0xf]
    %v1095 = vld [vmem:[#allocation5 + $0xf48] sm:$0xf]
    %v1096 = vld [vmem:[#allocation5 + $0xf4c] sm:$0xf]
    %v1097 = vld [vmem:[#allocation5 + $0xf50] sm:$0xf]
    %v1098 = vld [vmem:[#allocation5 + $0xf54] sm:$0xf]
    %v1099 = vld [vmem:[#allocation5 + $0xf58] sm:$0xf]
    %v1100 = vld [vmem:[#allocation5 + $0xf5c] sm:$0xf]
    %v1101 = vld [vmem:[#allocation5 + $0xf60] sm:$0xf]
    %v1102 = vld [vmem:[#allocation5 + $0xf64] sm:$0xf]
    %v1103 = vld [vmem:[#allocation5 + $0xf68] sm:$0xf]
    %v1104 = vld [vmem:[#allocation5 + $0xf6c] sm:$0xf]
    %v1105 = vld [vmem:[#allocation5 + $0xf70] sm:$0xf]
    %v1106 = vld [vmem:[#allocation5 + $0xf74] sm:$0xf]
    %v1107 = vld [vmem:[#allocation5 + $0xf78] sm:$0xf]
    %v1108 = vld [vmem:[#allocation5 + $0xf7c] sm:$0xf]
    %v1109 = vld [vmem:[#allocation5 + $0xf80] sm:$0xf]
    %v1110 = vld [vmem:[#allocation5 + $0xf84] sm:$0xf]
    %v1111 = vld [vmem:[#allocation5 + $0xf88] sm:$0xf]
    %v1112 = vld [vmem:[#allocation5 + $0xf8c] sm:$0xf]
    %v1113 = vld [vmem:[#allocation5 + $0xf90] sm:$0xf]
    %v1114 = vld [vmem:[#allocation5 + $0xf94] sm:$0xf]
    %v1115 = vld [vmem:[#allocation5 + $0xf98] sm:$0xf]
    %v1116 = vld [vmem:[#allocation5 + $0xf9c] sm:$0xf]
    %v1117 = vld [vmem:[#allocation5 + $0xfa0] sm:$0xf]
    %v1118 = vld [vmem:[#allocation5 + $0xfa4] sm:$0xf]
    %v1119 = vld [vmem:[#allocation5 + $0xfa8] sm:$0xf]
    %v1120 = vld [vmem:[#allocation5 + $0xfac] sm:$0xf]
    %v1121 = vld [vmem:[#allocation5 + $0xfb0] sm:$0xf]
    %v1122 = vld [vmem:[#allocation5 + $0xfb4] sm:$0xf]
    %v1123 = vld [vmem:[#allocation5 + $0xfb8] sm:$0xf]
    %v1124 = vld [vmem:[#allocation5 + $0xfbc] sm:$0xf]
    %v1125 = vld [vmem:[#allocation5 + $0xfc0] sm:$0xf]
    %v1126 = vld [vmem:[#allocation5 + $0xfc4] sm:$0xf]
    %v1127 = vld [vmem:[#allocation5 + $0xfc8] sm:$0xf]
    %v1128 = vld [vmem:[#allocation5 + $0xfcc] sm:$0xf]
    %v1129 = vld [vmem:[#allocation5 + $0xfd0] sm:$0xf]
    %v1130 = vld [vmem:[#allocation5 + $0xfd4] sm:$0xf]
    %v1131 = vld [vmem:[#allocation5 + $0xfd8] sm:$0xf]
    %v1132 = vld [vmem:[#allocation5 + $0xfdc] sm:$0xf]
    %v1133 = vld [vmem:[#allocation5 + $0xfe0] sm:$0xf]
    %v1134 = vld [vmem:[#allocation5 + $0xfe4] sm:$0xf]
    %v1135 = vld [vmem:[#allocation5 + $0xfe8] sm:$0xf]
    %v1136 = vld [vmem:[#allocation5 + $0xfec] sm:$0xf]
    %v1137 = vld [vmem:[#allocation5 + $0xff0] sm:$0xf]
    %v1138 = vld [vmem:[#allocation5 + $0xff4] sm:$0xf]
    %v1139 = vld [vmem:[#allocation5 + $0xff8] sm:$0xf]
    %v1140 = vld [vmem:[#allocation5 + $0xffc] sm:$0xf]
    %v1141 = vld [vmem:[#allocation5 + $0x1000] sm:$0xf]
    %v1142 = vld [vmem:[#allocation5 + $0x1004] sm:$0xf]
    %v1143 = vld [vmem:[#allocation5 + $0x1008] sm:$0xf]
    %v1144 = vld [vmem:[#allocation5 + $0x100c] sm:$0xf]
    %v1145 = vld [vmem:[#allocation5 + $0x1010] sm:$0xf]
    %v1146 = vld [vmem:[#allocation5 + $0x1014] sm:$0xf]
    %v1147 = vld [vmem:[#allocation5 + $0x1018] sm:$0xf]
    %v1148 = vld [vmem:[#allocation5 + $0x101c] sm:$0xf]
    %v1149 = vld [vmem:[#allocation5 + $0x1020] sm:$0xf]
    %v1150 = vld [vmem:[#allocation5 + $0x1024] sm:$0xf]
    %v1151 = vld [vmem:[#allocation5 + $0x1028] sm:$0xf]
    %v1152 = vld [vmem:[#allocation5 + $0x102c] sm:$0xf]
    %v1153 = vld [vmem:[#allocation5 + $0x1030] sm:$0xf]
    %v1154 = vld [vmem:[#allocation5 + $0x1034] sm:$0xf]
    %v1155 = vld [vmem:[#allocation5 + $0x1038] sm:$0xf]
    %v1156 = vld [vmem:[#allocation5 + $0x103c] sm:$0xf]
    %v1157 = vld [vmem:[#allocation5 + $0x1040] sm:$0xf]
    %v1158 = vld [vmem:[#allocation5 + $0x1044] sm:$0xf]
    %v1159 = vld [vmem:[#allocation5 + $0x1048] sm:$0xf]
    %v1160 = vld [vmem:[#allocation5 + $0x104c] sm:$0xf]
    %v1161 = vld [vmem:[#allocation5 + $0x1050] sm:$0xf]
    %v1162 = vld [vmem:[#allocation5 + $0x1054] sm:$0xf]
    %v1163 = vld [vmem:[#allocation5 + $0x1058] sm:$0xf]
    %v1164 = vld [vmem:[#allocation5 + $0x105c] sm:$0xf]
    %v1165 = vld [vmem:[#allocation5 + $0x1060] sm:$0xf]
    %v1166 = vld [vmem:[#allocation5 + $0x1064] sm:$0xf]
    %v1167 = vld [vmem:[#allocation5 + $0x1068] sm:$0xf]
    %v1168 = vld [vmem:[#allocation5 + $0x106c] sm:$0xf]
    %v1169 = vld [vmem:[#allocation5 + $0x1070] sm:$0xf]
    %v1170 = vld [vmem:[#allocation5 + $0x1074] sm:$0xf]
    %v1171 = vld [vmem:[#allocation5 + $0x1078] sm:$0xf]
    %v1172 = vld [vmem:[#allocation5 + $0x107c] sm:$0xf]
    %v1173 = vld [vmem:[#allocation5 + $0x1080] sm:$0xf]
    %v1174 = vld [vmem:[#allocation5 + $0x1084] sm:$0xf]
    %v1175 = vld [vmem:[#allocation5 + $0x1088] sm:$0xf]
    %v1176 = vld [vmem:[#allocation5 + $0x108c] sm:$0xf]
    %v1177 = vld [vmem:[#allocation5 + $0x1090] sm:$0xf]
    %v1178 = vld [vmem:[#allocation5 + $0x1094] sm:$0xf]
    %v1179 = vld [vmem:[#allocation5 + $0x1098] sm:$0xf]
    %v1180 = vld [vmem:[#allocation5 + $0x109c] sm:$0xf]
    %v1181 = vld [vmem:[#allocation5 + $0x10a0] sm:$0xf]
    %v1182 = vld [vmem:[#allocation5 + $0x10a4] sm:$0xf]
    %v1183 = vld [vmem:[#allocation5 + $0x10a8] sm:$0xf]
    %v1184 = vld [vmem:[#allocation5 + $0x10ac] sm:$0xf]
    %v1185 = vld [vmem:[#allocation5 + $0x10b0] sm:$0xf]
    %v1186 = vld [vmem:[#allocation5 + $0x10b4] sm:$0xf]
    %v1187 = vld [vmem:[#allocation5 + $0x10b8] sm:$0xf]
    %v1188 = vld [vmem:[#allocation5 + $0x10bc] sm:$0xf]
    %v1189 = vld [vmem:[#allocation5 + $0x10c0] sm:$0xf]
    %v1190 = vld [vmem:[#allocation5 + $0x10c4] sm:$0xf]
    %v1191 = vld [vmem:[#allocation5 + $0x10c8] sm:$0xf]
    %v1192 = vld [vmem:[#allocation5 + $0x10cc] sm:$0xf]
    %v1193 = vld [vmem:[#allocation5 + $0x10d0] sm:$0xf]
    %v1194 = vld [vmem:[#allocation5 + $0x10d4] sm:$0xf]
    %v1195 = vld [vmem:[#allocation5 + $0x10d8] sm:$0xf]
    %v1196 = vld [vmem:[#allocation5 + $0x10dc] sm:$0xf]
    %v1197 = vld [vmem:[#allocation5 + $0x10e0] sm:$0xf]
    %v1198 = vld [vmem:[#allocation5 + $0x10e4] sm:$0xf]
    %v1199 = vld [vmem:[#allocation5 + $0x10e8] sm:$0xf]
    %v1200 = vld [vmem:[#allocation5 + $0x10ec] sm:$0xf]
    %v1201 = vld [vmem:[#allocation5 + $0x10f0] sm:$0xf]
    %v1202 = vld [vmem:[#allocation5 + $0x10f4] sm:$0xf]
    %v1203 = vld [vmem:[#allocation5 + $0x10f8] sm:$0xf]
    %v1204 = vld [vmem:[#allocation5 + $0x10fc] sm:$0xf]
    %v1205 = vld [vmem:[#allocation5 + $0x1100] sm:$0xf]
    %v1206 = vld [vmem:[#allocation5 + $0x1104] sm:$0xf]
    %v1207 = vld [vmem:[#allocation5 + $0x1108] sm:$0xf]
    %v1208 = vld [vmem:[#allocation5 + $0x110c] sm:$0xf]
    %v1209 = vld [vmem:[#allocation5 + $0x1110] sm:$0xf]
    %v1210 = vld [vmem:[#allocation5 + $0x1114] sm:$0xf]
    %v1211 = vld [vmem:[#allocation5 + $0x1118] sm:$0xf]
    %v1212 = vld [vmem:[#allocation5 + $0x111c] sm:$0xf]
    %v1213 = vld [vmem:[#allocation5 + $0x1120] sm:$0xf]
    %v1214 = vld [vmem:[#allocation5 + $0x1124] sm:$0xf]
    %v1215 = vld [vmem:[#allocation5 + $0x1128] sm:$0xf]
    %v1216 = vld [vmem:[#allocation5 + $0x112c] sm:$0xf]
    %v1217 = vld [vmem:[#allocation5 + $0x1130] sm:$0xf]
    %v1218 = vld [vmem:[#allocation5 + $0x1134] sm:$0xf]
    %v1219 = vld [vmem:[#allocation5 + $0x1138] sm:$0xf]
    %v1220 = vld [vmem:[#allocation5 + $0x113c] sm:$0xf]
    %v1221 = vld [vmem:[#allocation5 + $0x1140] sm:$0xf]
    %v1222 = vld [vmem:[#allocation5 + $0x1144] sm:$0xf]
    %v1223 = vld [vmem:[#allocation5 + $0x1148] sm:$0xf]
    %v1224 = vld [vmem:[#allocation5 + $0x114c] sm:$0xf]
    %v1225 = vld [vmem:[#allocation5 + $0x1150] sm:$0xf]
    %v1226 = vld [vmem:[#allocation5 + $0x1154] sm:$0xf]
    %v1227 = vld [vmem:[#allocation5 + $0x1158] sm:$0xf]
    %v1228 = vld [vmem:[#allocation5 + $0x115c] sm:$0xf]
    %v1229 = vld [vmem:[#allocation5 + $0x1160] sm:$0xf]
    %v1230 = vld [vmem:[#allocation5 + $0x1164] sm:$0xf]
    %v1231 = vld [vmem:[#allocation5 + $0x1168] sm:$0xf]
    %v1232 = vld [vmem:[#allocation5 + $0x116c] sm:$0xf]
    %v1233 = vld [vmem:[#allocation5 + $0x1170] sm:$0xf]
    %v1234 = vld [vmem:[#allocation5 + $0x1174] sm:$0xf]
    %v1235 = vld [vmem:[#allocation5 + $0x1178] sm:$0xf]
    %v1236 = vld [vmem:[#allocation5 + $0x117c] sm:$0xf]
    %v1237 = vld [vmem:[#allocation5 + $0x1180] sm:$0xf]
    %v1238 = vld [vmem:[#allocation5 + $0x1184] sm:$0xf]
    %v1239 = vld [vmem:[#allocation5 + $0x1188] sm:$0xf]
    %v1240 = vld [vmem:[#allocation5 + $0x118c] sm:$0xf]
    %v1241 = vld [vmem:[#allocation5 + $0x1190] sm:$0xf]
    %v1242 = vld [vmem:[#allocation5 + $0x1194] sm:$0xf]
    %v1243 = vld [vmem:[#allocation5 + $0x1198] sm:$0xf]
    %v1244 = vld [vmem:[#allocation5 + $0x119c] sm:$0xf]
    %v1245 = vld [vmem:[#allocation5 + $0x11a0] sm:$0xf]
    %v1246 = vld [vmem:[#allocation5 + $0x11a4] sm:$0xf]
    %v1247 = vld [vmem:[#allocation5 + $0x11a8] sm:$0xf]
    %v1248 = vld [vmem:[#allocation5 + $0x11ac] sm:$0xf]
    %v1249 = vld [vmem:[#allocation5 + $0x11b0] sm:$0xf]
    %v1250 = vld [vmem:[#allocation5 + $0x11b4] sm:$0xf]
    %v1251 = vld [vmem:[#allocation5 + $0x11b8] sm:$0xf]
    %v1252 = vld [vmem:[#allocation5 + $0x11bc] sm:$0xf]
    %v1253 = vld [vmem:[#allocation5 + $0x11c0] sm:$0xf]
    %v1254 = vld [vmem:[#allocation5 + $0x11c4] sm:$0xf]
    %v1255 = vld [vmem:[#allocation5 + $0x11c8] sm:$0xf]
    %v1256 = vld [vmem:[#allocation5 + $0x11cc] sm:$0xf]
    %v1257 = vld [vmem:[#allocation5 + $0x11d0] sm:$0xf]
    %v1258 = vld [vmem:[#allocation5 + $0x11d4] sm:$0xf]
    %v1259 = vld [vmem:[#allocation5 + $0x11d8] sm:$0xf]
    %v1260 = vld [vmem:[#allocation5 + $0x11dc] sm:$0xf]
    %v1261 = vld [vmem:[#allocation5 + $0x11e0] sm:$0xf]
    %v1262 = vld [vmem:[#allocation5 + $0x11e4] sm:$0xf]
    %v1263 = vld [vmem:[#allocation5 + $0x11e8] sm:$0xf]
    %v1264 = vld [vmem:[#allocation5 + $0x11ec] sm:$0xf]
    %v1265 = vld [vmem:[#allocation5 + $0x11f0] sm:$0xf]
    %v1266 = vld [vmem:[#allocation5 + $0x11f4] sm:$0xf]
    %v1267 = vld [vmem:[#allocation5 + $0x11f8] sm:$0xf]
    %v1268 = vld [vmem:[#allocation5 + $0x11fc] sm:$0xf]
    %v1269 = vld [vmem:[#allocation5 + $0x1200] sm:$0xf]
    %v1270 = vld [vmem:[#allocation5 + $0x1204] sm:$0xf]
    %v1271 = vld [vmem:[#allocation5 + $0x1208] sm:$0xf]
    %v1272 = vld [vmem:[#allocation5 + $0x120c] sm:$0xf]
    %v1273 = vld [vmem:[#allocation5 + $0x1210] sm:$0xf]
    %v1274 = vld [vmem:[#allocation5 + $0x1214] sm:$0xf]
    %v1275 = vld [vmem:[#allocation5 + $0x1218] sm:$0xf]
    %v1276 = vld [vmem:[#allocation5 + $0x121c] sm:$0xf]
    %v1277 = vld [vmem:[#allocation5 + $0x1220] sm:$0xf]
    %v1278 = vld [vmem:[#allocation5 + $0x1224] sm:$0xf]
    %v1279 = vld [vmem:[#allocation5 + $0x1228] sm:$0xf]
    %v1280 = vld [vmem:[#allocation5 + $0x122c] sm:$0xf]
    %v1281 = vld [vmem:[#allocation5 + $0x1230] sm:$0xf]
    %v1282 = vld [vmem:[#allocation5 + $0x1234] sm:$0xf]
    %v1283 = vld [vmem:[#allocation5 + $0x1238] sm:$0xf]
    %v1284 = vld [vmem:[#allocation5 + $0x123c] sm:$0xf]
    %v1285 = vld [vmem:[#allocation5 + $0x1240] sm:$0xf]
    %v1286 = vld [vmem:[#allocation5 + $0x1244] sm:$0xf]
    %v1287 = vld [vmem:[#allocation5 + $0x1248] sm:$0xf]
    %v1288 = vld [vmem:[#allocation5 + $0x124c] sm:$0xf]
    %v1289 = vld [vmem:[#allocation5 + $0x1250] sm:$0xf]
    %v1290 = vld [vmem:[#allocation5 + $0x1254] sm:$0xf]
    %v1291 = vld [vmem:[#allocation5 + $0x1258] sm:$0xf]
    %v1292 = vld [vmem:[#allocation5 + $0x125c] sm:$0xf]
    %v1293 = vld [vmem:[#allocation5 + $0x1260] sm:$0xf]
    %v1294 = vld [vmem:[#allocation5 + $0x1264] sm:$0xf]
    %v1295 = vld [vmem:[#allocation5 + $0x1268] sm:$0xf]
    %v1296 = vld [vmem:[#allocation5 + $0x126c] sm:$0xf]
    %v1297 = vld [vmem:[#allocation5 + $0x1270] sm:$0xf]
    %v1298 = vld [vmem:[#allocation5 + $0x1274] sm:$0xf]
    %v1299 = vld [vmem:[#allocation5 + $0x1278] sm:$0xf]
    %v1300 = vld [vmem:[#allocation5 + $0x127c] sm:$0xf]
    %v1301 = vld [vmem:[#allocation5 + $0x1280] sm:$0xf]
    %v1302 = vld [vmem:[#allocation5 + $0x1284] sm:$0xf]
    %v1303 = vld [vmem:[#allocation5 + $0x1288] sm:$0xf]
    %v1304 = vld [vmem:[#allocation5 + $0x128c] sm:$0xf]
    %v1305 = vld [vmem:[#allocation5 + $0x1290] sm:$0xf]
    %v1306 = vld [vmem:[#allocation5 + $0x1294] sm:$0xf]
    %v1307 = vld [vmem:[#allocation5 + $0x1298] sm:$0xf]
    %v1308 = vld [vmem:[#allocation5 + $0x129c] sm:$0xf]
    %v1309 = vld [vmem:[#allocation5 + $0x12a0] sm:$0xf]
    %v1310 = vld [vmem:[#allocation5 + $0x12a4] sm:$0xf]
    %v1311 = vld [vmem:[#allocation5 + $0x12a8] sm:$0xf]
    %v1312 = vld [vmem:[#allocation5 + $0x12ac] sm:$0xf]
    %v1313 = vld [vmem:[#allocation5 + $0x12b0] sm:$0xf]
    %v1314 = vld [vmem:[#allocation5 + $0x12b4] sm:$0xf]
    %v1315 = vld [vmem:[#allocation5 + $0x12b8] sm:$0xf]
    %v1316 = vld [vmem:[#allocation5 + $0x12bc] sm:$0xf]
    %v1317 = vld [vmem:[#allocation5 + $0x12c0] sm:$0xf]
    %v1318 = vld [vmem:[#allocation5 + $0x12c4] sm:$0xf]
    %v1319 = vld [vmem:[#allocation5 + $0x12c8] sm:$0xf]
    %v1320 = vld [vmem:[#allocation5 + $0x12cc] sm:$0xf]
    %v1321 = vld [vmem:[#allocation5 + $0x12d0] sm:$0xf]
    %v1322 = vld [vmem:[#allocation5 + $0x12d4] sm:$0xf]
    %v1323 = vld [vmem:[#allocation5 + $0x12d8] sm:$0xf]
    %v1324 = vld [vmem:[#allocation5 + $0x12dc] sm:$0xf]
    %v1325 = vld [vmem:[#allocation5 + $0x12e0] sm:$0xf]
    %v1326 = vld [vmem:[#allocation5 + $0x12e4] sm:$0xf]
    %v1327 = vld [vmem:[#allocation5 + $0x12e8] sm:$0xf]
    %v1328 = vld [vmem:[#allocation5 + $0x12ec] sm:$0xf]
    %v1329 = vld [vmem:[#allocation5 + $0x12f0] sm:$0xf]
    %v1330 = vld [vmem:[#allocation5 + $0x12f4] sm:$0xf]
    %v1331 = vld [vmem:[#allocation5 + $0x12f8] sm:$0xf]
    %v1332 = vld [vmem:[#allocation5 + $0x12fc] sm:$0xf]
    %v1333 = vld [vmem:[#allocation5 + $0x1300] sm:$0xf]
    %v1334 = vld [vmem:[#allocation5 + $0x1304] sm:$0xf]
    %v1335 = vld [vmem:[#allocation5 + $0x1308] sm:$0xf]
    %v1336 = vld [vmem:[#allocation5 + $0x130c] sm:$0xf]
    %v1337 = vld [vmem:[#allocation5 + $0x1310] sm:$0xf]
    %v1338 = vld [vmem:[#allocation5 + $0x1314] sm:$0xf]
    %v1339 = vld [vmem:[#allocation5 + $0x1318] sm:$0xf]
    %v1340 = vld [vmem:[#allocation5 + $0x131c] sm:$0xf]
    %v1341 = vld [vmem:[#allocation5 + $0x1320] sm:$0xf]
    %v1342 = vld [vmem:[#allocation5 + $0x1324] sm:$0xf]
    %v1343 = vld [vmem:[#allocation5 + $0x1328] sm:$0xf]
    %v1344 = vld [vmem:[#allocation5 + $0x132c] sm:$0xf]
    %v1345 = vld [vmem:[#allocation5 + $0x1330] sm:$0xf]
    %v1346 = vld [vmem:[#allocation5 + $0x1334] sm:$0xf]
    %v1347 = vld [vmem:[#allocation5 + $0x1338] sm:$0xf]
    %v1348 = vld [vmem:[#allocation5 + $0x133c] sm:$0xf]
    %v1349 = vld [vmem:[#allocation5 + $0x1340] sm:$0xf]
    %v1350 = vld [vmem:[#allocation5 + $0x1344] sm:$0xf]
    %v1351 = vld [vmem:[#allocation5 + $0x1348] sm:$0xf]
    %v1352 = vld [vmem:[#allocation5 + $0x134c] sm:$0xf]
    %v1353 = vld [vmem:[#allocation5 + $0x1350] sm:$0xf]
    %v1354 = vld [vmem:[#allocation5 + $0x1354] sm:$0xf]
    %v1355 = vld [vmem:[#allocation5 + $0x1358] sm:$0xf]
    %v1356 = vld [vmem:[#allocation5 + $0x135c] sm:$0xf]
    %v1357 = vld [vmem:[#allocation5 + $0x1360] sm:$0xf]
    %v1358 = vld [vmem:[#allocation5 + $0x1364] sm:$0xf]
    %v1359 = vld [vmem:[#allocation5 + $0x1368] sm:$0xf]
    %v1360 = vld [vmem:[#allocation5 + $0x136c] sm:$0xf]
    %v1361 = vld [vmem:[#allocation5 + $0x1370] sm:$0xf]
    %v1362 = vld [vmem:[#allocation5 + $0x1374] sm:$0xf]
    %v1363 = vld [vmem:[#allocation5 + $0x1378] sm:$0xf]
    %v1364 = vld [vmem:[#allocation5 + $0x137c] sm:$0xf]
    %v1365 = vld [vmem:[#allocation5 + $0x1380] sm:$0xf]
    %v1366 = vld [vmem:[#allocation5 + $0x1384] sm:$0xf]
    %v1367 = vld [vmem:[#allocation5 + $0x1388] sm:$0xf]
    %v1368 = vld [vmem:[#allocation5 + $0x138c] sm:$0xf]
    %v1369 = vld [vmem:[#allocation5 + $0x1390] sm:$0xf]
    %v1370 = vld [vmem:[#allocation5 + $0x1394] sm:$0xf]
    %v1371 = vld [vmem:[#allocation5 + $0x1398] sm:$0xf]
    %v1372 = vld [vmem:[#allocation5 + $0x139c] sm:$0xf]
    %v1373 = vld [vmem:[#allocation5 + $0x13a0] sm:$0xf]
    %v1374 = vld [vmem:[#allocation5 + $0x13a4] sm:$0xf]
    %v1375 = vld [vmem:[#allocation5 + $0x13a8] sm:$0xf]
    %v1376 = vld [vmem:[#allocation5 + $0x13ac] sm:$0xf]
    %v1377 = vld [vmem:[#allocation5 + $0x13b0] sm:$0xf]
    %v1378 = vld [vmem:[#allocation5 + $0x13b4] sm:$0xf]
    %v1379 = vld [vmem:[#allocation5 + $0x13b8] sm:$0xf]
    %v1380 = vld [vmem:[#allocation5 + $0x13bc] sm:$0xf]
    %v1381 = vld [vmem:[#allocation5 + $0x13c0] sm:$0xf]
    %v1382 = vld [vmem:[#allocation5 + $0x13c4] sm:$0xf]
    %v1383 = vld [vmem:[#allocation5 + $0x13c8] sm:$0xf]
    %v1384 = vld [vmem:[#allocation5 + $0x13cc] sm:$0xf]
    %v1385 = vld [vmem:[#allocation5 + $0x13d0] sm:$0xf]
    %v1386 = vld [vmem:[#allocation5 + $0x13d4] sm:$0xf]
    %v1387 = vld [vmem:[#allocation5 + $0x13d8] sm:$0xf]
    %v1388 = vld [vmem:[#allocation5 + $0x13dc] sm:$0xf]
    %v1389 = vld [vmem:[#allocation5 + $0x13e0] sm:$0xf]
    %v1390 = vld [vmem:[#allocation5 + $0x13e4] sm:$0xf]
    %v1391 = vld [vmem:[#allocation5 + $0x13e8] sm:$0xf]
    %v1392 = vld [vmem:[#allocation5 + $0x13ec] sm:$0xf]
    %v1393 = vld [vmem:[#allocation5 + $0x13f0] sm:$0xf]
    %v1394 = vld [vmem:[#allocation5 + $0x13f4] sm:$0xf]
    %v1395 = vld [vmem:[#allocation5 + $0x13f8] sm:$0xf]
    %v1396 = vld [vmem:[#allocation5 + $0x13fc] sm:$0xf]
    %v1397 = vld [vmem:[#allocation5 + $0x1400] sm:$0xf]
    %v1398 = vld [vmem:[#allocation5 + $0x1404] sm:$0xf]
    %v1399 = vld [vmem:[#allocation5 + $0x1408] sm:$0xf]
    %v1400 = vld [vmem:[#allocation5 + $0x140c] sm:$0xf]
    %v1401 = vld [vmem:[#allocation5 + $0x1410] sm:$0xf]
    %v1402 = vld [vmem:[#allocation5 + $0x1414] sm:$0xf]
    %v1403 = vld [vmem:[#allocation5 + $0x1418] sm:$0xf]
    %v1404 = vld [vmem:[#allocation5 + $0x141c] sm:$0xf]
    %v1405 = vld [vmem:[#allocation5 + $0x1420] sm:$0xf]
    %v1406 = vld [vmem:[#allocation5 + $0x1424] sm:$0xf]
    %v1407 = vld [vmem:[#allocation5 + $0x1428] sm:$0xf]
    %v1408 = vld [vmem:[#allocation5 + $0x142c] sm:$0xf]
    %v1409 = vld [vmem:[#allocation5 + $0x1430] sm:$0xf]
    %v1410 = vld [vmem:[#allocation5 + $0x1434] sm:$0xf]
    %v1411 = vld [vmem:[#allocation5 + $0x1438] sm:$0xf]
    %v1412 = vld [vmem:[#allocation5 + $0x143c] sm:$0xf]
    %v1413 = vld [vmem:[#allocation5 + $0x1440] sm:$0xf]
    %v1414 = vld [vmem:[#allocation5 + $0x1444] sm:$0xf]
    %v1415 = vld [vmem:[#allocation5 + $0x1448] sm:$0xf]
    %v1416 = vld [vmem:[#allocation5 + $0x144c] sm:$0xf]
    %v1417 = vld [vmem:[#allocation5 + $0x1450] sm:$0xf]
    %v1418 = vld [vmem:[#allocation5 + $0x1454] sm:$0xf]
    %v1419 = vld [vmem:[#allocation5 + $0x1458] sm:$0xf]
    %v1420 = vld [vmem:[#allocation5 + $0x145c] sm:$0xf]
    %v1421 = vld [vmem:[#allocation5 + $0x1460] sm:$0xf]
    %v1422 = vld [vmem:[#allocation5 + $0x1464] sm:$0xf]
    %v1423 = vld [vmem:[#allocation5 + $0x1468] sm:$0xf]
    %v1424 = vld [vmem:[#allocation5 + $0x146c] sm:$0xf]
    %v1425 = vld [vmem:[#allocation5 + $0x1470] sm:$0xf]
    %v1426 = vld [vmem:[#allocation5 + $0x1474] sm:$0xf]
    %v1427 = vld [vmem:[#allocation5 + $0x1478] sm:$0xf]
    %v1428 = vld [vmem:[#allocation5 + $0x147c] sm:$0xf]
    %v1429 = vld [vmem:[#allocation5 + $0x1480] sm:$0xf]
    %v1430 = vld [vmem:[#allocation5 + $0x1484] sm:$0xf]
    %v1431 = vld [vmem:[#allocation5 + $0x1488] sm:$0xf]
    %v1432 = vld [vmem:[#allocation5 + $0x148c] sm:$0xf]
    %v1433 = vld [vmem:[#allocation5 + $0x1490] sm:$0xf]
    %v1434 = vld [vmem:[#allocation5 + $0x1494] sm:$0xf]
    %v1435 = vld [vmem:[#allocation5 + $0x1498] sm:$0xf]
    %v1436 = vld [vmem:[#allocation5 + $0x149c] sm:$0xf]
    %v1437 = vld [vmem:[#allocation5 + $0x14a0] sm:$0xf]
    %v1438 = vld [vmem:[#allocation5 + $0x14a4] sm:$0xf]
    %v1439 = vld [vmem:[#allocation5 + $0x14a8] sm:$0xf]
    %v1440 = vld [vmem:[#allocation5 + $0x14ac] sm:$0xf]
    %v1441 = vld [vmem:[#allocation5 + $0x14b0] sm:$0xf]
    %v1442 = vld [vmem:[#allocation5 + $0x14b4] sm:$0xf]
    %v1443 = vld [vmem:[#allocation5 + $0x14b8] sm:$0xf]
    %v1444 = vld [vmem:[#allocation5 + $0x14bc] sm:$0xf]
    %v1445 = vld [vmem:[#allocation5 + $0x14c0] sm:$0xf]
    %v1446 = vld [vmem:[#allocation5 + $0x14c4] sm:$0xf]
    %v1447 = vld [vmem:[#allocation5 + $0x14c8] sm:$0xf]
    %v1448 = vld [vmem:[#allocation5 + $0x14cc] sm:$0xf]
    %v1449 = vld [vmem:[#allocation5 + $0x14d0] sm:$0xf]
    %v1450 = vld [vmem:[#allocation5 + $0x14d4] sm:$0xf]
    %v1451 = vld [vmem:[#allocation5 + $0x14d8] sm:$0xf]
    %v1452 = vld [vmem:[#allocation5 + $0x14dc] sm:$0xf]
    %v1453 = vld [vmem:[#allocation5 + $0x14e0] sm:$0xf]
    %v1454 = vld [vmem:[#allocation5 + $0x14e4] sm:$0xf]
    %v1455 = vld [vmem:[#allocation5 + $0x14e8] sm:$0xf]
    %v1456 = vld [vmem:[#allocation5 + $0x14ec] sm:$0xf]
    %v1457 = vld [vmem:[#allocation5 + $0x14f0] sm:$0xf]
    %v1458 = vld [vmem:[#allocation5 + $0x14f4] sm:$0xf]
    %v1459 = vld [vmem:[#allocation5 + $0x14f8] sm:$0xf]
    %v1460 = vld [vmem:[#allocation5 + $0x14fc] sm:$0xf]
    %v1461 = vld [vmem:[#allocation5 + $0x1500] sm:$0xf]
    %v1462 = vld [vmem:[#allocation5 + $0x1504] sm:$0xf]
    %v1463 = vld [vmem:[#allocation5 + $0x1508] sm:$0xf]
    %v1464 = vld [vmem:[#allocation5 + $0x150c] sm:$0xf]
    %v1465 = vld [vmem:[#allocation5 + $0x1510] sm:$0xf]
    %v1466 = vld [vmem:[#allocation5 + $0x1514] sm:$0xf]
    %v1467 = vld [vmem:[#allocation5 + $0x1518] sm:$0xf]
    %v1468 = vld [vmem:[#allocation5 + $0x151c] sm:$0xf]
    %v1469 = vld [vmem:[#allocation5 + $0x1520] sm:$0xf]
    %v1470 = vld [vmem:[#allocation5 + $0x1524] sm:$0xf]
    %v1471 = vld [vmem:[#allocation5 + $0x1528] sm:$0xf]
    %v1472 = vld [vmem:[#allocation5 + $0x152c] sm:$0xf]
    %v1473 = vld [vmem:[#allocation5 + $0x1530] sm:$0xf]
    %v1474 = vld [vmem:[#allocation5 + $0x1534] sm:$0xf]
    %v1475 = vld [vmem:[#allocation5 + $0x1538] sm:$0xf]
    %v1476 = vld [vmem:[#allocation5 + $0x153c] sm:$0xf]
    %v1477 = vld [vmem:[#allocation5 + $0x1540] sm:$0xf]
    %v1478 = vld [vmem:[#allocation5 + $0x1544] sm:$0xf]
    %v1479 = vld [vmem:[#allocation5 + $0x1548] sm:$0xf]
    %v1480 = vld [vmem:[#allocation5 + $0x154c] sm:$0xf]
    %v1481 = vld [vmem:[#allocation5 + $0x1550] sm:$0xf]
    %v1482 = vld [vmem:[#allocation5 + $0x1554] sm:$0xf]
    %v1483 = vld [vmem:[#allocation5 + $0x1558] sm:$0xf]
    %v1484 = vld [vmem:[#allocation5 + $0x155c] sm:$0xf]
    %v1485 = vld [vmem:[#allocation5 + $0x1560] sm:$0xf]
    %v1486 = vld [vmem:[#allocation5 + $0x1564] sm:$0xf]
    %v1487 = vld [vmem:[#allocation5 + $0x1568] sm:$0xf]
    %v1488 = vld [vmem:[#allocation5 + $0x156c] sm:$0xf]
    %v1489 = vld [vmem:[#allocation5 + $0x1570] sm:$0xf]
    %v1490 = vld [vmem:[#allocation5 + $0x1574] sm:$0xf]
    %v1491 = vld [vmem:[#allocation5 + $0x1578] sm:$0xf]
    %v1492 = vld [vmem:[#allocation5 + $0x157c] sm:$0xf]
    %v1493 = vld [vmem:[#allocation5 + $0x1580] sm:$0xf]
    %v1494 = vld [vmem:[#allocation5 + $0x1584] sm:$0xf]
    %v1495 = vld [vmem:[#allocation5 + $0x1588] sm:$0xf]
    %v1496 = vld [vmem:[#allocation5 + $0x158c] sm:$0xf]
    %v1497 = vld [vmem:[#allocation5 + $0x1590] sm:$0xf]
    %v1498 = vld [vmem:[#allocation5 + $0x1594] sm:$0xf]
    %v1499 = vld [vmem:[#allocation5 + $0x1598] sm:$0xf]
    %v1500 = vld [vmem:[#allocation5 + $0x159c] sm:$0xf]
    %v1501 = vld [vmem:[#allocation5 + $0x15a0] sm:$0xf]
    %v1502 = vld [vmem:[#allocation5 + $0x15a4] sm:$0xf]
    %v1503 = vld [vmem:[#allocation5 + $0x15a8] sm:$0xf]
    %v1504 = vld [vmem:[#allocation5 + $0x15ac] sm:$0xf]
    %v1505 = vld [vmem:[#allocation5 + $0x15b0] sm:$0xf]
    %v1506 = vld [vmem:[#allocation5 + $0x15b4] sm:$0xf]
    %v1507 = vld [vmem:[#allocation5 + $0x15b8] sm:$0xf]
    %v1508 = vld [vmem:[#allocation5 + $0x15bc] sm:$0xf]
    %v1509 = vld [vmem:[#allocation5 + $0x15c0] sm:$0xf]
    %v1510 = vld [vmem:[#allocation5 + $0x15c4] sm:$0xf]
    %v1511 = vld [vmem:[#allocation5 + $0x15c8] sm:$0xf]
    %v1512 = vld [vmem:[#allocation5 + $0x15cc] sm:$0xf]
    %v1513 = vld [vmem:[#allocation5 + $0x15d0] sm:$0xf]
    %v1514 = vld [vmem:[#allocation5 + $0x15d4] sm:$0xf]
    %v1515 = vld [vmem:[#allocation5 + $0x15d8] sm:$0xf]
    %v1516 = vld [vmem:[#allocation5 + $0x15dc] sm:$0xf]
    %v1517 = vld [vmem:[#allocation5 + $0x15e0] sm:$0xf]
    %v1518 = vld [vmem:[#allocation5 + $0x15e4] sm:$0xf]
    %v1519 = vld [vmem:[#allocation5 + $0x15e8] sm:$0xf]
    %v1520 = vld [vmem:[#allocation5 + $0x15ec] sm:$0xf]
    %v1521 = vld [vmem:[#allocation5 + $0x15f0] sm:$0xf]
    %v1522 = vld [vmem:[#allocation5 + $0x15f4] sm:$0xf]
    %v1523 = vld [vmem:[#allocation5 + $0x15f8] sm:$0xf]
    %v1524 = vld [vmem:[#allocation5 + $0x15fc] sm:$0xf]
    %v1525 = vld [vmem:[#allocation5 + $0x1600] sm:$0xf]
    %v1526 = vld [vmem:[#allocation5 + $0x1604] sm:$0xf]
    %v1527 = vld [vmem:[#allocation5 + $0x1608] sm:$0xf]
    %v1528 = vld [vmem:[#allocation5 + $0x160c] sm:$0xf]
    %v1529 = vld [vmem:[#allocation5 + $0x1610] sm:$0xf]
    %v1530 = vld [vmem:[#allocation5 + $0x1614] sm:$0xf]
    %v1531 = vld [vmem:[#allocation5 + $0x1618] sm:$0xf]
    %v1532 = vld [vmem:[#allocation5 + $0x161c] sm:$0xf]
    %v1533 = vld [vmem:[#allocation5 + $0x1620] sm:$0xf]
    %v1534 = vld [vmem:[#allocation5 + $0x1624] sm:$0xf]
    %v1535 = vld [vmem:[#allocation5 + $0x1628] sm:$0xf]
    %v1536 = vld [vmem:[#allocation5 + $0x162c] sm:$0xf]
    %v1537 = vld [vmem:[#allocation5 + $0x1630] sm:$0xf]
    %v1538 = vld [vmem:[#allocation5 + $0x1634] sm:$0xf]
    %v1539 = vld [vmem:[#allocation5 + $0x1638] sm:$0xf]
    %v1540 = vld [vmem:[#allocation5 + $0x163c] sm:$0xf]
    %v1541 = vld [vmem:[#allocation5 + $0x1640] sm:$0xf]
    %v1542 = vld [vmem:[#allocation5 + $0x1644] sm:$0xf]
    %v1543 = vld [vmem:[#allocation5 + $0x1648] sm:$0xf]
    %v1544 = vld [vmem:[#allocation5 + $0x164c] sm:$0xf]
    %v1545 = vld [vmem:[#allocation5 + $0x1650] sm:$0xf]
    %v1546 = vld [vmem:[#allocation5 + $0x1654] sm:$0xf]
    %v1547 = vld [vmem:[#allocation5 + $0x1658] sm:$0xf]
    %v1548 = vld [vmem:[#allocation5 + $0x165c] sm:$0xf]
    %v1549 = vld [vmem:[#allocation5 + $0x1660] sm:$0xf]
    %v1550 = vld [vmem:[#allocation5 + $0x1664] sm:$0xf]
    %v1551 = vld [vmem:[#allocation5 + $0x1668] sm:$0xf]
    %v1552 = vld [vmem:[#allocation5 + $0x166c] sm:$0xf]
    %v1553 = vld [vmem:[#allocation5 + $0x1670] sm:$0xf]
    %v1554 = vld [vmem:[#allocation5 + $0x1674] sm:$0xf]
    %v1555 = vld [vmem:[#allocation5 + $0x1678] sm:$0xf]
    %v1556 = vld [vmem:[#allocation5 + $0x167c] sm:$0xf]
    %v1557 = vld [vmem:[#allocation5 + $0x1680] sm:$0xf]
    %v1558 = vld [vmem:[#allocation5 + $0x1684] sm:$0xf]
    %v1559 = vld [vmem:[#allocation5 + $0x1688] sm:$0xf]
    %v1560 = vld [vmem:[#allocation5 + $0x168c] sm:$0xf]
    %v1561 = vld [vmem:[#allocation5 + $0x1690] sm:$0xf]
    %v1562 = vld [vmem:[#allocation5 + $0x1694] sm:$0xf]
    %v1563 = vld [vmem:[#allocation5 + $0x1698] sm:$0xf]
    %v1564 = vld [vmem:[#allocation5 + $0x169c] sm:$0xf]
    %v1565 = vld [vmem:[#allocation5 + $0x16a0] sm:$0xf]
    %v1566 = vld [vmem:[#allocation5 + $0x16a4] sm:$0xf]
    %v1567 = vld [vmem:[#allocation5 + $0x16a8] sm:$0xf]
    %v1568 = vld [vmem:[#allocation5 + $0x16ac] sm:$0xf]
    %v1569 = vld [vmem:[#allocation5 + $0x16b0] sm:$0xf]
    %v1570 = vld [vmem:[#allocation5 + $0x16b4] sm:$0xf]
    %v1571 = vld [vmem:[#allocation5 + $0x16b8] sm:$0xf]
    %v1572 = vld [vmem:[#allocation5 + $0x16bc] sm:$0xf]
    %v1573 = vld [vmem:[#allocation5 + $0x16c0] sm:$0xf]
    %v1574 = vld [vmem:[#allocation5 + $0x16c4] sm:$0xf]
    %v1575 = vld [vmem:[#allocation5 + $0x16c8] sm:$0xf]
    %v1576 = vld [vmem:[#allocation5 + $0x16cc] sm:$0xf]
    %v1577 = vld [vmem:[#allocation5 + $0x16d0] sm:$0xf]
    %v1578 = vld [vmem:[#allocation5 + $0x16d4] sm:$0xf]
    %v1579 = vld [vmem:[#allocation5 + $0x16d8] sm:$0xf]
    %v1580 = vld [vmem:[#allocation5 + $0x16dc] sm:$0xf]
    %v1581 = vld [vmem:[#allocation5 + $0x16e0] sm:$0xf]
    %v1582 = vld [vmem:[#allocation5 + $0x16e4] sm:$0xf]
    %v1583 = vld [vmem:[#allocation5 + $0x16e8] sm:$0xf]
    %v1584 = vld [vmem:[#allocation5 + $0x16ec] sm:$0xf]
    %v1585 = vld [vmem:[#allocation5 + $0x16f0] sm:$0xf]
    %v1586 = vld [vmem:[#allocation5 + $0x16f4] sm:$0xf]
    %v1587 = vld [vmem:[#allocation5 + $0x16f8] sm:$0xf]
    %v1588 = vld [vmem:[#allocation5 + $0x16fc] sm:$0xf]
    %v1589 = vld [vmem:[#allocation5 + $0x1700] sm:$0xf]
    %v1590 = vld [vmem:[#allocation5 + $0x1704] sm:$0xf]
    %v1591 = vld [vmem:[#allocation5 + $0x1708] sm:$0xf]
    %v1592 = vld [vmem:[#allocation5 + $0x170c] sm:$0xf]
    %v1593 = vld [vmem:[#allocation5 + $0x1710] sm:$0xf]
    %v1594 = vld [vmem:[#allocation5 + $0x1714] sm:$0xf]
    %v1595 = vld [vmem:[#allocation5 + $0x1718] sm:$0xf]
    %v1596 = vld [vmem:[#allocation5 + $0x171c] sm:$0xf]
    %v1597 = vld [vmem:[#allocation5 + $0x1720] sm:$0xf]
    %v1598 = vld [vmem:[#allocation5 + $0x1724] sm:$0xf]
    %v1599 = vld [vmem:[#allocation5 + $0x1728] sm:$0xf]
    %v1600 = vld [vmem:[#allocation5 + $0x172c] sm:$0xf]
    %v1601 = vld [vmem:[#allocation5 + $0x1730] sm:$0xf]
    %v1602 = vld [vmem:[#allocation5 + $0x1734] sm:$0xf]
    %v1603 = vld [vmem:[#allocation5 + $0x1738] sm:$0xf]
    %v1604 = vld [vmem:[#allocation5 + $0x173c] sm:$0xf]
    %v1605 = vld [vmem:[#allocation5 + $0x1740] sm:$0xf]
    %v1606 = vld [vmem:[#allocation5 + $0x1744] sm:$0xf]
    %v1607 = vld [vmem:[#allocation5 + $0x1748] sm:$0xf]
    %v1608 = vld [vmem:[#allocation5 + $0x174c] sm:$0xf]
    %v1609 = vld [vmem:[#allocation5 + $0x1750] sm:$0xf]
    %v1610 = vld [vmem:[#allocation5 + $0x1754] sm:$0xf]
    %v1611 = vld [vmem:[#allocation5 + $0x1758] sm:$0xf]
    %v1612 = vld [vmem:[#allocation5 + $0x175c] sm:$0xf]
    %v1613 = vld [vmem:[#allocation5 + $0x1760] sm:$0xf]
    %v1614 = vld [vmem:[#allocation5 + $0x1764] sm:$0xf]
    %v1615 = vld [vmem:[#allocation5 + $0x1768] sm:$0xf]
    %v1616 = vld [vmem:[#allocation5 + $0x176c] sm:$0xf]
    %v1617 = vld [vmem:[#allocation5 + $0x1770] sm:$0xf]
    %v1618 = vld [vmem:[#allocation5 + $0x1774] sm:$0xf]
    %v1619 = vld [vmem:[#allocation5 + $0x1778] sm:$0xf]
    %v1620 = vld [vmem:[#allocation5 + $0x177c] sm:$0xf]
    %v1621 = vld [vmem:[#allocation5 + $0x1780] sm:$0xf]
    %v1622 = vld [vmem:[#allocation5 + $0x1784] sm:$0xf]
    %v1623 = vld [vmem:[#allocation5 + $0x1788] sm:$0xf]
    %v1624 = vld [vmem:[#allocation5 + $0x178c] sm:$0xf]
    %v1625 = vld [vmem:[#allocation5 + $0x1790] sm:$0xf]
    %v1626 = vld [vmem:[#allocation5 + $0x1794] sm:$0xf]
    %v1627 = vld [vmem:[#allocation5 + $0x1798] sm:$0xf]
    %v1628 = vld [vmem:[#allocation5 + $0x179c] sm:$0xf]
    %v1629 = vld [vmem:[#allocation5 + $0x17a0] sm:$0xf]
    %v1630 = vld [vmem:[#allocation5 + $0x17a4] sm:$0xf]
    %v1631 = vld [vmem:[#allocation5 + $0x17a8] sm:$0xf]
    %v1632 = vld [vmem:[#allocation5 + $0x17ac] sm:$0xf]
    %v1633 = vld [vmem:[#allocation5 + $0x17b0] sm:$0xf]
    %v1634 = vld [vmem:[#allocation5 + $0x17b4] sm:$0xf]
    %v1635 = vld [vmem:[#allocation5 + $0x17b8] sm:$0xf]
    %v1636 = vld [vmem:[#allocation5 + $0x17bc] sm:$0xf]
    %v1637 = vld [vmem:[#allocation5 + $0x17c0] sm:$0xf]
    %v1638 = vld [vmem:[#allocation5 + $0x17c4] sm:$0xf]
    %v1639 = vld [vmem:[#allocation5 + $0x17c8] sm:$0xf]
    %v1640 = vld [vmem:[#allocation5 + $0x17cc] sm:$0xf]
    %v1641 = vld [vmem:[#allocation5 + $0x17d0] sm:$0xf]
    %v1642 = vld [vmem:[#allocation5 + $0x17d4] sm:$0xf]
    %v1643 = vld [vmem:[#allocation5 + $0x17d8] sm:$0xf]
    %v1644 = vld [vmem:[#allocation5 + $0x17dc] sm:$0xf]
    %v1645 = vld [vmem:[#allocation5 + $0x17e0] sm:$0xf]
    %v1646 = vld [vmem:[#allocation5 + $0x17e4] sm:$0xf]
    %v1647 = vld [vmem:[#allocation5 + $0x17e8] sm:$0xf]
    %v1648 = vld [vmem:[#allocation5 + $0x17ec] sm:$0xf]
    %v1649 = vld [vmem:[#allocation5 + $0x17f0] sm:$0xf]
    %v1650 = vld [vmem:[#allocation5 + $0x17f4] sm:$0xf]
    %v1651 = vld [vmem:[#allocation5 + $0x17f8] sm:$0xf]
    %v1652 = vld [vmem:[#allocation5 + $0x17fc] sm:$0xf]
    %v1653 = vld [vmem:[#allocation5 + $0x1800] sm:$0xf]
    %v1654 = vld [vmem:[#allocation5 + $0x1804] sm:$0xf]
    %v1655 = vld [vmem:[#allocation5 + $0x1808] sm:$0xf]
    %v1656 = vld [vmem:[#allocation5 + $0x180c] sm:$0xf]
    %v1657 = vld [vmem:[#allocation5 + $0x1810] sm:$0xf]
    %v1658 = vld [vmem:[#allocation5 + $0x1814] sm:$0xf]
    %v1659 = vld [vmem:[#allocation5 + $0x1818] sm:$0xf]
    %v1660 = vld [vmem:[#allocation5 + $0x181c] sm:$0xf]
    %v1661 = vld [vmem:[#allocation5 + $0x1820] sm:$0xf]
    %v1662 = vld [vmem:[#allocation5 + $0x1824] sm:$0xf]
    %v1663 = vld [vmem:[#allocation5 + $0x1828] sm:$0xf]
    %v1664 = vld [vmem:[#allocation5 + $0x182c] sm:$0xf]
    %v1665 = vld [vmem:[#allocation5 + $0x1830] sm:$0xf]
    %v1666 = vld [vmem:[#allocation5 + $0x1834] sm:$0xf]
    %v1667 = vld [vmem:[#allocation5 + $0x1838] sm:$0xf]
    %v1668 = vld [vmem:[#allocation5 + $0x183c] sm:$0xf]
    %v1669 = vld [vmem:[#allocation5 + $0x1840] sm:$0xf]
    %v1670 = vld [vmem:[#allocation5 + $0x1844] sm:$0xf]
    %v1671 = vld [vmem:[#allocation5 + $0x1848] sm:$0xf]
    %v1672 = vld [vmem:[#allocation5 + $0x184c] sm:$0xf]
    %v1673 = vld [vmem:[#allocation5 + $0x1850] sm:$0xf]
    %v1674 = vld [vmem:[#allocation5 + $0x1854] sm:$0xf]
    %v1675 = vld [vmem:[#allocation5 + $0x1858] sm:$0xf]
    %v1676 = vld [vmem:[#allocation5 + $0x185c] sm:$0xf]
    %v1677 = vld [vmem:[#allocation5 + $0x1860] sm:$0xf]
    %v1678 = vld [vmem:[#allocation5 + $0x1864] sm:$0xf]
    %v1679 = vld [vmem:[#allocation5 + $0x1868] sm:$0xf]
    %v1680 = vld [vmem:[#allocation5 + $0x186c] sm:$0xf]
    %v1681 = vld [vmem:[#allocation5 + $0x1870] sm:$0xf]
    %v1682 = vld [vmem:[#allocation5 + $0x1874] sm:$0xf]
    %v1683 = vld [vmem:[#allocation5 + $0x1878] sm:$0xf]
    %v1684 = vld [vmem:[#allocation5 + $0x187c] sm:$0xf]
    %v1685 = vld [vmem:[#allocation5 + $0x1880] sm:$0xf]
    %v1686 = vld [vmem:[#allocation5 + $0x1884] sm:$0xf]
    %v1687 = vld [vmem:[#allocation5 + $0x1888] sm:$0xf]
    %v1688 = vld [vmem:[#allocation5 + $0x188c] sm:$0xf]
    %v1689 = vld [vmem:[#allocation5 + $0x1890] sm:$0xf]
    %v1690 = vld [vmem:[#allocation5 + $0x1894] sm:$0xf]
    %v1691 = vld [vmem:[#allocation5 + $0x1898] sm:$0xf]
    %v1692 = vld [vmem:[#allocation5 + $0x189c] sm:$0xf]
    %v1693 = vld [vmem:[#allocation5 + $0x18a0] sm:$0xf]
    %v1694 = vld [vmem:[#allocation5 + $0x18a4] sm:$0xf]
    %v1695 = vld [vmem:[#allocation5 + $0x18a8] sm:$0xf]
    %v1696 = vld [vmem:[#allocation5 + $0x18ac] sm:$0xf]
    %v1697 = vld [vmem:[#allocation5 + $0x18b0] sm:$0xf]
    %v1698 = vld [vmem:[#allocation5 + $0x18b4] sm:$0xf]
    %v1699 = vld [vmem:[#allocation5 + $0x18b8] sm:$0xf]
    %v1700 = vld [vmem:[#allocation5 + $0x18bc] sm:$0xf]
    %v1701 = vld [vmem:[#allocation5 + $0x18c0] sm:$0xf]
    %v1702 = vld [vmem:[#allocation5 + $0x18c4] sm:$0xf]
    %v1703 = vld [vmem:[#allocation5 + $0x18c8] sm:$0xf]
    %v1704 = vld [vmem:[#allocation5 + $0x18cc] sm:$0xf]
    %v1705 = vld [vmem:[#allocation5 + $0x18d0] sm:$0xf]
    %v1706 = vld [vmem:[#allocation5 + $0x18d4] sm:$0xf]
    %v1707 = vld [vmem:[#allocation5 + $0x18d8] sm:$0xf]
    %v1708 = vld [vmem:[#allocation5 + $0x18dc] sm:$0xf]
    %v1709 = vld [vmem:[#allocation5 + $0x18e0] sm:$0xf]
    %v1710 = vld [vmem:[#allocation5 + $0x18e4] sm:$0xf]
    %v1711 = vld [vmem:[#allocation5 + $0x18e8] sm:$0xf]
    %v1712 = vld [vmem:[#allocation5 + $0x18ec] sm:$0xf]
    %v1713 = vld [vmem:[#allocation5 + $0x18f0] sm:$0xf]
    %v1714 = vld [vmem:[#allocation5 + $0x18f4] sm:$0xf]
    %v1715 = vld [vmem:[#allocation5 + $0x18f8] sm:$0xf]
    %v1716 = vld [vmem:[#allocation5 + $0x18fc] sm:$0xf]
    %v1717 = vld [vmem:[#allocation5 + $0x1900] sm:$0xf]
    %v1718 = vld [vmem:[#allocation5 + $0x1904] sm:$0xf]
    %v1719 = vld [vmem:[#allocation5 + $0x1908] sm:$0xf]
    %v1720 = vld [vmem:[#allocation5 + $0x190c] sm:$0xf]
    %v1721 = vld [vmem:[#allocation5 + $0x1910] sm:$0xf]
    %v1722 = vld [vmem:[#allocation5 + $0x1914] sm:$0xf]
    %v1723 = vld [vmem:[#allocation5 + $0x1918] sm:$0xf]
    %v1724 = vld [vmem:[#allocation5 + $0x191c] sm:$0xf]
    %v1725 = vld [vmem:[#allocation5 + $0x1920] sm:$0xf]
    %v1726 = vld [vmem:[#allocation5 + $0x1924] sm:$0xf]
    %v1727 = vld [vmem:[#allocation5 + $0x1928] sm:$0xf]
    %v1728 = vld [vmem:[#allocation5 + $0x192c] sm:$0xf]
    %v1729 = vld [vmem:[#allocation5 + $0x1930] sm:$0xf]
    %v1730 = vld [vmem:[#allocation5 + $0x1934] sm:$0xf]
    %v1731 = vld [vmem:[#allocation5 + $0x1938] sm:$0xf]
    %v1732 = vld [vmem:[#allocation5 + $0x193c] sm:$0xf]
    %v1733 = vld [vmem:[#allocation5 + $0x1940] sm:$0xf]
    %v1734 = vld [vmem:[#allocation5 + $0x1944] sm:$0xf]
    %v1735 = vld [vmem:[#allocation5 + $0x1948] sm:$0xf]
    %v1736 = vld [vmem:[#allocation5 + $0x194c] sm:$0xf]
    %v1737 = vld [vmem:[#allocation5 + $0x1950] sm:$0xf]
    %v1738 = vld [vmem:[#allocation5 + $0x1954] sm:$0xf]
    %v1739 = vld [vmem:[#allocation5 + $0x1958] sm:$0xf]
    %v1740 = vld [vmem:[#allocation5 + $0x195c] sm:$0xf]
    %v1741 = vld [vmem:[#allocation5 + $0x1960] sm:$0xf]
    %v1742 = vld [vmem:[#allocation5 + $0x1964] sm:$0xf]
    %v1743 = vld [vmem:[#allocation5 + $0x1968] sm:$0xf]
    %v1744 = vld [vmem:[#allocation5 + $0x196c] sm:$0xf]
    %v1745 = vld [vmem:[#allocation5 + $0x1970] sm:$0xf]
    %v1746 = vld [vmem:[#allocation5 + $0x1974] sm:$0xf]
    %v1747 = vld [vmem:[#allocation5 + $0x1978] sm:$0xf]
    %v1748 = vld [vmem:[#allocation5 + $0x197c] sm:$0xf]
    %v1749 = vld [vmem:[#allocation5 + $0x1980] sm:$0xf]
    %v1750 = vld [vmem:[#allocation5 + $0x1984] sm:$0xf]
    %v1751 = vld [vmem:[#allocation5 + $0x1988] sm:$0xf]
    %v1752 = vld [vmem:[#allocation5 + $0x198c] sm:$0xf]
    %v1753 = vld [vmem:[#allocation5 + $0x1990] sm:$0xf]
    %v1754 = vld [vmem:[#allocation5 + $0x1994] sm:$0xf]
    %v1755 = vld [vmem:[#allocation5 + $0x1998] sm:$0xf]
    %v1756 = vld [vmem:[#allocation5 + $0x199c] sm:$0xf]
    %v1757 = vld [vmem:[#allocation5 + $0x19a0] sm:$0xf]
    %v1758 = vld [vmem:[#allocation5 + $0x19a4] sm:$0xf]
    %v1759 = vld [vmem:[#allocation5 + $0x19a8] sm:$0xf]
    %v1760 = vld [vmem:[#allocation5 + $0x19ac] sm:$0xf]
    %v1761 = vld [vmem:[#allocation5 + $0x19b0] sm:$0xf]
    %v1762 = vld [vmem:[#allocation5 + $0x19b4] sm:$0xf]
    %v1763 = vld [vmem:[#allocation5 + $0x19b8] sm:$0xf]
    %v1764 = vld [vmem:[#allocation5 + $0x19bc] sm:$0xf]
    %v1765 = vld [vmem:[#allocation5 + $0x19c0] sm:$0xf]
    %v1766 = vld [vmem:[#allocation5 + $0x19c4] sm:$0xf]
    %v1767 = vld [vmem:[#allocation5 + $0x19c8] sm:$0xf]
    %v1768 = vld [vmem:[#allocation5 + $0x19cc] sm:$0xf]
    %v1769 = vld [vmem:[#allocation5 + $0x19d0] sm:$0xf]
    %v1770 = vld [vmem:[#allocation5 + $0x19d4] sm:$0xf]
    %v1771 = vld [vmem:[#allocation5 + $0x19d8] sm:$0xf]
    %v1772 = vld [vmem:[#allocation5 + $0x19dc] sm:$0xf]
    %v1773 = vld [vmem:[#allocation5 + $0x19e0] sm:$0xf]
    %v1774 = vld [vmem:[#allocation5 + $0x19e4] sm:$0xf]
    %v1775 = vld [vmem:[#allocation5 + $0x19e8] sm:$0xf]
    %v1776 = vld [vmem:[#allocation5 + $0x19ec] sm:$0xf]
    %v1777 = vld [vmem:[#allocation5 + $0x19f0] sm:$0xf]
    %v1778 = vld [vmem:[#allocation5 + $0x19f4] sm:$0xf]
    %v1779 = vld [vmem:[#allocation5 + $0x19f8] sm:$0xf]
    %v1780 = vld [vmem:[#allocation5 + $0x19fc] sm:$0xf]
    %v1781 = vld [vmem:[#allocation5 + $0x1a00] sm:$0xf]
    %v1782 = vld [vmem:[#allocation5 + $0x1a04] sm:$0xf]
    %v1783 = vld [vmem:[#allocation5 + $0x1a08] sm:$0xf]
    %v1784 = vld [vmem:[#allocation5 + $0x1a0c] sm:$0xf]
    %v1785 = vld [vmem:[#allocation5 + $0x1a10] sm:$0xf]
    %v1786 = vld [vmem:[#allocation5 + $0x1a14] sm:$0xf]
    %v1787 = vld [vmem:[#allocation5 + $0x1a18] sm:$0xf]
    %v1788 = vld [vmem:[#allocation5 + $0x1a1c] sm:$0xf]
    %v1789 = vld [vmem:[#allocation5 + $0x1a20] sm:$0xf]
    %v1790 = vld [vmem:[#allocation5 + $0x1a24] sm:$0xf]
    %v1791 = vld [vmem:[#allocation5 + $0x1a28] sm:$0xf]
    %v1792 = vld [vmem:[#allocation5 + $0x1a2c] sm:$0xf]
    %v1793 = vld [vmem:[#allocation5 + $0x1a30] sm:$0xf]
    %v1794 = vld [vmem:[#allocation5 + $0x1a34] sm:$0xf]
    %v1795 = vld [vmem:[#allocation5 + $0x1a38] sm:$0xf]
    %v1796 = vld [vmem:[#allocation5 + $0x1a3c] sm:$0xf]
    %v1797 = vld [vmem:[#allocation5 + $0x1a40] sm:$0xf]
    %v1798 = vld [vmem:[#allocation5 + $0x1a44] sm:$0xf]
    %v1799 = vld [vmem:[#allocation5 + $0x1a48] sm:$0xf]
    %v1800 = vld [vmem:[#allocation5 + $0x1a4c] sm:$0xf]
    %v1801 = vld [vmem:[#allocation5 + $0x1a50] sm:$0xf]
    %v1802 = vld [vmem:[#allocation5 + $0x1a54] sm:$0xf]
    %v1803 = vld [vmem:[#allocation5 + $0x1a58] sm:$0xf]
    %v1804 = vld [vmem:[#allocation5 + $0x1a5c] sm:$0xf]
    %v1805 = vld [vmem:[#allocation5 + $0x1a60] sm:$0xf]
    %v1806 = vld [vmem:[#allocation5 + $0x1a64] sm:$0xf]
    %v1807 = vld [vmem:[#allocation5 + $0x1a68] sm:$0xf]
    %v1808 = vld [vmem:[#allocation5 + $0x1a6c] sm:$0xf]
    %v1809 = vld [vmem:[#allocation5 + $0x1a70] sm:$0xf]
    %v1810 = vld [vmem:[#allocation5 + $0x1a74] sm:$0xf]
    %v1811 = vld [vmem:[#allocation5 + $0x1a78] sm:$0xf]
    %v1812 = vld [vmem:[#allocation5 + $0x1a7c] sm:$0xf]
    %v1813 = vld [vmem:[#allocation5 + $0x1a80] sm:$0xf]
    %v1814 = vld [vmem:[#allocation5 + $0x1a84] sm:$0xf]
    %v1815 = vld [vmem:[#allocation5 + $0x1a88] sm:$0xf]
    %v1816 = vld [vmem:[#allocation5 + $0x1a8c] sm:$0xf]
    %v1817 = vld [vmem:[#allocation5 + $0x1a90] sm:$0xf]
    %v1818 = vld [vmem:[#allocation5 + $0x1a94] sm:$0xf]
    %v1819 = vld [vmem:[#allocation5 + $0x1a98] sm:$0xf]
    %v1820 = vld [vmem:[#allocation5 + $0x1a9c] sm:$0xf]
    %v1821 = vld [vmem:[#allocation5 + $0x1aa0] sm:$0xf]
    %v1822 = vld [vmem:[#allocation5 + $0x1aa4] sm:$0xf]
    %v1823 = vld [vmem:[#allocation5 + $0x1aa8] sm:$0xf]
    %v1824 = vld [vmem:[#allocation5 + $0x1aac] sm:$0xf]
    %v1825 = vld [vmem:[#allocation5 + $0x1ab0] sm:$0xf]
    %v1826 = vld [vmem:[#allocation5 + $0x1ab4] sm:$0xf]
    %v1827 = vld [vmem:[#allocation5 + $0x1ab8] sm:$0xf]
    %v1828 = vld [vmem:[#allocation5 + $0x1abc] sm:$0xf]
    %v1829 = vld [vmem:[#allocation5 + $0x1ac0] sm:$0xf]
    %v1830 = vld [vmem:[#allocation5 + $0x1ac4] sm:$0xf]
    %v1831 = vld [vmem:[#allocation5 + $0x1ac8] sm:$0xf]
    %v1832 = vld [vmem:[#allocation5 + $0x1acc] sm:$0xf]
    %v1833 = vld [vmem:[#allocation5 + $0x1ad0] sm:$0xf]
    %v1834 = vld [vmem:[#allocation5 + $0x1ad4] sm:$0xf]
    %v1835 = vld [vmem:[#allocation5 + $0x1ad8] sm:$0xf]
    %v1836 = vld [vmem:[#allocation5 + $0x1adc] sm:$0xf]
    %v1837 = vld [vmem:[#allocation5 + $0x1ae0] sm:$0xf]
    %v1838 = vld [vmem:[#allocation5 + $0x1ae4] sm:$0xf]
    %v1839 = vld [vmem:[#allocation5 + $0x1ae8] sm:$0xf]
    %v1840 = vld [vmem:[#allocation5 + $0x1aec] sm:$0xf]
    %v1841 = vld [vmem:[#allocation5 + $0x1af0] sm:$0xf]
    %v1842 = vld [vmem:[#allocation5 + $0x1af4] sm:$0xf]
    %v1843 = vld [vmem:[#allocation5 + $0x1af8] sm:$0xf]
    %v1844 = vld [vmem:[#allocation5 + $0x1afc] sm:$0xf]
    %v1845 = vld [vmem:[#allocation5 + $0x1b00] sm:$0xf]
    %v1846 = vld [vmem:[#allocation5 + $0x1b04] sm:$0xf]
    %v1847 = vld [vmem:[#allocation5 + $0x1b08] sm:$0xf]
    %v1848 = vld [vmem:[#allocation5 + $0x1b0c] sm:$0xf]
    %v1849 = vld [vmem:[#allocation5 + $0x1b10] sm:$0xf]
    %v1850 = vld [vmem:[#allocation5 + $0x1b14] sm:$0xf]
    %v1851 = vld [vmem:[#allocation5 + $0x1b18] sm:$0xf]
    %v1852 = vld [vmem:[#allocation5 + $0x1b1c] sm:$0xf]
    %v1853 = vld [vmem:[#allocation5 + $0x1b20] sm:$0xf]
    %v1854 = vld [vmem:[#allocation5 + $0x1b24] sm:$0xf]
    %v1855 = vld [vmem:[#allocation5 + $0x1b28] sm:$0xf]
    %v1856 = vld [vmem:[#allocation5 + $0x1b2c] sm:$0xf]
    %v1857 = vld [vmem:[#allocation5 + $0x1b30] sm:$0xf]
    %v1858 = vld [vmem:[#allocation5 + $0x1b34] sm:$0xf]
    %v1859 = vld [vmem:[#allocation5 + $0x1b38] sm:$0xf]
    %v1860 = vld [vmem:[#allocation5 + $0x1b3c] sm:$0xf]
    %v1861 = vld [vmem:[#allocation5 + $0x1b40] sm:$0xf]
    %v1862 = vld [vmem:[#allocation5 + $0x1b44] sm:$0xf]
    %v1863 = vld [vmem:[#allocation5 + $0x1b48] sm:$0xf]
    %v1864 = vld [vmem:[#allocation5 + $0x1b4c] sm:$0xf]
    %v1865 = vld [vmem:[#allocation5 + $0x1b50] sm:$0xf]
    %v1866 = vld [vmem:[#allocation5 + $0x1b54] sm:$0xf]
    %v1867 = vld [vmem:[#allocation5 + $0x1b58] sm:$0xf]
    %v1868 = vld [vmem:[#allocation5 + $0x1b5c] sm:$0xf]
    %v1869 = vld [vmem:[#allocation5 + $0x1b60] sm:$0xf]
    %v1870 = vld [vmem:[#allocation5 + $0x1b64] sm:$0xf]
    %v1871 = vld [vmem:[#allocation5 + $0x1b68] sm:$0xf]
    %v1872 = vld [vmem:[#allocation5 + $0x1b6c] sm:$0xf]
    %v1873 = vld [vmem:[#allocation5 + $0x1b70] sm:$0xf]
    %v1874 = vld [vmem:[#allocation5 + $0x1b74] sm:$0xf]
    %v1875 = vld [vmem:[#allocation5 + $0x1b78] sm:$0xf]
    %v1876 = vld [vmem:[#allocation5 + $0x1b7c] sm:$0xf]
    %v1877 = vld [vmem:[#allocation5 + $0x1b80] sm:$0xf]
    %v1878 = vld [vmem:[#allocation5 + $0x1b84] sm:$0xf]
    %v1879 = vld [vmem:[#allocation5 + $0x1b88] sm:$0xf]
    %v1880 = vld [vmem:[#allocation5 + $0x1b8c] sm:$0xf]
    %v1881 = vld [vmem:[#allocation5 + $0x1b90] sm:$0xf]
    %v1882 = vld [vmem:[#allocation5 + $0x1b94] sm:$0xf]
    %v1883 = vld [vmem:[#allocation5 + $0x1b98] sm:$0xf]
    %v1884 = vld [vmem:[#allocation5 + $0x1b9c] sm:$0xf]
    %v1885 = vld [vmem:[#allocation5 + $0x1ba0] sm:$0xf]
    %v1886 = vld [vmem:[#allocation5 + $0x1ba4] sm:$0xf]
    %v1887 = vld [vmem:[#allocation5 + $0x1ba8] sm:$0xf]
    %v1888 = vld [vmem:[#allocation5 + $0x1bac] sm:$0xf]
    %v1889 = vld [vmem:[#allocation5 + $0x1bb0] sm:$0xf]
    %v1890 = vld [vmem:[#allocation5 + $0x1bb4] sm:$0xf]
    %v1891 = vld [vmem:[#allocation5 + $0x1bb8] sm:$0xf]
    %v1892 = vld [vmem:[#allocation5 + $0x1bbc] sm:$0xf]
    %v1893 = vld [vmem:[#allocation5 + $0x1bc0] sm:$0xf]
    %v1894 = vld [vmem:[#allocation5 + $0x1bc4] sm:$0xf]
    %v1895 = vld [vmem:[#allocation5 + $0x1bc8] sm:$0xf]
    %v1896 = vld [vmem:[#allocation5 + $0x1bcc] sm:$0xf]
    %v1897 = vld [vmem:[#allocation5 + $0x1bd0] sm:$0xf]
    %v1898 = vld [vmem:[#allocation5 + $0x1bd4] sm:$0xf]
    %v1899 = vld [vmem:[#allocation5 + $0x1bd8] sm:$0xf]
    %v1900 = vld [vmem:[#allocation5 + $0x1bdc] sm:$0xf]
    %v1901 = vld [vmem:[#allocation5 + $0x1be0] sm:$0xf]
    %v1902 = vld [vmem:[#allocation5 + $0x1be4] sm:$0xf]
    %v1903 = vld [vmem:[#allocation5 + $0x1be8] sm:$0xf]
    %v1904 = vld [vmem:[#allocation5 + $0x1bec] sm:$0xf]
    %v1905 = vld [vmem:[#allocation5 + $0x1bf0] sm:$0xf]
    %v1906 = vld [vmem:[#allocation5 + $0x1bf4] sm:$0xf]
    %v1907 = vld [vmem:[#allocation5 + $0x1bf8] sm:$0xf]
    %v1908 = vld [vmem:[#allocation5 + $0x1bfc] sm:$0xf]
    %v1909 = vld [vmem:[#allocation5 + $0x1c00] sm:$0xf]
    %v1910 = vld [vmem:[#allocation5 + $0x1c04] sm:$0xf]
    %v1911 = vld [vmem:[#allocation5 + $0x1c08] sm:$0xf]
    %v1912 = vld [vmem:[#allocation5 + $0x1c0c] sm:$0xf]
    %v1913 = vld [vmem:[#allocation5 + $0x1c10] sm:$0xf]
    %v1914 = vld [vmem:[#allocation5 + $0x1c14] sm:$0xf]
    %v1915 = vld [vmem:[#allocation5 + $0x1c18] sm:$0xf]
    %v1916 = vld [vmem:[#allocation5 + $0x1c1c] sm:$0xf]
    %v1917 = vld [vmem:[#allocation5 + $0x1c20] sm:$0xf]
    %v1918 = vld [vmem:[#allocation5 + $0x1c24] sm:$0xf]
    %v1919 = vld [vmem:[#allocation5 + $0x1c28] sm:$0xf]
    %v1920 = vld [vmem:[#allocation5 + $0x1c2c] sm:$0xf]
    %v1921 = vld [vmem:[#allocation5 + $0x1c30] sm:$0xf]
    %v1922 = vld [vmem:[#allocation5 + $0x1c34] sm:$0xf]
    %v1923 = vld [vmem:[#allocation5 + $0x1c38] sm:$0xf]
    %v1924 = vld [vmem:[#allocation5 + $0x1c3c] sm:$0xf]
    %v1925 = vld [vmem:[#allocation5 + $0x1c40] sm:$0xf]
    %v1926 = vld [vmem:[#allocation5 + $0x1c44] sm:$0xf]
    %v1927 = vld [vmem:[#allocation5 + $0x1c48] sm:$0xf]
    %v1928 = vld [vmem:[#allocation5 + $0x1c4c] sm:$0xf]
    %v1929 = vld [vmem:[#allocation5 + $0x1c50] sm:$0xf]
    %v1930 = vld [vmem:[#allocation5 + $0x1c54] sm:$0xf]
    %v1931 = vld [vmem:[#allocation5 + $0x1c58] sm:$0xf]
    %v1932 = vld [vmem:[#allocation5 + $0x1c5c] sm:$0xf]
    %v1933 = vld [vmem:[#allocation5 + $0x1c60] sm:$0xf]
    %v1934 = vld [vmem:[#allocation5 + $0x1c64] sm:$0xf]
    %v1935 = vld [vmem:[#allocation5 + $0x1c68] sm:$0xf]
    %v1936 = vld [vmem:[#allocation5 + $0x1c6c] sm:$0xf]
    %v1937 = vld [vmem:[#allocation5 + $0x1c70] sm:$0xf]
    %v1938 = vld [vmem:[#allocation5 + $0x1c74] sm:$0xf]
    %v1939 = vld [vmem:[#allocation5 + $0x1c78] sm:$0xf]
    %v1940 = vld [vmem:[#allocation5 + $0x1c7c] sm:$0xf]
    %v1941 = vld [vmem:[#allocation5 + $0x1c80] sm:$0xf]
    %v1942 = vld [vmem:[#allocation5 + $0x1c84] sm:$0xf]
    %v1943 = vld [vmem:[#allocation5 + $0x1c88] sm:$0xf]
    %v1944 = vld [vmem:[#allocation5 + $0x1c8c] sm:$0xf]
    %v1945 = vld [vmem:[#allocation5 + $0x1c90] sm:$0xf]
    %v1946 = vld [vmem:[#allocation5 + $0x1c94] sm:$0xf]
    %v1947 = vld [vmem:[#allocation5 + $0x1c98] sm:$0xf]
    %v1948 = vld [vmem:[#allocation5 + $0x1c9c] sm:$0xf]
    %v1949 = vld [vmem:[#allocation5 + $0x1ca0] sm:$0xf]
    %v1950 = vld [vmem:[#allocation5 + $0x1ca4] sm:$0xf]
    %v1951 = vld [vmem:[#allocation5 + $0x1ca8] sm:$0xf]
    %v1952 = vld [vmem:[#allocation5 + $0x1cac] sm:$0xf]
    %v1953 = vld [vmem:[#allocation5 + $0x1cb0] sm:$0xf]
    %v1954 = vld [vmem:[#allocation5 + $0x1cb4] sm:$0xf]
    %v1955 = vld [vmem:[#allocation5 + $0x1cb8] sm:$0xf]
    %v1956 = vld [vmem:[#allocation5 + $0x1cbc] sm:$0xf]
    %v1957 = vld [vmem:[#allocation5 + $0x1cc0] sm:$0xf]
    %v1958 = vld [vmem:[#allocation5 + $0x1cc4] sm:$0xf]
    %v1959 = vld [vmem:[#allocation5 + $0x1cc8] sm:$0xf]
    %v1960 = vld [vmem:[#allocation5 + $0x1ccc] sm:$0xf]
    %v1961 = vld [vmem:[#allocation5 + $0x1cd0] sm:$0xf]
    %v1962 = vld [vmem:[#allocation5 + $0x1cd4] sm:$0xf]
    %v1963 = vld [vmem:[#allocation5 + $0x1cd8] sm:$0xf]
    %v1964 = vld [vmem:[#allocation5 + $0x1cdc] sm:$0xf]
    %v1965 = vld [vmem:[#allocation5 + $0x1ce0] sm:$0xf]
    %v1966 = vld [vmem:[#allocation5 + $0x1ce4] sm:$0xf]
    %v1967 = vld [vmem:[#allocation5 + $0x1ce8] sm:$0xf]
    %v1968 = vld [vmem:[#allocation5 + $0x1cec] sm:$0xf]
    %v1969 = vld [vmem:[#allocation5 + $0x1cf0] sm:$0xf]
    %v1970 = vld [vmem:[#allocation5 + $0x1cf4] sm:$0xf]
    %v1971 = vld [vmem:[#allocation5 + $0x1cf8] sm:$0xf]
    %v1972 = vld [vmem:[#allocation5 + $0x1cfc] sm:$0xf]
    %v1973 = vld [vmem:[#allocation5 + $0x1d00] sm:$0xf]
    %v1974 = vld [vmem:[#allocation5 + $0x1d04] sm:$0xf]
    %v1975 = vld [vmem:[#allocation5 + $0x1d08] sm:$0xf]
    %v1976 = vld [vmem:[#allocation5 + $0x1d0c] sm:$0xf]
    %v1977 = vld [vmem:[#allocation5 + $0x1d10] sm:$0xf]
    %v1978 = vld [vmem:[#allocation5 + $0x1d14] sm:$0xf]
    %v1979 = vld [vmem:[#allocation5 + $0x1d18] sm:$0xf]
    %v1980 = vld [vmem:[#allocation5 + $0x1d1c] sm:$0xf]
    %v1981 = vld [vmem:[#allocation5 + $0x1d20] sm:$0xf]
    %v1982 = vld [vmem:[#allocation5 + $0x1d24] sm:$0xf]
    %v1983 = vld [vmem:[#allocation5 + $0x1d28] sm:$0xf]
    %v1984 = vld [vmem:[#allocation5 + $0x1d2c] sm:$0xf]
    %v1985 = vld [vmem:[#allocation5 + $0x1d30] sm:$0xf]
    %v1986 = vld [vmem:[#allocation5 + $0x1d34] sm:$0xf]
    %v1987 = vld [vmem:[#allocation5 + $0x1d38] sm:$0xf]
    %v1988 = vld [vmem:[#allocation5 + $0x1d3c] sm:$0xf]
    %v1989 = vld [vmem:[#allocation5 + $0x1d40] sm:$0xf]
    %v1990 = vld [vmem:[#allocation5 + $0x1d44] sm:$0xf]
    %v1991 = vld [vmem:[#allocation5 + $0x1d48] sm:$0xf]
    %v1992 = vld [vmem:[#allocation5 + $0x1d4c] sm:$0xf]
    %v1993 = vld [vmem:[#allocation5 + $0x1d50] sm:$0xf]
    %v1994 = vld [vmem:[#allocation5 + $0x1d54] sm:$0xf]
    %v1995 = vld [vmem:[#allocation5 + $0x1d58] sm:$0xf]
    %v1996 = vld [vmem:[#allocation5 + $0x1d5c] sm:$0xf]
    %v1997 = vld [vmem:[#allocation5 + $0x1d60] sm:$0xf]
    %v1998 = vld [vmem:[#allocation5 + $0x1d64] sm:$0xf]
    %v1999 = vld [vmem:[#allocation5 + $0x1d68] sm:$0xf]
    %v2000 = vld [vmem:[#allocation5 + $0x1d6c] sm:$0xf]
    %v2001 = vld [vmem:[#allocation5 + $0x1d70] sm:$0xf]
    %v2002 = vld [vmem:[#allocation5 + $0x1d74] sm:$0xf]
    %v2003 = vld [vmem:[#allocation5 + $0x1d78] sm:$0xf]
    %v2004 = vld [vmem:[#allocation5 + $0x1d7c] sm:$0xf]
    %v2005 = vld [vmem:[#allocation5 + $0x1d80] sm:$0xf]
    %v2006 = vld [vmem:[#allocation5 + $0x1d84] sm:$0xf]
    %v2007 = vld [vmem:[#allocation5 + $0x1d88] sm:$0xf]
    %v2008 = vld [vmem:[#allocation5 + $0x1d8c] sm:$0xf]
    %v2009 = vld [vmem:[#allocation5 + $0x1d90] sm:$0xf]
    %v2010 = vld [vmem:[#allocation5 + $0x1d94] sm:$0xf]
    %v2011 = vld [vmem:[#allocation5 + $0x1d98] sm:$0xf]
    %v2012 = vld [vmem:[#allocation5 + $0x1d9c] sm:$0xf]
    %v2013 = vld [vmem:[#allocation5 + $0x1da0] sm:$0xf]
    %v2014 = vld [vmem:[#allocation5 + $0x1da4] sm:$0xf]
    %v2015 = vld [vmem:[#allocation5 + $0x1da8] sm:$0xf]
    %v2016 = vld [vmem:[#allocation5 + $0x1dac] sm:$0xf]
    %v2017 = vld [vmem:[#allocation5 + $0x1db0] sm:$0xf]
    %v2018 = vld [vmem:[#allocation5 + $0x1db4] sm:$0xf]
    %v2019 = vld [vmem:[#allocation5 + $0x1db8] sm:$0xf]
    %v2020 = vld [vmem:[#allocation5 + $0x1dbc] sm:$0xf]
    %v2021 = vld [vmem:[#allocation5 + $0x1dc0] sm:$0xf]
    %v2022 = vld [vmem:[#allocation5 + $0x1dc4] sm:$0xf]
    %v2023 = vld [vmem:[#allocation5 + $0x1dc8] sm:$0xf]
    %v2024 = vld [vmem:[#allocation5 + $0x1dcc] sm:$0xf]
    %v2025 = vld [vmem:[#allocation5 + $0x1dd0] sm:$0xf]
    %v2026 = vld [vmem:[#allocation5 + $0x1dd4] sm:$0xf]
    %v2027 = vld [vmem:[#allocation5 + $0x1dd8] sm:$0xf]
    %v2028 = vld [vmem:[#allocation5 + $0x1ddc] sm:$0xf]
    %v2029 = vld [vmem:[#allocation5 + $0x1de0] sm:$0xf]
    %v2030 = vld [vmem:[#allocation5 + $0x1de4] sm:$0xf]
    %v2031 = vld [vmem:[#allocation5 + $0x1de8] sm:$0xf]
    %v2032 = vld [vmem:[#allocation5 + $0x1dec] sm:$0xf]
    %v2033 = vld [vmem:[#allocation5 + $0x1df0] sm:$0xf]
    %v2034 = vld [vmem:[#allocation5 + $0x1df4] sm:$0xf]
    %v2035 = vld [vmem:[#allocation5 + $0x1df8] sm:$0xf]
    %v2036 = vld [vmem:[#allocation5 + $0x1dfc] sm:$0xf]
    %v2037 = vld [vmem:[#allocation5 + $0x1e00] sm:$0xf]
    %v2038 = vld [vmem:[#allocation5 + $0x1e04] sm:$0xf]
    %v2039 = vld [vmem:[#allocation5 + $0x1e08] sm:$0xf]
    %v2040 = vld [vmem:[#allocation5 + $0x1e0c] sm:$0xf]
    %v2041 = vld [vmem:[#allocation5 + $0x1e10] sm:$0xf]
    %v2042 = vld [vmem:[#allocation5 + $0x1e14] sm:$0xf]
    %v2043 = vld [vmem:[#allocation5 + $0x1e18] sm:$0xf]
    %v2044 = vld [vmem:[#allocation5 + $0x1e1c] sm:$0xf]
    %v2045 = vld [vmem:[#allocation5 + $0x1e20] sm:$0xf]
    %v2046 = vld [vmem:[#allocation5 + $0x1e24] sm:$0xf]
    %v2047 = vld [vmem:[#allocation5 + $0x1e28] sm:$0xf]
    %v2048 = vld [vmem:[#allocation5 + $0x1e2c] sm:$0xf]
    %v2049 = vld [vmem:[#allocation5 + $0x1e30] sm:$0xf]
    %v2050 = vld [vmem:[#allocation5 + $0x1e34] sm:$0xf]
    %v2051 = vld [vmem:[#allocation5 + $0x1e38] sm:$0xf]
    %v2052 = vld [vmem:[#allocation5 + $0x1e3c] sm:$0xf]
    %v2053 = vld [vmem:[#allocation5 + $0x1e40] sm:$0xf]
    %v2054 = vld [vmem:[#allocation5 + $0x1e44] sm:$0xf]
    %v2055 = vld [vmem:[#allocation5 + $0x1e48] sm:$0xf]
    %v2056 = vld [vmem:[#allocation5 + $0x1e4c] sm:$0xf]
    %v2057 = vld [vmem:[#allocation5 + $0x1e50] sm:$0xf]
    %v2058 = vld [vmem:[#allocation5 + $0x1e54] sm:$0xf]
    %v2059 = vld [vmem:[#allocation5 + $0x1e58] sm:$0xf]
    %v2060 = vld [vmem:[#allocation5 + $0x1e5c] sm:$0xf]
    %v2061 = vld [vmem:[#allocation5 + $0x1e60] sm:$0xf]
    %v2062 = vld [vmem:[#allocation5 + $0x1e64] sm:$0xf]
    %v2063 = vld [vmem:[#allocation5 + $0x1e68] sm:$0xf]
    %v2064 = vld [vmem:[#allocation5 + $0x1e6c] sm:$0xf]
    %v2065 = vld [vmem:[#allocation5 + $0x1e70] sm:$0xf]
    %v2066 = vld [vmem:[#allocation5 + $0x1e74] sm:$0xf]
    %v2067 = vld [vmem:[#allocation5 + $0x1e78] sm:$0xf]
    %v2068 = vld [vmem:[#allocation5 + $0x1e7c] sm:$0xf]
    %v2069 = vld [vmem:[#allocation5 + $0x1e80] sm:$0xf]
    %v2070 = vld [vmem:[#allocation5 + $0x1e84] sm:$0xf]
    %v2071 = vld [vmem:[#allocation5 + $0x1e88] sm:$0xf]
    %v2072 = vld [vmem:[#allocation5 + $0x1e8c] sm:$0xf]
    %v2073 = vld [vmem:[#allocation5 + $0x1e90] sm:$0xf]
    %v2074 = vld [vmem:[#allocation5 + $0x1e94] sm:$0xf]
    %v2075 = vld [vmem:[#allocation5 + $0x1e98] sm:$0xf]
    %v2076 = vld [vmem:[#allocation5 + $0x1e9c] sm:$0xf]
    %v2077 = vld [vmem:[#allocation5 + $0x1ea0] sm:$0xf]
    %v2078 = vld [vmem:[#allocation5 + $0x1ea4] sm:$0xf]
    %v2079 = vld [vmem:[#allocation5 + $0x1ea8] sm:$0xf]
    %v2080 = vld [vmem:[#allocation5 + $0x1eac] sm:$0xf]
    %v2081 = vld [vmem:[#allocation5 + $0x1eb0] sm:$0xf]
    %v2082 = vld [vmem:[#allocation5 + $0x1eb4] sm:$0xf]
    %v2083 = vld [vmem:[#allocation5 + $0x1eb8] sm:$0xf]
    %v2084 = vld [vmem:[#allocation5 + $0x1ebc] sm:$0xf]
    %v2085 = vld [vmem:[#allocation5 + $0x1ec0] sm:$0xf]
    %v2086 = vld [vmem:[#allocation5 + $0x1ec4] sm:$0xf]
    %v2087 = vld [vmem:[#allocation5 + $0x1ec8] sm:$0xf]
    %v2088 = vld [vmem:[#allocation5 + $0x1ecc] sm:$0xf]
    %v2089 = vld [vmem:[#allocation5 + $0x1ed0] sm:$0xf]
    %v2090 = vld [vmem:[#allocation5 + $0x1ed4] sm:$0xf]
    %v2091 = vld [vmem:[#allocation5 + $0x1ed8] sm:$0xf]
    %v2092 = vld [vmem:[#allocation5 + $0x1edc] sm:$0xf]
    %v2093 = vld [vmem:[#allocation5 + $0x1ee0] sm:$0xf]
    %v2094 = vld [vmem:[#allocation5 + $0x1ee4] sm:$0xf]
    %v2095 = vld [vmem:[#allocation5 + $0x1ee8] sm:$0xf]
    %v2096 = vld [vmem:[#allocation5 + $0x1eec] sm:$0xf]
    %v2097 = vld [vmem:[#allocation5 + $0x1ef0] sm:$0xf]
    %v2098 = vld [vmem:[#allocation5 + $0x1ef4] sm:$0xf]
    %v2099 = vld [vmem:[#allocation5 + $0x1ef8] sm:$0xf]
    %v2100 = vld [vmem:[#allocation5 + $0x1efc] sm:$0xf]
    %v2101 = vld [vmem:[#allocation5 + $0x1f00] sm:$0xf]
    %v2102 = vld [vmem:[#allocation5 + $0x1f04] sm:$0xf]
    %v2103 = vld [vmem:[#allocation5 + $0x1f08] sm:$0xf]
    %v2104 = vld [vmem:[#allocation5 + $0x1f0c] sm:$0xf]
    %v2105 = vld [vmem:[#allocation5 + $0x1f10] sm:$0xf]
    %v2106 = vld [vmem:[#allocation5 + $0x1f14] sm:$0xf]
    %v2107 = vld [vmem:[#allocation5 + $0x1f18] sm:$0xf]
    %v2108 = vld [vmem:[#allocation5 + $0x1f1c] sm:$0xf]
    %v2109 = vld [vmem:[#allocation5 + $0x1f20] sm:$0xf]
    %v2110 = vld [vmem:[#allocation5 + $0x1f24] sm:$0xf]
    %v2111 = vld [vmem:[#allocation5 + $0x1f28] sm:$0xf]
    %v2112 = vld [vmem:[#allocation5 + $0x1f2c] sm:$0xf]
    %v2113 = vld [vmem:[#allocation5 + $0x1f30] sm:$0xf]
    %v2114 = vld [vmem:[#allocation5 + $0x1f34] sm:$0xf]
    %v2115 = vld [vmem:[#allocation5 + $0x1f38] sm:$0xf]
    %v2116 = vld [vmem:[#allocation5 + $0x1f3c] sm:$0xf]
    %v2117 = vld [vmem:[#allocation5 + $0x1f40] sm:$0xf]
    %v2118 = vld [vmem:[#allocation5 + $0x1f44] sm:$0xf]
    %v2119 = vld [vmem:[#allocation5 + $0x1f48] sm:$0xf]
    %v2120 = vld [vmem:[#allocation5 + $0x1f4c] sm:$0xf]
    %v2121 = vld [vmem:[#allocation5 + $0x1f50] sm:$0xf]
    %v2122 = vld [vmem:[#allocation5 + $0x1f54] sm:$0xf]
    %v2123 = vld [vmem:[#allocation5 + $0x1f58] sm:$0xf]
    %v2124 = vld [vmem:[#allocation5 + $0x1f5c] sm:$0xf]
    %v2125 = vld [vmem:[#allocation5 + $0x1f60] sm:$0xf]
    %v2126 = vld [vmem:[#allocation5 + $0x1f64] sm:$0xf]
    %v2127 = vld [vmem:[#allocation5 + $0x1f68] sm:$0xf]
    %v2128 = vld [vmem:[#allocation5 + $0x1f6c] sm:$0xf]
    %v2129 = vld [vmem:[#allocation5 + $0x1f70] sm:$0xf]
    %v2130 = vld [vmem:[#allocation5 + $0x1f74] sm:$0xf]
    %v2131 = vld [vmem:[#allocation5 + $0x1f78] sm:$0xf]
    %v2132 = vld [vmem:[#allocation5 + $0x1f7c] sm:$0xf]
    %v2133 = vld [vmem:[#allocation5 + $0x1f80] sm:$0xf]
    %v2134 = vld [vmem:[#allocation5 + $0x1f84] sm:$0xf]
    %v2135 = vld [vmem:[#allocation5 + $0x1f88] sm:$0xf]
    %v2136 = vld [vmem:[#allocation5 + $0x1f8c] sm:$0xf]
    %v2137 = vld [vmem:[#allocation5 + $0x1f90] sm:$0xf]
    %v2138 = vld [vmem:[#allocation5 + $0x1f94] sm:$0xf]
    %v2139 = vld [vmem:[#allocation5 + $0x1f98] sm:$0xf]
    %v2140 = vld [vmem:[#allocation5 + $0x1f9c] sm:$0xf]
    %v2141 = vld [vmem:[#allocation5 + $0x1fa0] sm:$0xf]
    %v2142 = vld [vmem:[#allocation5 + $0x1fa4] sm:$0xf]
    %v2143 = vld [vmem:[#allocation5 + $0x1fa8] sm:$0xf]
    %v2144 = vld [vmem:[#allocation5 + $0x1fac] sm:$0xf]
    %v2145 = vld [vmem:[#allocation5 + $0x1fb0] sm:$0xf]
    %v2146 = vld [vmem:[#allocation5 + $0x1fb4] sm:$0xf]
    %v2147 = vld [vmem:[#allocation5 + $0x1fb8] sm:$0xf]
    %v2148 = vld [vmem:[#allocation5 + $0x1fbc] sm:$0xf]
    %v2149 = vld [vmem:[#allocation5 + $0x1fc0] sm:$0xf]
    %v2150 = vld [vmem:[#allocation5 + $0x1fc4] sm:$0xf]
    %v2151 = vld [vmem:[#allocation5 + $0x1fc8] sm:$0xf]
    %v2152 = vld [vmem:[#allocation5 + $0x1fcc] sm:$0xf]
    %v2153 = vld [vmem:[#allocation5 + $0x1fd0] sm:$0xf]
    %v2154 = vld [vmem:[#allocation5 + $0x1fd4] sm:$0xf]
    %v2155 = vld [vmem:[#allocation5 + $0x1fd8] sm:$0xf]
    %v2156 = vld [vmem:[#allocation5 + $0x1fdc] sm:$0xf]
    %v2157 = vld [vmem:[#allocation5 + $0x1fe0] sm:$0xf]
    %v2158 = vld [vmem:[#allocation5 + $0x1fe4] sm:$0xf]
    %v2159 = vld [vmem:[#allocation5 + $0x1fe8] sm:$0xf]
    %v2160 = vld [vmem:[#allocation5 + $0x1fec] sm:$0xf]
    %v2161 = vld [vmem:[#allocation5 + $0x1ff0] sm:$0xf]
    %v2162 = vld [vmem:[#allocation5 + $0x1ff4] sm:$0xf]
    %v2163 = vld [vmem:[#allocation5 + $0x1ff8] sm:$0xf]
    %v2164 = vld [vmem:[#allocation5 + $0x1ffc] sm:$0xf]
    %v2165 = vld [vmem:[#allocation7] sm:$0x1]
    %v2167 = vlaneseq
    %v2168 = vshrl.u32 %v2167, 7
    %v2169 = vsub.s32 0, %v2168
    %v2170 = vrot.slane %v2165, %v2169
    %v2236 = vunpack.c.l.b16 %v53
    %v2237 = vunpack.c.h.b16 %v53
    %v2238 = vunpack.c.l.b16 %v54
    %v2239 = vunpack.c.h.b16 %v54
    %v2240 = vunpack.c.l.b16 %v55
    %v2241 = vunpack.c.h.b16 %v55
    %v2242 = vunpack.c.l.b16 %v56
    %v2243 = vunpack.c.h.b16 %v56
    %v2244 = vunpack.c.l.b16 %v57
    %v2245 = vunpack.c.h.b16 %v57
    %v2246 = vunpack.c.l.b16 %v58
    %v2247 = vunpack.c.h.b16 %v58
    %v2248 = vunpack.c.l.b16 %v59
    %v2249 = vunpack.c.h.b16 %v59
    %v2250 = vunpack.c.l.b16 %v60
    %v2251 = vunpack.c.h.b16 %v60
    %v2252 = vunpack.c.l.b16 %v61
    %v2253 = vunpack.c.h.b16 %v61
    %v2254 = vunpack.c.l.b16 %v62
    %v2255 = vunpack.c.h.b16 %v62
    %v2256 = vunpack.c.l.b16 %v63
    %v2257 = vunpack.c.h.b16 %v63
    %v2258 = vunpack.c.l.b16 %v64
    %v2259 = vunpack.c.h.b16 %v64
    %v2260 = vunpack.c.l.b16 %v65
    %v2261 = vunpack.c.h.b16 %v65
    %v2262 = vunpack.c.l.b16 %v66
    %v2263 = vunpack.c.h.b16 %v66
    %v2264 = vunpack.c.l.b16 %v67
    %v2265 = vunpack.c.h.b16 %v67
    %v2266 = vunpack.c.l.b16 %v68
    %v2267 = vunpack.c.h.b16 %v68
    %v2268 = vunpack.c.l.b16 %v69
    %v2269 = vunpack.c.h.b16 %v69
    %v2270 = vunpack.c.l.b16 %v70
    %v2271 = vunpack.c.h.b16 %v70
    %v2272 = vunpack.c.l.b16 %v71
    %v2273 = vunpack.c.h.b16 %v71
    %v2274 = vunpack.c.l.b16 %v72
    %v2275 = vunpack.c.h.b16 %v72
    %v2276 = vunpack.c.l.b16 %v73
    %v2277 = vunpack.c.h.b16 %v73
    %v2278 = vunpack.c.l.b16 %v74
    %v2279 = vunpack.c.h.b16 %v74
    %v2280 = vunpack.c.l.b16 %v75
    %v2281 = vunpack.c.h.b16 %v75
    %v2282 = vunpack.c.l.b16 %v76
    %v2283 = vunpack.c.h.b16 %v76
    %v2284 = vunpack.c.l.b16 %v77
    %v2285 = vunpack.c.h.b16 %v77
    %v2286 = vunpack.c.l.b16 %v78
    %v2287 = vunpack.c.h.b16 %v78
    %v2288 = vunpack.c.l.b16 %v79
    %v2289 = vunpack.c.h.b16 %v79
    %v2290 = vunpack.c.l.b16 %v80
    %v2291 = vunpack.c.h.b16 %v80
    %v2292 = vunpack.c.l.b16 %v81
    %v2293 = vunpack.c.h.b16 %v81
    %v2294 = vunpack.c.l.b16 %v82
    %v2295 = vunpack.c.h.b16 %v82
    %v2296 = vunpack.c.l.b16 %v83
    %v2297 = vunpack.c.h.b16 %v83
    %v2298 = vunpack.c.l.b16 %v84
    %v2299 = vunpack.c.h.b16 %v84
    %v2300 = vunpack.c.l.b16 %v85
    %v2301 = vunpack.c.h.b16 %v85
    %v2302 = vunpack.c.l.b16 %v86
    %v2303 = vunpack.c.h.b16 %v86
    %v2304 = vunpack.c.l.b16 %v87
    %v2305 = vunpack.c.h.b16 %v87
    %v2306 = vunpack.c.l.b16 %v88
    %v2307 = vunpack.c.h.b16 %v88
    %v2308 = vunpack.c.l.b16 %v89
    %v2309 = vunpack.c.h.b16 %v89
    %v2310 = vunpack.c.l.b16 %v90
    %v2311 = vunpack.c.h.b16 %v90
    %v2312 = vunpack.c.l.b16 %v91
    %v2313 = vunpack.c.h.b16 %v91
    %v2314 = vunpack.c.l.b16 %v92
    %v2315 = vunpack.c.h.b16 %v92
    %v2316 = vunpack.c.l.b16 %v93
    %v2317 = vunpack.c.h.b16 %v93
    %v2318 = vunpack.c.l.b16 %v94
    %v2319 = vunpack.c.h.b16 %v94
    %v2320 = vunpack.c.l.b16 %v95
    %v2321 = vunpack.c.h.b16 %v95
    %v2322 = vunpack.c.l.b16 %v96
    %v2323 = vunpack.c.h.b16 %v96
    %v2324 = vunpack.c.l.b16 %v97
    %v2325 = vunpack.c.h.b16 %v97
    %v2326 = vunpack.c.l.b16 %v98
    %v2327 = vunpack.c.h.b16 %v98
    %v2328 = vunpack.c.l.b16 %v99
    %v2329 = vunpack.c.h.b16 %v99
    %v2330 = vunpack.c.l.b16 %v100
    %v2331 = vunpack.c.h.b16 %v100
    %v2332 = vunpack.c.l.b16 %v101
    %v2333 = vunpack.c.h.b16 %v101
    %v2334 = vunpack.c.l.b16 %v102
    %v2335 = vunpack.c.h.b16 %v102
    %v2336 = vunpack.c.l.b16 %v103
    %v2337 = vunpack.c.h.b16 %v103
    %v2338 = vunpack.c.l.b16 %v104
    %v2339 = vunpack.c.h.b16 %v104
    %v2340 = vunpack.c.l.b16 %v105
    %v2341 = vunpack.c.h.b16 %v105
    %v2342 = vunpack.c.l.b16 %v106
    %v2343 = vunpack.c.h.b16 %v106
    %v2344 = vunpack.c.l.b16 %v107
    %v2345 = vunpack.c.h.b16 %v107
    %v2346 = vunpack.c.l.b16 %v108
    %v2347 = vunpack.c.h.b16 %v108
    %v2348 = vunpack.c.l.b16 %v109
    %v2349 = vunpack.c.h.b16 %v109
    %v2350 = vunpack.c.l.b16 %v110
    %v2351 = vunpack.c.h.b16 %v110
    %v2352 = vunpack.c.l.b16 %v111
    %v2353 = vunpack.c.h.b16 %v111
    %v2354 = vunpack.c.l.b16 %v112
    %v2355 = vunpack.c.h.b16 %v112
    %v2356 = vunpack.c.l.b16 %v113
    %v2357 = vunpack.c.h.b16 %v113
    %v2358 = vunpack.c.l.b16 %v114
    %v2359 = vunpack.c.h.b16 %v114
    %v2360 = vunpack.c.l.b16 %v115
    %v2361 = vunpack.c.h.b16 %v115
    %v2362 = vunpack.c.l.b16 %v116
    %v2363 = vunpack.c.h.b16 %v116
    %v2364 = vpack.c.b16 %v2236, %v2236
    %v2365 = vpack.c.b16 %v2237, %v2237
    %v2366 = vpack.c.b16 %v2238, %v2238
    %v2367 = vpack.c.b16 %v2239, %v2239
    %v2368 = vpack.c.b16 %v2240, %v2240
    %v2369 = vpack.c.b16 %v2241, %v2241
    %v2370 = vpack.c.b16 %v2242, %v2242
    %v2371 = vpack.c.b16 %v2243, %v2243
    %v2372 = vpack.c.b16 %v2244, %v2244
    %v2373 = vpack.c.b16 %v2245, %v2245
    %v2374 = vpack.c.b16 %v2246, %v2246
    %v2375 = vpack.c.b16 %v2247, %v2247
    %v2376 = vpack.c.b16 %v2248, %v2248
    %v2377 = vpack.c.b16 %v2249, %v2249
    %v2378 = vpack.c.b16 %v2250, %v2250
    %v2379 = vpack.c.b16 %v2251, %v2251
    %v2380 = vpack.c.b16 %v2252, %v2252
    %v2381 = vpack.c.b16 %v2253, %v2253
    %v2382 = vpack.c.b16 %v2254, %v2254
    %v2383 = vpack.c.b16 %v2255, %v2255
    %v2384 = vpack.c.b16 %v2256, %v2256
    %v2385 = vpack.c.b16 %v2257, %v2257
    %v2386 = vpack.c.b16 %v2258, %v2258
    %v2387 = vpack.c.b16 %v2259, %v2259
    %v2388 = vpack.c.b16 %v2260, %v2260
    %v2389 = vpack.c.b16 %v2261, %v2261
    %v2390 = vpack.c.b16 %v2262, %v2262
    %v2391 = vpack.c.b16 %v2263, %v2263
    %v2392 = vpack.c.b16 %v2264, %v2264
    %v2393 = vpack.c.b16 %v2265, %v2265
    %v2394 = vpack.c.b16 %v2266, %v2266
    %v2395 = vpack.c.b16 %v2267, %v2267
    %v2396 = vpack.c.b16 %v2268, %v2268
    %v2397 = vpack.c.b16 %v2269, %v2269
    %v2398 = vpack.c.b16 %v2270, %v2270
    %v2399 = vpack.c.b16 %v2271, %v2271
    %v2400 = vpack.c.b16 %v2272, %v2272
    %v2401 = vpack.c.b16 %v2273, %v2273
    %v2402 = vpack.c.b16 %v2274, %v2274
    %v2403 = vpack.c.b16 %v2275, %v2275
    %v2404 = vpack.c.b16 %v2276, %v2276
    %v2405 = vpack.c.b16 %v2277, %v2277
    %v2406 = vpack.c.b16 %v2278, %v2278
    %v2407 = vpack.c.b16 %v2279, %v2279
    %v2408 = vpack.c.b16 %v2280, %v2280
    %v2409 = vpack.c.b16 %v2281, %v2281
    %v2410 = vpack.c.b16 %v2282, %v2282
    %v2411 = vpack.c.b16 %v2283, %v2283
    %v2412 = vpack.c.b16 %v2284, %v2284
    %v2413 = vpack.c.b16 %v2285, %v2285
    %v2414 = vpack.c.b16 %v2286, %v2286
    %v2415 = vpack.c.b16 %v2287, %v2287
    %v2416 = vpack.c.b16 %v2288, %v2288
    %v2417 = vpack.c.b16 %v2289, %v2289
    %v2418 = vpack.c.b16 %v2290, %v2290
    %v2419 = vpack.c.b16 %v2291, %v2291
    %v2420 = vpack.c.b16 %v2292, %v2292
    %v2421 = vpack.c.b16 %v2293, %v2293
    %v2422 = vpack.c.b16 %v2294, %v2294
    %v2423 = vpack.c.b16 %v2295, %v2295
    %v2424 = vpack.c.b16 %v2296, %v2296
    %v2425 = vpack.c.b16 %v2297, %v2297
    %v2426 = vpack.c.b16 %v2298, %v2298
    %v2427 = vpack.c.b16 %v2299, %v2299
    %v2428 = vpack.c.b16 %v2300, %v2300
    %v2429 = vpack.c.b16 %v2301, %v2301
    %v2430 = vpack.c.b16 %v2302, %v2302
    %v2431 = vpack.c.b16 %v2303, %v2303
    %v2432 = vpack.c.b16 %v2304, %v2304
    %v2433 = vpack.c.b16 %v2305, %v2305
    %v2434 = vpack.c.b16 %v2306, %v2306
    %v2435 = vpack.c.b16 %v2307, %v2307
    %v2436 = vpack.c.b16 %v2308, %v2308
    %v2437 = vpack.c.b16 %v2309, %v2309
    %v2438 = vpack.c.b16 %v2310, %v2310
    %v2439 = vpack.c.b16 %v2311, %v2311
    %v2440 = vpack.c.b16 %v2312, %v2312
    %v2441 = vpack.c.b16 %v2313, %v2313
    %v2442 = vpack.c.b16 %v2314, %v2314
    %v2443 = vpack.c.b16 %v2315, %v2315
    %v2444 = vpack.c.b16 %v2316, %v2316
    %v2445 = vpack.c.b16 %v2317, %v2317
    %v2446 = vpack.c.b16 %v2318, %v2318
    %v2447 = vpack.c.b16 %v2319, %v2319
    %v2448 = vpack.c.b16 %v2320, %v2320
    %v2449 = vpack.c.b16 %v2321, %v2321
    %v2450 = vpack.c.b16 %v2322, %v2322
    %v2451 = vpack.c.b16 %v2323, %v2323
    %v2452 = vpack.c.b16 %v2324, %v2324
    %v2453 = vpack.c.b16 %v2325, %v2325
    %v2454 = vpack.c.b16 %v2326, %v2326
    %v2455 = vpack.c.b16 %v2327, %v2327
    %v2456 = vpack.c.b16 %v2328, %v2328
    %v2457 = vpack.c.b16 %v2329, %v2329
    %v2458 = vpack.c.b16 %v2330, %v2330
    %v2459 = vpack.c.b16 %v2331, %v2331
    %v2460 = vpack.c.b16 %v2332, %v2332
    %v2461 = vpack.c.b16 %v2333, %v2333
    %v2462 = vpack.c.b16 %v2334, %v2334
    %v2463 = vpack.c.b16 %v2335, %v2335
    %v2464 = vpack.c.b16 %v2336, %v2336
    %v2465 = vpack.c.b16 %v2337, %v2337
    %v2466 = vpack.c.b16 %v2338, %v2338
    %v2467 = vpack.c.b16 %v2339, %v2339
    %v2468 = vpack.c.b16 %v2340, %v2340
    %v2469 = vpack.c.b16 %v2341, %v2341
    %v2470 = vpack.c.b16 %v2342, %v2342
    %v2471 = vpack.c.b16 %v2343, %v2343
    %v2472 = vpack.c.b16 %v2344, %v2344
    %v2473 = vpack.c.b16 %v2345, %v2345
    %v2474 = vpack.c.b16 %v2346, %v2346
    %v2475 = vpack.c.b16 %v2347, %v2347
    %v2476 = vpack.c.b16 %v2348, %v2348
    %v2477 = vpack.c.b16 %v2349, %v2349
    %v2478 = vpack.c.b16 %v2350, %v2350
    %v2479 = vpack.c.b16 %v2351, %v2351
    %v2480 = vpack.c.b16 %v2352, %v2352
    %v2481 = vpack.c.b16 %v2353, %v2353
    %v2482 = vpack.c.b16 %v2354, %v2354
    %v2483 = vpack.c.b16 %v2355, %v2355
    %v2484 = vpack.c.b16 %v2356, %v2356
    %v2485 = vpack.c.b16 %v2357, %v2357
    %v2486 = vpack.c.b16 %v2358, %v2358
    %v2487 = vpack.c.b16 %v2359, %v2359
    %v2488 = vpack.c.b16 %v2360, %v2360
    %v2489 = vpack.c.b16 %v2361, %v2361
    %v2490 = vpack.c.b16 %v2362, %v2362
    %v2491 = vpack.c.b16 %v2363, %v2363
    %v4668 = vunpack.c.l.b16 %v117
    %v4669 = vunpack.c.l.b16 %v118
    %v4670 = vunpack.c.l.b16 %v119
    %v4671 = vunpack.c.l.b16 %v120
    %v4672 = vunpack.c.l.b16 %v121
    %v4673 = vunpack.c.l.b16 %v122
    %v4674 = vunpack.c.l.b16 %v123
    %v4675 = vunpack.c.l.b16 %v124
    %v4676 = vunpack.c.l.b16 %v125
    %v4677 = vunpack.c.l.b16 %v126
    %v4678 = vunpack.c.l.b16 %v127
    %v4679 = vunpack.c.l.b16 %v128
    %v4680 = vunpack.c.l.b16 %v129
    %v4681 = vunpack.c.l.b16 %v130
    %v4682 = vunpack.c.l.b16 %v131
    %v4683 = vunpack.c.l.b16 %v132
    %v4684 = vunpack.c.l.b16 %v133
    %v4685 = vunpack.c.l.b16 %v134
    %v4686 = vunpack.c.l.b16 %v135
    %v4687 = vunpack.c.l.b16 %v136
    %v4688 = vunpack.c.l.b16 %v137
    %v4689 = vunpack.c.l.b16 %v138
    %v4690 = vunpack.c.l.b16 %v139
    %v4691 = vunpack.c.l.b16 %v140
    %v4692 = vunpack.c.l.b16 %v141
    %v4693 = vunpack.c.l.b16 %v142
    %v4694 = vunpack.c.l.b16 %v143
    %v4695 = vunpack.c.l.b16 %v144
    %v4696 = vunpack.c.l.b16 %v145
    %v4697 = vunpack.c.l.b16 %v146
    %v4698 = vunpack.c.l.b16 %v147
    %v4699 = vunpack.c.l.b16 %v148
    %v4700 = vunpack.c.l.b16 %v149
    %v4701 = vunpack.c.l.b16 %v150
    %v4702 = vunpack.c.l.b16 %v151
    %v4703 = vunpack.c.l.b16 %v152
    %v4704 = vunpack.c.l.b16 %v153
    %v4705 = vunpack.c.l.b16 %v154
    %v4706 = vunpack.c.l.b16 %v155
    %v4707 = vunpack.c.l.b16 %v156
    %v4708 = vunpack.c.l.b16 %v157
    %v4709 = vunpack.c.l.b16 %v158
    %v4710 = vunpack.c.l.b16 %v159
    %v4711 = vunpack.c.l.b16 %v160
    %v4712 = vunpack.c.l.b16 %v161
    %v4713 = vunpack.c.l.b16 %v162
    %v4714 = vunpack.c.l.b16 %v163
    %v4715 = vunpack.c.l.b16 %v164
    %v4716 = vunpack.c.l.b16 %v165
    %v4717 = vunpack.c.l.b16 %v166
    %v4718 = vunpack.c.l.b16 %v167
    %v4719 = vunpack.c.l.b16 %v168
    %v4720 = vunpack.c.l.b16 %v169
    %v4721 = vunpack.c.l.b16 %v170
    %v4722 = vunpack.c.l.b16 %v171
    %v4723 = vunpack.c.l.b16 %v172
    %v4724 = vunpack.c.l.b16 %v173
    %v4725 = vunpack.c.l.b16 %v174
    %v4726 = vunpack.c.l.b16 %v175
    %v4727 = vunpack.c.l.b16 %v176
    %v4728 = vunpack.c.l.b16 %v177
    %v4729 = vunpack.c.l.b16 %v178
    %v4730 = vunpack.c.l.b16 %v179
    %v4731 = vunpack.c.l.b16 %v180
    %v4732 = vunpack.c.l.b16 %v181
    %v4733 = vunpack.c.l.b16 %v182
    %v4734 = vunpack.c.l.b16 %v183
    %v4735 = vunpack.c.l.b16 %v184
    %v4736 = vunpack.c.l.b16 %v185
    %v4737 = vunpack.c.l.b16 %v186
    %v4738 = vunpack.c.l.b16 %v187
    %v4739 = vunpack.c.l.b16 %v188
    %v4740 = vunpack.c.l.b16 %v189
    %v4741 = vunpack.c.l.b16 %v190
    %v4742 = vunpack.c.l.b16 %v191
    %v4743 = vunpack.c.l.b16 %v192
    %v4744 = vunpack.c.l.b16 %v193
    %v4745 = vunpack.c.l.b16 %v194
    %v4746 = vunpack.c.l.b16 %v195
    %v4747 = vunpack.c.l.b16 %v196
    %v4748 = vunpack.c.l.b16 %v197
    %v4749 = vunpack.c.l.b16 %v198
    %v4750 = vunpack.c.l.b16 %v199
    %v4751 = vunpack.c.l.b16 %v200
    %v4752 = vunpack.c.l.b16 %v201
    %v4753 = vunpack.c.l.b16 %v202
    %v4754 = vunpack.c.l.b16 %v203
    %v4755 = vunpack.c.l.b16 %v204
    %v4756 = vunpack.c.l.b16 %v205
    %v4757 = vunpack.c.l.b16 %v206
    %v4758 = vunpack.c.l.b16 %v207
    %v4759 = vunpack.c.l.b16 %v208
    %v4760 = vunpack.c.l.b16 %v209
    %v4761 = vunpack.c.l.b16 %v210
    %v4762 = vunpack.c.l.b16 %v211
    %v4763 = vunpack.c.l.b16 %v212
    %v4764 = vunpack.c.l.b16 %v213
    %v4765 = vunpack.c.l.b16 %v214
    %v4766 = vunpack.c.l.b16 %v215
    %v4767 = vunpack.c.l.b16 %v216
    %v4768 = vunpack.c.l.b16 %v217
    %v4769 = vunpack.c.l.b16 %v218
    %v4770 = vunpack.c.l.b16 %v219
    %v4771 = vunpack.c.l.b16 %v220
    %v4772 = vunpack.c.l.b16 %v221
    %v4773 = vunpack.c.l.b16 %v222
    %v4774 = vunpack.c.l.b16 %v223
    %v4775 = vunpack.c.l.b16 %v224
    %v4776 = vunpack.c.l.b16 %v225
    %v4777 = vunpack.c.l.b16 %v226
    %v4778 = vunpack.c.l.b16 %v227
    %v4779 = vunpack.c.l.b16 %v228
    %v4780 = vunpack.c.l.b16 %v229
    %v4781 = vunpack.c.l.b16 %v230
    %v4782 = vunpack.c.l.b16 %v231
    %v4783 = vunpack.c.l.b16 %v232
    %v4784 = vunpack.c.l.b16 %v233
    %v4785 = vunpack.c.l.b16 %v234
    %v4786 = vunpack.c.l.b16 %v235
    %v4787 = vunpack.c.l.b16 %v236
    %v4788 = vunpack.c.l.b16 %v237
    %v4789 = vunpack.c.l.b16 %v238
    %v4790 = vunpack.c.l.b16 %v239
    %v4791 = vunpack.c.l.b16 %v240
    %v4792 = vunpack.c.l.b16 %v241
    %v4793 = vunpack.c.l.b16 %v242
    %v4794 = vunpack.c.l.b16 %v243
    %v4795 = vunpack.c.l.b16 %v244
    %v4796 = vunpack.c.l.b16 %v245
    %v4797 = vunpack.c.l.b16 %v246
    %v4798 = vunpack.c.l.b16 %v247
    %v4799 = vunpack.c.l.b16 %v248
    %v4800 = vunpack.c.l.b16 %v249
    %v4801 = vunpack.c.l.b16 %v250
    %v4802 = vunpack.c.l.b16 %v251
    %v4803 = vunpack.c.l.b16 %v252
    %v4804 = vunpack.c.l.b16 %v253
    %v4805 = vunpack.c.l.b16 %v254
    %v4806 = vunpack.c.l.b16 %v255
    %v4807 = vunpack.c.l.b16 %v256
    %v4808 = vunpack.c.l.b16 %v257
    %v4809 = vunpack.c.l.b16 %v258
    %v4810 = vunpack.c.l.b16 %v259
    %v4811 = vunpack.c.l.b16 %v260
    %v4812 = vunpack.c.l.b16 %v261
    %v4813 = vunpack.c.l.b16 %v262
    %v4814 = vunpack.c.l.b16 %v263
    %v4815 = vunpack.c.l.b16 %v264
    %v4816 = vunpack.c.l.b16 %v265
    %v4817 = vunpack.c.l.b16 %v266
    %v4818 = vunpack.c.l.b16 %v267
    %v4819 = vunpack.c.l.b16 %v268
    %v4820 = vunpack.c.l.b16 %v269
    %v4821 = vunpack.c.l.b16 %v270
    %v4822 = vunpack.c.l.b16 %v271
    %v4823 = vunpack.c.l.b16 %v272
    %v4824 = vunpack.c.l.b16 %v273
    %v4825 = vunpack.c.l.b16 %v274
    %v4826 = vunpack.c.l.b16 %v275
    %v4827 = vunpack.c.l.b16 %v276
    %v4828 = vunpack.c.l.b16 %v277
    %v4829 = vunpack.c.l.b16 %v278
    %v4830 = vunpack.c.l.b16 %v279
    %v4831 = vunpack.c.l.b16 %v280
    %v4832 = vunpack.c.l.b16 %v281
    %v4833 = vunpack.c.l.b16 %v282
    %v4834 = vunpack.c.l.b16 %v283
    %v4835 = vunpack.c.l.b16 %v284
    %v4836 = vunpack.c.l.b16 %v285
    %v4837 = vunpack.c.l.b16 %v286
    %v4838 = vunpack.c.l.b16 %v287
    %v4839 = vunpack.c.l.b16 %v288
    %v4840 = vunpack.c.l.b16 %v289
    %v4841 = vunpack.c.l.b16 %v290
    %v4842 = vunpack.c.l.b16 %v291
    %v4843 = vunpack.c.l.b16 %v292
    %v4844 = vunpack.c.l.b16 %v293
    %v4845 = vunpack.c.l.b16 %v294
    %v4846 = vunpack.c.l.b16 %v295
    %v4847 = vunpack.c.l.b16 %v296
    %v4848 = vunpack.c.l.b16 %v297
    %v4849 = vunpack.c.l.b16 %v298
    %v4850 = vunpack.c.l.b16 %v299
    %v4851 = vunpack.c.l.b16 %v300
    %v4852 = vunpack.c.l.b16 %v301
    %v4853 = vunpack.c.l.b16 %v302
    %v4854 = vunpack.c.l.b16 %v303
    %v4855 = vunpack.c.l.b16 %v304
    %v4856 = vunpack.c.l.b16 %v305
    %v4857 = vunpack.c.l.b16 %v306
    %v4858 = vunpack.c.l.b16 %v307
    %v4859 = vunpack.c.l.b16 %v308
    %v4860 = vunpack.c.l.b16 %v309
    %v4861 = vunpack.c.l.b16 %v310
    %v4862 = vunpack.c.l.b16 %v311
    %v4863 = vunpack.c.l.b16 %v312
    %v4864 = vunpack.c.l.b16 %v313
    %v4865 = vunpack.c.l.b16 %v314
    %v4866 = vunpack.c.l.b16 %v315
    %v4867 = vunpack.c.l.b16 %v316
    %v4868 = vunpack.c.l.b16 %v317
    %v4869 = vunpack.c.l.b16 %v318
    %v4870 = vunpack.c.l.b16 %v319
    %v4871 = vunpack.c.l.b16 %v320
    %v4872 = vunpack.c.l.b16 %v321
    %v4873 = vunpack.c.l.b16 %v322
    %v4874 = vunpack.c.l.b16 %v323
    %v4875 = vunpack.c.l.b16 %v324
    %v4876 = vunpack.c.l.b16 %v325
    %v4877 = vunpack.c.l.b16 %v326
    %v4878 = vunpack.c.l.b16 %v327
    %v4879 = vunpack.c.l.b16 %v328
    %v4880 = vunpack.c.l.b16 %v329
    %v4881 = vunpack.c.l.b16 %v330
    %v4882 = vunpack.c.l.b16 %v331
    %v4883 = vunpack.c.l.b16 %v332
    %v4884 = vunpack.c.l.b16 %v333
    %v4885 = vunpack.c.l.b16 %v334
    %v4886 = vunpack.c.l.b16 %v335
    %v4887 = vunpack.c.l.b16 %v336
    %v4888 = vunpack.c.l.b16 %v337
    %v4889 = vunpack.c.l.b16 %v338
    %v4890 = vunpack.c.l.b16 %v339
    %v4891 = vunpack.c.l.b16 %v340
    %v4892 = vunpack.c.l.b16 %v341
    %v4893 = vunpack.c.l.b16 %v342
    %v4894 = vunpack.c.l.b16 %v343
    %v4895 = vunpack.c.l.b16 %v344
    %v4896 = vunpack.c.l.b16 %v345
    %v4897 = vunpack.c.l.b16 %v346
    %v4898 = vunpack.c.l.b16 %v347
    %v4899 = vunpack.c.l.b16 %v348
    %v4900 = vunpack.c.l.b16 %v349
    %v4901 = vunpack.c.l.b16 %v350
    %v4902 = vunpack.c.l.b16 %v351
    %v4903 = vunpack.c.l.b16 %v352
    %v4904 = vunpack.c.l.b16 %v353
    %v4905 = vunpack.c.l.b16 %v354
    %v4906 = vunpack.c.l.b16 %v355
    %v4907 = vunpack.c.l.b16 %v356
    %v4908 = vunpack.c.l.b16 %v357
    %v4909 = vunpack.c.l.b16 %v358
    %v4910 = vunpack.c.l.b16 %v359
    %v4911 = vunpack.c.l.b16 %v360
    %v4912 = vunpack.c.l.b16 %v361
    %v4913 = vunpack.c.l.b16 %v362
    %v4914 = vunpack.c.l.b16 %v363
    %v4915 = vunpack.c.l.b16 %v364
    %v4916 = vunpack.c.l.b16 %v365
    %v4917 = vunpack.c.l.b16 %v366
    %v4918 = vunpack.c.l.b16 %v367
    %v4919 = vunpack.c.l.b16 %v368
    %v4920 = vunpack.c.l.b16 %v369
    %v4921 = vunpack.c.l.b16 %v370
    %v4922 = vunpack.c.l.b16 %v371
    %v4923 = vunpack.c.l.b16 %v372
    %v4924 = vunpack.c.l.b16 %v373
    %v4925 = vunpack.c.l.b16 %v374
    %v4926 = vunpack.c.l.b16 %v375
    %v4927 = vunpack.c.l.b16 %v376
    %v4928 = vunpack.c.l.b16 %v377
    %v4929 = vunpack.c.l.b16 %v378
    %v4930 = vunpack.c.l.b16 %v379
    %v4931 = vunpack.c.l.b16 %v380
    %v4932 = vunpack.c.l.b16 %v381
    %v4933 = vunpack.c.l.b16 %v382
    %v4934 = vunpack.c.l.b16 %v383
    %v4935 = vunpack.c.l.b16 %v384
    %v4936 = vunpack.c.l.b16 %v385
    %v4937 = vunpack.c.l.b16 %v386
    %v4938 = vunpack.c.l.b16 %v387
    %v4939 = vunpack.c.l.b16 %v388
    %v4940 = vunpack.c.l.b16 %v389
    %v4941 = vunpack.c.l.b16 %v390
    %v4942 = vunpack.c.l.b16 %v391
    %v4943 = vunpack.c.l.b16 %v392
    %v4944 = vunpack.c.l.b16 %v393
    %v4945 = vunpack.c.l.b16 %v394
    %v4946 = vunpack.c.l.b16 %v395
    %v4947 = vunpack.c.l.b16 %v396
    %v4948 = vunpack.c.l.b16 %v397
    %v4949 = vunpack.c.l.b16 %v398
    %v4950 = vunpack.c.l.b16 %v399
    %v4951 = vunpack.c.l.b16 %v400
    %v4952 = vunpack.c.l.b16 %v401
    %v4953 = vunpack.c.l.b16 %v402
    %v4954 = vunpack.c.l.b16 %v403
    %v4955 = vunpack.c.l.b16 %v404
    %v4956 = vunpack.c.l.b16 %v405
    %v4957 = vunpack.c.l.b16 %v406
    %v4958 = vunpack.c.l.b16 %v407
    %v4959 = vunpack.c.l.b16 %v408
    %v4960 = vunpack.c.l.b16 %v409
    %v4961 = vunpack.c.l.b16 %v410
    %v4962 = vunpack.c.l.b16 %v411
    %v4963 = vunpack.c.l.b16 %v412
    %v4964 = vunpack.c.l.b16 %v413
    %v4965 = vunpack.c.l.b16 %v414
    %v4966 = vunpack.c.l.b16 %v415
    %v4967 = vunpack.c.l.b16 %v416
    %v4968 = vunpack.c.l.b16 %v417
    %v4969 = vunpack.c.l.b16 %v418
    %v4970 = vunpack.c.l.b16 %v419
    %v4971 = vunpack.c.l.b16 %v420
    %v4972 = vunpack.c.l.b16 %v421
    %v4973 = vunpack.c.l.b16 %v422
    %v4974 = vunpack.c.l.b16 %v423
    %v4975 = vunpack.c.l.b16 %v424
    %v4976 = vunpack.c.l.b16 %v425
    %v4977 = vunpack.c.l.b16 %v426
    %v4978 = vunpack.c.l.b16 %v427
    %v4979 = vunpack.c.l.b16 %v428
    %v4980 = vunpack.c.l.b16 %v429
    %v4981 = vunpack.c.l.b16 %v430
    %v4982 = vunpack.c.l.b16 %v431
    %v4983 = vunpack.c.l.b16 %v432
    %v4984 = vunpack.c.l.b16 %v433
    %v4985 = vunpack.c.l.b16 %v434
    %v4986 = vunpack.c.l.b16 %v435
    %v4987 = vunpack.c.l.b16 %v436
    %v4988 = vunpack.c.l.b16 %v437
    %v4989 = vunpack.c.l.b16 %v438
    %v4990 = vunpack.c.l.b16 %v439
    %v4991 = vunpack.c.l.b16 %v440
    %v4992 = vunpack.c.l.b16 %v441
    %v4993 = vunpack.c.l.b16 %v442
    %v4994 = vunpack.c.l.b16 %v443
    %v4995 = vunpack.c.l.b16 %v444
    %v4996 = vunpack.c.l.b16 %v445
    %v4997 = vunpack.c.l.b16 %v446
    %v4998 = vunpack.c.l.b16 %v447
    %v4999 = vunpack.c.l.b16 %v448
    %v5000 = vunpack.c.l.b16 %v449
    %v5001 = vunpack.c.l.b16 %v450
    %v5002 = vunpack.c.l.b16 %v451
    %v5003 = vunpack.c.l.b16 %v452
    %v5004 = vunpack.c.l.b16 %v453
    %v5005 = vunpack.c.l.b16 %v454
    %v5006 = vunpack.c.l.b16 %v455
    %v5007 = vunpack.c.l.b16 %v456
    %v5008 = vunpack.c.l.b16 %v457
    %v5009 = vunpack.c.l.b16 %v458
    %v5010 = vunpack.c.l.b16 %v459
    %v5011 = vunpack.c.l.b16 %v460
    %v5012 = vunpack.c.l.b16 %v461
    %v5013 = vunpack.c.l.b16 %v462
    %v5014 = vunpack.c.l.b16 %v463
    %v5015 = vunpack.c.l.b16 %v464
    %v5016 = vunpack.c.l.b16 %v465
    %v5017 = vunpack.c.l.b16 %v466
    %v5018 = vunpack.c.l.b16 %v467
    %v5019 = vunpack.c.l.b16 %v468
    %v5020 = vunpack.c.l.b16 %v469
    %v5021 = vunpack.c.l.b16 %v470
    %v5022 = vunpack.c.l.b16 %v471
    %v5023 = vunpack.c.l.b16 %v472
    %v5024 = vunpack.c.l.b16 %v473
    %v5025 = vunpack.c.l.b16 %v474
    %v5026 = vunpack.c.l.b16 %v475
    %v5027 = vunpack.c.l.b16 %v476
    %v5028 = vunpack.c.l.b16 %v477
    %v5029 = vunpack.c.l.b16 %v478
    %v5030 = vunpack.c.l.b16 %v479
    %v5031 = vunpack.c.l.b16 %v480
    %v5032 = vunpack.c.l.b16 %v481
    %v5033 = vunpack.c.l.b16 %v482
    %v5034 = vunpack.c.l.b16 %v483
    %v5035 = vunpack.c.l.b16 %v484
    %v5036 = vunpack.c.l.b16 %v485
    %v5037 = vunpack.c.l.b16 %v486
    %v5038 = vunpack.c.l.b16 %v487
    %v5039 = vunpack.c.l.b16 %v488
    %v5040 = vunpack.c.l.b16 %v489
    %v5041 = vunpack.c.l.b16 %v490
    %v5042 = vunpack.c.l.b16 %v491
    %v5043 = vunpack.c.l.b16 %v492
    %v5044 = vunpack.c.l.b16 %v493
    %v5045 = vunpack.c.l.b16 %v494
    %v5046 = vunpack.c.l.b16 %v495
    %v5047 = vunpack.c.l.b16 %v496
    %v5048 = vunpack.c.l.b16 %v497
    %v5049 = vunpack.c.l.b16 %v498
    %v5050 = vunpack.c.l.b16 %v499
    %v5051 = vunpack.c.l.b16 %v500
    %v5052 = vunpack.c.l.b16 %v501
    %v5053 = vunpack.c.l.b16 %v502
    %v5054 = vunpack.c.l.b16 %v503
    %v5055 = vunpack.c.l.b16 %v504
    %v5056 = vunpack.c.l.b16 %v505
    %v5057 = vunpack.c.l.b16 %v506
    %v5058 = vunpack.c.l.b16 %v507
    %v5059 = vunpack.c.l.b16 %v508
    %v5060 = vunpack.c.l.b16 %v509
    %v5061 = vunpack.c.l.b16 %v510
    %v5062 = vunpack.c.l.b16 %v511
    %v5063 = vunpack.c.l.b16 %v512
    %v5064 = vunpack.c.l.b16 %v513
    %v5065 = vunpack.c.l.b16 %v514
    %v5066 = vunpack.c.l.b16 %v515
    %v5067 = vunpack.c.l.b16 %v516
    %v5068 = vunpack.c.l.b16 %v517
    %v5069 = vunpack.c.l.b16 %v518
    %v5070 = vunpack.c.l.b16 %v519
    %v5071 = vunpack.c.l.b16 %v520
    %v5072 = vunpack.c.l.b16 %v521
    %v5073 = vunpack.c.l.b16 %v522
    %v5074 = vunpack.c.l.b16 %v523
    %v5075 = vunpack.c.l.b16 %v524
    %v5076 = vunpack.c.l.b16 %v525
    %v5077 = vunpack.c.l.b16 %v526
    %v5078 = vunpack.c.l.b16 %v527
    %v5079 = vunpack.c.l.b16 %v528
    %v5080 = vunpack.c.l.b16 %v529
    %v5081 = vunpack.c.l.b16 %v530
    %v5082 = vunpack.c.l.b16 %v531
    %v5083 = vunpack.c.l.b16 %v532
    %v5084 = vunpack.c.l.b16 %v533
    %v5085 = vunpack.c.l.b16 %v534
    %v5086 = vunpack.c.l.b16 %v535
    %v5087 = vunpack.c.l.b16 %v536
    %v5088 = vunpack.c.l.b16 %v537
    %v5089 = vunpack.c.l.b16 %v538
    %v5090 = vunpack.c.l.b16 %v539
    %v5091 = vunpack.c.l.b16 %v540
    %v5092 = vunpack.c.l.b16 %v541
    %v5093 = vunpack.c.l.b16 %v542
    %v5094 = vunpack.c.l.b16 %v543
    %v5095 = vunpack.c.l.b16 %v544
    %v5096 = vunpack.c.l.b16 %v545
    %v5097 = vunpack.c.l.b16 %v546
    %v5098 = vunpack.c.l.b16 %v547
    %v5099 = vunpack.c.l.b16 %v548
    %v5100 = vunpack.c.l.b16 %v549
    %v5101 = vunpack.c.l.b16 %v550
    %v5102 = vunpack.c.l.b16 %v551
    %v5103 = vunpack.c.l.b16 %v552
    %v5104 = vunpack.c.l.b16 %v553
    %v5105 = vunpack.c.l.b16 %v554
    %v5106 = vunpack.c.l.b16 %v555
    %v5107 = vunpack.c.l.b16 %v556
    %v5108 = vunpack.c.l.b16 %v557
    %v5109 = vunpack.c.l.b16 %v558
    %v5110 = vunpack.c.l.b16 %v559
    %v5111 = vunpack.c.l.b16 %v560
    %v5112 = vunpack.c.l.b16 %v561
    %v5113 = vunpack.c.l.b16 %v562
    %v5114 = vunpack.c.l.b16 %v563
    %v5115 = vunpack.c.l.b16 %v564
    %v5116 = vunpack.c.l.b16 %v565
    %v5117 = vunpack.c.l.b16 %v566
    %v5118 = vunpack.c.l.b16 %v567
    %v5119 = vunpack.c.l.b16 %v568
    %v5120 = vunpack.c.l.b16 %v569
    %v5121 = vunpack.c.l.b16 %v570
    %v5122 = vunpack.c.l.b16 %v571
    %v5123 = vunpack.c.l.b16 %v572
    %v5124 = vunpack.c.l.b16 %v573
    %v5125 = vunpack.c.l.b16 %v574
    %v5126 = vunpack.c.l.b16 %v575
    %v5127 = vunpack.c.l.b16 %v576
    %v5128 = vunpack.c.l.b16 %v577
    %v5129 = vunpack.c.l.b16 %v578
    %v5130 = vunpack.c.l.b16 %v579
    %v5131 = vunpack.c.l.b16 %v580
    %v5132 = vunpack.c.l.b16 %v581
    %v5133 = vunpack.c.l.b16 %v582
    %v5134 = vunpack.c.l.b16 %v583
    %v5135 = vunpack.c.l.b16 %v584
    %v5136 = vunpack.c.l.b16 %v585
    %v5137 = vunpack.c.l.b16 %v586
    %v5138 = vunpack.c.l.b16 %v587
    %v5139 = vunpack.c.l.b16 %v588
    %v5140 = vunpack.c.l.b16 %v589
    %v5141 = vunpack.c.l.b16 %v590
    %v5142 = vunpack.c.l.b16 %v591
    %v5143 = vunpack.c.l.b16 %v592
    %v5144 = vunpack.c.l.b16 %v593
    %v5145 = vunpack.c.l.b16 %v594
    %v5146 = vunpack.c.l.b16 %v595
    %v5147 = vunpack.c.l.b16 %v596
    %v5148 = vunpack.c.l.b16 %v597
    %v5149 = vunpack.c.l.b16 %v598
    %v5150 = vunpack.c.l.b16 %v599
    %v5151 = vunpack.c.l.b16 %v600
    %v5152 = vunpack.c.l.b16 %v601
    %v5153 = vunpack.c.l.b16 %v602
    %v5154 = vunpack.c.l.b16 %v603
    %v5155 = vunpack.c.l.b16 %v604
    %v5156 = vunpack.c.l.b16 %v605
    %v5157 = vunpack.c.l.b16 %v606
    %v5158 = vunpack.c.l.b16 %v607
    %v5159 = vunpack.c.l.b16 %v608
    %v5160 = vunpack.c.l.b16 %v609
    %v5161 = vunpack.c.l.b16 %v610
    %v5162 = vunpack.c.l.b16 %v611
    %v5163 = vunpack.c.l.b16 %v612
    %v5164 = vunpack.c.l.b16 %v613
    %v5165 = vunpack.c.l.b16 %v614
    %v5166 = vunpack.c.l.b16 %v615
    %v5167 = vunpack.c.l.b16 %v616
    %v5168 = vunpack.c.l.b16 %v617
    %v5169 = vunpack.c.l.b16 %v618
    %v5170 = vunpack.c.l.b16 %v619
    %v5171 = vunpack.c.l.b16 %v620
    %v5172 = vunpack.c.l.b16 %v621
    %v5173 = vunpack.c.l.b16 %v622
    %v5174 = vunpack.c.l.b16 %v623
    %v5175 = vunpack.c.l.b16 %v624
    %v5176 = vunpack.c.l.b16 %v625
    %v5177 = vunpack.c.l.b16 %v626
    %v5178 = vunpack.c.l.b16 %v627
    %v5179 = vunpack.c.l.b16 %v628
    %v5180 = vunpack.c.l.b16 %v629
    %v5181 = vunpack.c.l.b16 %v630
    %v5182 = vunpack.c.l.b16 %v631
    %v5183 = vunpack.c.l.b16 %v632
    %v5184 = vunpack.c.l.b16 %v633
    %v5185 = vunpack.c.l.b16 %v634
    %v5186 = vunpack.c.l.b16 %v635
    %v5187 = vunpack.c.l.b16 %v636
    %v5188 = vunpack.c.l.b16 %v637
    %v5189 = vunpack.c.l.b16 %v638
    %v5190 = vunpack.c.l.b16 %v639
    %v5191 = vunpack.c.l.b16 %v640
    %v5192 = vunpack.c.l.b16 %v641
    %v5193 = vunpack.c.l.b16 %v642
    %v5194 = vunpack.c.l.b16 %v643
    %v5195 = vunpack.c.l.b16 %v644
    %v5196 = vunpack.c.l.b16 %v645
    %v5197 = vunpack.c.l.b16 %v646
    %v5198 = vunpack.c.l.b16 %v647
    %v5199 = vunpack.c.l.b16 %v648
    %v5200 = vunpack.c.l.b16 %v649
    %v5201 = vunpack.c.l.b16 %v650
    %v5202 = vunpack.c.l.b16 %v651
    %v5203 = vunpack.c.l.b16 %v652
    %v5204 = vunpack.c.l.b16 %v653
    %v5205 = vunpack.c.l.b16 %v654
    %v5206 = vunpack.c.l.b16 %v655
    %v5207 = vunpack.c.l.b16 %v656
    %v5208 = vunpack.c.l.b16 %v657
    %v5209 = vunpack.c.l.b16 %v658
    %v5210 = vunpack.c.l.b16 %v659
    %v5211 = vunpack.c.l.b16 %v660
    %v5212 = vunpack.c.l.b16 %v661
    %v5213 = vunpack.c.l.b16 %v662
    %v5214 = vunpack.c.l.b16 %v663
    %v5215 = vunpack.c.l.b16 %v664
    %v5216 = vunpack.c.l.b16 %v665
    %v5217 = vunpack.c.l.b16 %v666
    %v5218 = vunpack.c.l.b16 %v667
    %v5219 = vunpack.c.l.b16 %v668
    %v5220 = vunpack.c.l.b16 %v669
    %v5221 = vunpack.c.l.b16 %v670
    %v5222 = vunpack.c.l.b16 %v671
    %v5223 = vunpack.c.l.b16 %v672
    %v5224 = vunpack.c.l.b16 %v673
    %v5225 = vunpack.c.l.b16 %v674
    %v5226 = vunpack.c.l.b16 %v675
    %v5227 = vunpack.c.l.b16 %v676
    %v5228 = vunpack.c.l.b16 %v677
    %v5229 = vunpack.c.l.b16 %v678
    %v5230 = vunpack.c.l.b16 %v679
    %v5231 = vunpack.c.l.b16 %v680
    %v5232 = vunpack.c.l.b16 %v681
    %v5233 = vunpack.c.l.b16 %v682
    %v5234 = vunpack.c.l.b16 %v683
    %v5235 = vunpack.c.l.b16 %v684
    %v5236 = vunpack.c.l.b16 %v685
    %v5237 = vunpack.c.l.b16 %v686
    %v5238 = vunpack.c.l.b16 %v687
    %v5239 = vunpack.c.l.b16 %v688
    %v5240 = vunpack.c.l.b16 %v689
    %v5241 = vunpack.c.l.b16 %v690
    %v5242 = vunpack.c.l.b16 %v691
    %v5243 = vunpack.c.l.b16 %v692
    %v5244 = vunpack.c.l.b16 %v693
    %v5245 = vunpack.c.l.b16 %v694
    %v5246 = vunpack.c.l.b16 %v695
    %v5247 = vunpack.c.l.b16 %v696
    %v5248 = vunpack.c.l.b16 %v697
    %v5249 = vunpack.c.l.b16 %v698
    %v5250 = vunpack.c.l.b16 %v699
    %v5251 = vunpack.c.l.b16 %v700
    %v5252 = vunpack.c.l.b16 %v701
    %v5253 = vunpack.c.l.b16 %v702
    %v5254 = vunpack.c.l.b16 %v703
    %v5255 = vunpack.c.l.b16 %v704
    %v5256 = vunpack.c.l.b16 %v705
    %v5257 = vunpack.c.l.b16 %v706
    %v5258 = vunpack.c.l.b16 %v707
    %v5259 = vunpack.c.l.b16 %v708
    %v5260 = vunpack.c.l.b16 %v709
    %v5261 = vunpack.c.l.b16 %v710
    %v5262 = vunpack.c.l.b16 %v711
    %v5263 = vunpack.c.l.b16 %v712
    %v5264 = vunpack.c.l.b16 %v713
    %v5265 = vunpack.c.l.b16 %v714
    %v5266 = vunpack.c.l.b16 %v715
    %v5267 = vunpack.c.l.b16 %v716
    %v5268 = vunpack.c.l.b16 %v717
    %v5269 = vunpack.c.l.b16 %v718
    %v5270 = vunpack.c.l.b16 %v719
    %v5271 = vunpack.c.l.b16 %v720
    %v5272 = vunpack.c.l.b16 %v721
    %v5273 = vunpack.c.l.b16 %v722
    %v5274 = vunpack.c.l.b16 %v723
    %v5275 = vunpack.c.l.b16 %v724
    %v5276 = vunpack.c.l.b16 %v725
    %v5277 = vunpack.c.l.b16 %v726
    %v5278 = vunpack.c.l.b16 %v727
    %v5279 = vunpack.c.l.b16 %v728
    %v5280 = vunpack.c.l.b16 %v729
    %v5281 = vunpack.c.l.b16 %v730
    %v5282 = vunpack.c.l.b16 %v731
    %v5283 = vunpack.c.l.b16 %v732
    %v5284 = vunpack.c.l.b16 %v733
    %v5285 = vunpack.c.l.b16 %v734
    %v5286 = vunpack.c.l.b16 %v735
    %v5287 = vunpack.c.l.b16 %v736
    %v5288 = vunpack.c.l.b16 %v737
    %v5289 = vunpack.c.l.b16 %v738
    %v5290 = vunpack.c.l.b16 %v739
    %v5291 = vunpack.c.l.b16 %v740
    %v5292 = vunpack.c.l.b16 %v741
    %v5293 = vunpack.c.l.b16 %v742
    %v5294 = vunpack.c.l.b16 %v743
    %v5295 = vunpack.c.l.b16 %v744
    %v5296 = vunpack.c.l.b16 %v745
    %v5297 = vunpack.c.l.b16 %v746
    %v5298 = vunpack.c.l.b16 %v747
    %v5299 = vunpack.c.l.b16 %v748
    %v5300 = vunpack.c.l.b16 %v749
    %v5301 = vunpack.c.l.b16 %v750
    %v5302 = vunpack.c.l.b16 %v751
    %v5303 = vunpack.c.l.b16 %v752
    %v5304 = vunpack.c.l.b16 %v753
    %v5305 = vunpack.c.l.b16 %v754
    %v5306 = vunpack.c.l.b16 %v755
    %v5307 = vunpack.c.l.b16 %v756
    %v5308 = vunpack.c.l.b16 %v757
    %v5309 = vunpack.c.l.b16 %v758
    %v5310 = vunpack.c.l.b16 %v759
    %v5311 = vunpack.c.l.b16 %v760
    %v5312 = vunpack.c.l.b16 %v761
    %v5313 = vunpack.c.l.b16 %v762
    %v5314 = vunpack.c.l.b16 %v763
    %v5315 = vunpack.c.l.b16 %v764
    %v5316 = vunpack.c.l.b16 %v765
    %v5317 = vunpack.c.l.b16 %v766
    %v5318 = vunpack.c.l.b16 %v767
    %v5319 = vunpack.c.l.b16 %v768
    %v5320 = vunpack.c.l.b16 %v769
    %v5321 = vunpack.c.l.b16 %v770
    %v5322 = vunpack.c.l.b16 %v771
    %v5323 = vunpack.c.l.b16 %v772
    %v5324 = vunpack.c.l.b16 %v773
    %v5325 = vunpack.c.l.b16 %v774
    %v5326 = vunpack.c.l.b16 %v775
    %v5327 = vunpack.c.l.b16 %v776
    %v5328 = vunpack.c.l.b16 %v777
    %v5329 = vunpack.c.l.b16 %v778
    %v5330 = vunpack.c.l.b16 %v779
    %v5331 = vunpack.c.l.b16 %v780
    %v5332 = vunpack.c.l.b16 %v781
    %v5333 = vunpack.c.l.b16 %v782
    %v5334 = vunpack.c.l.b16 %v783
    %v5335 = vunpack.c.l.b16 %v784
    %v5336 = vunpack.c.l.b16 %v785
    %v5337 = vunpack.c.l.b16 %v786
    %v5338 = vunpack.c.l.b16 %v787
    %v5339 = vunpack.c.l.b16 %v788
    %v5340 = vunpack.c.l.b16 %v789
    %v5341 = vunpack.c.l.b16 %v790
    %v5342 = vunpack.c.l.b16 %v791
    %v5343 = vunpack.c.l.b16 %v792
    %v5344 = vunpack.c.l.b16 %v793
    %v5345 = vunpack.c.l.b16 %v794
    %v5346 = vunpack.c.l.b16 %v795
    %v5347 = vunpack.c.l.b16 %v796
    %v5348 = vunpack.c.l.b16 %v797
    %v5349 = vunpack.c.l.b16 %v798
    %v5350 = vunpack.c.l.b16 %v799
    %v5351 = vunpack.c.l.b16 %v800
    %v5352 = vunpack.c.l.b16 %v801
    %v5353 = vunpack.c.l.b16 %v802
    %v5354 = vunpack.c.l.b16 %v803
    %v5355 = vunpack.c.l.b16 %v804
    %v5356 = vunpack.c.l.b16 %v805
    %v5357 = vunpack.c.l.b16 %v806
    %v5358 = vunpack.c.l.b16 %v807
    %v5359 = vunpack.c.l.b16 %v808
    %v5360 = vunpack.c.l.b16 %v809
    %v5361 = vunpack.c.l.b16 %v810
    %v5362 = vunpack.c.l.b16 %v811
    %v5363 = vunpack.c.l.b16 %v812
    %v5364 = vunpack.c.l.b16 %v813
    %v5365 = vunpack.c.l.b16 %v814
    %v5366 = vunpack.c.l.b16 %v815
    %v5367 = vunpack.c.l.b16 %v816
    %v5368 = vunpack.c.l.b16 %v817
    %v5369 = vunpack.c.l.b16 %v818
    %v5370 = vunpack.c.l.b16 %v819
    %v5371 = vunpack.c.l.b16 %v820
    %v5372 = vunpack.c.l.b16 %v821
    %v5373 = vunpack.c.l.b16 %v822
    %v5374 = vunpack.c.l.b16 %v823
    %v5375 = vunpack.c.l.b16 %v824
    %v5376 = vunpack.c.l.b16 %v825
    %v5377 = vunpack.c.l.b16 %v826
    %v5378 = vunpack.c.l.b16 %v827
    %v5379 = vunpack.c.l.b16 %v828
    %v5380 = vunpack.c.l.b16 %v829
    %v5381 = vunpack.c.l.b16 %v830
    %v5382 = vunpack.c.l.b16 %v831
    %v5383 = vunpack.c.l.b16 %v832
    %v5384 = vunpack.c.l.b16 %v833
    %v5385 = vunpack.c.l.b16 %v834
    %v5386 = vunpack.c.l.b16 %v835
    %v5387 = vunpack.c.l.b16 %v836
    %v5388 = vunpack.c.l.b16 %v837
    %v5389 = vunpack.c.l.b16 %v838
    %v5390 = vunpack.c.l.b16 %v839
    %v5391 = vunpack.c.l.b16 %v840
    %v5392 = vunpack.c.l.b16 %v841
    %v5393 = vunpack.c.l.b16 %v842
    %v5394 = vunpack.c.l.b16 %v843
    %v5395 = vunpack.c.l.b16 %v844
    %v5396 = vunpack.c.l.b16 %v845
    %v5397 = vunpack.c.l.b16 %v846
    %v5398 = vunpack.c.l.b16 %v847
    %v5399 = vunpack.c.l.b16 %v848
    %v5400 = vunpack.c.l.b16 %v849
    %v5401 = vunpack.c.l.b16 %v850
    %v5402 = vunpack.c.l.b16 %v851
    %v5403 = vunpack.c.l.b16 %v852
    %v5404 = vunpack.c.l.b16 %v853
    %v5405 = vunpack.c.l.b16 %v854
    %v5406 = vunpack.c.l.b16 %v855
    %v5407 = vunpack.c.l.b16 %v856
    %v5408 = vunpack.c.l.b16 %v857
    %v5409 = vunpack.c.l.b16 %v858
    %v5410 = vunpack.c.l.b16 %v859
    %v5411 = vunpack.c.l.b16 %v860
    %v5412 = vunpack.c.l.b16 %v861
    %v5413 = vunpack.c.l.b16 %v862
    %v5414 = vunpack.c.l.b16 %v863
    %v5415 = vunpack.c.l.b16 %v864
    %v5416 = vunpack.c.l.b16 %v865
    %v5417 = vunpack.c.l.b16 %v866
    %v5418 = vunpack.c.l.b16 %v867
    %v5419 = vunpack.c.l.b16 %v868
    %v5420 = vunpack.c.l.b16 %v869
    %v5421 = vunpack.c.l.b16 %v870
    %v5422 = vunpack.c.l.b16 %v871
    %v5423 = vunpack.c.l.b16 %v872
    %v5424 = vunpack.c.l.b16 %v873
    %v5425 = vunpack.c.l.b16 %v874
    %v5426 = vunpack.c.l.b16 %v875
    %v5427 = vunpack.c.l.b16 %v876
    %v5428 = vunpack.c.l.b16 %v877
    %v5429 = vunpack.c.l.b16 %v878
    %v5430 = vunpack.c.l.b16 %v879
    %v5431 = vunpack.c.l.b16 %v880
    %v5432 = vunpack.c.l.b16 %v881
    %v5433 = vunpack.c.l.b16 %v882
    %v5434 = vunpack.c.l.b16 %v883
    %v5435 = vunpack.c.l.b16 %v884
    %v5436 = vunpack.c.l.b16 %v885
    %v5437 = vunpack.c.l.b16 %v886
    %v5438 = vunpack.c.l.b16 %v887
    %v5439 = vunpack.c.l.b16 %v888
    %v5440 = vunpack.c.l.b16 %v889
    %v5441 = vunpack.c.l.b16 %v890
    %v5442 = vunpack.c.l.b16 %v891
    %v5443 = vunpack.c.l.b16 %v892
    %v5444 = vunpack.c.l.b16 %v893
    %v5445 = vunpack.c.l.b16 %v894
    %v5446 = vunpack.c.l.b16 %v895
    %v5447 = vunpack.c.l.b16 %v896
    %v5448 = vunpack.c.l.b16 %v897
    %v5449 = vunpack.c.l.b16 %v898
    %v5450 = vunpack.c.l.b16 %v899
    %v5451 = vunpack.c.l.b16 %v900
    %v5452 = vunpack.c.l.b16 %v901
    %v5453 = vunpack.c.l.b16 %v902
    %v5454 = vunpack.c.l.b16 %v903
    %v5455 = vunpack.c.l.b16 %v904
    %v5456 = vunpack.c.l.b16 %v905
    %v5457 = vunpack.c.l.b16 %v906
    %v5458 = vunpack.c.l.b16 %v907
    %v5459 = vunpack.c.l.b16 %v908
    %v5460 = vunpack.c.l.b16 %v909
    %v5461 = vunpack.c.l.b16 %v910
    %v5462 = vunpack.c.l.b16 %v911
    %v5463 = vunpack.c.l.b16 %v912
    %v5464 = vunpack.c.l.b16 %v913
    %v5465 = vunpack.c.l.b16 %v914
    %v5466 = vunpack.c.l.b16 %v915
    %v5467 = vunpack.c.l.b16 %v916
    %v5468 = vunpack.c.l.b16 %v917
    %v5469 = vunpack.c.l.b16 %v918
    %v5470 = vunpack.c.l.b16 %v919
    %v5471 = vunpack.c.l.b16 %v920
    %v5472 = vunpack.c.l.b16 %v921
    %v5473 = vunpack.c.l.b16 %v922
    %v5474 = vunpack.c.l.b16 %v923
    %v5475 = vunpack.c.l.b16 %v924
    %v5476 = vunpack.c.l.b16 %v925
    %v5477 = vunpack.c.l.b16 %v926
    %v5478 = vunpack.c.l.b16 %v927
    %v5479 = vunpack.c.l.b16 %v928
    %v5480 = vunpack.c.l.b16 %v929
    %v5481 = vunpack.c.l.b16 %v930
    %v5482 = vunpack.c.l.b16 %v931
    %v5483 = vunpack.c.l.b16 %v932
    %v5484 = vunpack.c.l.b16 %v933
    %v5485 = vunpack.c.l.b16 %v934
    %v5486 = vunpack.c.l.b16 %v935
    %v5487 = vunpack.c.l.b16 %v936
    %v5488 = vunpack.c.l.b16 %v937
    %v5489 = vunpack.c.l.b16 %v938
    %v5490 = vunpack.c.l.b16 %v939
    %v5491 = vunpack.c.l.b16 %v940
    %v5492 = vunpack.c.l.b16 %v941
    %v5493 = vunpack.c.l.b16 %v942
    %v5494 = vunpack.c.l.b16 %v943
    %v5495 = vunpack.c.l.b16 %v944
    %v5496 = vunpack.c.l.b16 %v945
    %v5497 = vunpack.c.l.b16 %v946
    %v5498 = vunpack.c.l.b16 %v947
    %v5499 = vunpack.c.l.b16 %v948
    %v5500 = vunpack.c.l.b16 %v949
    %v5501 = vunpack.c.l.b16 %v950
    %v5502 = vunpack.c.l.b16 %v951
    %v5503 = vunpack.c.l.b16 %v952
    %v5504 = vunpack.c.l.b16 %v953
    %v5505 = vunpack.c.l.b16 %v954
    %v5506 = vunpack.c.l.b16 %v955
    %v5507 = vunpack.c.l.b16 %v956
    %v5508 = vunpack.c.l.b16 %v957
    %v5509 = vunpack.c.l.b16 %v958
    %v5510 = vunpack.c.l.b16 %v959
    %v5511 = vunpack.c.l.b16 %v960
    %v5512 = vunpack.c.l.b16 %v961
    %v5513 = vunpack.c.l.b16 %v962
    %v5514 = vunpack.c.l.b16 %v963
    %v5515 = vunpack.c.l.b16 %v964
    %v5516 = vunpack.c.l.b16 %v965
    %v5517 = vunpack.c.l.b16 %v966
    %v5518 = vunpack.c.l.b16 %v967
    %v5519 = vunpack.c.l.b16 %v968
    %v5520 = vunpack.c.l.b16 %v969
    %v5521 = vunpack.c.l.b16 %v970
    %v5522 = vunpack.c.l.b16 %v971
    %v5523 = vunpack.c.l.b16 %v972
    %v5524 = vunpack.c.l.b16 %v973
    %v5525 = vunpack.c.l.b16 %v974
    %v5526 = vunpack.c.l.b16 %v975
    %v5527 = vunpack.c.l.b16 %v976
    %v5528 = vunpack.c.l.b16 %v977
    %v5529 = vunpack.c.l.b16 %v978
    %v5530 = vunpack.c.l.b16 %v979
    %v5531 = vunpack.c.l.b16 %v980
    %v5532 = vunpack.c.l.b16 %v981
    %v5533 = vunpack.c.l.b16 %v982
    %v5534 = vunpack.c.l.b16 %v983
    %v5535 = vunpack.c.l.b16 %v984
    %v5536 = vunpack.c.l.b16 %v985
    %v5537 = vunpack.c.l.b16 %v986
    %v5538 = vunpack.c.l.b16 %v987
    %v5539 = vunpack.c.l.b16 %v988
    %v5540 = vunpack.c.l.b16 %v989
    %v5541 = vunpack.c.l.b16 %v990
    %v5542 = vunpack.c.l.b16 %v991
    %v5543 = vunpack.c.l.b16 %v992
    %v5544 = vunpack.c.l.b16 %v993
    %v5545 = vunpack.c.l.b16 %v994
    %v5546 = vunpack.c.l.b16 %v995
    %v5547 = vunpack.c.l.b16 %v996
    %v5548 = vunpack.c.l.b16 %v997
    %v5549 = vunpack.c.l.b16 %v998
    %v5550 = vunpack.c.l.b16 %v999
    %v5551 = vunpack.c.l.b16 %v1000
    %v5552 = vunpack.c.l.b16 %v1001
    %v5553 = vunpack.c.l.b16 %v1002
    %v5554 = vunpack.c.l.b16 %v1003
    %v5555 = vunpack.c.l.b16 %v1004
    %v5556 = vunpack.c.l.b16 %v1005
    %v5557 = vunpack.c.l.b16 %v1006
    %v5558 = vunpack.c.l.b16 %v1007
    %v5559 = vunpack.c.l.b16 %v1008
    %v5560 = vunpack.c.l.b16 %v1009
    %v5561 = vunpack.c.l.b16 %v1010
    %v5562 = vunpack.c.l.b16 %v1011
    %v5563 = vunpack.c.l.b16 %v1012
    %v5564 = vunpack.c.l.b16 %v1013
    %v5565 = vunpack.c.l.b16 %v1014
    %v5566 = vunpack.c.l.b16 %v1015
    %v5567 = vunpack.c.l.b16 %v1016
    %v5568 = vunpack.c.l.b16 %v1017
    %v5569 = vunpack.c.l.b16 %v1018
    %v5570 = vunpack.c.l.b16 %v1019
    %v5571 = vunpack.c.l.b16 %v1020
    %v5572 = vunpack.c.l.b16 %v1021
    %v5573 = vunpack.c.l.b16 %v1022
    %v5574 = vunpack.c.l.b16 %v1023
    %v5575 = vunpack.c.l.b16 %v1024
    %v5576 = vunpack.c.l.b16 %v1025
    %v5577 = vunpack.c.l.b16 %v1026
    %v5578 = vunpack.c.l.b16 %v1027
    %v5579 = vunpack.c.l.b16 %v1028
    %v5580 = vunpack.c.l.b16 %v1029
    %v5581 = vunpack.c.l.b16 %v1030
    %v5582 = vunpack.c.l.b16 %v1031
    %v5583 = vunpack.c.l.b16 %v1032
    %v5584 = vunpack.c.l.b16 %v1033
    %v5585 = vunpack.c.l.b16 %v1034
    %v5586 = vunpack.c.l.b16 %v1035
    %v5587 = vunpack.c.l.b16 %v1036
    %v5588 = vunpack.c.l.b16 %v1037
    %v5589 = vunpack.c.l.b16 %v1038
    %v5590 = vunpack.c.l.b16 %v1039
    %v5591 = vunpack.c.l.b16 %v1040
    %v5592 = vunpack.c.l.b16 %v1041
    %v5593 = vunpack.c.l.b16 %v1042
    %v5594 = vunpack.c.l.b16 %v1043
    %v5595 = vunpack.c.l.b16 %v1044
    %v5596 = vunpack.c.l.b16 %v1045
    %v5597 = vunpack.c.l.b16 %v1046
    %v5598 = vunpack.c.l.b16 %v1047
    %v5599 = vunpack.c.l.b16 %v1048
    %v5600 = vunpack.c.l.b16 %v1049
    %v5601 = vunpack.c.l.b16 %v1050
    %v5602 = vunpack.c.l.b16 %v1051
    %v5603 = vunpack.c.l.b16 %v1052
    %v5604 = vunpack.c.l.b16 %v1053
    %v5605 = vunpack.c.l.b16 %v1054
    %v5606 = vunpack.c.l.b16 %v1055
    %v5607 = vunpack.c.l.b16 %v1056
    %v5608 = vunpack.c.l.b16 %v1057
    %v5609 = vunpack.c.l.b16 %v1058
    %v5610 = vunpack.c.l.b16 %v1059
    %v5611 = vunpack.c.l.b16 %v1060
    %v5612 = vunpack.c.l.b16 %v1061
    %v5613 = vunpack.c.l.b16 %v1062
    %v5614 = vunpack.c.l.b16 %v1063
    %v5615 = vunpack.c.l.b16 %v1064
    %v5616 = vunpack.c.l.b16 %v1065
    %v5617 = vunpack.c.l.b16 %v1066
    %v5618 = vunpack.c.l.b16 %v1067
    %v5619 = vunpack.c.l.b16 %v1068
    %v5620 = vunpack.c.l.b16 %v1069
    %v5621 = vunpack.c.l.b16 %v1070
    %v5622 = vunpack.c.l.b16 %v1071
    %v5623 = vunpack.c.l.b16 %v1072
    %v5624 = vunpack.c.l.b16 %v1073
    %v5625 = vunpack.c.l.b16 %v1074
    %v5626 = vunpack.c.l.b16 %v1075
    %v5627 = vunpack.c.l.b16 %v1076
    %v5628 = vunpack.c.l.b16 %v1077
    %v5629 = vunpack.c.l.b16 %v1078
    %v5630 = vunpack.c.l.b16 %v1079
    %v5631 = vunpack.c.l.b16 %v1080
    %v5632 = vunpack.c.l.b16 %v1081
    %v5633 = vunpack.c.l.b16 %v1082
    %v5634 = vunpack.c.l.b16 %v1083
    %v5635 = vunpack.c.l.b16 %v1084
    %v5636 = vunpack.c.l.b16 %v1085
    %v5637 = vunpack.c.l.b16 %v1086
    %v5638 = vunpack.c.l.b16 %v1087
    %v5639 = vunpack.c.l.b16 %v1088
    %v5640 = vunpack.c.l.b16 %v1089
    %v5641 = vunpack.c.l.b16 %v1090
    %v5642 = vunpack.c.l.b16 %v1091
    %v5643 = vunpack.c.l.b16 %v1092
    %v5644 = vunpack.c.l.b16 %v1093
    %v5645 = vunpack.c.l.b16 %v1094
    %v5646 = vunpack.c.l.b16 %v1095
    %v5647 = vunpack.c.l.b16 %v1096
    %v5648 = vunpack.c.l.b16 %v1097
    %v5649 = vunpack.c.l.b16 %v1098
    %v5650 = vunpack.c.l.b16 %v1099
    %v5651 = vunpack.c.l.b16 %v1100
    %v5652 = vunpack.c.l.b16 %v1101
    %v5653 = vunpack.c.l.b16 %v1102
    %v5654 = vunpack.c.l.b16 %v1103
    %v5655 = vunpack.c.l.b16 %v1104
    %v5656 = vunpack.c.l.b16 %v1105
    %v5657 = vunpack.c.l.b16 %v1106
    %v5658 = vunpack.c.l.b16 %v1107
    %v5659 = vunpack.c.l.b16 %v1108
    %v5660 = vunpack.c.l.b16 %v1109
    %v5661 = vunpack.c.l.b16 %v1110
    %v5662 = vunpack.c.l.b16 %v1111
    %v5663 = vunpack.c.l.b16 %v1112
    %v5664 = vunpack.c.l.b16 %v1113
    %v5665 = vunpack.c.l.b16 %v1114
    %v5666 = vunpack.c.l.b16 %v1115
    %v5667 = vunpack.c.l.b16 %v1116
    %v5668 = vunpack.c.l.b16 %v1117
    %v5669 = vunpack.c.l.b16 %v1118
    %v5670 = vunpack.c.l.b16 %v1119
    %v5671 = vunpack.c.l.b16 %v1120
    %v5672 = vunpack.c.l.b16 %v1121
    %v5673 = vunpack.c.l.b16 %v1122
    %v5674 = vunpack.c.l.b16 %v1123
    %v5675 = vunpack.c.l.b16 %v1124
    %v5676 = vunpack.c.l.b16 %v1125
    %v5677 = vunpack.c.l.b16 %v1126
    %v5678 = vunpack.c.l.b16 %v1127
    %v5679 = vunpack.c.l.b16 %v1128
    %v5680 = vunpack.c.l.b16 %v1129
    %v5681 = vunpack.c.l.b16 %v1130
    %v5682 = vunpack.c.l.b16 %v1131
    %v5683 = vunpack.c.l.b16 %v1132
    %v5684 = vunpack.c.l.b16 %v1133
    %v5685 = vunpack.c.l.b16 %v1134
    %v5686 = vunpack.c.l.b16 %v1135
    %v5687 = vunpack.c.l.b16 %v1136
    %v5688 = vunpack.c.l.b16 %v1137
    %v5689 = vunpack.c.l.b16 %v1138
    %v5690 = vunpack.c.l.b16 %v1139
    %v5691 = vunpack.c.l.b16 %v1140
    %v5692 = vunpack.c.l.b16 %v1141
    %v5693 = vunpack.c.l.b16 %v1142
    %v5694 = vunpack.c.l.b16 %v1143
    %v5695 = vunpack.c.l.b16 %v1144
    %v5696 = vunpack.c.l.b16 %v1145
    %v5697 = vunpack.c.l.b16 %v1146
    %v5698 = vunpack.c.l.b16 %v1147
    %v5699 = vunpack.c.l.b16 %v1148
    %v5700 = vunpack.c.l.b16 %v1149
    %v5701 = vunpack.c.l.b16 %v1150
    %v5702 = vunpack.c.l.b16 %v1151
    %v5703 = vunpack.c.l.b16 %v1152
    %v5704 = vunpack.c.l.b16 %v1153
    %v5705 = vunpack.c.l.b16 %v1154
    %v5706 = vunpack.c.l.b16 %v1155
    %v5707 = vunpack.c.l.b16 %v1156
    %v5708 = vunpack.c.l.b16 %v1157
    %v5709 = vunpack.c.l.b16 %v1158
    %v5710 = vunpack.c.l.b16 %v1159
    %v5711 = vunpack.c.l.b16 %v1160
    %v5712 = vunpack.c.l.b16 %v1161
    %v5713 = vunpack.c.l.b16 %v1162
    %v5714 = vunpack.c.l.b16 %v1163
    %v5715 = vunpack.c.l.b16 %v1164
    %v5716 = vunpack.c.l.b16 %v1165
    %v5717 = vunpack.c.l.b16 %v1166
    %v5718 = vunpack.c.l.b16 %v1167
    %v5719 = vunpack.c.l.b16 %v1168
    %v5720 = vunpack.c.l.b16 %v1169
    %v5721 = vunpack.c.l.b16 %v1170
    %v5722 = vunpack.c.l.b16 %v1171
    %v5723 = vunpack.c.l.b16 %v1172
    %v5724 = vunpack.c.l.b16 %v1173
    %v5725 = vunpack.c.l.b16 %v1174
    %v5726 = vunpack.c.l.b16 %v1175
    %v5727 = vunpack.c.l.b16 %v1176
    %v5728 = vunpack.c.l.b16 %v1177
    %v5729 = vunpack.c.l.b16 %v1178
    %v5730 = vunpack.c.l.b16 %v1179
    %v5731 = vunpack.c.l.b16 %v1180
    %v5732 = vunpack.c.l.b16 %v1181
    %v5733 = vunpack.c.l.b16 %v1182
    %v5734 = vunpack.c.l.b16 %v1183
    %v5735 = vunpack.c.l.b16 %v1184
    %v5736 = vunpack.c.l.b16 %v1185
    %v5737 = vunpack.c.l.b16 %v1186
    %v5738 = vunpack.c.l.b16 %v1187
    %v5739 = vunpack.c.l.b16 %v1188
    %v5740 = vunpack.c.l.b16 %v1189
    %v5741 = vunpack.c.l.b16 %v1190
    %v5742 = vunpack.c.l.b16 %v1191
    %v5743 = vunpack.c.l.b16 %v1192
    %v5744 = vunpack.c.l.b16 %v1193
    %v5745 = vunpack.c.l.b16 %v1194
    %v5746 = vunpack.c.l.b16 %v1195
    %v5747 = vunpack.c.l.b16 %v1196
    %v5748 = vunpack.c.l.b16 %v1197
    %v5749 = vunpack.c.l.b16 %v1198
    %v5750 = vunpack.c.l.b16 %v1199
    %v5751 = vunpack.c.l.b16 %v1200
    %v5752 = vunpack.c.l.b16 %v1201
    %v5753 = vunpack.c.l.b16 %v1202
    %v5754 = vunpack.c.l.b16 %v1203
    %v5755 = vunpack.c.l.b16 %v1204
    %v5756 = vunpack.c.l.b16 %v1205
    %v5757 = vunpack.c.l.b16 %v1206
    %v5758 = vunpack.c.l.b16 %v1207
    %v5759 = vunpack.c.l.b16 %v1208
    %v5760 = vunpack.c.l.b16 %v1209
    %v5761 = vunpack.c.l.b16 %v1210
    %v5762 = vunpack.c.l.b16 %v1211
    %v5763 = vunpack.c.l.b16 %v1212
    %v5764 = vunpack.c.l.b16 %v1213
    %v5765 = vunpack.c.l.b16 %v1214
    %v5766 = vunpack.c.l.b16 %v1215
    %v5767 = vunpack.c.l.b16 %v1216
    %v5768 = vunpack.c.l.b16 %v1217
    %v5769 = vunpack.c.l.b16 %v1218
    %v5770 = vunpack.c.l.b16 %v1219
    %v5771 = vunpack.c.l.b16 %v1220
    %v5772 = vunpack.c.l.b16 %v1221
    %v5773 = vunpack.c.l.b16 %v1222
    %v5774 = vunpack.c.l.b16 %v1223
    %v5775 = vunpack.c.l.b16 %v1224
    %v5776 = vunpack.c.l.b16 %v1225
    %v5777 = vunpack.c.l.b16 %v1226
    %v5778 = vunpack.c.l.b16 %v1227
    %v5779 = vunpack.c.l.b16 %v1228
    %v5780 = vunpack.c.l.b16 %v1229
    %v5781 = vunpack.c.l.b16 %v1230
    %v5782 = vunpack.c.l.b16 %v1231
    %v5783 = vunpack.c.l.b16 %v1232
    %v5784 = vunpack.c.l.b16 %v1233
    %v5785 = vunpack.c.l.b16 %v1234
    %v5786 = vunpack.c.l.b16 %v1235
    %v5787 = vunpack.c.l.b16 %v1236
    %v5788 = vunpack.c.l.b16 %v1237
    %v5789 = vunpack.c.l.b16 %v1238
    %v5790 = vunpack.c.l.b16 %v1239
    %v5791 = vunpack.c.l.b16 %v1240
    %v5792 = vunpack.c.l.b16 %v1241
    %v5793 = vunpack.c.l.b16 %v1242
    %v5794 = vunpack.c.l.b16 %v1243
    %v5795 = vunpack.c.l.b16 %v1244
    %v5796 = vunpack.c.l.b16 %v1245
    %v5797 = vunpack.c.l.b16 %v1246
    %v5798 = vunpack.c.l.b16 %v1247
    %v5799 = vunpack.c.l.b16 %v1248
    %v5800 = vunpack.c.l.b16 %v1249
    %v5801 = vunpack.c.l.b16 %v1250
    %v5802 = vunpack.c.l.b16 %v1251
    %v5803 = vunpack.c.l.b16 %v1252
    %v5804 = vunpack.c.l.b16 %v1253
    %v5805 = vunpack.c.l.b16 %v1254
    %v5806 = vunpack.c.l.b16 %v1255
    %v5807 = vunpack.c.l.b16 %v1256
    %v5808 = vunpack.c.l.b16 %v1257
    %v5809 = vunpack.c.l.b16 %v1258
    %v5810 = vunpack.c.l.b16 %v1259
    %v5811 = vunpack.c.l.b16 %v1260
    %v5812 = vunpack.c.l.b16 %v1261
    %v5813 = vunpack.c.l.b16 %v1262
    %v5814 = vunpack.c.l.b16 %v1263
    %v5815 = vunpack.c.l.b16 %v1264
    %v5816 = vunpack.c.l.b16 %v1265
    %v5817 = vunpack.c.l.b16 %v1266
    %v5818 = vunpack.c.l.b16 %v1267
    %v5819 = vunpack.c.l.b16 %v1268
    %v5820 = vunpack.c.l.b16 %v1269
    %v5821 = vunpack.c.l.b16 %v1270
    %v5822 = vunpack.c.l.b16 %v1271
    %v5823 = vunpack.c.l.b16 %v1272
    %v5824 = vunpack.c.l.b16 %v1273
    %v5825 = vunpack.c.l.b16 %v1274
    %v5826 = vunpack.c.l.b16 %v1275
    %v5827 = vunpack.c.l.b16 %v1276
    %v5828 = vunpack.c.l.b16 %v1277
    %v5829 = vunpack.c.l.b16 %v1278
    %v5830 = vunpack.c.l.b16 %v1279
    %v5831 = vunpack.c.l.b16 %v1280
    %v5832 = vunpack.c.l.b16 %v1281
    %v5833 = vunpack.c.l.b16 %v1282
    %v5834 = vunpack.c.l.b16 %v1283
    %v5835 = vunpack.c.l.b16 %v1284
    %v5836 = vunpack.c.l.b16 %v1285
    %v5837 = vunpack.c.l.b16 %v1286
    %v5838 = vunpack.c.l.b16 %v1287
    %v5839 = vunpack.c.l.b16 %v1288
    %v5840 = vunpack.c.l.b16 %v1289
    %v5841 = vunpack.c.l.b16 %v1290
    %v5842 = vunpack.c.l.b16 %v1291
    %v5843 = vunpack.c.l.b16 %v1292
    %v5844 = vunpack.c.l.b16 %v1293
    %v5845 = vunpack.c.l.b16 %v1294
    %v5846 = vunpack.c.l.b16 %v1295
    %v5847 = vunpack.c.l.b16 %v1296
    %v5848 = vunpack.c.l.b16 %v1297
    %v5849 = vunpack.c.l.b16 %v1298
    %v5850 = vunpack.c.l.b16 %v1299
    %v5851 = vunpack.c.l.b16 %v1300
    %v5852 = vunpack.c.l.b16 %v1301
    %v5853 = vunpack.c.l.b16 %v1302
    %v5854 = vunpack.c.l.b16 %v1303
    %v5855 = vunpack.c.l.b16 %v1304
    %v5856 = vunpack.c.l.b16 %v1305
    %v5857 = vunpack.c.l.b16 %v1306
    %v5858 = vunpack.c.l.b16 %v1307
    %v5859 = vunpack.c.l.b16 %v1308
    %v5860 = vunpack.c.l.b16 %v1309
    %v5861 = vunpack.c.l.b16 %v1310
    %v5862 = vunpack.c.l.b16 %v1311
    %v5863 = vunpack.c.l.b16 %v1312
    %v5864 = vunpack.c.l.b16 %v1313
    %v5865 = vunpack.c.l.b16 %v1314
    %v5866 = vunpack.c.l.b16 %v1315
    %v5867 = vunpack.c.l.b16 %v1316
    %v5868 = vunpack.c.l.b16 %v1317
    %v5869 = vunpack.c.l.b16 %v1318
    %v5870 = vunpack.c.l.b16 %v1319
    %v5871 = vunpack.c.l.b16 %v1320
    %v5872 = vunpack.c.l.b16 %v1321
    %v5873 = vunpack.c.l.b16 %v1322
    %v5874 = vunpack.c.l.b16 %v1323
    %v5875 = vunpack.c.l.b16 %v1324
    %v5876 = vunpack.c.l.b16 %v1325
    %v5877 = vunpack.c.l.b16 %v1326
    %v5878 = vunpack.c.l.b16 %v1327
    %v5879 = vunpack.c.l.b16 %v1328
    %v5880 = vunpack.c.l.b16 %v1329
    %v5881 = vunpack.c.l.b16 %v1330
    %v5882 = vunpack.c.l.b16 %v1331
    %v5883 = vunpack.c.l.b16 %v1332
    %v5884 = vunpack.c.l.b16 %v1333
    %v5885 = vunpack.c.l.b16 %v1334
    %v5886 = vunpack.c.l.b16 %v1335
    %v5887 = vunpack.c.l.b16 %v1336
    %v5888 = vunpack.c.l.b16 %v1337
    %v5889 = vunpack.c.l.b16 %v1338
    %v5890 = vunpack.c.l.b16 %v1339
    %v5891 = vunpack.c.l.b16 %v1340
    %v5892 = vunpack.c.l.b16 %v1341
    %v5893 = vunpack.c.l.b16 %v1342
    %v5894 = vunpack.c.l.b16 %v1343
    %v5895 = vunpack.c.l.b16 %v1344
    %v5896 = vunpack.c.l.b16 %v1345
    %v5897 = vunpack.c.l.b16 %v1346
    %v5898 = vunpack.c.l.b16 %v1347
    %v5899 = vunpack.c.l.b16 %v1348
    %v5900 = vunpack.c.l.b16 %v1349
    %v5901 = vunpack.c.l.b16 %v1350
    %v5902 = vunpack.c.l.b16 %v1351
    %v5903 = vunpack.c.l.b16 %v1352
    %v5904 = vunpack.c.l.b16 %v1353
    %v5905 = vunpack.c.l.b16 %v1354
    %v5906 = vunpack.c.l.b16 %v1355
    %v5907 = vunpack.c.l.b16 %v1356
    %v5908 = vunpack.c.l.b16 %v1357
    %v5909 = vunpack.c.l.b16 %v1358
    %v5910 = vunpack.c.l.b16 %v1359
    %v5911 = vunpack.c.l.b16 %v1360
    %v5912 = vunpack.c.l.b16 %v1361
    %v5913 = vunpack.c.l.b16 %v1362
    %v5914 = vunpack.c.l.b16 %v1363
    %v5915 = vunpack.c.l.b16 %v1364
    %v5916 = vunpack.c.l.b16 %v1365
    %v5917 = vunpack.c.l.b16 %v1366
    %v5918 = vunpack.c.l.b16 %v1367
    %v5919 = vunpack.c.l.b16 %v1368
    %v5920 = vunpack.c.l.b16 %v1369
    %v5921 = vunpack.c.l.b16 %v1370
    %v5922 = vunpack.c.l.b16 %v1371
    %v5923 = vunpack.c.l.b16 %v1372
    %v5924 = vunpack.c.l.b16 %v1373
    %v5925 = vunpack.c.l.b16 %v1374
    %v5926 = vunpack.c.l.b16 %v1375
    %v5927 = vunpack.c.l.b16 %v1376
    %v5928 = vunpack.c.l.b16 %v1377
    %v5929 = vunpack.c.l.b16 %v1378
    %v5930 = vunpack.c.l.b16 %v1379
    %v5931 = vunpack.c.l.b16 %v1380
    %v5932 = vunpack.c.l.b16 %v1381
    %v5933 = vunpack.c.l.b16 %v1382
    %v5934 = vunpack.c.l.b16 %v1383
    %v5935 = vunpack.c.l.b16 %v1384
    %v5936 = vunpack.c.l.b16 %v1385
    %v5937 = vunpack.c.l.b16 %v1386
    %v5938 = vunpack.c.l.b16 %v1387
    %v5939 = vunpack.c.l.b16 %v1388
    %v5940 = vunpack.c.l.b16 %v1389
    %v5941 = vunpack.c.l.b16 %v1390
    %v5942 = vunpack.c.l.b16 %v1391
    %v5943 = vunpack.c.l.b16 %v1392
    %v5944 = vunpack.c.l.b16 %v1393
    %v5945 = vunpack.c.l.b16 %v1394
    %v5946 = vunpack.c.l.b16 %v1395
    %v5947 = vunpack.c.l.b16 %v1396
    %v5948 = vunpack.c.l.b16 %v1397
    %v5949 = vunpack.c.l.b16 %v1398
    %v5950 = vunpack.c.l.b16 %v1399
    %v5951 = vunpack.c.l.b16 %v1400
    %v5952 = vunpack.c.l.b16 %v1401
    %v5953 = vunpack.c.l.b16 %v1402
    %v5954 = vunpack.c.l.b16 %v1403
    %v5955 = vunpack.c.l.b16 %v1404
    %v5956 = vunpack.c.l.b16 %v1405
    %v5957 = vunpack.c.l.b16 %v1406
    %v5958 = vunpack.c.l.b16 %v1407
    %v5959 = vunpack.c.l.b16 %v1408
    %v5960 = vunpack.c.l.b16 %v1409
    %v5961 = vunpack.c.l.b16 %v1410
    %v5962 = vunpack.c.l.b16 %v1411
    %v5963 = vunpack.c.l.b16 %v1412
    %v5964 = vunpack.c.l.b16 %v1413
    %v5965 = vunpack.c.l.b16 %v1414
    %v5966 = vunpack.c.l.b16 %v1415
    %v5967 = vunpack.c.l.b16 %v1416
    %v5968 = vunpack.c.l.b16 %v1417
    %v5969 = vunpack.c.l.b16 %v1418
    %v5970 = vunpack.c.l.b16 %v1419
    %v5971 = vunpack.c.l.b16 %v1420
    %v5972 = vunpack.c.l.b16 %v1421
    %v5973 = vunpack.c.l.b16 %v1422
    %v5974 = vunpack.c.l.b16 %v1423
    %v5975 = vunpack.c.l.b16 %v1424
    %v5976 = vunpack.c.l.b16 %v1425
    %v5977 = vunpack.c.l.b16 %v1426
    %v5978 = vunpack.c.l.b16 %v1427
    %v5979 = vunpack.c.l.b16 %v1428
    %v5980 = vunpack.c.l.b16 %v1429
    %v5981 = vunpack.c.l.b16 %v1430
    %v5982 = vunpack.c.l.b16 %v1431
    %v5983 = vunpack.c.l.b16 %v1432
    %v5984 = vunpack.c.l.b16 %v1433
    %v5985 = vunpack.c.l.b16 %v1434
    %v5986 = vunpack.c.l.b16 %v1435
    %v5987 = vunpack.c.l.b16 %v1436
    %v5988 = vunpack.c.l.b16 %v1437
    %v5989 = vunpack.c.l.b16 %v1438
    %v5990 = vunpack.c.l.b16 %v1439
    %v5991 = vunpack.c.l.b16 %v1440
    %v5992 = vunpack.c.l.b16 %v1441
    %v5993 = vunpack.c.l.b16 %v1442
    %v5994 = vunpack.c.l.b16 %v1443
    %v5995 = vunpack.c.l.b16 %v1444
    %v5996 = vunpack.c.l.b16 %v1445
    %v5997 = vunpack.c.l.b16 %v1446
    %v5998 = vunpack.c.l.b16 %v1447
    %v5999 = vunpack.c.l.b16 %v1448
    %v6000 = vunpack.c.l.b16 %v1449
    %v6001 = vunpack.c.l.b16 %v1450
    %v6002 = vunpack.c.l.b16 %v1451
    %v6003 = vunpack.c.l.b16 %v1452
    %v6004 = vunpack.c.l.b16 %v1453
    %v6005 = vunpack.c.l.b16 %v1454
    %v6006 = vunpack.c.l.b16 %v1455
    %v6007 = vunpack.c.l.b16 %v1456
    %v6008 = vunpack.c.l.b16 %v1457
    %v6009 = vunpack.c.l.b16 %v1458
    %v6010 = vunpack.c.l.b16 %v1459
    %v6011 = vunpack.c.l.b16 %v1460
    %v6012 = vunpack.c.l.b16 %v1461
    %v6013 = vunpack.c.l.b16 %v1462
    %v6014 = vunpack.c.l.b16 %v1463
    %v6015 = vunpack.c.l.b16 %v1464
    %v6016 = vunpack.c.l.b16 %v1465
    %v6017 = vunpack.c.l.b16 %v1466
    %v6018 = vunpack.c.l.b16 %v1467
    %v6019 = vunpack.c.l.b16 %v1468
    %v6020 = vunpack.c.l.b16 %v1469
    %v6021 = vunpack.c.l.b16 %v1470
    %v6022 = vunpack.c.l.b16 %v1471
    %v6023 = vunpack.c.l.b16 %v1472
    %v6024 = vunpack.c.l.b16 %v1473
    %v6025 = vunpack.c.l.b16 %v1474
    %v6026 = vunpack.c.l.b16 %v1475
    %v6027 = vunpack.c.l.b16 %v1476
    %v6028 = vunpack.c.l.b16 %v1477
    %v6029 = vunpack.c.l.b16 %v1478
    %v6030 = vunpack.c.l.b16 %v1479
    %v6031 = vunpack.c.l.b16 %v1480
    %v6032 = vunpack.c.l.b16 %v1481
    %v6033 = vunpack.c.l.b16 %v1482
    %v6034 = vunpack.c.l.b16 %v1483
    %v6035 = vunpack.c.l.b16 %v1484
    %v6036 = vunpack.c.l.b16 %v1485
    %v6037 = vunpack.c.l.b16 %v1486
    %v6038 = vunpack.c.l.b16 %v1487
    %v6039 = vunpack.c.l.b16 %v1488
    %v6040 = vunpack.c.l.b16 %v1489
    %v6041 = vunpack.c.l.b16 %v1490
    %v6042 = vunpack.c.l.b16 %v1491
    %v6043 = vunpack.c.l.b16 %v1492
    %v6044 = vunpack.c.l.b16 %v1493
    %v6045 = vunpack.c.l.b16 %v1494
    %v6046 = vunpack.c.l.b16 %v1495
    %v6047 = vunpack.c.l.b16 %v1496
    %v6048 = vunpack.c.l.b16 %v1497
    %v6049 = vunpack.c.l.b16 %v1498
    %v6050 = vunpack.c.l.b16 %v1499
    %v6051 = vunpack.c.l.b16 %v1500
    %v6052 = vunpack.c.l.b16 %v1501
    %v6053 = vunpack.c.l.b16 %v1502
    %v6054 = vunpack.c.l.b16 %v1503
    %v6055 = vunpack.c.l.b16 %v1504
    %v6056 = vunpack.c.l.b16 %v1505
    %v6057 = vunpack.c.l.b16 %v1506
    %v6058 = vunpack.c.l.b16 %v1507
    %v6059 = vunpack.c.l.b16 %v1508
    %v6060 = vunpack.c.l.b16 %v1509
    %v6061 = vunpack.c.l.b16 %v1510
    %v6062 = vunpack.c.l.b16 %v1511
    %v6063 = vunpack.c.l.b16 %v1512
    %v6064 = vunpack.c.l.b16 %v1513
    %v6065 = vunpack.c.l.b16 %v1514
    %v6066 = vunpack.c.l.b16 %v1515
    %v6067 = vunpack.c.l.b16 %v1516
    %v6068 = vunpack.c.l.b16 %v1517
    %v6069 = vunpack.c.l.b16 %v1518
    %v6070 = vunpack.c.l.b16 %v1519
    %v6071 = vunpack.c.l.b16 %v1520
    %v6072 = vunpack.c.l.b16 %v1521
    %v6073 = vunpack.c.l.b16 %v1522
    %v6074 = vunpack.c.l.b16 %v1523
    %v6075 = vunpack.c.l.b16 %v1524
    %v6076 = vunpack.c.l.b16 %v1525
    %v6077 = vunpack.c.l.b16 %v1526
    %v6078 = vunpack.c.l.b16 %v1527
    %v6079 = vunpack.c.l.b16 %v1528
    %v6080 = vunpack.c.l.b16 %v1529
    %v6081 = vunpack.c.l.b16 %v1530
    %v6082 = vunpack.c.l.b16 %v1531
    %v6083 = vunpack.c.l.b16 %v1532
    %v6084 = vunpack.c.l.b16 %v1533
    %v6085 = vunpack.c.l.b16 %v1534
    %v6086 = vunpack.c.l.b16 %v1535
    %v6087 = vunpack.c.l.b16 %v1536
    %v6088 = vunpack.c.l.b16 %v1537
    %v6089 = vunpack.c.l.b16 %v1538
    %v6090 = vunpack.c.l.b16 %v1539
    %v6091 = vunpack.c.l.b16 %v1540
    %v6092 = vunpack.c.l.b16 %v1541
    %v6093 = vunpack.c.l.b16 %v1542
    %v6094 = vunpack.c.l.b16 %v1543
    %v6095 = vunpack.c.l.b16 %v1544
    %v6096 = vunpack.c.l.b16 %v1545
    %v6097 = vunpack.c.l.b16 %v1546
    %v6098 = vunpack.c.l.b16 %v1547
    %v6099 = vunpack.c.l.b16 %v1548
    %v6100 = vunpack.c.l.b16 %v1549
    %v6101 = vunpack.c.l.b16 %v1550
    %v6102 = vunpack.c.l.b16 %v1551
    %v6103 = vunpack.c.l.b16 %v1552
    %v6104 = vunpack.c.l.b16 %v1553
    %v6105 = vunpack.c.l.b16 %v1554
    %v6106 = vunpack.c.l.b16 %v1555
    %v6107 = vunpack.c.l.b16 %v1556
    %v6108 = vunpack.c.l.b16 %v1557
    %v6109 = vunpack.c.l.b16 %v1558
    %v6110 = vunpack.c.l.b16 %v1559
    %v6111 = vunpack.c.l.b16 %v1560
    %v6112 = vunpack.c.l.b16 %v1561
    %v6113 = vunpack.c.l.b16 %v1562
    %v6114 = vunpack.c.l.b16 %v1563
    %v6115 = vunpack.c.l.b16 %v1564
    %v6116 = vunpack.c.l.b16 %v1565
    %v6117 = vunpack.c.l.b16 %v1566
    %v6118 = vunpack.c.l.b16 %v1567
    %v6119 = vunpack.c.l.b16 %v1568
    %v6120 = vunpack.c.l.b16 %v1569
    %v6121 = vunpack.c.l.b16 %v1570
    %v6122 = vunpack.c.l.b16 %v1571
    %v6123 = vunpack.c.l.b16 %v1572
    %v6124 = vunpack.c.l.b16 %v1573
    %v6125 = vunpack.c.l.b16 %v1574
    %v6126 = vunpack.c.l.b16 %v1575
    %v6127 = vunpack.c.l.b16 %v1576
    %v6128 = vunpack.c.l.b16 %v1577
    %v6129 = vunpack.c.l.b16 %v1578
    %v6130 = vunpack.c.l.b16 %v1579
    %v6131 = vunpack.c.l.b16 %v1580
    %v6132 = vunpack.c.l.b16 %v1581
    %v6133 = vunpack.c.l.b16 %v1582
    %v6134 = vunpack.c.l.b16 %v1583
    %v6135 = vunpack.c.l.b16 %v1584
    %v6136 = vunpack.c.l.b16 %v1585
    %v6137 = vunpack.c.l.b16 %v1586
    %v6138 = vunpack.c.l.b16 %v1587
    %v6139 = vunpack.c.l.b16 %v1588
    %v6140 = vunpack.c.l.b16 %v1589
    %v6141 = vunpack.c.l.b16 %v1590
    %v6142 = vunpack.c.l.b16 %v1591
    %v6143 = vunpack.c.l.b16 %v1592
    %v6144 = vunpack.c.l.b16 %v1593
    %v6145 = vunpack.c.l.b16 %v1594
    %v6146 = vunpack.c.l.b16 %v1595
    %v6147 = vunpack.c.l.b16 %v1596
    %v6148 = vunpack.c.l.b16 %v1597
    %v6149 = vunpack.c.l.b16 %v1598
    %v6150 = vunpack.c.l.b16 %v1599
    %v6151 = vunpack.c.l.b16 %v1600
    %v6152 = vunpack.c.l.b16 %v1601
    %v6153 = vunpack.c.l.b16 %v1602
    %v6154 = vunpack.c.l.b16 %v1603
    %v6155 = vunpack.c.l.b16 %v1604
    %v6156 = vunpack.c.l.b16 %v1605
    %v6157 = vunpack.c.l.b16 %v1606
    %v6158 = vunpack.c.l.b16 %v1607
    %v6159 = vunpack.c.l.b16 %v1608
    %v6160 = vunpack.c.l.b16 %v1609
    %v6161 = vunpack.c.l.b16 %v1610
    %v6162 = vunpack.c.l.b16 %v1611
    %v6163 = vunpack.c.l.b16 %v1612
    %v6164 = vunpack.c.l.b16 %v1613
    %v6165 = vunpack.c.l.b16 %v1614
    %v6166 = vunpack.c.l.b16 %v1615
    %v6167 = vunpack.c.l.b16 %v1616
    %v6168 = vunpack.c.l.b16 %v1617
    %v6169 = vunpack.c.l.b16 %v1618
    %v6170 = vunpack.c.l.b16 %v1619
    %v6171 = vunpack.c.l.b16 %v1620
    %v6172 = vunpack.c.l.b16 %v1621
    %v6173 = vunpack.c.l.b16 %v1622
    %v6174 = vunpack.c.l.b16 %v1623
    %v6175 = vunpack.c.l.b16 %v1624
    %v6176 = vunpack.c.l.b16 %v1625
    %v6177 = vunpack.c.l.b16 %v1626
    %v6178 = vunpack.c.l.b16 %v1627
    %v6179 = vunpack.c.l.b16 %v1628
    %v6180 = vunpack.c.l.b16 %v1629
    %v6181 = vunpack.c.l.b16 %v1630
    %v6182 = vunpack.c.l.b16 %v1631
    %v6183 = vunpack.c.l.b16 %v1632
    %v6184 = vunpack.c.l.b16 %v1633
    %v6185 = vunpack.c.l.b16 %v1634
    %v6186 = vunpack.c.l.b16 %v1635
    %v6187 = vunpack.c.l.b16 %v1636
    %v6188 = vunpack.c.l.b16 %v1637
    %v6189 = vunpack.c.l.b16 %v1638
    %v6190 = vunpack.c.l.b16 %v1639
    %v6191 = vunpack.c.l.b16 %v1640
    %v6192 = vunpack.c.l.b16 %v1641
    %v6193 = vunpack.c.l.b16 %v1642
    %v6194 = vunpack.c.l.b16 %v1643
    %v6195 = vunpack.c.l.b16 %v1644
    %v6196 = vunpack.c.l.b16 %v1645
    %v6197 = vunpack.c.l.b16 %v1646
    %v6198 = vunpack.c.l.b16 %v1647
    %v6199 = vunpack.c.l.b16 %v1648
    %v6200 = vunpack.c.l.b16 %v1649
    %v6201 = vunpack.c.l.b16 %v1650
    %v6202 = vunpack.c.l.b16 %v1651
    %v6203 = vunpack.c.l.b16 %v1652
    %v6204 = vunpack.c.l.b16 %v1653
    %v6205 = vunpack.c.l.b16 %v1654
    %v6206 = vunpack.c.l.b16 %v1655
    %v6207 = vunpack.c.l.b16 %v1656
    %v6208 = vunpack.c.l.b16 %v1657
    %v6209 = vunpack.c.l.b16 %v1658
    %v6210 = vunpack.c.l.b16 %v1659
    %v6211 = vunpack.c.l.b16 %v1660
    %v6212 = vunpack.c.l.b16 %v1661
    %v6213 = vunpack.c.l.b16 %v1662
    %v6214 = vunpack.c.l.b16 %v1663
    %v6215 = vunpack.c.l.b16 %v1664
    %v6216 = vunpack.c.l.b16 %v1665
    %v6217 = vunpack.c.l.b16 %v1666
    %v6218 = vunpack.c.l.b16 %v1667
    %v6219 = vunpack.c.l.b16 %v1668
    %v6220 = vunpack.c.l.b16 %v1669
    %v6221 = vunpack.c.l.b16 %v1670
    %v6222 = vunpack.c.l.b16 %v1671
    %v6223 = vunpack.c.l.b16 %v1672
    %v6224 = vunpack.c.l.b16 %v1673
    %v6225 = vunpack.c.l.b16 %v1674
    %v6226 = vunpack.c.l.b16 %v1675
    %v6227 = vunpack.c.l.b16 %v1676
    %v6228 = vunpack.c.l.b16 %v1677
    %v6229 = vunpack.c.l.b16 %v1678
    %v6230 = vunpack.c.l.b16 %v1679
    %v6231 = vunpack.c.l.b16 %v1680
    %v6232 = vunpack.c.l.b16 %v1681
    %v6233 = vunpack.c.l.b16 %v1682
    %v6234 = vunpack.c.l.b16 %v1683
    %v6235 = vunpack.c.l.b16 %v1684
    %v6236 = vunpack.c.l.b16 %v1685
    %v6237 = vunpack.c.l.b16 %v1686
    %v6238 = vunpack.c.l.b16 %v1687
    %v6239 = vunpack.c.l.b16 %v1688
    %v6240 = vunpack.c.l.b16 %v1689
    %v6241 = vunpack.c.l.b16 %v1690
    %v6242 = vunpack.c.l.b16 %v1691
    %v6243 = vunpack.c.l.b16 %v1692
    %v6244 = vunpack.c.l.b16 %v1693
    %v6245 = vunpack.c.l.b16 %v1694
    %v6246 = vunpack.c.l.b16 %v1695
    %v6247 = vunpack.c.l.b16 %v1696
    %v6248 = vunpack.c.l.b16 %v1697
    %v6249 = vunpack.c.l.b16 %v1698
    %v6250 = vunpack.c.l.b16 %v1699
    %v6251 = vunpack.c.l.b16 %v1700
    %v6252 = vunpack.c.l.b16 %v1701
    %v6253 = vunpack.c.l.b16 %v1702
    %v6254 = vunpack.c.l.b16 %v1703
    %v6255 = vunpack.c.l.b16 %v1704
    %v6256 = vunpack.c.l.b16 %v1705
    %v6257 = vunpack.c.l.b16 %v1706
    %v6258 = vunpack.c.l.b16 %v1707
    %v6259 = vunpack.c.l.b16 %v1708
    %v6260 = vunpack.c.l.b16 %v1709
    %v6261 = vunpack.c.l.b16 %v1710
    %v6262 = vunpack.c.l.b16 %v1711
    %v6263 = vunpack.c.l.b16 %v1712
    %v6264 = vunpack.c.l.b16 %v1713
    %v6265 = vunpack.c.l.b16 %v1714
    %v6266 = vunpack.c.l.b16 %v1715
    %v6267 = vunpack.c.l.b16 %v1716
    %v6268 = vunpack.c.l.b16 %v1717
    %v6269 = vunpack.c.l.b16 %v1718
    %v6270 = vunpack.c.l.b16 %v1719
    %v6271 = vunpack.c.l.b16 %v1720
    %v6272 = vunpack.c.l.b16 %v1721
    %v6273 = vunpack.c.l.b16 %v1722
    %v6274 = vunpack.c.l.b16 %v1723
    %v6275 = vunpack.c.l.b16 %v1724
    %v6276 = vunpack.c.l.b16 %v1725
    %v6277 = vunpack.c.l.b16 %v1726
    %v6278 = vunpack.c.l.b16 %v1727
    %v6279 = vunpack.c.l.b16 %v1728
    %v6280 = vunpack.c.l.b16 %v1729
    %v6281 = vunpack.c.l.b16 %v1730
    %v6282 = vunpack.c.l.b16 %v1731
    %v6283 = vunpack.c.l.b16 %v1732
    %v6284 = vunpack.c.l.b16 %v1733
    %v6285 = vunpack.c.l.b16 %v1734
    %v6286 = vunpack.c.l.b16 %v1735
    %v6287 = vunpack.c.l.b16 %v1736
    %v6288 = vunpack.c.l.b16 %v1737
    %v6289 = vunpack.c.l.b16 %v1738
    %v6290 = vunpack.c.l.b16 %v1739
    %v6291 = vunpack.c.l.b16 %v1740
    %v6292 = vunpack.c.l.b16 %v1741
    %v6293 = vunpack.c.l.b16 %v1742
    %v6294 = vunpack.c.l.b16 %v1743
    %v6295 = vunpack.c.l.b16 %v1744
    %v6296 = vunpack.c.l.b16 %v1745
    %v6297 = vunpack.c.l.b16 %v1746
    %v6298 = vunpack.c.l.b16 %v1747
    %v6299 = vunpack.c.l.b16 %v1748
    %v6300 = vunpack.c.l.b16 %v1749
    %v6301 = vunpack.c.l.b16 %v1750
    %v6302 = vunpack.c.l.b16 %v1751
    %v6303 = vunpack.c.l.b16 %v1752
    %v6304 = vunpack.c.l.b16 %v1753
    %v6305 = vunpack.c.l.b16 %v1754
    %v6306 = vunpack.c.l.b16 %v1755
    %v6307 = vunpack.c.l.b16 %v1756
    %v6308 = vunpack.c.l.b16 %v1757
    %v6309 = vunpack.c.l.b16 %v1758
    %v6310 = vunpack.c.l.b16 %v1759
    %v6311 = vunpack.c.l.b16 %v1760
    %v6312 = vunpack.c.l.b16 %v1761
    %v6313 = vunpack.c.l.b16 %v1762
    %v6314 = vunpack.c.l.b16 %v1763
    %v6315 = vunpack.c.l.b16 %v1764
    %v6316 = vunpack.c.l.b16 %v1765
    %v6317 = vunpack.c.l.b16 %v1766
    %v6318 = vunpack.c.l.b16 %v1767
    %v6319 = vunpack.c.l.b16 %v1768
    %v6320 = vunpack.c.l.b16 %v1769
    %v6321 = vunpack.c.l.b16 %v1770
    %v6322 = vunpack.c.l.b16 %v1771
    %v6323 = vunpack.c.l.b16 %v1772
    %v6324 = vunpack.c.l.b16 %v1773
    %v6325 = vunpack.c.l.b16 %v1774
    %v6326 = vunpack.c.l.b16 %v1775
    %v6327 = vunpack.c.l.b16 %v1776
    %v6328 = vunpack.c.l.b16 %v1777
    %v6329 = vunpack.c.l.b16 %v1778
    %v6330 = vunpack.c.l.b16 %v1779
    %v6331 = vunpack.c.l.b16 %v1780
    %v6332 = vunpack.c.l.b16 %v1781
    %v6333 = vunpack.c.l.b16 %v1782
    %v6334 = vunpack.c.l.b16 %v1783
    %v6335 = vunpack.c.l.b16 %v1784
    %v6336 = vunpack.c.l.b16 %v1785
    %v6337 = vunpack.c.l.b16 %v1786
    %v6338 = vunpack.c.l.b16 %v1787
    %v6339 = vunpack.c.l.b16 %v1788
    %v6340 = vunpack.c.l.b16 %v1789
    %v6341 = vunpack.c.l.b16 %v1790
    %v6342 = vunpack.c.l.b16 %v1791
    %v6343 = vunpack.c.l.b16 %v1792
    %v6344 = vunpack.c.l.b16 %v1793
    %v6345 = vunpack.c.l.b16 %v1794
    %v6346 = vunpack.c.l.b16 %v1795
    %v6347 = vunpack.c.l.b16 %v1796
    %v6348 = vunpack.c.l.b16 %v1797
    %v6349 = vunpack.c.l.b16 %v1798
    %v6350 = vunpack.c.l.b16 %v1799
    %v6351 = vunpack.c.l.b16 %v1800
    %v6352 = vunpack.c.l.b16 %v1801
    %v6353 = vunpack.c.l.b16 %v1802
    %v6354 = vunpack.c.l.b16 %v1803
    %v6355 = vunpack.c.l.b16 %v1804
    %v6356 = vunpack.c.l.b16 %v1805
    %v6357 = vunpack.c.l.b16 %v1806
    %v6358 = vunpack.c.l.b16 %v1807
    %v6359 = vunpack.c.l.b16 %v1808
    %v6360 = vunpack.c.l.b16 %v1809
    %v6361 = vunpack.c.l.b16 %v1810
    %v6362 = vunpack.c.l.b16 %v1811
    %v6363 = vunpack.c.l.b16 %v1812
    %v6364 = vunpack.c.l.b16 %v1813
    %v6365 = vunpack.c.l.b16 %v1814
    %v6366 = vunpack.c.l.b16 %v1815
    %v6367 = vunpack.c.l.b16 %v1816
    %v6368 = vunpack.c.l.b16 %v1817
    %v6369 = vunpack.c.l.b16 %v1818
    %v6370 = vunpack.c.l.b16 %v1819
    %v6371 = vunpack.c.l.b16 %v1820
    %v6372 = vunpack.c.l.b16 %v1821
    %v6373 = vunpack.c.l.b16 %v1822
    %v6374 = vunpack.c.l.b16 %v1823
    %v6375 = vunpack.c.l.b16 %v1824
    %v6376 = vunpack.c.l.b16 %v1825
    %v6377 = vunpack.c.l.b16 %v1826
    %v6378 = vunpack.c.l.b16 %v1827
    %v6379 = vunpack.c.l.b16 %v1828
    %v6380 = vunpack.c.l.b16 %v1829
    %v6381 = vunpack.c.l.b16 %v1830
    %v6382 = vunpack.c.l.b16 %v1831
    %v6383 = vunpack.c.l.b16 %v1832
    %v6384 = vunpack.c.l.b16 %v1833
    %v6385 = vunpack.c.l.b16 %v1834
    %v6386 = vunpack.c.l.b16 %v1835
    %v6387 = vunpack.c.l.b16 %v1836
    %v6388 = vunpack.c.l.b16 %v1837
    %v6389 = vunpack.c.l.b16 %v1838
    %v6390 = vunpack.c.l.b16 %v1839
    %v6391 = vunpack.c.l.b16 %v1840
    %v6392 = vunpack.c.l.b16 %v1841
    %v6393 = vunpack.c.l.b16 %v1842
    %v6394 = vunpack.c.l.b16 %v1843
    %v6395 = vunpack.c.l.b16 %v1844
    %v6396 = vunpack.c.l.b16 %v1845
    %v6397 = vunpack.c.l.b16 %v1846
    %v6398 = vunpack.c.l.b16 %v1847
    %v6399 = vunpack.c.l.b16 %v1848
    %v6400 = vunpack.c.l.b16 %v1849
    %v6401 = vunpack.c.l.b16 %v1850
    %v6402 = vunpack.c.l.b16 %v1851
    %v6403 = vunpack.c.l.b16 %v1852
    %v6404 = vunpack.c.l.b16 %v1853
    %v6405 = vunpack.c.l.b16 %v1854
    %v6406 = vunpack.c.l.b16 %v1855
    %v6407 = vunpack.c.l.b16 %v1856
    %v6408 = vunpack.c.l.b16 %v1857
    %v6409 = vunpack.c.l.b16 %v1858
    %v6410 = vunpack.c.l.b16 %v1859
    %v6411 = vunpack.c.l.b16 %v1860
    %v6412 = vunpack.c.l.b16 %v1861
    %v6413 = vunpack.c.l.b16 %v1862
    %v6414 = vunpack.c.l.b16 %v1863
    %v6415 = vunpack.c.l.b16 %v1864
    %v6416 = vunpack.c.l.b16 %v1865
    %v6417 = vunpack.c.l.b16 %v1866
    %v6418 = vunpack.c.l.b16 %v1867
    %v6419 = vunpack.c.l.b16 %v1868
    %v6420 = vunpack.c.l.b16 %v1869
    %v6421 = vunpack.c.l.b16 %v1870
    %v6422 = vunpack.c.l.b16 %v1871
    %v6423 = vunpack.c.l.b16 %v1872
    %v6424 = vunpack.c.l.b16 %v1873
    %v6425 = vunpack.c.l.b16 %v1874
    %v6426 = vunpack.c.l.b16 %v1875
    %v6427 = vunpack.c.l.b16 %v1876
    %v6428 = vunpack.c.l.b16 %v1877
    %v6429 = vunpack.c.l.b16 %v1878
    %v6430 = vunpack.c.l.b16 %v1879
    %v6431 = vunpack.c.l.b16 %v1880
    %v6432 = vunpack.c.l.b16 %v1881
    %v6433 = vunpack.c.l.b16 %v1882
    %v6434 = vunpack.c.l.b16 %v1883
    %v6435 = vunpack.c.l.b16 %v1884
    %v6436 = vunpack.c.l.b16 %v1885
    %v6437 = vunpack.c.l.b16 %v1886
    %v6438 = vunpack.c.l.b16 %v1887
    %v6439 = vunpack.c.l.b16 %v1888
    %v6440 = vunpack.c.l.b16 %v1889
    %v6441 = vunpack.c.l.b16 %v1890
    %v6442 = vunpack.c.l.b16 %v1891
    %v6443 = vunpack.c.l.b16 %v1892
    %v6444 = vunpack.c.l.b16 %v1893
    %v6445 = vunpack.c.l.b16 %v1894
    %v6446 = vunpack.c.l.b16 %v1895
    %v6447 = vunpack.c.l.b16 %v1896
    %v6448 = vunpack.c.l.b16 %v1897
    %v6449 = vunpack.c.l.b16 %v1898
    %v6450 = vunpack.c.l.b16 %v1899
    %v6451 = vunpack.c.l.b16 %v1900
    %v6452 = vunpack.c.l.b16 %v1901
    %v6453 = vunpack.c.l.b16 %v1902
    %v6454 = vunpack.c.l.b16 %v1903
    %v6455 = vunpack.c.l.b16 %v1904
    %v6456 = vunpack.c.l.b16 %v1905
    %v6457 = vunpack.c.l.b16 %v1906
    %v6458 = vunpack.c.l.b16 %v1907
    %v6459 = vunpack.c.l.b16 %v1908
    %v6460 = vunpack.c.l.b16 %v1909
    %v6461 = vunpack.c.l.b16 %v1910
    %v6462 = vunpack.c.l.b16 %v1911
    %v6463 = vunpack.c.l.b16 %v1912
    %v6464 = vunpack.c.l.b16 %v1913
    %v6465 = vunpack.c.l.b16 %v1914
    %v6466 = vunpack.c.l.b16 %v1915
    %v6467 = vunpack.c.l.b16 %v1916
    %v6468 = vunpack.c.l.b16 %v1917
    %v6469 = vunpack.c.l.b16 %v1918
    %v6470 = vunpack.c.l.b16 %v1919
    %v6471 = vunpack.c.l.b16 %v1920
    %v6472 = vunpack.c.l.b16 %v1921
    %v6473 = vunpack.c.l.b16 %v1922
    %v6474 = vunpack.c.l.b16 %v1923
    %v6475 = vunpack.c.l.b16 %v1924
    %v6476 = vunpack.c.l.b16 %v1925
    %v6477 = vunpack.c.l.b16 %v1926
    %v6478 = vunpack.c.l.b16 %v1927
    %v6479 = vunpack.c.l.b16 %v1928
    %v6480 = vunpack.c.l.b16 %v1929
    %v6481 = vunpack.c.l.b16 %v1930
    %v6482 = vunpack.c.l.b16 %v1931
    %v6483 = vunpack.c.l.b16 %v1932
    %v6484 = vunpack.c.l.b16 %v1933
    %v6485 = vunpack.c.l.b16 %v1934
    %v6486 = vunpack.c.l.b16 %v1935
    %v6487 = vunpack.c.l.b16 %v1936
    %v6488 = vunpack.c.l.b16 %v1937
    %v6489 = vunpack.c.l.b16 %v1938
    %v6490 = vunpack.c.l.b16 %v1939
    %v6491 = vunpack.c.l.b16 %v1940
    %v6492 = vunpack.c.l.b16 %v1941
    %v6493 = vunpack.c.l.b16 %v1942
    %v6494 = vunpack.c.l.b16 %v1943
    %v6495 = vunpack.c.l.b16 %v1944
    %v6496 = vunpack.c.l.b16 %v1945
    %v6497 = vunpack.c.l.b16 %v1946
    %v6498 = vunpack.c.l.b16 %v1947
    %v6499 = vunpack.c.l.b16 %v1948
    %v6500 = vunpack.c.l.b16 %v1949
    %v6501 = vunpack.c.l.b16 %v1950
    %v6502 = vunpack.c.l.b16 %v1951
    %v6503 = vunpack.c.l.b16 %v1952
    %v6504 = vunpack.c.l.b16 %v1953
    %v6505 = vunpack.c.l.b16 %v1954
    %v6506 = vunpack.c.l.b16 %v1955
    %v6507 = vunpack.c.l.b16 %v1956
    %v6508 = vunpack.c.l.b16 %v1957
    %v6509 = vunpack.c.l.b16 %v1958
    %v6510 = vunpack.c.l.b16 %v1959
    %v6511 = vunpack.c.l.b16 %v1960
    %v6512 = vunpack.c.l.b16 %v1961
    %v6513 = vunpack.c.l.b16 %v1962
    %v6514 = vunpack.c.l.b16 %v1963
    %v6515 = vunpack.c.l.b16 %v1964
    %v6516 = vunpack.c.l.b16 %v1965
    %v6517 = vunpack.c.l.b16 %v1966
    %v6518 = vunpack.c.l.b16 %v1967
    %v6519 = vunpack.c.l.b16 %v1968
    %v6520 = vunpack.c.l.b16 %v1969
    %v6521 = vunpack.c.l.b16 %v1970
    %v6522 = vunpack.c.l.b16 %v1971
    %v6523 = vunpack.c.l.b16 %v1972
    %v6524 = vunpack.c.l.b16 %v1973
    %v6525 = vunpack.c.l.b16 %v1974
    %v6526 = vunpack.c.l.b16 %v1975
    %v6527 = vunpack.c.l.b16 %v1976
    %v6528 = vunpack.c.l.b16 %v1977
    %v6529 = vunpack.c.l.b16 %v1978
    %v6530 = vunpack.c.l.b16 %v1979
    %v6531 = vunpack.c.l.b16 %v1980
    %v6532 = vunpack.c.l.b16 %v1981
    %v6533 = vunpack.c.l.b16 %v1982
    %v6534 = vunpack.c.l.b16 %v1983
    %v6535 = vunpack.c.l.b16 %v1984
    %v6536 = vunpack.c.l.b16 %v1985
    %v6537 = vunpack.c.l.b16 %v1986
    %v6538 = vunpack.c.l.b16 %v1987
    %v6539 = vunpack.c.l.b16 %v1988
    %v6540 = vunpack.c.l.b16 %v1989
    %v6541 = vunpack.c.l.b16 %v1990
    %v6542 = vunpack.c.l.b16 %v1991
    %v6543 = vunpack.c.l.b16 %v1992
    %v6544 = vunpack.c.l.b16 %v1993
    %v6545 = vunpack.c.l.b16 %v1994
    %v6546 = vunpack.c.l.b16 %v1995
    %v6547 = vunpack.c.l.b16 %v1996
    %v6548 = vunpack.c.l.b16 %v1997
    %v6549 = vunpack.c.l.b16 %v1998
    %v6550 = vunpack.c.l.b16 %v1999
    %v6551 = vunpack.c.l.b16 %v2000
    %v6552 = vunpack.c.l.b16 %v2001
    %v6553 = vunpack.c.l.b16 %v2002
    %v6554 = vunpack.c.l.b16 %v2003
    %v6555 = vunpack.c.l.b16 %v2004
    %v6556 = vunpack.c.l.b16 %v2005
    %v6557 = vunpack.c.l.b16 %v2006
    %v6558 = vunpack.c.l.b16 %v2007
    %v6559 = vunpack.c.l.b16 %v2008
    %v6560 = vunpack.c.l.b16 %v2009
    %v6561 = vunpack.c.l.b16 %v2010
    %v6562 = vunpack.c.l.b16 %v2011
    %v6563 = vunpack.c.l.b16 %v2012
    %v6564 = vunpack.c.l.b16 %v2013
    %v6565 = vunpack.c.l.b16 %v2014
    %v6566 = vunpack.c.l.b16 %v2015
    %v6567 = vunpack.c.l.b16 %v2016
    %v6568 = vunpack.c.l.b16 %v2017
    %v6569 = vunpack.c.l.b16 %v2018
    %v6570 = vunpack.c.l.b16 %v2019
    %v6571 = vunpack.c.l.b16 %v2020
    %v6572 = vunpack.c.l.b16 %v2021
    %v6573 = vunpack.c.l.b16 %v2022
    %v6574 = vunpack.c.l.b16 %v2023
    %v6575 = vunpack.c.l.b16 %v2024
    %v6576 = vunpack.c.l.b16 %v2025
    %v6577 = vunpack.c.l.b16 %v2026
    %v6578 = vunpack.c.l.b16 %v2027
    %v6579 = vunpack.c.l.b16 %v2028
    %v6580 = vunpack.c.l.b16 %v2029
    %v6581 = vunpack.c.l.b16 %v2030
    %v6582 = vunpack.c.l.b16 %v2031
    %v6583 = vunpack.c.l.b16 %v2032
    %v6584 = vunpack.c.l.b16 %v2033
    %v6585 = vunpack.c.l.b16 %v2034
    %v6586 = vunpack.c.l.b16 %v2035
    %v6587 = vunpack.c.l.b16 %v2036
    %v6588 = vunpack.c.l.b16 %v2037
    %v6589 = vunpack.c.l.b16 %v2038
    %v6590 = vunpack.c.l.b16 %v2039
    %v6591 = vunpack.c.l.b16 %v2040
    %v6592 = vunpack.c.l.b16 %v2041
    %v6593 = vunpack.c.l.b16 %v2042
    %v6594 = vunpack.c.l.b16 %v2043
    %v6595 = vunpack.c.l.b16 %v2044
    %v6596 = vunpack.c.l.b16 %v2045
    %v6597 = vunpack.c.l.b16 %v2046
    %v6598 = vunpack.c.l.b16 %v2047
    %v6599 = vunpack.c.l.b16 %v2048
    %v6600 = vunpack.c.l.b16 %v2049
    %v6601 = vunpack.c.l.b16 %v2050
    %v6602 = vunpack.c.l.b16 %v2051
    %v6603 = vunpack.c.l.b16 %v2052
    %v6604 = vunpack.c.l.b16 %v2053
    %v6605 = vunpack.c.l.b16 %v2054
    %v6606 = vunpack.c.l.b16 %v2055
    %v6607 = vunpack.c.l.b16 %v2056
    %v6608 = vunpack.c.l.b16 %v2057
    %v6609 = vunpack.c.l.b16 %v2058
    %v6610 = vunpack.c.l.b16 %v2059
    %v6611 = vunpack.c.l.b16 %v2060
    %v6612 = vunpack.c.l.b16 %v2061
    %v6613 = vunpack.c.l.b16 %v2062
    %v6614 = vunpack.c.l.b16 %v2063
    %v6615 = vunpack.c.l.b16 %v2064
    %v6616 = vunpack.c.l.b16 %v2065
    %v6617 = vunpack.c.l.b16 %v2066
    %v6618 = vunpack.c.l.b16 %v2067
    %v6619 = vunpack.c.l.b16 %v2068
    %v6620 = vunpack.c.l.b16 %v2069
    %v6621 = vunpack.c.l.b16 %v2070
    %v6622 = vunpack.c.l.b16 %v2071
    %v6623 = vunpack.c.l.b16 %v2072
    %v6624 = vunpack.c.l.b16 %v2073
    %v6625 = vunpack.c.l.b16 %v2074
    %v6626 = vunpack.c.l.b16 %v2075
    %v6627 = vunpack.c.l.b16 %v2076
    %v6628 = vunpack.c.l.b16 %v2077
    %v6629 = vunpack.c.l.b16 %v2078
    %v6630 = vunpack.c.l.b16 %v2079
    %v6631 = vunpack.c.l.b16 %v2080
    %v6632 = vunpack.c.l.b16 %v2081
    %v6633 = vunpack.c.l.b16 %v2082
    %v6634 = vunpack.c.l.b16 %v2083
    %v6635 = vunpack.c.l.b16 %v2084
    %v6636 = vunpack.c.l.b16 %v2085
    %v6637 = vunpack.c.l.b16 %v2086
    %v6638 = vunpack.c.l.b16 %v2087
    %v6639 = vunpack.c.l.b16 %v2088
    %v6640 = vunpack.c.l.b16 %v2089
    %v6641 = vunpack.c.l.b16 %v2090
    %v6642 = vunpack.c.l.b16 %v2091
    %v6643 = vunpack.c.l.b16 %v2092
    %v6644 = vunpack.c.l.b16 %v2093
    %v6645 = vunpack.c.l.b16 %v2094
    %v6646 = vunpack.c.l.b16 %v2095
    %v6647 = vunpack.c.l.b16 %v2096
    %v6648 = vunpack.c.l.b16 %v2097
    %v6649 = vunpack.c.l.b16 %v2098
    %v6650 = vunpack.c.l.b16 %v2099
    %v6651 = vunpack.c.l.b16 %v2100
    %v6652 = vunpack.c.l.b16 %v2101
    %v6653 = vunpack.c.l.b16 %v2102
    %v6654 = vunpack.c.l.b16 %v2103
    %v6655 = vunpack.c.l.b16 %v2104
    %v6656 = vunpack.c.l.b16 %v2105
    %v6657 = vunpack.c.l.b16 %v2106
    %v6658 = vunpack.c.l.b16 %v2107
    %v6659 = vunpack.c.l.b16 %v2108
    %v6660 = vunpack.c.l.b16 %v2109
    %v6661 = vunpack.c.l.b16 %v2110
    %v6662 = vunpack.c.l.b16 %v2111
    %v6663 = vunpack.c.l.b16 %v2112
    %v6664 = vunpack.c.l.b16 %v2113
    %v6665 = vunpack.c.l.b16 %v2114
    %v6666 = vunpack.c.l.b16 %v2115
    %v6667 = vunpack.c.l.b16 %v2116
    %v6668 = vunpack.c.l.b16 %v2117
    %v6669 = vunpack.c.l.b16 %v2118
    %v6670 = vunpack.c.l.b16 %v2119
    %v6671 = vunpack.c.l.b16 %v2120
    %v6672 = vunpack.c.l.b16 %v2121
    %v6673 = vunpack.c.l.b16 %v2122
    %v6674 = vunpack.c.l.b16 %v2123
    %v6675 = vunpack.c.l.b16 %v2124
    %v6676 = vunpack.c.l.b16 %v2125
    %v6677 = vunpack.c.l.b16 %v2126
    %v6678 = vunpack.c.l.b16 %v2127
    %v6679 = vunpack.c.l.b16 %v2128
    %v6680 = vunpack.c.l.b16 %v2129
    %v6681 = vunpack.c.l.b16 %v2130
    %v6682 = vunpack.c.l.b16 %v2131
    %v6683 = vunpack.c.l.b16 %v2132
    %v6684 = vunpack.c.l.b16 %v2133
    %v6685 = vunpack.c.l.b16 %v2134
    %v6686 = vunpack.c.l.b16 %v2135
    %v6687 = vunpack.c.l.b16 %v2136
    %v6688 = vunpack.c.l.b16 %v2137
    %v6689 = vunpack.c.l.b16 %v2138
    %v6690 = vunpack.c.l.b16 %v2139
    %v6691 = vunpack.c.l.b16 %v2140
    %v6692 = vunpack.c.l.b16 %v2141
    %v6693 = vunpack.c.l.b16 %v2142
    %v6694 = vunpack.c.l.b16 %v2143
    %v6695 = vunpack.c.l.b16 %v2144
    %v6696 = vunpack.c.l.b16 %v2145
    %v6697 = vunpack.c.l.b16 %v2146
    %v6698 = vunpack.c.l.b16 %v2147
    %v6699 = vunpack.c.l.b16 %v2148
    %v6700 = vunpack.c.l.b16 %v2149
    %v6701 = vunpack.c.l.b16 %v2150
    %v6702 = vunpack.c.l.b16 %v2151
    %v6703 = vunpack.c.l.b16 %v2152
    %v6704 = vunpack.c.l.b16 %v2153
    %v6705 = vunpack.c.l.b16 %v2154
    %v6706 = vunpack.c.l.b16 %v2155
    %v6707 = vunpack.c.l.b16 %v2156
    %v6708 = vunpack.c.l.b16 %v2157
    %v6709 = vunpack.c.l.b16 %v2158
    %v6710 = vunpack.c.l.b16 %v2159
    %v6711 = vunpack.c.l.b16 %v2160
    %v6712 = vunpack.c.l.b16 %v2161
    %v6713 = vunpack.c.l.b16 %v2162
    %v6714 = vunpack.c.l.b16 %v2163
    %v6715 = vunpack.c.l.b16 %v2164
    %v6716 = vpack.c.b16 %v4669, %v4668
    %v6717 = vpack.c.b16 %v4671, %v4670
    %v6718 = vpack.c.b16 %v4673, %v4672
    %v6719 = vpack.c.b16 %v4675, %v4674
    %v6720 = vpack.c.b16 %v4677, %v4676
    %v6721 = vpack.c.b16 %v4679, %v4678
    %v6722 = vpack.c.b16 %v4681, %v4680
    %v6723 = vpack.c.b16 %v4683, %v4682
    %v6724 = vpack.c.b16 %v4685, %v4684
    %v6725 = vpack.c.b16 %v4687, %v4686
    %v6726 = vpack.c.b16 %v4689, %v4688
    %v6727 = vpack.c.b16 %v4691, %v4690
    %v6728 = vpack.c.b16 %v4693, %v4692
    %v6729 = vpack.c.b16 %v4695, %v4694
    %v6730 = vpack.c.b16 %v4697, %v4696
    %v6731 = vpack.c.b16 %v4699, %v4698
    %v6732 = vpack.c.b16 %v4701, %v4700
    %v6733 = vpack.c.b16 %v4703, %v4702
    %v6734 = vpack.c.b16 %v4705, %v4704
    %v6735 = vpack.c.b16 %v4707, %v4706
    %v6736 = vpack.c.b16 %v4709, %v4708
    %v6737 = vpack.c.b16 %v4711, %v4710
    %v6738 = vpack.c.b16 %v4713, %v4712
    %v6739 = vpack.c.b16 %v4715, %v4714
    %v6740 = vpack.c.b16 %v4717, %v4716
    %v6741 = vpack.c.b16 %v4719, %v4718
    %v6742 = vpack.c.b16 %v4721, %v4720
    %v6743 = vpack.c.b16 %v4723, %v4722
    %v6744 = vpack.c.b16 %v4725, %v4724
    %v6745 = vpack.c.b16 %v4727, %v4726
    %v6746 = vpack.c.b16 %v4729, %v4728
    %v6747 = vpack.c.b16 %v4731, %v4730
    %v6748 = vpack.c.b16 %v4733, %v4732
    %v6749 = vpack.c.b16 %v4735, %v4734
    %v6750 = vpack.c.b16 %v4737, %v4736
    %v6751 = vpack.c.b16 %v4739, %v4738
    %v6752 = vpack.c.b16 %v4741, %v4740
    %v6753 = vpack.c.b16 %v4743, %v4742
    %v6754 = vpack.c.b16 %v4745, %v4744
    %v6755 = vpack.c.b16 %v4747, %v4746
    %v6756 = vpack.c.b16 %v4749, %v4748
    %v6757 = vpack.c.b16 %v4751, %v4750
    %v6758 = vpack.c.b16 %v4753, %v4752
    %v6759 = vpack.c.b16 %v4755, %v4754
    %v6760 = vpack.c.b16 %v4757, %v4756
    %v6761 = vpack.c.b16 %v4759, %v4758
    %v6762 = vpack.c.b16 %v4761, %v4760
    %v6763 = vpack.c.b16 %v4763, %v4762
    %v6764 = vpack.c.b16 %v4765, %v4764
    %v6765 = vpack.c.b16 %v4767, %v4766
    %v6766 = vpack.c.b16 %v4769, %v4768
    %v6767 = vpack.c.b16 %v4771, %v4770
    %v6768 = vpack.c.b16 %v4773, %v4772
    %v6769 = vpack.c.b16 %v4775, %v4774
    %v6770 = vpack.c.b16 %v4777, %v4776
    %v6771 = vpack.c.b16 %v4779, %v4778
    %v6772 = vpack.c.b16 %v4781, %v4780
    %v6773 = vpack.c.b16 %v4783, %v4782
    %v6774 = vpack.c.b16 %v4785, %v4784
    %v6775 = vpack.c.b16 %v4787, %v4786
    %v6776 = vpack.c.b16 %v4789, %v4788
    %v6777 = vpack.c.b16 %v4791, %v4790
    %v6778 = vpack.c.b16 %v4793, %v4792
    %v6779 = vpack.c.b16 %v4795, %v4794
    %v6780 = vpack.c.b16 %v4797, %v4796
    %v6781 = vpack.c.b16 %v4799, %v4798
    %v6782 = vpack.c.b16 %v4801, %v4800
    %v6783 = vpack.c.b16 %v4803, %v4802
    %v6784 = vpack.c.b16 %v4805, %v4804
    %v6785 = vpack.c.b16 %v4807, %v4806
    %v6786 = vpack.c.b16 %v4809, %v4808
    %v6787 = vpack.c.b16 %v4811, %v4810
    %v6788 = vpack.c.b16 %v4813, %v4812
    %v6789 = vpack.c.b16 %v4815, %v4814
    %v6790 = vpack.c.b16 %v4817, %v4816
    %v6791 = vpack.c.b16 %v4819, %v4818
    %v6792 = vpack.c.b16 %v4821, %v4820
    %v6793 = vpack.c.b16 %v4823, %v4822
    %v6794 = vpack.c.b16 %v4825, %v4824
    %v6795 = vpack.c.b16 %v4827, %v4826
    %v6796 = vpack.c.b16 %v4829, %v4828
    %v6797 = vpack.c.b16 %v4831, %v4830
    %v6798 = vpack.c.b16 %v4833, %v4832
    %v6799 = vpack.c.b16 %v4835, %v4834
    %v6800 = vpack.c.b16 %v4837, %v4836
    %v6801 = vpack.c.b16 %v4839, %v4838
    %v6802 = vpack.c.b16 %v4841, %v4840
    %v6803 = vpack.c.b16 %v4843, %v4842
    %v6804 = vpack.c.b16 %v4845, %v4844
    %v6805 = vpack.c.b16 %v4847, %v4846
    %v6806 = vpack.c.b16 %v4849, %v4848
    %v6807 = vpack.c.b16 %v4851, %v4850
    %v6808 = vpack.c.b16 %v4853, %v4852
    %v6809 = vpack.c.b16 %v4855, %v4854
    %v6810 = vpack.c.b16 %v4857, %v4856
    %v6811 = vpack.c.b16 %v4859, %v4858
    %v6812 = vpack.c.b16 %v4861, %v4860
    %v6813 = vpack.c.b16 %v4863, %v4862
    %v6814 = vpack.c.b16 %v4865, %v4864
    %v6815 = vpack.c.b16 %v4867, %v4866
    %v6816 = vpack.c.b16 %v4869, %v4868
    %v6817 = vpack.c.b16 %v4871, %v4870
    %v6818 = vpack.c.b16 %v4873, %v4872
    %v6819 = vpack.c.b16 %v4875, %v4874
    %v6820 = vpack.c.b16 %v4877, %v4876
    %v6821 = vpack.c.b16 %v4879, %v4878
    %v6822 = vpack.c.b16 %v4881, %v4880
    %v6823 = vpack.c.b16 %v4883, %v4882
    %v6824 = vpack.c.b16 %v4885, %v4884
    %v6825 = vpack.c.b16 %v4887, %v4886
    %v6826 = vpack.c.b16 %v4889, %v4888
    %v6827 = vpack.c.b16 %v4891, %v4890
    %v6828 = vpack.c.b16 %v4893, %v4892
    %v6829 = vpack.c.b16 %v4895, %v4894
    %v6830 = vpack.c.b16 %v4897, %v4896
    %v6831 = vpack.c.b16 %v4899, %v4898
    %v6832 = vpack.c.b16 %v4901, %v4900
    %v6833 = vpack.c.b16 %v4903, %v4902
    %v6834 = vpack.c.b16 %v4905, %v4904
    %v6835 = vpack.c.b16 %v4907, %v4906
    %v6836 = vpack.c.b16 %v4909, %v4908
    %v6837 = vpack.c.b16 %v4911, %v4910
    %v6838 = vpack.c.b16 %v4913, %v4912
    %v6839 = vpack.c.b16 %v4915, %v4914
    %v6840 = vpack.c.b16 %v4917, %v4916
    %v6841 = vpack.c.b16 %v4919, %v4918
    %v6842 = vpack.c.b16 %v4921, %v4920
    %v6843 = vpack.c.b16 %v4923, %v4922
    %v6844 = vpack.c.b16 %v4925, %v4924
    %v6845 = vpack.c.b16 %v4927, %v4926
    %v6846 = vpack.c.b16 %v4929, %v4928
    %v6847 = vpack.c.b16 %v4931, %v4930
    %v6848 = vpack.c.b16 %v4933, %v4932
    %v6849 = vpack.c.b16 %v4935, %v4934
    %v6850 = vpack.c.b16 %v4937, %v4936
    %v6851 = vpack.c.b16 %v4939, %v4938
    %v6852 = vpack.c.b16 %v4941, %v4940
    %v6853 = vpack.c.b16 %v4943, %v4942
    %v6854 = vpack.c.b16 %v4945, %v4944
    %v6855 = vpack.c.b16 %v4947, %v4946
    %v6856 = vpack.c.b16 %v4949, %v4948
    %v6857 = vpack.c.b16 %v4951, %v4950
    %v6858 = vpack.c.b16 %v4953, %v4952
    %v6859 = vpack.c.b16 %v4955, %v4954
    %v6860 = vpack.c.b16 %v4957, %v4956
    %v6861 = vpack.c.b16 %v4959, %v4958
    %v6862 = vpack.c.b16 %v4961, %v4960
    %v6863 = vpack.c.b16 %v4963, %v4962
    %v6864 = vpack.c.b16 %v4965, %v4964
    %v6865 = vpack.c.b16 %v4967, %v4966
    %v6866 = vpack.c.b16 %v4969, %v4968
    %v6867 = vpack.c.b16 %v4971, %v4970
    %v6868 = vpack.c.b16 %v4973, %v4972
    %v6869 = vpack.c.b16 %v4975, %v4974
    %v6870 = vpack.c.b16 %v4977, %v4976
    %v6871 = vpack.c.b16 %v4979, %v4978
    %v6872 = vpack.c.b16 %v4981, %v4980
    %v6873 = vpack.c.b16 %v4983, %v4982
    %v6874 = vpack.c.b16 %v4985, %v4984
    %v6875 = vpack.c.b16 %v4987, %v4986
    %v6876 = vpack.c.b16 %v4989, %v4988
    %v6877 = vpack.c.b16 %v4991, %v4990
    %v6878 = vpack.c.b16 %v4993, %v4992
    %v6879 = vpack.c.b16 %v4995, %v4994
    %v6880 = vpack.c.b16 %v4997, %v4996
    %v6881 = vpack.c.b16 %v4999, %v4998
    %v6882 = vpack.c.b16 %v5001, %v5000
    %v6883 = vpack.c.b16 %v5003, %v5002
    %v6884 = vpack.c.b16 %v5005, %v5004
    %v6885 = vpack.c.b16 %v5007, %v5006
    %v6886 = vpack.c.b16 %v5009, %v5008
    %v6887 = vpack.c.b16 %v5011, %v5010
    %v6888 = vpack.c.b16 %v5013, %v5012
    %v6889 = vpack.c.b16 %v5015, %v5014
    %v6890 = vpack.c.b16 %v5017, %v5016
    %v6891 = vpack.c.b16 %v5019, %v5018
    %v6892 = vpack.c.b16 %v5021, %v5020
    %v6893 = vpack.c.b16 %v5023, %v5022
    %v6894 = vpack.c.b16 %v5025, %v5024
    %v6895 = vpack.c.b16 %v5027, %v5026
    %v6896 = vpack.c.b16 %v5029, %v5028
    %v6897 = vpack.c.b16 %v5031, %v5030
    %v6898 = vpack.c.b16 %v5033, %v5032
    %v6899 = vpack.c.b16 %v5035, %v5034
    %v6900 = vpack.c.b16 %v5037, %v5036
    %v6901 = vpack.c.b16 %v5039, %v5038
    %v6902 = vpack.c.b16 %v5041, %v5040
    %v6903 = vpack.c.b16 %v5043, %v5042
    %v6904 = vpack.c.b16 %v5045, %v5044
    %v6905 = vpack.c.b16 %v5047, %v5046
    %v6906 = vpack.c.b16 %v5049, %v5048
    %v6907 = vpack.c.b16 %v5051, %v5050
    %v6908 = vpack.c.b16 %v5053, %v5052
    %v6909 = vpack.c.b16 %v5055, %v5054
    %v6910 = vpack.c.b16 %v5057, %v5056
    %v6911 = vpack.c.b16 %v5059, %v5058
    %v6912 = vpack.c.b16 %v5061, %v5060
    %v6913 = vpack.c.b16 %v5063, %v5062
    %v6914 = vpack.c.b16 %v5065, %v5064
    %v6915 = vpack.c.b16 %v5067, %v5066
    %v6916 = vpack.c.b16 %v5069, %v5068
    %v6917 = vpack.c.b16 %v5071, %v5070
    %v6918 = vpack.c.b16 %v5073, %v5072
    %v6919 = vpack.c.b16 %v5075, %v5074
    %v6920 = vpack.c.b16 %v5077, %v5076
    %v6921 = vpack.c.b16 %v5079, %v5078
    %v6922 = vpack.c.b16 %v5081, %v5080
    %v6923 = vpack.c.b16 %v5083, %v5082
    %v6924 = vpack.c.b16 %v5085, %v5084
    %v6925 = vpack.c.b16 %v5087, %v5086
    %v6926 = vpack.c.b16 %v5089, %v5088
    %v6927 = vpack.c.b16 %v5091, %v5090
    %v6928 = vpack.c.b16 %v5093, %v5092
    %v6929 = vpack.c.b16 %v5095, %v5094
    %v6930 = vpack.c.b16 %v5097, %v5096
    %v6931 = vpack.c.b16 %v5099, %v5098
    %v6932 = vpack.c.b16 %v5101, %v5100
    %v6933 = vpack.c.b16 %v5103, %v5102
    %v6934 = vpack.c.b16 %v5105, %v5104
    %v6935 = vpack.c.b16 %v5107, %v5106
    %v6936 = vpack.c.b16 %v5109, %v5108
    %v6937 = vpack.c.b16 %v5111, %v5110
    %v6938 = vpack.c.b16 %v5113, %v5112
    %v6939 = vpack.c.b16 %v5115, %v5114
    %v6940 = vpack.c.b16 %v5117, %v5116
    %v6941 = vpack.c.b16 %v5119, %v5118
    %v6942 = vpack.c.b16 %v5121, %v5120
    %v6943 = vpack.c.b16 %v5123, %v5122
    %v6944 = vpack.c.b16 %v5125, %v5124
    %v6945 = vpack.c.b16 %v5127, %v5126
    %v6946 = vpack.c.b16 %v5129, %v5128
    %v6947 = vpack.c.b16 %v5131, %v5130
    %v6948 = vpack.c.b16 %v5133, %v5132
    %v6949 = vpack.c.b16 %v5135, %v5134
    %v6950 = vpack.c.b16 %v5137, %v5136
    %v6951 = vpack.c.b16 %v5139, %v5138
    %v6952 = vpack.c.b16 %v5141, %v5140
    %v6953 = vpack.c.b16 %v5143, %v5142
    %v6954 = vpack.c.b16 %v5145, %v5144
    %v6955 = vpack.c.b16 %v5147, %v5146
    %v6956 = vpack.c.b16 %v5149, %v5148
    %v6957 = vpack.c.b16 %v5151, %v5150
    %v6958 = vpack.c.b16 %v5153, %v5152
    %v6959 = vpack.c.b16 %v5155, %v5154
    %v6960 = vpack.c.b16 %v5157, %v5156
    %v6961 = vpack.c.b16 %v5159, %v5158
    %v6962 = vpack.c.b16 %v5161, %v5160
    %v6963 = vpack.c.b16 %v5163, %v5162
    %v6964 = vpack.c.b16 %v5165, %v5164
    %v6965 = vpack.c.b16 %v5167, %v5166
    %v6966 = vpack.c.b16 %v5169, %v5168
    %v6967 = vpack.c.b16 %v5171, %v5170
    %v6968 = vpack.c.b16 %v5173, %v5172
    %v6969 = vpack.c.b16 %v5175, %v5174
    %v6970 = vpack.c.b16 %v5177, %v5176
    %v6971 = vpack.c.b16 %v5179, %v5178
    %v6972 = vpack.c.b16 %v5181, %v5180
    %v6973 = vpack.c.b16 %v5183, %v5182
    %v6974 = vpack.c.b16 %v5185, %v5184
    %v6975 = vpack.c.b16 %v5187, %v5186
    %v6976 = vpack.c.b16 %v5189, %v5188
    %v6977 = vpack.c.b16 %v5191, %v5190
    %v6978 = vpack.c.b16 %v5193, %v5192
    %v6979 = vpack.c.b16 %v5195, %v5194
    %v6980 = vpack.c.b16 %v5197, %v5196
    %v6981 = vpack.c.b16 %v5199, %v5198
    %v6982 = vpack.c.b16 %v5201, %v5200
    %v6983 = vpack.c.b16 %v5203, %v5202
    %v6984 = vpack.c.b16 %v5205, %v5204
    %v6985 = vpack.c.b16 %v5207, %v5206
    %v6986 = vpack.c.b16 %v5209, %v5208
    %v6987 = vpack.c.b16 %v5211, %v5210
    %v6988 = vpack.c.b16 %v5213, %v5212
    %v6989 = vpack.c.b16 %v5215, %v5214
    %v6990 = vpack.c.b16 %v5217, %v5216
    %v6991 = vpack.c.b16 %v5219, %v5218
    %v6992 = vpack.c.b16 %v5221, %v5220
    %v6993 = vpack.c.b16 %v5223, %v5222
    %v6994 = vpack.c.b16 %v5225, %v5224
    %v6995 = vpack.c.b16 %v5227, %v5226
    %v6996 = vpack.c.b16 %v5229, %v5228
    %v6997 = vpack.c.b16 %v5231, %v5230
    %v6998 = vpack.c.b16 %v5233, %v5232
    %v6999 = vpack.c.b16 %v5235, %v5234
    %v7000 = vpack.c.b16 %v5237, %v5236
    %v7001 = vpack.c.b16 %v5239, %v5238
    %v7002 = vpack.c.b16 %v5241, %v5240
    %v7003 = vpack.c.b16 %v5243, %v5242
    %v7004 = vpack.c.b16 %v5245, %v5244
    %v7005 = vpack.c.b16 %v5247, %v5246
    %v7006 = vpack.c.b16 %v5249, %v5248
    %v7007 = vpack.c.b16 %v5251, %v5250
    %v7008 = vpack.c.b16 %v5253, %v5252
    %v7009 = vpack.c.b16 %v5255, %v5254
    %v7010 = vpack.c.b16 %v5257, %v5256
    %v7011 = vpack.c.b16 %v5259, %v5258
    %v7012 = vpack.c.b16 %v5261, %v5260
    %v7013 = vpack.c.b16 %v5263, %v5262
    %v7014 = vpack.c.b16 %v5265, %v5264
    %v7015 = vpack.c.b16 %v5267, %v5266
    %v7016 = vpack.c.b16 %v5269, %v5268
    %v7017 = vpack.c.b16 %v5271, %v5270
    %v7018 = vpack.c.b16 %v5273, %v5272
    %v7019 = vpack.c.b16 %v5275, %v5274
    %v7020 = vpack.c.b16 %v5277, %v5276
    %v7021 = vpack.c.b16 %v5279, %v5278
    %v7022 = vpack.c.b16 %v5281, %v5280
    %v7023 = vpack.c.b16 %v5283, %v5282
    %v7024 = vpack.c.b16 %v5285, %v5284
    %v7025 = vpack.c.b16 %v5287, %v5286
    %v7026 = vpack.c.b16 %v5289, %v5288
    %v7027 = vpack.c.b16 %v5291, %v5290
    %v7028 = vpack.c.b16 %v5293, %v5292
    %v7029 = vpack.c.b16 %v5295, %v5294
    %v7030 = vpack.c.b16 %v5297, %v5296
    %v7031 = vpack.c.b16 %v5299, %v5298
    %v7032 = vpack.c.b16 %v5301, %v5300
    %v7033 = vpack.c.b16 %v5303, %v5302
    %v7034 = vpack.c.b16 %v5305, %v5304
    %v7035 = vpack.c.b16 %v5307, %v5306
    %v7036 = vpack.c.b16 %v5309, %v5308
    %v7037 = vpack.c.b16 %v5311, %v5310
    %v7038 = vpack.c.b16 %v5313, %v5312
    %v7039 = vpack.c.b16 %v5315, %v5314
    %v7040 = vpack.c.b16 %v5317, %v5316
    %v7041 = vpack.c.b16 %v5319, %v5318
    %v7042 = vpack.c.b16 %v5321, %v5320
    %v7043 = vpack.c.b16 %v5323, %v5322
    %v7044 = vpack.c.b16 %v5325, %v5324
    %v7045 = vpack.c.b16 %v5327, %v5326
    %v7046 = vpack.c.b16 %v5329, %v5328
    %v7047 = vpack.c.b16 %v5331, %v5330
    %v7048 = vpack.c.b16 %v5333, %v5332
    %v7049 = vpack.c.b16 %v5335, %v5334
    %v7050 = vpack.c.b16 %v5337, %v5336
    %v7051 = vpack.c.b16 %v5339, %v5338
    %v7052 = vpack.c.b16 %v5341, %v5340
    %v7053 = vpack.c.b16 %v5343, %v5342
    %v7054 = vpack.c.b16 %v5345, %v5344
    %v7055 = vpack.c.b16 %v5347, %v5346
    %v7056 = vpack.c.b16 %v5349, %v5348
    %v7057 = vpack.c.b16 %v5351, %v5350
    %v7058 = vpack.c.b16 %v5353, %v5352
    %v7059 = vpack.c.b16 %v5355, %v5354
    %v7060 = vpack.c.b16 %v5357, %v5356
    %v7061 = vpack.c.b16 %v5359, %v5358
    %v7062 = vpack.c.b16 %v5361, %v5360
    %v7063 = vpack.c.b16 %v5363, %v5362
    %v7064 = vpack.c.b16 %v5365, %v5364
    %v7065 = vpack.c.b16 %v5367, %v5366
    %v7066 = vpack.c.b16 %v5369, %v5368
    %v7067 = vpack.c.b16 %v5371, %v5370
    %v7068 = vpack.c.b16 %v5373, %v5372
    %v7069 = vpack.c.b16 %v5375, %v5374
    %v7070 = vpack.c.b16 %v5377, %v5376
    %v7071 = vpack.c.b16 %v5379, %v5378
    %v7072 = vpack.c.b16 %v5381, %v5380
    %v7073 = vpack.c.b16 %v5383, %v5382
    %v7074 = vpack.c.b16 %v5385, %v5384
    %v7075 = vpack.c.b16 %v5387, %v5386
    %v7076 = vpack.c.b16 %v5389, %v5388
    %v7077 = vpack.c.b16 %v5391, %v5390
    %v7078 = vpack.c.b16 %v5393, %v5392
    %v7079 = vpack.c.b16 %v5395, %v5394
    %v7080 = vpack.c.b16 %v5397, %v5396
    %v7081 = vpack.c.b16 %v5399, %v5398
    %v7082 = vpack.c.b16 %v5401, %v5400
    %v7083 = vpack.c.b16 %v5403, %v5402
    %v7084 = vpack.c.b16 %v5405, %v5404
    %v7085 = vpack.c.b16 %v5407, %v5406
    %v7086 = vpack.c.b16 %v5409, %v5408
    %v7087 = vpack.c.b16 %v5411, %v5410
    %v7088 = vpack.c.b16 %v5413, %v5412
    %v7089 = vpack.c.b16 %v5415, %v5414
    %v7090 = vpack.c.b16 %v5417, %v5416
    %v7091 = vpack.c.b16 %v5419, %v5418
    %v7092 = vpack.c.b16 %v5421, %v5420
    %v7093 = vpack.c.b16 %v5423, %v5422
    %v7094 = vpack.c.b16 %v5425, %v5424
    %v7095 = vpack.c.b16 %v5427, %v5426
    %v7096 = vpack.c.b16 %v5429, %v5428
    %v7097 = vpack.c.b16 %v5431, %v5430
    %v7098 = vpack.c.b16 %v5433, %v5432
    %v7099 = vpack.c.b16 %v5435, %v5434
    %v7100 = vpack.c.b16 %v5437, %v5436
    %v7101 = vpack.c.b16 %v5439, %v5438
    %v7102 = vpack.c.b16 %v5441, %v5440
    %v7103 = vpack.c.b16 %v5443, %v5442
    %v7104 = vpack.c.b16 %v5445, %v5444
    %v7105 = vpack.c.b16 %v5447, %v5446
    %v7106 = vpack.c.b16 %v5449, %v5448
    %v7107 = vpack.c.b16 %v5451, %v5450
    %v7108 = vpack.c.b16 %v5453, %v5452
    %v7109 = vpack.c.b16 %v5455, %v5454
    %v7110 = vpack.c.b16 %v5457, %v5456
    %v7111 = vpack.c.b16 %v5459, %v5458
    %v7112 = vpack.c.b16 %v5461, %v5460
    %v7113 = vpack.c.b16 %v5463, %v5462
    %v7114 = vpack.c.b16 %v5465, %v5464
    %v7115 = vpack.c.b16 %v5467, %v5466
    %v7116 = vpack.c.b16 %v5469, %v5468
    %v7117 = vpack.c.b16 %v5471, %v5470
    %v7118 = vpack.c.b16 %v5473, %v5472
    %v7119 = vpack.c.b16 %v5475, %v5474
    %v7120 = vpack.c.b16 %v5477, %v5476
    %v7121 = vpack.c.b16 %v5479, %v5478
    %v7122 = vpack.c.b16 %v5481, %v5480
    %v7123 = vpack.c.b16 %v5483, %v5482
    %v7124 = vpack.c.b16 %v5485, %v5484
    %v7125 = vpack.c.b16 %v5487, %v5486
    %v7126 = vpack.c.b16 %v5489, %v5488
    %v7127 = vpack.c.b16 %v5491, %v5490
    %v7128 = vpack.c.b16 %v5493, %v5492
    %v7129 = vpack.c.b16 %v5495, %v5494
    %v7130 = vpack.c.b16 %v5497, %v5496
    %v7131 = vpack.c.b16 %v5499, %v5498
    %v7132 = vpack.c.b16 %v5501, %v5500
    %v7133 = vpack.c.b16 %v5503, %v5502
    %v7134 = vpack.c.b16 %v5505, %v5504
    %v7135 = vpack.c.b16 %v5507, %v5506
    %v7136 = vpack.c.b16 %v5509, %v5508
    %v7137 = vpack.c.b16 %v5511, %v5510
    %v7138 = vpack.c.b16 %v5513, %v5512
    %v7139 = vpack.c.b16 %v5515, %v5514
    %v7140 = vpack.c.b16 %v5517, %v5516
    %v7141 = vpack.c.b16 %v5519, %v5518
    %v7142 = vpack.c.b16 %v5521, %v5520
    %v7143 = vpack.c.b16 %v5523, %v5522
    %v7144 = vpack.c.b16 %v5525, %v5524
    %v7145 = vpack.c.b16 %v5527, %v5526
    %v7146 = vpack.c.b16 %v5529, %v5528
    %v7147 = vpack.c.b16 %v5531, %v5530
    %v7148 = vpack.c.b16 %v5533, %v5532
    %v7149 = vpack.c.b16 %v5535, %v5534
    %v7150 = vpack.c.b16 %v5537, %v5536
    %v7151 = vpack.c.b16 %v5539, %v5538
    %v7152 = vpack.c.b16 %v5541, %v5540
    %v7153 = vpack.c.b16 %v5543, %v5542
    %v7154 = vpack.c.b16 %v5545, %v5544
    %v7155 = vpack.c.b16 %v5547, %v5546
    %v7156 = vpack.c.b16 %v5549, %v5548
    %v7157 = vpack.c.b16 %v5551, %v5550
    %v7158 = vpack.c.b16 %v5553, %v5552
    %v7159 = vpack.c.b16 %v5555, %v5554
    %v7160 = vpack.c.b16 %v5557, %v5556
    %v7161 = vpack.c.b16 %v5559, %v5558
    %v7162 = vpack.c.b16 %v5561, %v5560
    %v7163 = vpack.c.b16 %v5563, %v5562
    %v7164 = vpack.c.b16 %v5565, %v5564
    %v7165 = vpack.c.b16 %v5567, %v5566
    %v7166 = vpack.c.b16 %v5569, %v5568
    %v7167 = vpack.c.b16 %v5571, %v5570
    %v7168 = vpack.c.b16 %v5573, %v5572
    %v7169 = vpack.c.b16 %v5575, %v5574
    %v7170 = vpack.c.b16 %v5577, %v5576
    %v7171 = vpack.c.b16 %v5579, %v5578
    %v7172 = vpack.c.b16 %v5581, %v5580
    %v7173 = vpack.c.b16 %v5583, %v5582
    %v7174 = vpack.c.b16 %v5585, %v5584
    %v7175 = vpack.c.b16 %v5587, %v5586
    %v7176 = vpack.c.b16 %v5589, %v5588
    %v7177 = vpack.c.b16 %v5591, %v5590
    %v7178 = vpack.c.b16 %v5593, %v5592
    %v7179 = vpack.c.b16 %v5595, %v5594
    %v7180 = vpack.c.b16 %v5597, %v5596
    %v7181 = vpack.c.b16 %v5599, %v5598
    %v7182 = vpack.c.b16 %v5601, %v5600
    %v7183 = vpack.c.b16 %v5603, %v5602
    %v7184 = vpack.c.b16 %v5605, %v5604
    %v7185 = vpack.c.b16 %v5607, %v5606
    %v7186 = vpack.c.b16 %v5609, %v5608
    %v7187 = vpack.c.b16 %v5611, %v5610
    %v7188 = vpack.c.b16 %v5613, %v5612
    %v7189 = vpack.c.b16 %v5615, %v5614
    %v7190 = vpack.c.b16 %v5617, %v5616
    %v7191 = vpack.c.b16 %v5619, %v5618
    %v7192 = vpack.c.b16 %v5621, %v5620
    %v7193 = vpack.c.b16 %v5623, %v5622
    %v7194 = vpack.c.b16 %v5625, %v5624
    %v7195 = vpack.c.b16 %v5627, %v5626
    %v7196 = vpack.c.b16 %v5629, %v5628
    %v7197 = vpack.c.b16 %v5631, %v5630
    %v7198 = vpack.c.b16 %v5633, %v5632
    %v7199 = vpack.c.b16 %v5635, %v5634
    %v7200 = vpack.c.b16 %v5637, %v5636
    %v7201 = vpack.c.b16 %v5639, %v5638
    %v7202 = vpack.c.b16 %v5641, %v5640
    %v7203 = vpack.c.b16 %v5643, %v5642
    %v7204 = vpack.c.b16 %v5645, %v5644
    %v7205 = vpack.c.b16 %v5647, %v5646
    %v7206 = vpack.c.b16 %v5649, %v5648
    %v7207 = vpack.c.b16 %v5651, %v5650
    %v7208 = vpack.c.b16 %v5653, %v5652
    %v7209 = vpack.c.b16 %v5655, %v5654
    %v7210 = vpack.c.b16 %v5657, %v5656
    %v7211 = vpack.c.b16 %v5659, %v5658
    %v7212 = vpack.c.b16 %v5661, %v5660
    %v7213 = vpack.c.b16 %v5663, %v5662
    %v7214 = vpack.c.b16 %v5665, %v5664
    %v7215 = vpack.c.b16 %v5667, %v5666
    %v7216 = vpack.c.b16 %v5669, %v5668
    %v7217 = vpack.c.b16 %v5671, %v5670
    %v7218 = vpack.c.b16 %v5673, %v5672
    %v7219 = vpack.c.b16 %v5675, %v5674
    %v7220 = vpack.c.b16 %v5677, %v5676
    %v7221 = vpack.c.b16 %v5679, %v5678
    %v7222 = vpack.c.b16 %v5681, %v5680
    %v7223 = vpack.c.b16 %v5683, %v5682
    %v7224 = vpack.c.b16 %v5685, %v5684
    %v7225 = vpack.c.b16 %v5687, %v5686
    %v7226 = vpack.c.b16 %v5689, %v5688
    %v7227 = vpack.c.b16 %v5691, %v5690
    %v7228 = vpack.c.b16 %v5693, %v5692
    %v7229 = vpack.c.b16 %v5695, %v5694
    %v7230 = vpack.c.b16 %v5697, %v5696
    %v7231 = vpack.c.b16 %v5699, %v5698
    %v7232 = vpack.c.b16 %v5701, %v5700
    %v7233 = vpack.c.b16 %v5703, %v5702
    %v7234 = vpack.c.b16 %v5705, %v5704
    %v7235 = vpack.c.b16 %v5707, %v5706
    %v7236 = vpack.c.b16 %v5709, %v5708
    %v7237 = vpack.c.b16 %v5711, %v5710
    %v7238 = vpack.c.b16 %v5713, %v5712
    %v7239 = vpack.c.b16 %v5715, %v5714
    %v7240 = vpack.c.b16 %v5717, %v5716
    %v7241 = vpack.c.b16 %v5719, %v5718
    %v7242 = vpack.c.b16 %v5721, %v5720
    %v7243 = vpack.c.b16 %v5723, %v5722
    %v7244 = vpack.c.b16 %v5725, %v5724
    %v7245 = vpack.c.b16 %v5727, %v5726
    %v7246 = vpack.c.b16 %v5729, %v5728
    %v7247 = vpack.c.b16 %v5731, %v5730
    %v7248 = vpack.c.b16 %v5733, %v5732
    %v7249 = vpack.c.b16 %v5735, %v5734
    %v7250 = vpack.c.b16 %v5737, %v5736
    %v7251 = vpack.c.b16 %v5739, %v5738
    %v7252 = vpack.c.b16 %v5741, %v5740
    %v7253 = vpack.c.b16 %v5743, %v5742
    %v7254 = vpack.c.b16 %v5745, %v5744
    %v7255 = vpack.c.b16 %v5747, %v5746
    %v7256 = vpack.c.b16 %v5749, %v5748
    %v7257 = vpack.c.b16 %v5751, %v5750
    %v7258 = vpack.c.b16 %v5753, %v5752
    %v7259 = vpack.c.b16 %v5755, %v5754
    %v7260 = vpack.c.b16 %v5757, %v5756
    %v7261 = vpack.c.b16 %v5759, %v5758
    %v7262 = vpack.c.b16 %v5761, %v5760
    %v7263 = vpack.c.b16 %v5763, %v5762
    %v7264 = vpack.c.b16 %v5765, %v5764
    %v7265 = vpack.c.b16 %v5767, %v5766
    %v7266 = vpack.c.b16 %v5769, %v5768
    %v7267 = vpack.c.b16 %v5771, %v5770
    %v7268 = vpack.c.b16 %v5773, %v5772
    %v7269 = vpack.c.b16 %v5775, %v5774
    %v7270 = vpack.c.b16 %v5777, %v5776
    %v7271 = vpack.c.b16 %v5779, %v5778
    %v7272 = vpack.c.b16 %v5781, %v5780
    %v7273 = vpack.c.b16 %v5783, %v5782
    %v7274 = vpack.c.b16 %v5785, %v5784
    %v7275 = vpack.c.b16 %v5787, %v5786
    %v7276 = vpack.c.b16 %v5789, %v5788
    %v7277 = vpack.c.b16 %v5791, %v5790
    %v7278 = vpack.c.b16 %v5793, %v5792
    %v7279 = vpack.c.b16 %v5795, %v5794
    %v7280 = vpack.c.b16 %v5797, %v5796
    %v7281 = vpack.c.b16 %v5799, %v5798
    %v7282 = vpack.c.b16 %v5801, %v5800
    %v7283 = vpack.c.b16 %v5803, %v5802
    %v7284 = vpack.c.b16 %v5805, %v5804
    %v7285 = vpack.c.b16 %v5807, %v5806
    %v7286 = vpack.c.b16 %v5809, %v5808
    %v7287 = vpack.c.b16 %v5811, %v5810
    %v7288 = vpack.c.b16 %v5813, %v5812
    %v7289 = vpack.c.b16 %v5815, %v5814
    %v7290 = vpack.c.b16 %v5817, %v5816
    %v7291 = vpack.c.b16 %v5819, %v5818
    %v7292 = vpack.c.b16 %v5821, %v5820
    %v7293 = vpack.c.b16 %v5823, %v5822
    %v7294 = vpack.c.b16 %v5825, %v5824
    %v7295 = vpack.c.b16 %v5827, %v5826
    %v7296 = vpack.c.b16 %v5829, %v5828
    %v7297 = vpack.c.b16 %v5831, %v5830
    %v7298 = vpack.c.b16 %v5833, %v5832
    %v7299 = vpack.c.b16 %v5835, %v5834
    %v7300 = vpack.c.b16 %v5837, %v5836
    %v7301 = vpack.c.b16 %v5839, %v5838
    %v7302 = vpack.c.b16 %v5841, %v5840
    %v7303 = vpack.c.b16 %v5843, %v5842
    %v7304 = vpack.c.b16 %v5845, %v5844
    %v7305 = vpack.c.b16 %v5847, %v5846
    %v7306 = vpack.c.b16 %v5849, %v5848
    %v7307 = vpack.c.b16 %v5851, %v5850
    %v7308 = vpack.c.b16 %v5853, %v5852
    %v7309 = vpack.c.b16 %v5855, %v5854
    %v7310 = vpack.c.b16 %v5857, %v5856
    %v7311 = vpack.c.b16 %v5859, %v5858
    %v7312 = vpack.c.b16 %v5861, %v5860
    %v7313 = vpack.c.b16 %v5863, %v5862
    %v7314 = vpack.c.b16 %v5865, %v5864
    %v7315 = vpack.c.b16 %v5867, %v5866
    %v7316 = vpack.c.b16 %v5869, %v5868
    %v7317 = vpack.c.b16 %v5871, %v5870
    %v7318 = vpack.c.b16 %v5873, %v5872
    %v7319 = vpack.c.b16 %v5875, %v5874
    %v7320 = vpack.c.b16 %v5877, %v5876
    %v7321 = vpack.c.b16 %v5879, %v5878
    %v7322 = vpack.c.b16 %v5881, %v5880
    %v7323 = vpack.c.b16 %v5883, %v5882
    %v7324 = vpack.c.b16 %v5885, %v5884
    %v7325 = vpack.c.b16 %v5887, %v5886
    %v7326 = vpack.c.b16 %v5889, %v5888
    %v7327 = vpack.c.b16 %v5891, %v5890
    %v7328 = vpack.c.b16 %v5893, %v5892
    %v7329 = vpack.c.b16 %v5895, %v5894
    %v7330 = vpack.c.b16 %v5897, %v5896
    %v7331 = vpack.c.b16 %v5899, %v5898
    %v7332 = vpack.c.b16 %v5901, %v5900
    %v7333 = vpack.c.b16 %v5903, %v5902
    %v7334 = vpack.c.b16 %v5905, %v5904
    %v7335 = vpack.c.b16 %v5907, %v5906
    %v7336 = vpack.c.b16 %v5909, %v5908
    %v7337 = vpack.c.b16 %v5911, %v5910
    %v7338 = vpack.c.b16 %v5913, %v5912
    %v7339 = vpack.c.b16 %v5915, %v5914
    %v7340 = vpack.c.b16 %v5917, %v5916
    %v7341 = vpack.c.b16 %v5919, %v5918
    %v7342 = vpack.c.b16 %v5921, %v5920
    %v7343 = vpack.c.b16 %v5923, %v5922
    %v7344 = vpack.c.b16 %v5925, %v5924
    %v7345 = vpack.c.b16 %v5927, %v5926
    %v7346 = vpack.c.b16 %v5929, %v5928
    %v7347 = vpack.c.b16 %v5931, %v5930
    %v7348 = vpack.c.b16 %v5933, %v5932
    %v7349 = vpack.c.b16 %v5935, %v5934
    %v7350 = vpack.c.b16 %v5937, %v5936
    %v7351 = vpack.c.b16 %v5939, %v5938
    %v7352 = vpack.c.b16 %v5941, %v5940
    %v7353 = vpack.c.b16 %v5943, %v5942
    %v7354 = vpack.c.b16 %v5945, %v5944
    %v7355 = vpack.c.b16 %v5947, %v5946
    %v7356 = vpack.c.b16 %v5949, %v5948
    %v7357 = vpack.c.b16 %v5951, %v5950
    %v7358 = vpack.c.b16 %v5953, %v5952
    %v7359 = vpack.c.b16 %v5955, %v5954
    %v7360 = vpack.c.b16 %v5957, %v5956
    %v7361 = vpack.c.b16 %v5959, %v5958
    %v7362 = vpack.c.b16 %v5961, %v5960
    %v7363 = vpack.c.b16 %v5963, %v5962
    %v7364 = vpack.c.b16 %v5965, %v5964
    %v7365 = vpack.c.b16 %v5967, %v5966
    %v7366 = vpack.c.b16 %v5969, %v5968
    %v7367 = vpack.c.b16 %v5971, %v5970
    %v7368 = vpack.c.b16 %v5973, %v5972
    %v7369 = vpack.c.b16 %v5975, %v5974
    %v7370 = vpack.c.b16 %v5977, %v5976
    %v7371 = vpack.c.b16 %v5979, %v5978
    %v7372 = vpack.c.b16 %v5981, %v5980
    %v7373 = vpack.c.b16 %v5983, %v5982
    %v7374 = vpack.c.b16 %v5985, %v5984
    %v7375 = vpack.c.b16 %v5987, %v5986
    %v7376 = vpack.c.b16 %v5989, %v5988
    %v7377 = vpack.c.b16 %v5991, %v5990
    %v7378 = vpack.c.b16 %v5993, %v5992
    %v7379 = vpack.c.b16 %v5995, %v5994
    %v7380 = vpack.c.b16 %v5997, %v5996
    %v7381 = vpack.c.b16 %v5999, %v5998
    %v7382 = vpack.c.b16 %v6001, %v6000
    %v7383 = vpack.c.b16 %v6003, %v6002
    %v7384 = vpack.c.b16 %v6005, %v6004
    %v7385 = vpack.c.b16 %v6007, %v6006
    %v7386 = vpack.c.b16 %v6009, %v6008
    %v7387 = vpack.c.b16 %v6011, %v6010
    %v7388 = vpack.c.b16 %v6013, %v6012
    %v7389 = vpack.c.b16 %v6015, %v6014
    %v7390 = vpack.c.b16 %v6017, %v6016
    %v7391 = vpack.c.b16 %v6019, %v6018
    %v7392 = vpack.c.b16 %v6021, %v6020
    %v7393 = vpack.c.b16 %v6023, %v6022
    %v7394 = vpack.c.b16 %v6025, %v6024
    %v7395 = vpack.c.b16 %v6027, %v6026
    %v7396 = vpack.c.b16 %v6029, %v6028
    %v7397 = vpack.c.b16 %v6031, %v6030
    %v7398 = vpack.c.b16 %v6033, %v6032
    %v7399 = vpack.c.b16 %v6035, %v6034
    %v7400 = vpack.c.b16 %v6037, %v6036
    %v7401 = vpack.c.b16 %v6039, %v6038
    %v7402 = vpack.c.b16 %v6041, %v6040
    %v7403 = vpack.c.b16 %v6043, %v6042
    %v7404 = vpack.c.b16 %v6045, %v6044
    %v7405 = vpack.c.b16 %v6047, %v6046
    %v7406 = vpack.c.b16 %v6049, %v6048
    %v7407 = vpack.c.b16 %v6051, %v6050
    %v7408 = vpack.c.b16 %v6053, %v6052
    %v7409 = vpack.c.b16 %v6055, %v6054
    %v7410 = vpack.c.b16 %v6057, %v6056
    %v7411 = vpack.c.b16 %v6059, %v6058
    %v7412 = vpack.c.b16 %v6061, %v6060
    %v7413 = vpack.c.b16 %v6063, %v6062
    %v7414 = vpack.c.b16 %v6065, %v6064
    %v7415 = vpack.c.b16 %v6067, %v6066
    %v7416 = vpack.c.b16 %v6069, %v6068
    %v7417 = vpack.c.b16 %v6071, %v6070
    %v7418 = vpack.c.b16 %v6073, %v6072
    %v7419 = vpack.c.b16 %v6075, %v6074
    %v7420 = vpack.c.b16 %v6077, %v6076
    %v7421 = vpack.c.b16 %v6079, %v6078
    %v7422 = vpack.c.b16 %v6081, %v6080
    %v7423 = vpack.c.b16 %v6083, %v6082
    %v7424 = vpack.c.b16 %v6085, %v6084
    %v7425 = vpack.c.b16 %v6087, %v6086
    %v7426 = vpack.c.b16 %v6089, %v6088
    %v7427 = vpack.c.b16 %v6091, %v6090
    %v7428 = vpack.c.b16 %v6093, %v6092
    %v7429 = vpack.c.b16 %v6095, %v6094
    %v7430 = vpack.c.b16 %v6097, %v6096
    %v7431 = vpack.c.b16 %v6099, %v6098
    %v7432 = vpack.c.b16 %v6101, %v6100
    %v7433 = vpack.c.b16 %v6103, %v6102
    %v7434 = vpack.c.b16 %v6105, %v6104
    %v7435 = vpack.c.b16 %v6107, %v6106
    %v7436 = vpack.c.b16 %v6109, %v6108
    %v7437 = vpack.c.b16 %v6111, %v6110
    %v7438 = vpack.c.b16 %v6113, %v6112
    %v7439 = vpack.c.b16 %v6115, %v6114
    %v7440 = vpack.c.b16 %v6117, %v6116
    %v7441 = vpack.c.b16 %v6119, %v6118
    %v7442 = vpack.c.b16 %v6121, %v6120
    %v7443 = vpack.c.b16 %v6123, %v6122
    %v7444 = vpack.c.b16 %v6125, %v6124
    %v7445 = vpack.c.b16 %v6127, %v6126
    %v7446 = vpack.c.b16 %v6129, %v6128
    %v7447 = vpack.c.b16 %v6131, %v6130
    %v7448 = vpack.c.b16 %v6133, %v6132
    %v7449 = vpack.c.b16 %v6135, %v6134
    %v7450 = vpack.c.b16 %v6137, %v6136
    %v7451 = vpack.c.b16 %v6139, %v6138
    %v7452 = vpack.c.b16 %v6141, %v6140
    %v7453 = vpack.c.b16 %v6143, %v6142
    %v7454 = vpack.c.b16 %v6145, %v6144
    %v7455 = vpack.c.b16 %v6147, %v6146
    %v7456 = vpack.c.b16 %v6149, %v6148
    %v7457 = vpack.c.b16 %v6151, %v6150
    %v7458 = vpack.c.b16 %v6153, %v6152
    %v7459 = vpack.c.b16 %v6155, %v6154
    %v7460 = vpack.c.b16 %v6157, %v6156
    %v7461 = vpack.c.b16 %v6159, %v6158
    %v7462 = vpack.c.b16 %v6161, %v6160
    %v7463 = vpack.c.b16 %v6163, %v6162
    %v7464 = vpack.c.b16 %v6165, %v6164
    %v7465 = vpack.c.b16 %v6167, %v6166
    %v7466 = vpack.c.b16 %v6169, %v6168
    %v7467 = vpack.c.b16 %v6171, %v6170
    %v7468 = vpack.c.b16 %v6173, %v6172
    %v7469 = vpack.c.b16 %v6175, %v6174
    %v7470 = vpack.c.b16 %v6177, %v6176
    %v7471 = vpack.c.b16 %v6179, %v6178
    %v7472 = vpack.c.b16 %v6181, %v6180
    %v7473 = vpack.c.b16 %v6183, %v6182
    %v7474 = vpack.c.b16 %v6185, %v6184
    %v7475 = vpack.c.b16 %v6187, %v6186
    %v7476 = vpack.c.b16 %v6189, %v6188
    %v7477 = vpack.c.b16 %v6191, %v6190
    %v7478 = vpack.c.b16 %v6193, %v6192
    %v7479 = vpack.c.b16 %v6195, %v6194
    %v7480 = vpack.c.b16 %v6197, %v6196
    %v7481 = vpack.c.b16 %v6199, %v6198
    %v7482 = vpack.c.b16 %v6201, %v6200
    %v7483 = vpack.c.b16 %v6203, %v6202
    %v7484 = vpack.c.b16 %v6205, %v6204
    %v7485 = vpack.c.b16 %v6207, %v6206
    %v7486 = vpack.c.b16 %v6209, %v6208
    %v7487 = vpack.c.b16 %v6211, %v6210
    %v7488 = vpack.c.b16 %v6213, %v6212
    %v7489 = vpack.c.b16 %v6215, %v6214
    %v7490 = vpack.c.b16 %v6217, %v6216
    %v7491 = vpack.c.b16 %v6219, %v6218
    %v7492 = vpack.c.b16 %v6221, %v6220
    %v7493 = vpack.c.b16 %v6223, %v6222
    %v7494 = vpack.c.b16 %v6225, %v6224
    %v7495 = vpack.c.b16 %v6227, %v6226
    %v7496 = vpack.c.b16 %v6229, %v6228
    %v7497 = vpack.c.b16 %v6231, %v6230
    %v7498 = vpack.c.b16 %v6233, %v6232
    %v7499 = vpack.c.b16 %v6235, %v6234
    %v7500 = vpack.c.b16 %v6237, %v6236
    %v7501 = vpack.c.b16 %v6239, %v6238
    %v7502 = vpack.c.b16 %v6241, %v6240
    %v7503 = vpack.c.b16 %v6243, %v6242
    %v7504 = vpack.c.b16 %v6245, %v6244
    %v7505 = vpack.c.b16 %v6247, %v6246
    %v7506 = vpack.c.b16 %v6249, %v6248
    %v7507 = vpack.c.b16 %v6251, %v6250
    %v7508 = vpack.c.b16 %v6253, %v6252
    %v7509 = vpack.c.b16 %v6255, %v6254
    %v7510 = vpack.c.b16 %v6257, %v6256
    %v7511 = vpack.c.b16 %v6259, %v6258
    %v7512 = vpack.c.b16 %v6261, %v6260
    %v7513 = vpack.c.b16 %v6263, %v6262
    %v7514 = vpack.c.b16 %v6265, %v6264
    %v7515 = vpack.c.b16 %v6267, %v6266
    %v7516 = vpack.c.b16 %v6269, %v6268
    %v7517 = vpack.c.b16 %v6271, %v6270
    %v7518 = vpack.c.b16 %v6273, %v6272
    %v7519 = vpack.c.b16 %v6275, %v6274
    %v7520 = vpack.c.b16 %v6277, %v6276
    %v7521 = vpack.c.b16 %v6279, %v6278
    %v7522 = vpack.c.b16 %v6281, %v6280
    %v7523 = vpack.c.b16 %v6283, %v6282
    %v7524 = vpack.c.b16 %v6285, %v6284
    %v7525 = vpack.c.b16 %v6287, %v6286
    %v7526 = vpack.c.b16 %v6289, %v6288
    %v7527 = vpack.c.b16 %v6291, %v6290
    %v7528 = vpack.c.b16 %v6293, %v6292
    %v7529 = vpack.c.b16 %v6295, %v6294
    %v7530 = vpack.c.b16 %v6297, %v6296
    %v7531 = vpack.c.b16 %v6299, %v6298
    %v7532 = vpack.c.b16 %v6301, %v6300
    %v7533 = vpack.c.b16 %v6303, %v6302
    %v7534 = vpack.c.b16 %v6305, %v6304
    %v7535 = vpack.c.b16 %v6307, %v6306
    %v7536 = vpack.c.b16 %v6309, %v6308
    %v7537 = vpack.c.b16 %v6311, %v6310
    %v7538 = vpack.c.b16 %v6313, %v6312
    %v7539 = vpack.c.b16 %v6315, %v6314
    %v7540 = vpack.c.b16 %v6317, %v6316
    %v7541 = vpack.c.b16 %v6319, %v6318
    %v7542 = vpack.c.b16 %v6321, %v6320
    %v7543 = vpack.c.b16 %v6323, %v6322
    %v7544 = vpack.c.b16 %v6325, %v6324
    %v7545 = vpack.c.b16 %v6327, %v6326
    %v7546 = vpack.c.b16 %v6329, %v6328
    %v7547 = vpack.c.b16 %v6331, %v6330
    %v7548 = vpack.c.b16 %v6333, %v6332
    %v7549 = vpack.c.b16 %v6335, %v6334
    %v7550 = vpack.c.b16 %v6337, %v6336
    %v7551 = vpack.c.b16 %v6339, %v6338
    %v7552 = vpack.c.b16 %v6341, %v6340
    %v7553 = vpack.c.b16 %v6343, %v6342
    %v7554 = vpack.c.b16 %v6345, %v6344
    %v7555 = vpack.c.b16 %v6347, %v6346
    %v7556 = vpack.c.b16 %v6349, %v6348
    %v7557 = vpack.c.b16 %v6351, %v6350
    %v7558 = vpack.c.b16 %v6353, %v6352
    %v7559 = vpack.c.b16 %v6355, %v6354
    %v7560 = vpack.c.b16 %v6357, %v6356
    %v7561 = vpack.c.b16 %v6359, %v6358
    %v7562 = vpack.c.b16 %v6361, %v6360
    %v7563 = vpack.c.b16 %v6363, %v6362
    %v7564 = vpack.c.b16 %v6365, %v6364
    %v7565 = vpack.c.b16 %v6367, %v6366
    %v7566 = vpack.c.b16 %v6369, %v6368
    %v7567 = vpack.c.b16 %v6371, %v6370
    %v7568 = vpack.c.b16 %v6373, %v6372
    %v7569 = vpack.c.b16 %v6375, %v6374
    %v7570 = vpack.c.b16 %v6377, %v6376
    %v7571 = vpack.c.b16 %v6379, %v6378
    %v7572 = vpack.c.b16 %v6381, %v6380
    %v7573 = vpack.c.b16 %v6383, %v6382
    %v7574 = vpack.c.b16 %v6385, %v6384
    %v7575 = vpack.c.b16 %v6387, %v6386
    %v7576 = vpack.c.b16 %v6389, %v6388
    %v7577 = vpack.c.b16 %v6391, %v6390
    %v7578 = vpack.c.b16 %v6393, %v6392
    %v7579 = vpack.c.b16 %v6395, %v6394
    %v7580 = vpack.c.b16 %v6397, %v6396
    %v7581 = vpack.c.b16 %v6399, %v6398
    %v7582 = vpack.c.b16 %v6401, %v6400
    %v7583 = vpack.c.b16 %v6403, %v6402
    %v7584 = vpack.c.b16 %v6405, %v6404
    %v7585 = vpack.c.b16 %v6407, %v6406
    %v7586 = vpack.c.b16 %v6409, %v6408
    %v7587 = vpack.c.b16 %v6411, %v6410
    %v7588 = vpack.c.b16 %v6413, %v6412
    %v7589 = vpack.c.b16 %v6415, %v6414
    %v7590 = vpack.c.b16 %v6417, %v6416
    %v7591 = vpack.c.b16 %v6419, %v6418
    %v7592 = vpack.c.b16 %v6421, %v6420
    %v7593 = vpack.c.b16 %v6423, %v6422
    %v7594 = vpack.c.b16 %v6425, %v6424
    %v7595 = vpack.c.b16 %v6427, %v6426
    %v7596 = vpack.c.b16 %v6429, %v6428
    %v7597 = vpack.c.b16 %v6431, %v6430
    %v7598 = vpack.c.b16 %v6433, %v6432
    %v7599 = vpack.c.b16 %v6435, %v6434
    %v7600 = vpack.c.b16 %v6437, %v6436
    %v7601 = vpack.c.b16 %v6439, %v6438
    %v7602 = vpack.c.b16 %v6441, %v6440
    %v7603 = vpack.c.b16 %v6443, %v6442
    %v7604 = vpack.c.b16 %v6445, %v6444
    %v7605 = vpack.c.b16 %v6447, %v6446
    %v7606 = vpack.c.b16 %v6449, %v6448
    %v7607 = vpack.c.b16 %v6451, %v6450
    %v7608 = vpack.c.b16 %v6453, %v6452
    %v7609 = vpack.c.b16 %v6455, %v6454
    %v7610 = vpack.c.b16 %v6457, %v6456
    %v7611 = vpack.c.b16 %v6459, %v6458
    %v7612 = vpack.c.b16 %v6461, %v6460
    %v7613 = vpack.c.b16 %v6463, %v6462
    %v7614 = vpack.c.b16 %v6465, %v6464
    %v7615 = vpack.c.b16 %v6467, %v6466
    %v7616 = vpack.c.b16 %v6469, %v6468
    %v7617 = vpack.c.b16 %v6471, %v6470
    %v7618 = vpack.c.b16 %v6473, %v6472
    %v7619 = vpack.c.b16 %v6475, %v6474
    %v7620 = vpack.c.b16 %v6477, %v6476
    %v7621 = vpack.c.b16 %v6479, %v6478
    %v7622 = vpack.c.b16 %v6481, %v6480
    %v7623 = vpack.c.b16 %v6483, %v6482
    %v7624 = vpack.c.b16 %v6485, %v6484
    %v7625 = vpack.c.b16 %v6487, %v6486
    %v7626 = vpack.c.b16 %v6489, %v6488
    %v7627 = vpack.c.b16 %v6491, %v6490
    %v7628 = vpack.c.b16 %v6493, %v6492
    %v7629 = vpack.c.b16 %v6495, %v6494
    %v7630 = vpack.c.b16 %v6497, %v6496
    %v7631 = vpack.c.b16 %v6499, %v6498
    %v7632 = vpack.c.b16 %v6501, %v6500
    %v7633 = vpack.c.b16 %v6503, %v6502
    %v7634 = vpack.c.b16 %v6505, %v6504
    %v7635 = vpack.c.b16 %v6507, %v6506
    %v7636 = vpack.c.b16 %v6509, %v6508
    %v7637 = vpack.c.b16 %v6511, %v6510
    %v7638 = vpack.c.b16 %v6513, %v6512
    %v7639 = vpack.c.b16 %v6515, %v6514
    %v7640 = vpack.c.b16 %v6517, %v6516
    %v7641 = vpack.c.b16 %v6519, %v6518
    %v7642 = vpack.c.b16 %v6521, %v6520
    %v7643 = vpack.c.b16 %v6523, %v6522
    %v7644 = vpack.c.b16 %v6525, %v6524
    %v7645 = vpack.c.b16 %v6527, %v6526
    %v7646 = vpack.c.b16 %v6529, %v6528
    %v7647 = vpack.c.b16 %v6531, %v6530
    %v7648 = vpack.c.b16 %v6533, %v6532
    %v7649 = vpack.c.b16 %v6535, %v6534
    %v7650 = vpack.c.b16 %v6537, %v6536
    %v7651 = vpack.c.b16 %v6539, %v6538
    %v7652 = vpack.c.b16 %v6541, %v6540
    %v7653 = vpack.c.b16 %v6543, %v6542
    %v7654 = vpack.c.b16 %v6545, %v6544
    %v7655 = vpack.c.b16 %v6547, %v6546
    %v7656 = vpack.c.b16 %v6549, %v6548
    %v7657 = vpack.c.b16 %v6551, %v6550
    %v7658 = vpack.c.b16 %v6553, %v6552
    %v7659 = vpack.c.b16 %v6555, %v6554
    %v7660 = vpack.c.b16 %v6557, %v6556
    %v7661 = vpack.c.b16 %v6559, %v6558
    %v7662 = vpack.c.b16 %v6561, %v6560
    %v7663 = vpack.c.b16 %v6563, %v6562
    %v7664 = vpack.c.b16 %v6565, %v6564
    %v7665 = vpack.c.b16 %v6567, %v6566
    %v7666 = vpack.c.b16 %v6569, %v6568
    %v7667 = vpack.c.b16 %v6571, %v6570
    %v7668 = vpack.c.b16 %v6573, %v6572
    %v7669 = vpack.c.b16 %v6575, %v6574
    %v7670 = vpack.c.b16 %v6577, %v6576
    %v7671 = vpack.c.b16 %v6579, %v6578
    %v7672 = vpack.c.b16 %v6581, %v6580
    %v7673 = vpack.c.b16 %v6583, %v6582
    %v7674 = vpack.c.b16 %v6585, %v6584
    %v7675 = vpack.c.b16 %v6587, %v6586
    %v7676 = vpack.c.b16 %v6589, %v6588
    %v7677 = vpack.c.b16 %v6591, %v6590
    %v7678 = vpack.c.b16 %v6593, %v6592
    %v7679 = vpack.c.b16 %v6595, %v6594
    %v7680 = vpack.c.b16 %v6597, %v6596
    %v7681 = vpack.c.b16 %v6599, %v6598
    %v7682 = vpack.c.b16 %v6601, %v6600
    %v7683 = vpack.c.b16 %v6603, %v6602
    %v7684 = vpack.c.b16 %v6605, %v6604
    %v7685 = vpack.c.b16 %v6607, %v6606
    %v7686 = vpack.c.b16 %v6609, %v6608
    %v7687 = vpack.c.b16 %v6611, %v6610
    %v7688 = vpack.c.b16 %v6613, %v6612
    %v7689 = vpack.c.b16 %v6615, %v6614
    %v7690 = vpack.c.b16 %v6617, %v6616
    %v7691 = vpack.c.b16 %v6619, %v6618
    %v7692 = vpack.c.b16 %v6621, %v6620
    %v7693 = vpack.c.b16 %v6623, %v6622
    %v7694 = vpack.c.b16 %v6625, %v6624
    %v7695 = vpack.c.b16 %v6627, %v6626
    %v7696 = vpack.c.b16 %v6629, %v6628
    %v7697 = vpack.c.b16 %v6631, %v6630
    %v7698 = vpack.c.b16 %v6633, %v6632
    %v7699 = vpack.c.b16 %v6635, %v6634
    %v7700 = vpack.c.b16 %v6637, %v6636
    %v7701 = vpack.c.b16 %v6639, %v6638
    %v7702 = vpack.c.b16 %v6641, %v6640
    %v7703 = vpack.c.b16 %v6643, %v6642
    %v7704 = vpack.c.b16 %v6645, %v6644
    %v7705 = vpack.c.b16 %v6647, %v6646
    %v7706 = vpack.c.b16 %v6649, %v6648
    %v7707 = vpack.c.b16 %v6651, %v6650
    %v7708 = vpack.c.b16 %v6653, %v6652
    %v7709 = vpack.c.b16 %v6655, %v6654
    %v7710 = vpack.c.b16 %v6657, %v6656
    %v7711 = vpack.c.b16 %v6659, %v6658
    %v7712 = vpack.c.b16 %v6661, %v6660
    %v7713 = vpack.c.b16 %v6663, %v6662
    %v7714 = vpack.c.b16 %v6665, %v6664
    %v7715 = vpack.c.b16 %v6667, %v6666
    %v7716 = vpack.c.b16 %v6669, %v6668
    %v7717 = vpack.c.b16 %v6671, %v6670
    %v7718 = vpack.c.b16 %v6673, %v6672
    %v7719 = vpack.c.b16 %v6675, %v6674
    %v7720 = vpack.c.b16 %v6677, %v6676
    %v7721 = vpack.c.b16 %v6679, %v6678
    %v7722 = vpack.c.b16 %v6681, %v6680
    %v7723 = vpack.c.b16 %v6683, %v6682
    %v7724 = vpack.c.b16 %v6685, %v6684
    %v7725 = vpack.c.b16 %v6687, %v6686
    %v7726 = vpack.c.b16 %v6689, %v6688
    %v7727 = vpack.c.b16 %v6691, %v6690
    %v7728 = vpack.c.b16 %v6693, %v6692
    %v7729 = vpack.c.b16 %v6695, %v6694
    %v7730 = vpack.c.b16 %v6697, %v6696
    %v7731 = vpack.c.b16 %v6699, %v6698
    %v7732 = vpack.c.b16 %v6701, %v6700
    %v7733 = vpack.c.b16 %v6703, %v6702
    %v7734 = vpack.c.b16 %v6705, %v6704
    %v7735 = vpack.c.b16 %v6707, %v6706
    %v7736 = vpack.c.b16 %v6709, %v6708
    %v7737 = vpack.c.b16 %v6711, %v6710
    %v7738 = vpack.c.b16 %v6713, %v6712
    %v7739 = vpack.c.b16 %v6715, %v6714
    %8764 = vmatprep.subr.bf16.mxu0 0
    %8765 = vmatpush1.bf16.msra.mxu0 %v6723
    %8766 = vmatprep.subr.bf16.mxu0 0
    %8767 = vmatpush1.bf16.msra.mxu0 %v6722
    %8768 = vmatprep.subr.bf16.mxu0 0
    %8769 = vmatpush1.bf16.msra.mxu0 %v6721
    %8770 = vmatprep.subr.bf16.mxu0 0
    %8771 = vmatpush1.bf16.msra.mxu0 %v6720
    %8772 = vmatprep.subr.bf16.mxu0 0
    %8773 = vmatpush1.bf16.msra.mxu0 %v6719
    %8774 = vmatprep.subr.bf16.mxu0 0
    %8775 = vmatpush1.bf16.msra.mxu0 %v6718
    %8776 = vmatprep.subr.bf16.mxu0 0
    %8777 = vmatpush1.bf16.msra.mxu0 %v6717
    %8778 = vmatprep.subr.bf16.mxu0 0
    %8779 = vmatpush1.bf16.msra.mxu0 %v6716
    %8780 = vmatprep.subr.bf16.mxu0 0
    %8781 = vmatpush2.bf16.msra.mxu0 %v6731
    %8782 = vmatprep.subr.bf16.mxu0 0
    %8783 = vmatpush2.bf16.msra.mxu0 %v6730
    %8784 = vmatprep.subr.bf16.mxu0 0
    %8785 = vmatpush2.bf16.msra.mxu0 %v6729
    %8786 = vmatprep.subr.bf16.mxu0 0
    %8787 = vmatpush2.bf16.msra.mxu0 %v6728
    %8788 = vmatprep.subr.bf16.mxu0 0
    %8789 = vmatpush2.bf16.msra.mxu0 %v6727
    %8790 = vmatprep.subr.bf16.mxu0 0
    %8791 = vmatpush2.bf16.msra.mxu0 %v6726
    %8792 = vmatprep.subr.bf16.mxu0 0
    %8793 = vmatpush2.bf16.msra.mxu0 %v6725
    %8794 = vmatprep.subr.bf16.mxu0 0
    %8795 = vmatpush2.bf16.msra.mxu0 %v6724
    %8796 = vmatprep.mubr.bf16.mxu0 %v2365
    %8797 = vmatmul.mubr.bf16.gmra.mxu0 %v2364
    %v8798 = vpop.f32.mrf.mxu0
    %v8799 = vadd.f32 %v2170, %v8798
    %v8800 = vpop.f32.mrf.mxu0
    %v8801 = vpop.f32.mrf.mxu0
    %v8802 = vpop.f32.mrf.mxu0
    %8803 = vdwg.mxu0
    %8804 = vmatprep.subr.bf16.mxu0 0
    %8805 = vmatpush1.bf16.msra.mxu0 %v6739
    %8806 = vmatprep.subr.bf16.mxu0 0
    %8807 = vmatpush1.bf16.msra.mxu0 %v6738
    %8808 = vmatprep.subr.bf16.mxu0 0
    %8809 = vmatpush1.bf16.msra.mxu0 %v6737
    %8810 = vmatprep.subr.bf16.mxu0 0
    %8811 = vmatpush1.bf16.msra.mxu0 %v6736
    %8812 = vmatprep.subr.bf16.mxu0 0
    %8813 = vmatpush1.bf16.msra.mxu0 %v6735
    %8814 = vmatprep.subr.bf16.mxu0 0
    %8815 = vmatpush1.bf16.msra.mxu0 %v6734
    %8816 = vmatprep.subr.bf16.mxu0 0
    %8817 = vmatpush1.bf16.msra.mxu0 %v6733
    %8818 = vmatprep.subr.bf16.mxu0 0
    %8819 = vmatpush1.bf16.msra.mxu0 %v6732
    %8820 = vmatprep.subr.bf16.mxu0 0
    %8821 = vmatpush2.bf16.msra.mxu0 %v6747
    %8822 = vmatprep.subr.bf16.mxu0 0
    %8823 = vmatpush2.bf16.msra.mxu0 %v6746
    %8824 = vmatprep.subr.bf16.mxu0 0
    %8825 = vmatpush2.bf16.msra.mxu0 %v6745
    %8826 = vmatprep.subr.bf16.mxu0 0
    %8827 = vmatpush2.bf16.msra.mxu0 %v6744
    %8828 = vmatprep.subr.bf16.mxu0 0
    %8829 = vmatpush2.bf16.msra.mxu0 %v6743
    %8830 = vmatprep.subr.bf16.mxu0 0
    %8831 = vmatpush2.bf16.msra.mxu0 %v6742
    %8832 = vmatprep.subr.bf16.mxu0 0
    %8833 = vmatpush2.bf16.msra.mxu0 %v6741
    %8834 = vmatprep.subr.bf16.mxu0 0
    %8835 = vmatpush2.bf16.msra.mxu0 %v6740
    %8836 = vmatprep.mubr.bf16.mxu0 %v2367
    %8837 = vmatmul.mubr.bf16.gmra.mxu0 %v2366
    %v8838 = vpop.f32.mrf.mxu0
    %v8839 = vadd.f32 %v8799, %v8838
    %v8840 = vpop.f32.mrf.mxu0
    %v8841 = vpop.f32.mrf.mxu0
    %v8842 = vpop.f32.mrf.mxu0
    %8843 = vdwg.mxu0
    %8844 = vmatprep.subr.bf16.mxu0 0
    %8845 = vmatpush1.bf16.msra.mxu0 %v6755
    %8846 = vmatprep.subr.bf16.mxu0 0
    %8847 = vmatpush1.bf16.msra.mxu0 %v6754
    %8848 = vmatprep.subr.bf16.mxu0 0
    %8849 = vmatpush1.bf16.msra.mxu0 %v6753
    %8850 = vmatprep.subr.bf16.mxu0 0
    %8851 = vmatpush1.bf16.msra.mxu0 %v6752
    %8852 = vmatprep.subr.bf16.mxu0 0
    %8853 = vmatpush1.bf16.msra.mxu0 %v6751
    %8854 = vmatprep.subr.bf16.mxu0 0
    %8855 = vmatpush1.bf16.msra.mxu0 %v6750
    %8856 = vmatprep.subr.bf16.mxu0 0
    %8857 = vmatpush1.bf16.msra.mxu0 %v6749
    %8858 = vmatprep.subr.bf16.mxu0 0
    %8859 = vmatpush1.bf16.msra.mxu0 %v6748
    %8860 = vmatprep.subr.bf16.mxu0 0
    %8861 = vmatpush2.bf16.msra.mxu0 %v6763
    %8862 = vmatprep.subr.bf16.mxu0 0
    %8863 = vmatpush2.bf16.msra.mxu0 %v6762
    %8864 = vmatprep.subr.bf16.mxu0 0
    %8865 = vmatpush2.bf16.msra.mxu0 %v6761
    %8866 = vmatprep.subr.bf16.mxu0 0
    %8867 = vmatpush2.bf16.msra.mxu0 %v6760
    %8868 = vmatprep.subr.bf16.mxu0 0
    %8869 = vmatpush2.bf16.msra.mxu0 %v6759
    %8870 = vmatprep.subr.bf16.mxu0 0
    %8871 = vmatpush2.bf16.msra.mxu0 %v6758
    %8872 = vmatprep.subr.bf16.mxu0 0
    %8873 = vmatpush2.bf16.msra.mxu0 %v6757
    %8874 = vmatprep.subr.bf16.mxu0 0
    %8875 = vmatpush2.bf16.msra.mxu0 %v6756
    %8876 = vmatprep.mubr.bf16.mxu0 %v2369
    %8877 = vmatmul.mubr.bf16.gmra.mxu0 %v2368
    %v8878 = vpop.f32.mrf.mxu0
    %v8879 = vadd.f32 %v8839, %v8878
    %v8880 = vpop.f32.mrf.mxu0
    %v8881 = vpop.f32.mrf.mxu0
    %v8882 = vpop.f32.mrf.mxu0
    %8883 = vdwg.mxu0
    %8884 = vmatprep.subr.bf16.mxu0 0
    %8885 = vmatpush1.bf16.msra.mxu0 %v6771
    %8886 = vmatprep.subr.bf16.mxu0 0
    %8887 = vmatpush1.bf16.msra.mxu0 %v6770
    %8888 = vmatprep.subr.bf16.mxu0 0
    %8889 = vmatpush1.bf16.msra.mxu0 %v6769
    %8890 = vmatprep.subr.bf16.mxu0 0
    %8891 = vmatpush1.bf16.msra.mxu0 %v6768
    %8892 = vmatprep.subr.bf16.mxu0 0
    %8893 = vmatpush1.bf16.msra.mxu0 %v6767
    %8894 = vmatprep.subr.bf16.mxu0 0
    %8895 = vmatpush1.bf16.msra.mxu0 %v6766
    %8896 = vmatprep.subr.bf16.mxu0 0
    %8897 = vmatpush1.bf16.msra.mxu0 %v6765
    %8898 = vmatprep.subr.bf16.mxu0 0
    %8899 = vmatpush1.bf16.msra.mxu0 %v6764
    %8900 = vmatprep.subr.bf16.mxu0 0
    %8901 = vmatpush2.bf16.msra.mxu0 %v6779
    %8902 = vmatprep.subr.bf16.mxu0 0
    %8903 = vmatpush2.bf16.msra.mxu0 %v6778
    %8904 = vmatprep.subr.bf16.mxu0 0
    %8905 = vmatpush2.bf16.msra.mxu0 %v6777
    %8906 = vmatprep.subr.bf16.mxu0 0
    %8907 = vmatpush2.bf16.msra.mxu0 %v6776
    %8908 = vmatprep.subr.bf16.mxu0 0
    %8909 = vmatpush2.bf16.msra.mxu0 %v6775
    %8910 = vmatprep.subr.bf16.mxu0 0
    %8911 = vmatpush2.bf16.msra.mxu0 %v6774
    %8912 = vmatprep.subr.bf16.mxu0 0
    %8913 = vmatpush2.bf16.msra.mxu0 %v6773
    %8914 = vmatprep.subr.bf16.mxu0 0
    %8915 = vmatpush2.bf16.msra.mxu0 %v6772
    %8916 = vmatprep.mubr.bf16.mxu0 %v2371
    %8917 = vmatmul.mubr.bf16.gmra.mxu0 %v2370
    %v8918 = vpop.f32.mrf.mxu0
    %v8919 = vadd.f32 %v8879, %v8918
    %v8920 = vpop.f32.mrf.mxu0
    %v8921 = vpop.f32.mrf.mxu0
    %v8922 = vpop.f32.mrf.mxu0
    %8923 = vdwg.mxu0
    %8924 = vmatprep.subr.bf16.mxu0 0
    %8925 = vmatpush1.bf16.msra.mxu0 %v6787
    %8926 = vmatprep.subr.bf16.mxu0 0
    %8927 = vmatpush1.bf16.msra.mxu0 %v6786
    %8928 = vmatprep.subr.bf16.mxu0 0
    %8929 = vmatpush1.bf16.msra.mxu0 %v6785
    %8930 = vmatprep.subr.bf16.mxu0 0
    %8931 = vmatpush1.bf16.msra.mxu0 %v6784
    %8932 = vmatprep.subr.bf16.mxu0 0
    %8933 = vmatpush1.bf16.msra.mxu0 %v6783
    %8934 = vmatprep.subr.bf16.mxu0 0
    %8935 = vmatpush1.bf16.msra.mxu0 %v6782
    %8936 = vmatprep.subr.bf16.mxu0 0
    %8937 = vmatpush1.bf16.msra.mxu0 %v6781
    %8938 = vmatprep.subr.bf16.mxu0 0
    %8939 = vmatpush1.bf16.msra.mxu0 %v6780
    %8940 = vmatprep.subr.bf16.mxu0 0
    %8941 = vmatpush2.bf16.msra.mxu0 %v6795
    %8942 = vmatprep.subr.bf16.mxu0 0
    %8943 = vmatpush2.bf16.msra.mxu0 %v6794
    %8944 = vmatprep.subr.bf16.mxu0 0
    %8945 = vmatpush2.bf16.msra.mxu0 %v6793
    %8946 = vmatprep.subr.bf16.mxu0 0
    %8947 = vmatpush2.bf16.msra.mxu0 %v6792
    %8948 = vmatprep.subr.bf16.mxu0 0
    %8949 = vmatpush2.bf16.msra.mxu0 %v6791
    %8950 = vmatprep.subr.bf16.mxu0 0
    %8951 = vmatpush2.bf16.msra.mxu0 %v6790
    %8952 = vmatprep.subr.bf16.mxu0 0
    %8953 = vmatpush2.bf16.msra.mxu0 %v6789
    %8954 = vmatprep.subr.bf16.mxu0 0
    %8955 = vmatpush2.bf16.msra.mxu0 %v6788
    %8956 = vmatprep.mubr.bf16.mxu0 %v2373
    %8957 = vmatmul.mubr.bf16.gmra.mxu0 %v2372
    %v8958 = vpop.f32.mrf.mxu0
    %v8959 = vadd.f32 %v8919, %v8958
    %v8960 = vpop.f32.mrf.mxu0
    %v8961 = vpop.f32.mrf.mxu0
    %v8962 = vpop.f32.mrf.mxu0
    %8963 = vdwg.mxu0
    %8964 = vmatprep.subr.bf16.mxu0 0
    %8965 = vmatpush1.bf16.msra.mxu0 %v6803
    %8966 = vmatprep.subr.bf16.mxu0 0
    %8967 = vmatpush1.bf16.msra.mxu0 %v6802
    %8968 = vmatprep.subr.bf16.mxu0 0
    %8969 = vmatpush1.bf16.msra.mxu0 %v6801
    %8970 = vmatprep.subr.bf16.mxu0 0
    %8971 = vmatpush1.bf16.msra.mxu0 %v6800
    %8972 = vmatprep.subr.bf16.mxu0 0
    %8973 = vmatpush1.bf16.msra.mxu0 %v6799
    %8974 = vmatprep.subr.bf16.mxu0 0
    %8975 = vmatpush1.bf16.msra.mxu0 %v6798
    %8976 = vmatprep.subr.bf16.mxu0 0
    %8977 = vmatpush1.bf16.msra.mxu0 %v6797
    %8978 = vmatprep.subr.bf16.mxu0 0
    %8979 = vmatpush1.bf16.msra.mxu0 %v6796
    %8980 = vmatprep.subr.bf16.mxu0 0
    %8981 = vmatpush2.bf16.msra.mxu0 %v6811
    %8982 = vmatprep.subr.bf16.mxu0 0
    %8983 = vmatpush2.bf16.msra.mxu0 %v6810
    %8984 = vmatprep.subr.bf16.mxu0 0
    %8985 = vmatpush2.bf16.msra.mxu0 %v6809
    %8986 = vmatprep.subr.bf16.mxu0 0
    %8987 = vmatpush2.bf16.msra.mxu0 %v6808
    %8988 = vmatprep.subr.bf16.mxu0 0
    %8989 = vmatpush2.bf16.msra.mxu0 %v6807
    %8990 = vmatprep.subr.bf16.mxu0 0
    %8991 = vmatpush2.bf16.msra.mxu0 %v6806
    %8992 = vmatprep.subr.bf16.mxu0 0
    %8993 = vmatpush2.bf16.msra.mxu0 %v6805
    %8994 = vmatprep.subr.bf16.mxu0 0
    %8995 = vmatpush2.bf16.msra.mxu0 %v6804
    %8996 = vmatprep.mubr.bf16.mxu0 %v2375
    %8997 = vmatmul.mubr.bf16.gmra.mxu0 %v2374
    %v8998 = vpop.f32.mrf.mxu0
    %v8999 = vadd.f32 %v8959, %v8998
    %v9000 = vpop.f32.mrf.mxu0
    %v9001 = vpop.f32.mrf.mxu0
    %v9002 = vpop.f32.mrf.mxu0
    %9003 = vdwg.mxu0
    %9004 = vmatprep.subr.bf16.mxu0 0
    %9005 = vmatpush1.bf16.msra.mxu0 %v6819
    %9006 = vmatprep.subr.bf16.mxu0 0
    %9007 = vmatpush1.bf16.msra.mxu0 %v6818
    %9008 = vmatprep.subr.bf16.mxu0 0
    %9009 = vmatpush1.bf16.msra.mxu0 %v6817
    %9010 = vmatprep.subr.bf16.mxu0 0
    %9011 = vmatpush1.bf16.msra.mxu0 %v6816
    %9012 = vmatprep.subr.bf16.mxu0 0
    %9013 = vmatpush1.bf16.msra.mxu0 %v6815
    %9014 = vmatprep.subr.bf16.mxu0 0
    %9015 = vmatpush1.bf16.msra.mxu0 %v6814
    %9016 = vmatprep.subr.bf16.mxu0 0
    %9017 = vmatpush1.bf16.msra.mxu0 %v6813
    %9018 = vmatprep.subr.bf16.mxu0 0
    %9019 = vmatpush1.bf16.msra.mxu0 %v6812
    %9020 = vmatprep.subr.bf16.mxu0 0
    %9021 = vmatpush2.bf16.msra.mxu0 %v6827
    %9022 = vmatprep.subr.bf16.mxu0 0
    %9023 = vmatpush2.bf16.msra.mxu0 %v6826
    %9024 = vmatprep.subr.bf16.mxu0 0
    %9025 = vmatpush2.bf16.msra.mxu0 %v6825
    %9026 = vmatprep.subr.bf16.mxu0 0
    %9027 = vmatpush2.bf16.msra.mxu0 %v6824
    %9028 = vmatprep.subr.bf16.mxu0 0
    %9029 = vmatpush2.bf16.msra.mxu0 %v6823
    %9030 = vmatprep.subr.bf16.mxu0 0
    %9031 = vmatpush2.bf16.msra.mxu0 %v6822
    %9032 = vmatprep.subr.bf16.mxu0 0
    %9033 = vmatpush2.bf16.msra.mxu0 %v6821
    %9034 = vmatprep.subr.bf16.mxu0 0
    %9035 = vmatpush2.bf16.msra.mxu0 %v6820
    %9036 = vmatprep.mubr.bf16.mxu0 %v2377
    %9037 = vmatmul.mubr.bf16.gmra.mxu0 %v2376
    %v9038 = vpop.f32.mrf.mxu0
    %v9039 = vadd.f32 %v8999, %v9038
    %v9040 = vpop.f32.mrf.mxu0
    %v9041 = vpop.f32.mrf.mxu0
    %v9042 = vpop.f32.mrf.mxu0
    %9043 = vdwg.mxu0
    %9044 = vmatprep.subr.bf16.mxu0 0
    %9045 = vmatpush1.bf16.msra.mxu0 %v6835
    %9046 = vmatprep.subr.bf16.mxu0 0
    %9047 = vmatpush1.bf16.msra.mxu0 %v6834
    %9048 = vmatprep.subr.bf16.mxu0 0
    %9049 = vmatpush1.bf16.msra.mxu0 %v6833
    %9050 = vmatprep.subr.bf16.mxu0 0
    %9051 = vmatpush1.bf16.msra.mxu0 %v6832
    %9052 = vmatprep.subr.bf16.mxu0 0
    %9053 = vmatpush1.bf16.msra.mxu0 %v6831
    %9054 = vmatprep.subr.bf16.mxu0 0
    %9055 = vmatpush1.bf16.msra.mxu0 %v6830
    %9056 = vmatprep.subr.bf16.mxu0 0
    %9057 = vmatpush1.bf16.msra.mxu0 %v6829
    %9058 = vmatprep.subr.bf16.mxu0 0
    %9059 = vmatpush1.bf16.msra.mxu0 %v6828
    %9060 = vmatprep.subr.bf16.mxu0 0
    %9061 = vmatpush2.bf16.msra.mxu0 %v6843
    %9062 = vmatprep.subr.bf16.mxu0 0
    %9063 = vmatpush2.bf16.msra.mxu0 %v6842
    %9064 = vmatprep.subr.bf16.mxu0 0
    %9065 = vmatpush2.bf16.msra.mxu0 %v6841
    %9066 = vmatprep.subr.bf16.mxu0 0
    %9067 = vmatpush2.bf16.msra.mxu0 %v6840
    %9068 = vmatprep.subr.bf16.mxu0 0
    %9069 = vmatpush2.bf16.msra.mxu0 %v6839
    %9070 = vmatprep.subr.bf16.mxu0 0
    %9071 = vmatpush2.bf16.msra.mxu0 %v6838
    %9072 = vmatprep.subr.bf16.mxu0 0
    %9073 = vmatpush2.bf16.msra.mxu0 %v6837
    %9074 = vmatprep.subr.bf16.mxu0 0
    %9075 = vmatpush2.bf16.msra.mxu0 %v6836
    %9076 = vmatprep.mubr.bf16.mxu0 %v2379
    %9077 = vmatmul.mubr.bf16.gmra.mxu0 %v2378
    %v9078 = vpop.f32.mrf.mxu0
    %v9079 = vadd.f32 %v9039, %v9078
    %v9080 = vpop.f32.mrf.mxu0
    %v9081 = vpop.f32.mrf.mxu0
    %v9082 = vpop.f32.mrf.mxu0
    %9083 = vdwg.mxu0
    %9084 = vmatprep.subr.bf16.mxu0 0
    %9085 = vmatpush1.bf16.msra.mxu0 %v6851
    %9086 = vmatprep.subr.bf16.mxu0 0
    %9087 = vmatpush1.bf16.msra.mxu0 %v6850
    %9088 = vmatprep.subr.bf16.mxu0 0
    %9089 = vmatpush1.bf16.msra.mxu0 %v6849
    %9090 = vmatprep.subr.bf16.mxu0 0
    %9091 = vmatpush1.bf16.msra.mxu0 %v6848
    %9092 = vmatprep.subr.bf16.mxu0 0
    %9093 = vmatpush1.bf16.msra.mxu0 %v6847
    %9094 = vmatprep.subr.bf16.mxu0 0
    %9095 = vmatpush1.bf16.msra.mxu0 %v6846
    %9096 = vmatprep.subr.bf16.mxu0 0
    %9097 = vmatpush1.bf16.msra.mxu0 %v6845
    %9098 = vmatprep.subr.bf16.mxu0 0
    %9099 = vmatpush1.bf16.msra.mxu0 %v6844
    %9100 = vmatprep.subr.bf16.mxu0 0
    %9101 = vmatpush2.bf16.msra.mxu0 %v6859
    %9102 = vmatprep.subr.bf16.mxu0 0
    %9103 = vmatpush2.bf16.msra.mxu0 %v6858
    %9104 = vmatprep.subr.bf16.mxu0 0
    %9105 = vmatpush2.bf16.msra.mxu0 %v6857
    %9106 = vmatprep.subr.bf16.mxu0 0
    %9107 = vmatpush2.bf16.msra.mxu0 %v6856
    %9108 = vmatprep.subr.bf16.mxu0 0
    %9109 = vmatpush2.bf16.msra.mxu0 %v6855
    %9110 = vmatprep.subr.bf16.mxu0 0
    %9111 = vmatpush2.bf16.msra.mxu0 %v6854
    %9112 = vmatprep.subr.bf16.mxu0 0
    %9113 = vmatpush2.bf16.msra.mxu0 %v6853
    %9114 = vmatprep.subr.bf16.mxu0 0
    %9115 = vmatpush2.bf16.msra.mxu0 %v6852
    %9116 = vmatprep.mubr.bf16.mxu0 %v2381
    %9117 = vmatmul.mubr.bf16.gmra.mxu0 %v2380
    %v9118 = vpop.f32.mrf.mxu0
    %v9119 = vadd.f32 %v9079, %v9118
    %v9120 = vpop.f32.mrf.mxu0
    %v9121 = vpop.f32.mrf.mxu0
    %v9122 = vpop.f32.mrf.mxu0
    %9123 = vdwg.mxu0
    %9124 = vmatprep.subr.bf16.mxu0 0
    %9125 = vmatpush1.bf16.msra.mxu0 %v6867
    %9126 = vmatprep.subr.bf16.mxu0 0
    %9127 = vmatpush1.bf16.msra.mxu0 %v6866
    %9128 = vmatprep.subr.bf16.mxu0 0
    %9129 = vmatpush1.bf16.msra.mxu0 %v6865
    %9130 = vmatprep.subr.bf16.mxu0 0
    %9131 = vmatpush1.bf16.msra.mxu0 %v6864
    %9132 = vmatprep.subr.bf16.mxu0 0
    %9133 = vmatpush1.bf16.msra.mxu0 %v6863
    %9134 = vmatprep.subr.bf16.mxu0 0
    %9135 = vmatpush1.bf16.msra.mxu0 %v6862
    %9136 = vmatprep.subr.bf16.mxu0 0
    %9137 = vmatpush1.bf16.msra.mxu0 %v6861
    %9138 = vmatprep.subr.bf16.mxu0 0
    %9139 = vmatpush1.bf16.msra.mxu0 %v6860
    %9140 = vmatprep.subr.bf16.mxu0 0
    %9141 = vmatpush2.bf16.msra.mxu0 %v6875
    %9142 = vmatprep.subr.bf16.mxu0 0
    %9143 = vmatpush2.bf16.msra.mxu0 %v6874
    %9144 = vmatprep.subr.bf16.mxu0 0
    %9145 = vmatpush2.bf16.msra.mxu0 %v6873
    %9146 = vmatprep.subr.bf16.mxu0 0
    %9147 = vmatpush2.bf16.msra.mxu0 %v6872
    %9148 = vmatprep.subr.bf16.mxu0 0
    %9149 = vmatpush2.bf16.msra.mxu0 %v6871
    %9150 = vmatprep.subr.bf16.mxu0 0
    %9151 = vmatpush2.bf16.msra.mxu0 %v6870
    %9152 = vmatprep.subr.bf16.mxu0 0
    %9153 = vmatpush2.bf16.msra.mxu0 %v6869
    %9154 = vmatprep.subr.bf16.mxu0 0
    %9155 = vmatpush2.bf16.msra.mxu0 %v6868
    %9156 = vmatprep.mubr.bf16.mxu0 %v2383
    %9157 = vmatmul.mubr.bf16.gmra.mxu0 %v2382
    %v9158 = vpop.f32.mrf.mxu0
    %v9159 = vadd.f32 %v9119, %v9158
    %v9160 = vpop.f32.mrf.mxu0
    %v9161 = vpop.f32.mrf.mxu0
    %v9162 = vpop.f32.mrf.mxu0
    %9163 = vdwg.mxu0
    %9164 = vmatprep.subr.bf16.mxu0 0
    %9165 = vmatpush1.bf16.msra.mxu0 %v6883
    %9166 = vmatprep.subr.bf16.mxu0 0
    %9167 = vmatpush1.bf16.msra.mxu0 %v6882
    %9168 = vmatprep.subr.bf16.mxu0 0
    %9169 = vmatpush1.bf16.msra.mxu0 %v6881
    %9170 = vmatprep.subr.bf16.mxu0 0
    %9171 = vmatpush1.bf16.msra.mxu0 %v6880
    %9172 = vmatprep.subr.bf16.mxu0 0
    %9173 = vmatpush1.bf16.msra.mxu0 %v6879
    %9174 = vmatprep.subr.bf16.mxu0 0
    %9175 = vmatpush1.bf16.msra.mxu0 %v6878
    %9176 = vmatprep.subr.bf16.mxu0 0
    %9177 = vmatpush1.bf16.msra.mxu0 %v6877
    %9178 = vmatprep.subr.bf16.mxu0 0
    %9179 = vmatpush1.bf16.msra.mxu0 %v6876
    %9180 = vmatprep.subr.bf16.mxu0 0
    %9181 = vmatpush2.bf16.msra.mxu0 %v6891
    %9182 = vmatprep.subr.bf16.mxu0 0
    %9183 = vmatpush2.bf16.msra.mxu0 %v6890
    %9184 = vmatprep.subr.bf16.mxu0 0
    %9185 = vmatpush2.bf16.msra.mxu0 %v6889
    %9186 = vmatprep.subr.bf16.mxu0 0
    %9187 = vmatpush2.bf16.msra.mxu0 %v6888
    %9188 = vmatprep.subr.bf16.mxu0 0
    %9189 = vmatpush2.bf16.msra.mxu0 %v6887
    %9190 = vmatprep.subr.bf16.mxu0 0
    %9191 = vmatpush2.bf16.msra.mxu0 %v6886
    %9192 = vmatprep.subr.bf16.mxu0 0
    %9193 = vmatpush2.bf16.msra.mxu0 %v6885
    %9194 = vmatprep.subr.bf16.mxu0 0
    %9195 = vmatpush2.bf16.msra.mxu0 %v6884
    %9196 = vmatprep.mubr.bf16.mxu0 %v2385
    %9197 = vmatmul.mubr.bf16.gmra.mxu0 %v2384
    %v9198 = vpop.f32.mrf.mxu0
    %v9199 = vadd.f32 %v9159, %v9198
    %v9200 = vpop.f32.mrf.mxu0
    %v9201 = vpop.f32.mrf.mxu0
    %v9202 = vpop.f32.mrf.mxu0
    %9203 = vdwg.mxu0
    %9204 = vmatprep.subr.bf16.mxu0 0
    %9205 = vmatpush1.bf16.msra.mxu0 %v6899
    %9206 = vmatprep.subr.bf16.mxu0 0
    %9207 = vmatpush1.bf16.msra.mxu0 %v6898
    %9208 = vmatprep.subr.bf16.mxu0 0
    %9209 = vmatpush1.bf16.msra.mxu0 %v6897
    %9210 = vmatprep.subr.bf16.mxu0 0
    %9211 = vmatpush1.bf16.msra.mxu0 %v6896
    %9212 = vmatprep.subr.bf16.mxu0 0
    %9213 = vmatpush1.bf16.msra.mxu0 %v6895
    %9214 = vmatprep.subr.bf16.mxu0 0
    %9215 = vmatpush1.bf16.msra.mxu0 %v6894
    %9216 = vmatprep.subr.bf16.mxu0 0
    %9217 = vmatpush1.bf16.msra.mxu0 %v6893
    %9218 = vmatprep.subr.bf16.mxu0 0
    %9219 = vmatpush1.bf16.msra.mxu0 %v6892
    %9220 = vmatprep.subr.bf16.mxu0 0
    %9221 = vmatpush2.bf16.msra.mxu0 %v6907
    %9222 = vmatprep.subr.bf16.mxu0 0
    %9223 = vmatpush2.bf16.msra.mxu0 %v6906
    %9224 = vmatprep.subr.bf16.mxu0 0
    %9225 = vmatpush2.bf16.msra.mxu0 %v6905
    %9226 = vmatprep.subr.bf16.mxu0 0
    %9227 = vmatpush2.bf16.msra.mxu0 %v6904
    %9228 = vmatprep.subr.bf16.mxu0 0
    %9229 = vmatpush2.bf16.msra.mxu0 %v6903
    %9230 = vmatprep.subr.bf16.mxu0 0
    %9231 = vmatpush2.bf16.msra.mxu0 %v6902
    %9232 = vmatprep.subr.bf16.mxu0 0
    %9233 = vmatpush2.bf16.msra.mxu0 %v6901
    %9234 = vmatprep.subr.bf16.mxu0 0
    %9235 = vmatpush2.bf16.msra.mxu0 %v6900
    %9236 = vmatprep.mubr.bf16.mxu0 %v2387
    %9237 = vmatmul.mubr.bf16.gmra.mxu0 %v2386
    %v9238 = vpop.f32.mrf.mxu0
    %v9239 = vadd.f32 %v9199, %v9238
    %v9240 = vpop.f32.mrf.mxu0
    %v9241 = vpop.f32.mrf.mxu0
    %v9242 = vpop.f32.mrf.mxu0
    %9243 = vdwg.mxu0
    %9244 = vmatprep.subr.bf16.mxu0 0
    %9245 = vmatpush1.bf16.msra.mxu0 %v6915
    %9246 = vmatprep.subr.bf16.mxu0 0
    %9247 = vmatpush1.bf16.msra.mxu0 %v6914
    %9248 = vmatprep.subr.bf16.mxu0 0
    %9249 = vmatpush1.bf16.msra.mxu0 %v6913
    %9250 = vmatprep.subr.bf16.mxu0 0
    %9251 = vmatpush1.bf16.msra.mxu0 %v6912
    %9252 = vmatprep.subr.bf16.mxu0 0
    %9253 = vmatpush1.bf16.msra.mxu0 %v6911
    %9254 = vmatprep.subr.bf16.mxu0 0
    %9255 = vmatpush1.bf16.msra.mxu0 %v6910
    %9256 = vmatprep.subr.bf16.mxu0 0
    %9257 = vmatpush1.bf16.msra.mxu0 %v6909
    %9258 = vmatprep.subr.bf16.mxu0 0
    %9259 = vmatpush1.bf16.msra.mxu0 %v6908
    %9260 = vmatprep.subr.bf16.mxu0 0
    %9261 = vmatpush2.bf16.msra.mxu0 %v6923
    %9262 = vmatprep.subr.bf16.mxu0 0
    %9263 = vmatpush2.bf16.msra.mxu0 %v6922
    %9264 = vmatprep.subr.bf16.mxu0 0
    %9265 = vmatpush2.bf16.msra.mxu0 %v6921
    %9266 = vmatprep.subr.bf16.mxu0 0
    %9267 = vmatpush2.bf16.msra.mxu0 %v6920
    %9268 = vmatprep.subr.bf16.mxu0 0
    %9269 = vmatpush2.bf16.msra.mxu0 %v6919
    %9270 = vmatprep.subr.bf16.mxu0 0
    %9271 = vmatpush2.bf16.msra.mxu0 %v6918
    %9272 = vmatprep.subr.bf16.mxu0 0
    %9273 = vmatpush2.bf16.msra.mxu0 %v6917
    %9274 = vmatprep.subr.bf16.mxu0 0
    %9275 = vmatpush2.bf16.msra.mxu0 %v6916
    %9276 = vmatprep.mubr.bf16.mxu0 %v2389
    %9277 = vmatmul.mubr.bf16.gmra.mxu0 %v2388
    %v9278 = vpop.f32.mrf.mxu0
    %v9279 = vadd.f32 %v9239, %v9278
    %v9280 = vpop.f32.mrf.mxu0
    %v9281 = vpop.f32.mrf.mxu0
    %v9282 = vpop.f32.mrf.mxu0
    %9283 = vdwg.mxu0
    %9284 = vmatprep.subr.bf16.mxu0 0
    %9285 = vmatpush1.bf16.msra.mxu0 %v6931
    %9286 = vmatprep.subr.bf16.mxu0 0
    %9287 = vmatpush1.bf16.msra.mxu0 %v6930
    %9288 = vmatprep.subr.bf16.mxu0 0
    %9289 = vmatpush1.bf16.msra.mxu0 %v6929
    %9290 = vmatprep.subr.bf16.mxu0 0
    %9291 = vmatpush1.bf16.msra.mxu0 %v6928
    %9292 = vmatprep.subr.bf16.mxu0 0
    %9293 = vmatpush1.bf16.msra.mxu0 %v6927
    %9294 = vmatprep.subr.bf16.mxu0 0
    %9295 = vmatpush1.bf16.msra.mxu0 %v6926
    %9296 = vmatprep.subr.bf16.mxu0 0
    %9297 = vmatpush1.bf16.msra.mxu0 %v6925
    %9298 = vmatprep.subr.bf16.mxu0 0
    %9299 = vmatpush1.bf16.msra.mxu0 %v6924
    %9300 = vmatprep.subr.bf16.mxu0 0
    %9301 = vmatpush2.bf16.msra.mxu0 %v6939
    %9302 = vmatprep.subr.bf16.mxu0 0
    %9303 = vmatpush2.bf16.msra.mxu0 %v6938
    %9304 = vmatprep.subr.bf16.mxu0 0
    %9305 = vmatpush2.bf16.msra.mxu0 %v6937
    %9306 = vmatprep.subr.bf16.mxu0 0
    %9307 = vmatpush2.bf16.msra.mxu0 %v6936
    %9308 = vmatprep.subr.bf16.mxu0 0
    %9309 = vmatpush2.bf16.msra.mxu0 %v6935
    %9310 = vmatprep.subr.bf16.mxu0 0
    %9311 = vmatpush2.bf16.msra.mxu0 %v6934
    %9312 = vmatprep.subr.bf16.mxu0 0
    %9313 = vmatpush2.bf16.msra.mxu0 %v6933
    %9314 = vmatprep.subr.bf16.mxu0 0
    %9315 = vmatpush2.bf16.msra.mxu0 %v6932
    %9316 = vmatprep.mubr.bf16.mxu0 %v2391
    %9317 = vmatmul.mubr.bf16.gmra.mxu0 %v2390
    %v9318 = vpop.f32.mrf.mxu0
    %v9319 = vadd.f32 %v9279, %v9318
    %v9320 = vpop.f32.mrf.mxu0
    %v9321 = vpop.f32.mrf.mxu0
    %v9322 = vpop.f32.mrf.mxu0
    %9323 = vdwg.mxu0
    %9324 = vmatprep.subr.bf16.mxu0 0
    %9325 = vmatpush1.bf16.msra.mxu0 %v6947
    %9326 = vmatprep.subr.bf16.mxu0 0
    %9327 = vmatpush1.bf16.msra.mxu0 %v6946
    %9328 = vmatprep.subr.bf16.mxu0 0
    %9329 = vmatpush1.bf16.msra.mxu0 %v6945
    %9330 = vmatprep.subr.bf16.mxu0 0
    %9331 = vmatpush1.bf16.msra.mxu0 %v6944
    %9332 = vmatprep.subr.bf16.mxu0 0
    %9333 = vmatpush1.bf16.msra.mxu0 %v6943
    %9334 = vmatprep.subr.bf16.mxu0 0
    %9335 = vmatpush1.bf16.msra.mxu0 %v6942
    %9336 = vmatprep.subr.bf16.mxu0 0
    %9337 = vmatpush1.bf16.msra.mxu0 %v6941
    %9338 = vmatprep.subr.bf16.mxu0 0
    %9339 = vmatpush1.bf16.msra.mxu0 %v6940
    %9340 = vmatprep.subr.bf16.mxu0 0
    %9341 = vmatpush2.bf16.msra.mxu0 %v6955
    %9342 = vmatprep.subr.bf16.mxu0 0
    %9343 = vmatpush2.bf16.msra.mxu0 %v6954
    %9344 = vmatprep.subr.bf16.mxu0 0
    %9345 = vmatpush2.bf16.msra.mxu0 %v6953
    %9346 = vmatprep.subr.bf16.mxu0 0
    %9347 = vmatpush2.bf16.msra.mxu0 %v6952
    %9348 = vmatprep.subr.bf16.mxu0 0
    %9349 = vmatpush2.bf16.msra.mxu0 %v6951
    %9350 = vmatprep.subr.bf16.mxu0 0
    %9351 = vmatpush2.bf16.msra.mxu0 %v6950
    %9352 = vmatprep.subr.bf16.mxu0 0
    %9353 = vmatpush2.bf16.msra.mxu0 %v6949
    %9354 = vmatprep.subr.bf16.mxu0 0
    %9355 = vmatpush2.bf16.msra.mxu0 %v6948
    %9356 = vmatprep.mubr.bf16.mxu0 %v2393
    %9357 = vmatmul.mubr.bf16.gmra.mxu0 %v2392
    %v9358 = vpop.f32.mrf.mxu0
    %v9359 = vadd.f32 %v9319, %v9358
    %v9360 = vpop.f32.mrf.mxu0
    %v9361 = vpop.f32.mrf.mxu0
    %v9362 = vpop.f32.mrf.mxu0
    %9363 = vdwg.mxu0
    %9364 = vmatprep.subr.bf16.mxu0 0
    %9365 = vmatpush1.bf16.msra.mxu0 %v6963
    %9366 = vmatprep.subr.bf16.mxu0 0
    %9367 = vmatpush1.bf16.msra.mxu0 %v6962
    %9368 = vmatprep.subr.bf16.mxu0 0
    %9369 = vmatpush1.bf16.msra.mxu0 %v6961
    %9370 = vmatprep.subr.bf16.mxu0 0
    %9371 = vmatpush1.bf16.msra.mxu0 %v6960
    %9372 = vmatprep.subr.bf16.mxu0 0
    %9373 = vmatpush1.bf16.msra.mxu0 %v6959
    %9374 = vmatprep.subr.bf16.mxu0 0
    %9375 = vmatpush1.bf16.msra.mxu0 %v6958
    %9376 = vmatprep.subr.bf16.mxu0 0
    %9377 = vmatpush1.bf16.msra.mxu0 %v6957
    %9378 = vmatprep.subr.bf16.mxu0 0
    %9379 = vmatpush1.bf16.msra.mxu0 %v6956
    %9380 = vmatprep.subr.bf16.mxu0 0
    %9381 = vmatpush2.bf16.msra.mxu0 %v6971
    %9382 = vmatprep.subr.bf16.mxu0 0
    %9383 = vmatpush2.bf16.msra.mxu0 %v6970
    %9384 = vmatprep.subr.bf16.mxu0 0
    %9385 = vmatpush2.bf16.msra.mxu0 %v6969
    %9386 = vmatprep.subr.bf16.mxu0 0
    %9387 = vmatpush2.bf16.msra.mxu0 %v6968
    %9388 = vmatprep.subr.bf16.mxu0 0
    %9389 = vmatpush2.bf16.msra.mxu0 %v6967
    %9390 = vmatprep.subr.bf16.mxu0 0
    %9391 = vmatpush2.bf16.msra.mxu0 %v6966
    %9392 = vmatprep.subr.bf16.mxu0 0
    %9393 = vmatpush2.bf16.msra.mxu0 %v6965
    %9394 = vmatprep.subr.bf16.mxu0 0
    %9395 = vmatpush2.bf16.msra.mxu0 %v6964
    %9396 = vmatprep.mubr.bf16.mxu0 %v2395
    %9397 = vmatmul.mubr.bf16.gmra.mxu0 %v2394
    %v9398 = vpop.f32.mrf.mxu0
    %v9399 = vadd.f32 %v9359, %v9398
    %v9400 = vpop.f32.mrf.mxu0
    %v9401 = vpop.f32.mrf.mxu0
    %v9402 = vpop.f32.mrf.mxu0
    %9403 = vdwg.mxu0
    %9404 = vmatprep.subr.bf16.mxu0 0
    %9405 = vmatpush1.bf16.msra.mxu0 %v6979
    %9406 = vmatprep.subr.bf16.mxu0 0
    %9407 = vmatpush1.bf16.msra.mxu0 %v6978
    %9408 = vmatprep.subr.bf16.mxu0 0
    %9409 = vmatpush1.bf16.msra.mxu0 %v6977
    %9410 = vmatprep.subr.bf16.mxu0 0
    %9411 = vmatpush1.bf16.msra.mxu0 %v6976
    %9412 = vmatprep.subr.bf16.mxu0 0
    %9413 = vmatpush1.bf16.msra.mxu0 %v6975
    %9414 = vmatprep.subr.bf16.mxu0 0
    %9415 = vmatpush1.bf16.msra.mxu0 %v6974
    %9416 = vmatprep.subr.bf16.mxu0 0
    %9417 = vmatpush1.bf16.msra.mxu0 %v6973
    %9418 = vmatprep.subr.bf16.mxu0 0
    %9419 = vmatpush1.bf16.msra.mxu0 %v6972
    %9420 = vmatprep.subr.bf16.mxu0 0
    %9421 = vmatpush2.bf16.msra.mxu0 %v6987
    %9422 = vmatprep.subr.bf16.mxu0 0
    %9423 = vmatpush2.bf16.msra.mxu0 %v6986
    %9424 = vmatprep.subr.bf16.mxu0 0
    %9425 = vmatpush2.bf16.msra.mxu0 %v6985
    %9426 = vmatprep.subr.bf16.mxu0 0
    %9427 = vmatpush2.bf16.msra.mxu0 %v6984
    %9428 = vmatprep.subr.bf16.mxu0 0
    %9429 = vmatpush2.bf16.msra.mxu0 %v6983
    %9430 = vmatprep.subr.bf16.mxu0 0
    %9431 = vmatpush2.bf16.msra.mxu0 %v6982
    %9432 = vmatprep.subr.bf16.mxu0 0
    %9433 = vmatpush2.bf16.msra.mxu0 %v6981
    %9434 = vmatprep.subr.bf16.mxu0 0
    %9435 = vmatpush2.bf16.msra.mxu0 %v6980
    %9436 = vmatprep.mubr.bf16.mxu0 %v2397
    %9437 = vmatmul.mubr.bf16.gmra.mxu0 %v2396
    %v9438 = vpop.f32.mrf.mxu0
    %v9439 = vadd.f32 %v9399, %v9438
    %v9440 = vpop.f32.mrf.mxu0
    %v9441 = vpop.f32.mrf.mxu0
    %v9442 = vpop.f32.mrf.mxu0
    %9443 = vdwg.mxu0
    %9444 = vmatprep.subr.bf16.mxu0 0
    %9445 = vmatpush1.bf16.msra.mxu0 %v6995
    %9446 = vmatprep.subr.bf16.mxu0 0
    %9447 = vmatpush1.bf16.msra.mxu0 %v6994
    %9448 = vmatprep.subr.bf16.mxu0 0
    %9449 = vmatpush1.bf16.msra.mxu0 %v6993
    %9450 = vmatprep.subr.bf16.mxu0 0
    %9451 = vmatpush1.bf16.msra.mxu0 %v6992
    %9452 = vmatprep.subr.bf16.mxu0 0
    %9453 = vmatpush1.bf16.msra.mxu0 %v6991
    %9454 = vmatprep.subr.bf16.mxu0 0
    %9455 = vmatpush1.bf16.msra.mxu0 %v6990
    %9456 = vmatprep.subr.bf16.mxu0 0
    %9457 = vmatpush1.bf16.msra.mxu0 %v6989
    %9458 = vmatprep.subr.bf16.mxu0 0
    %9459 = vmatpush1.bf16.msra.mxu0 %v6988
    %9460 = vmatprep.subr.bf16.mxu0 0
    %9461 = vmatpush2.bf16.msra.mxu0 %v7003
    %9462 = vmatprep.subr.bf16.mxu0 0
    %9463 = vmatpush2.bf16.msra.mxu0 %v7002
    %9464 = vmatprep.subr.bf16.mxu0 0
    %9465 = vmatpush2.bf16.msra.mxu0 %v7001
    %9466 = vmatprep.subr.bf16.mxu0 0
    %9467 = vmatpush2.bf16.msra.mxu0 %v7000
    %9468 = vmatprep.subr.bf16.mxu0 0
    %9469 = vmatpush2.bf16.msra.mxu0 %v6999
    %9470 = vmatprep.subr.bf16.mxu0 0
    %9471 = vmatpush2.bf16.msra.mxu0 %v6998
    %9472 = vmatprep.subr.bf16.mxu0 0
    %9473 = vmatpush2.bf16.msra.mxu0 %v6997
    %9474 = vmatprep.subr.bf16.mxu0 0
    %9475 = vmatpush2.bf16.msra.mxu0 %v6996
    %9476 = vmatprep.mubr.bf16.mxu0 %v2399
    %9477 = vmatmul.mubr.bf16.gmra.mxu0 %v2398
    %v9478 = vpop.f32.mrf.mxu0
    %v9479 = vadd.f32 %v9439, %v9478
    %v9480 = vpop.f32.mrf.mxu0
    %v9481 = vpop.f32.mrf.mxu0
    %v9482 = vpop.f32.mrf.mxu0
    %9483 = vdwg.mxu0
    %9484 = vmatprep.subr.bf16.mxu0 0
    %9485 = vmatpush1.bf16.msra.mxu0 %v7011
    %9486 = vmatprep.subr.bf16.mxu0 0
    %9487 = vmatpush1.bf16.msra.mxu0 %v7010
    %9488 = vmatprep.subr.bf16.mxu0 0
    %9489 = vmatpush1.bf16.msra.mxu0 %v7009
    %9490 = vmatprep.subr.bf16.mxu0 0
    %9491 = vmatpush1.bf16.msra.mxu0 %v7008
    %9492 = vmatprep.subr.bf16.mxu0 0
    %9493 = vmatpush1.bf16.msra.mxu0 %v7007
    %9494 = vmatprep.subr.bf16.mxu0 0
    %9495 = vmatpush1.bf16.msra.mxu0 %v7006
    %9496 = vmatprep.subr.bf16.mxu0 0
    %9497 = vmatpush1.bf16.msra.mxu0 %v7005
    %9498 = vmatprep.subr.bf16.mxu0 0
    %9499 = vmatpush1.bf16.msra.mxu0 %v7004
    %9500 = vmatprep.subr.bf16.mxu0 0
    %9501 = vmatpush2.bf16.msra.mxu0 %v7019
    %9502 = vmatprep.subr.bf16.mxu0 0
    %9503 = vmatpush2.bf16.msra.mxu0 %v7018
    %9504 = vmatprep.subr.bf16.mxu0 0
    %9505 = vmatpush2.bf16.msra.mxu0 %v7017
    %9506 = vmatprep.subr.bf16.mxu0 0
    %9507 = vmatpush2.bf16.msra.mxu0 %v7016
    %9508 = vmatprep.subr.bf16.mxu0 0
    %9509 = vmatpush2.bf16.msra.mxu0 %v7015
    %9510 = vmatprep.subr.bf16.mxu0 0
    %9511 = vmatpush2.bf16.msra.mxu0 %v7014
    %9512 = vmatprep.subr.bf16.mxu0 0
    %9513 = vmatpush2.bf16.msra.mxu0 %v7013
    %9514 = vmatprep.subr.bf16.mxu0 0
    %9515 = vmatpush2.bf16.msra.mxu0 %v7012
    %9516 = vmatprep.mubr.bf16.mxu0 %v2401
    %9517 = vmatmul.mubr.bf16.gmra.mxu0 %v2400
    %v9518 = vpop.f32.mrf.mxu0
    %v9519 = vadd.f32 %v9479, %v9518
    %v9520 = vpop.f32.mrf.mxu0
    %v9521 = vpop.f32.mrf.mxu0
    %v9522 = vpop.f32.mrf.mxu0
    %9523 = vdwg.mxu0
    %9524 = vmatprep.subr.bf16.mxu0 0
    %9525 = vmatpush1.bf16.msra.mxu0 %v7027
    %9526 = vmatprep.subr.bf16.mxu0 0
    %9527 = vmatpush1.bf16.msra.mxu0 %v7026
    %9528 = vmatprep.subr.bf16.mxu0 0
    %9529 = vmatpush1.bf16.msra.mxu0 %v7025
    %9530 = vmatprep.subr.bf16.mxu0 0
    %9531 = vmatpush1.bf16.msra.mxu0 %v7024
    %9532 = vmatprep.subr.bf16.mxu0 0
    %9533 = vmatpush1.bf16.msra.mxu0 %v7023
    %9534 = vmatprep.subr.bf16.mxu0 0
    %9535 = vmatpush1.bf16.msra.mxu0 %v7022
    %9536 = vmatprep.subr.bf16.mxu0 0
    %9537 = vmatpush1.bf16.msra.mxu0 %v7021
    %9538 = vmatprep.subr.bf16.mxu0 0
    %9539 = vmatpush1.bf16.msra.mxu0 %v7020
    %9540 = vmatprep.subr.bf16.mxu0 0
    %9541 = vmatpush2.bf16.msra.mxu0 %v7035
    %9542 = vmatprep.subr.bf16.mxu0 0
    %9543 = vmatpush2.bf16.msra.mxu0 %v7034
    %9544 = vmatprep.subr.bf16.mxu0 0
    %9545 = vmatpush2.bf16.msra.mxu0 %v7033
    %9546 = vmatprep.subr.bf16.mxu0 0
    %9547 = vmatpush2.bf16.msra.mxu0 %v7032
    %9548 = vmatprep.subr.bf16.mxu0 0
    %9549 = vmatpush2.bf16.msra.mxu0 %v7031
    %9550 = vmatprep.subr.bf16.mxu0 0
    %9551 = vmatpush2.bf16.msra.mxu0 %v7030
    %9552 = vmatprep.subr.bf16.mxu0 0
    %9553 = vmatpush2.bf16.msra.mxu0 %v7029
    %9554 = vmatprep.subr.bf16.mxu0 0
    %9555 = vmatpush2.bf16.msra.mxu0 %v7028
    %9556 = vmatprep.mubr.bf16.mxu0 %v2403
    %9557 = vmatmul.mubr.bf16.gmra.mxu0 %v2402
    %v9558 = vpop.f32.mrf.mxu0
    %v9559 = vadd.f32 %v9519, %v9558
    %v9560 = vpop.f32.mrf.mxu0
    %v9561 = vpop.f32.mrf.mxu0
    %v9562 = vpop.f32.mrf.mxu0
    %9563 = vdwg.mxu0
    %9564 = vmatprep.subr.bf16.mxu0 0
    %9565 = vmatpush1.bf16.msra.mxu0 %v7043
    %9566 = vmatprep.subr.bf16.mxu0 0
    %9567 = vmatpush1.bf16.msra.mxu0 %v7042
    %9568 = vmatprep.subr.bf16.mxu0 0
    %9569 = vmatpush1.bf16.msra.mxu0 %v7041
    %9570 = vmatprep.subr.bf16.mxu0 0
    %9571 = vmatpush1.bf16.msra.mxu0 %v7040
    %9572 = vmatprep.subr.bf16.mxu0 0
    %9573 = vmatpush1.bf16.msra.mxu0 %v7039
    %9574 = vmatprep.subr.bf16.mxu0 0
    %9575 = vmatpush1.bf16.msra.mxu0 %v7038
    %9576 = vmatprep.subr.bf16.mxu0 0
    %9577 = vmatpush1.bf16.msra.mxu0 %v7037
    %9578 = vmatprep.subr.bf16.mxu0 0
    %9579 = vmatpush1.bf16.msra.mxu0 %v7036
    %9580 = vmatprep.subr.bf16.mxu0 0
    %9581 = vmatpush2.bf16.msra.mxu0 %v7051
    %9582 = vmatprep.subr.bf16.mxu0 0
    %9583 = vmatpush2.bf16.msra.mxu0 %v7050
    %9584 = vmatprep.subr.bf16.mxu0 0
    %9585 = vmatpush2.bf16.msra.mxu0 %v7049
    %9586 = vmatprep.subr.bf16.mxu0 0
    %9587 = vmatpush2.bf16.msra.mxu0 %v7048
    %9588 = vmatprep.subr.bf16.mxu0 0
    %9589 = vmatpush2.bf16.msra.mxu0 %v7047
    %9590 = vmatprep.subr.bf16.mxu0 0
    %9591 = vmatpush2.bf16.msra.mxu0 %v7046
    %9592 = vmatprep.subr.bf16.mxu0 0
    %9593 = vmatpush2.bf16.msra.mxu0 %v7045
    %9594 = vmatprep.subr.bf16.mxu0 0
    %9595 = vmatpush2.bf16.msra.mxu0 %v7044
    %9596 = vmatprep.mubr.bf16.mxu0 %v2405
    %9597 = vmatmul.mubr.bf16.gmra.mxu0 %v2404
    %v9598 = vpop.f32.mrf.mxu0
    %v9599 = vadd.f32 %v9559, %v9598
    %v9600 = vpop.f32.mrf.mxu0
    %v9601 = vpop.f32.mrf.mxu0
    %v9602 = vpop.f32.mrf.mxu0
    %9603 = vdwg.mxu0
    %9604 = vmatprep.subr.bf16.mxu0 0
    %9605 = vmatpush1.bf16.msra.mxu0 %v7059
    %9606 = vmatprep.subr.bf16.mxu0 0
    %9607 = vmatpush1.bf16.msra.mxu0 %v7058
    %9608 = vmatprep.subr.bf16.mxu0 0
    %9609 = vmatpush1.bf16.msra.mxu0 %v7057
    %9610 = vmatprep.subr.bf16.mxu0 0
    %9611 = vmatpush1.bf16.msra.mxu0 %v7056
    %9612 = vmatprep.subr.bf16.mxu0 0
    %9613 = vmatpush1.bf16.msra.mxu0 %v7055
    %9614 = vmatprep.subr.bf16.mxu0 0
    %9615 = vmatpush1.bf16.msra.mxu0 %v7054
    %9616 = vmatprep.subr.bf16.mxu0 0
    %9617 = vmatpush1.bf16.msra.mxu0 %v7053
    %9618 = vmatprep.subr.bf16.mxu0 0
    %9619 = vmatpush1.bf16.msra.mxu0 %v7052
    %9620 = vmatprep.subr.bf16.mxu0 0
    %9621 = vmatpush2.bf16.msra.mxu0 %v7067
    %9622 = vmatprep.subr.bf16.mxu0 0
    %9623 = vmatpush2.bf16.msra.mxu0 %v7066
    %9624 = vmatprep.subr.bf16.mxu0 0
    %9625 = vmatpush2.bf16.msra.mxu0 %v7065
    %9626 = vmatprep.subr.bf16.mxu0 0
    %9627 = vmatpush2.bf16.msra.mxu0 %v7064
    %9628 = vmatprep.subr.bf16.mxu0 0
    %9629 = vmatpush2.bf16.msra.mxu0 %v7063
    %9630 = vmatprep.subr.bf16.mxu0 0
    %9631 = vmatpush2.bf16.msra.mxu0 %v7062
    %9632 = vmatprep.subr.bf16.mxu0 0
    %9633 = vmatpush2.bf16.msra.mxu0 %v7061
    %9634 = vmatprep.subr.bf16.mxu0 0
    %9635 = vmatpush2.bf16.msra.mxu0 %v7060
    %9636 = vmatprep.mubr.bf16.mxu0 %v2407
    %9637 = vmatmul.mubr.bf16.gmra.mxu0 %v2406
    %v9638 = vpop.f32.mrf.mxu0
    %v9639 = vadd.f32 %v9599, %v9638
    %v9640 = vpop.f32.mrf.mxu0
    %v9641 = vpop.f32.mrf.mxu0
    %v9642 = vpop.f32.mrf.mxu0
    %9643 = vdwg.mxu0
    %9644 = vmatprep.subr.bf16.mxu0 0
    %9645 = vmatpush1.bf16.msra.mxu0 %v7075
    %9646 = vmatprep.subr.bf16.mxu0 0
    %9647 = vmatpush1.bf16.msra.mxu0 %v7074
    %9648 = vmatprep.subr.bf16.mxu0 0
    %9649 = vmatpush1.bf16.msra.mxu0 %v7073
    %9650 = vmatprep.subr.bf16.mxu0 0
    %9651 = vmatpush1.bf16.msra.mxu0 %v7072
    %9652 = vmatprep.subr.bf16.mxu0 0
    %9653 = vmatpush1.bf16.msra.mxu0 %v7071
    %9654 = vmatprep.subr.bf16.mxu0 0
    %9655 = vmatpush1.bf16.msra.mxu0 %v7070
    %9656 = vmatprep.subr.bf16.mxu0 0
    %9657 = vmatpush1.bf16.msra.mxu0 %v7069
    %9658 = vmatprep.subr.bf16.mxu0 0
    %9659 = vmatpush1.bf16.msra.mxu0 %v7068
    %9660 = vmatprep.subr.bf16.mxu0 0
    %9661 = vmatpush2.bf16.msra.mxu0 %v7083
    %9662 = vmatprep.subr.bf16.mxu0 0
    %9663 = vmatpush2.bf16.msra.mxu0 %v7082
    %9664 = vmatprep.subr.bf16.mxu0 0
    %9665 = vmatpush2.bf16.msra.mxu0 %v7081
    %9666 = vmatprep.subr.bf16.mxu0 0
    %9667 = vmatpush2.bf16.msra.mxu0 %v7080
    %9668 = vmatprep.subr.bf16.mxu0 0
    %9669 = vmatpush2.bf16.msra.mxu0 %v7079
    %9670 = vmatprep.subr.bf16.mxu0 0
    %9671 = vmatpush2.bf16.msra.mxu0 %v7078
    %9672 = vmatprep.subr.bf16.mxu0 0
    %9673 = vmatpush2.bf16.msra.mxu0 %v7077
    %9674 = vmatprep.subr.bf16.mxu0 0
    %9675 = vmatpush2.bf16.msra.mxu0 %v7076
    %9676 = vmatprep.mubr.bf16.mxu0 %v2409
    %9677 = vmatmul.mubr.bf16.gmra.mxu0 %v2408
    %v9678 = vpop.f32.mrf.mxu0
    %v9679 = vadd.f32 %v9639, %v9678
    %v9680 = vpop.f32.mrf.mxu0
    %v9681 = vpop.f32.mrf.mxu0
    %v9682 = vpop.f32.mrf.mxu0
    %9683 = vdwg.mxu0
    %9684 = vmatprep.subr.bf16.mxu0 0
    %9685 = vmatpush1.bf16.msra.mxu0 %v7091
    %9686 = vmatprep.subr.bf16.mxu0 0
    %9687 = vmatpush1.bf16.msra.mxu0 %v7090
    %9688 = vmatprep.subr.bf16.mxu0 0
    %9689 = vmatpush1.bf16.msra.mxu0 %v7089
    %9690 = vmatprep.subr.bf16.mxu0 0
    %9691 = vmatpush1.bf16.msra.mxu0 %v7088
    %9692 = vmatprep.subr.bf16.mxu0 0
    %9693 = vmatpush1.bf16.msra.mxu0 %v7087
    %9694 = vmatprep.subr.bf16.mxu0 0
    %9695 = vmatpush1.bf16.msra.mxu0 %v7086
    %9696 = vmatprep.subr.bf16.mxu0 0
    %9697 = vmatpush1.bf16.msra.mxu0 %v7085
    %9698 = vmatprep.subr.bf16.mxu0 0
    %9699 = vmatpush1.bf16.msra.mxu0 %v7084
    %9700 = vmatprep.subr.bf16.mxu0 0
    %9701 = vmatpush2.bf16.msra.mxu0 %v7099
    %9702 = vmatprep.subr.bf16.mxu0 0
    %9703 = vmatpush2.bf16.msra.mxu0 %v7098
    %9704 = vmatprep.subr.bf16.mxu0 0
    %9705 = vmatpush2.bf16.msra.mxu0 %v7097
    %9706 = vmatprep.subr.bf16.mxu0 0
    %9707 = vmatpush2.bf16.msra.mxu0 %v7096
    %9708 = vmatprep.subr.bf16.mxu0 0
    %9709 = vmatpush2.bf16.msra.mxu0 %v7095
    %9710 = vmatprep.subr.bf16.mxu0 0
    %9711 = vmatpush2.bf16.msra.mxu0 %v7094
    %9712 = vmatprep.subr.bf16.mxu0 0
    %9713 = vmatpush2.bf16.msra.mxu0 %v7093
    %9714 = vmatprep.subr.bf16.mxu0 0
    %9715 = vmatpush2.bf16.msra.mxu0 %v7092
    %9716 = vmatprep.mubr.bf16.mxu0 %v2411
    %9717 = vmatmul.mubr.bf16.gmra.mxu0 %v2410
    %v9718 = vpop.f32.mrf.mxu0
    %v9719 = vadd.f32 %v9679, %v9718
    %v9720 = vpop.f32.mrf.mxu0
    %v9721 = vpop.f32.mrf.mxu0
    %v9722 = vpop.f32.mrf.mxu0
    %9723 = vdwg.mxu0
    %9724 = vmatprep.subr.bf16.mxu0 0
    %9725 = vmatpush1.bf16.msra.mxu0 %v7107
    %9726 = vmatprep.subr.bf16.mxu0 0
    %9727 = vmatpush1.bf16.msra.mxu0 %v7106
    %9728 = vmatprep.subr.bf16.mxu0 0
    %9729 = vmatpush1.bf16.msra.mxu0 %v7105
    %9730 = vmatprep.subr.bf16.mxu0 0
    %9731 = vmatpush1.bf16.msra.mxu0 %v7104
    %9732 = vmatprep.subr.bf16.mxu0 0
    %9733 = vmatpush1.bf16.msra.mxu0 %v7103
    %9734 = vmatprep.subr.bf16.mxu0 0
    %9735 = vmatpush1.bf16.msra.mxu0 %v7102
    %9736 = vmatprep.subr.bf16.mxu0 0
    %9737 = vmatpush1.bf16.msra.mxu0 %v7101
    %9738 = vmatprep.subr.bf16.mxu0 0
    %9739 = vmatpush1.bf16.msra.mxu0 %v7100
    %9740 = vmatprep.subr.bf16.mxu0 0
    %9741 = vmatpush2.bf16.msra.mxu0 %v7115
    %9742 = vmatprep.subr.bf16.mxu0 0
    %9743 = vmatpush2.bf16.msra.mxu0 %v7114
    %9744 = vmatprep.subr.bf16.mxu0 0
    %9745 = vmatpush2.bf16.msra.mxu0 %v7113
    %9746 = vmatprep.subr.bf16.mxu0 0
    %9747 = vmatpush2.bf16.msra.mxu0 %v7112
    %9748 = vmatprep.subr.bf16.mxu0 0
    %9749 = vmatpush2.bf16.msra.mxu0 %v7111
    %9750 = vmatprep.subr.bf16.mxu0 0
    %9751 = vmatpush2.bf16.msra.mxu0 %v7110
    %9752 = vmatprep.subr.bf16.mxu0 0
    %9753 = vmatpush2.bf16.msra.mxu0 %v7109
    %9754 = vmatprep.subr.bf16.mxu0 0
    %9755 = vmatpush2.bf16.msra.mxu0 %v7108
    %9756 = vmatprep.mubr.bf16.mxu0 %v2413
    %9757 = vmatmul.mubr.bf16.gmra.mxu0 %v2412
    %v9758 = vpop.f32.mrf.mxu0
    %v9759 = vadd.f32 %v9719, %v9758
    %v9760 = vpop.f32.mrf.mxu0
    %v9761 = vpop.f32.mrf.mxu0
    %v9762 = vpop.f32.mrf.mxu0
    %9763 = vdwg.mxu0
    %9764 = vmatprep.subr.bf16.mxu0 0
    %9765 = vmatpush1.bf16.msra.mxu0 %v7123
    %9766 = vmatprep.subr.bf16.mxu0 0
    %9767 = vmatpush1.bf16.msra.mxu0 %v7122
    %9768 = vmatprep.subr.bf16.mxu0 0
    %9769 = vmatpush1.bf16.msra.mxu0 %v7121
    %9770 = vmatprep.subr.bf16.mxu0 0
    %9771 = vmatpush1.bf16.msra.mxu0 %v7120
    %9772 = vmatprep.subr.bf16.mxu0 0
    %9773 = vmatpush1.bf16.msra.mxu0 %v7119
    %9774 = vmatprep.subr.bf16.mxu0 0
    %9775 = vmatpush1.bf16.msra.mxu0 %v7118
    %9776 = vmatprep.subr.bf16.mxu0 0
    %9777 = vmatpush1.bf16.msra.mxu0 %v7117
    %9778 = vmatprep.subr.bf16.mxu0 0
    %9779 = vmatpush1.bf16.msra.mxu0 %v7116
    %9780 = vmatprep.subr.bf16.mxu0 0
    %9781 = vmatpush2.bf16.msra.mxu0 %v7131
    %9782 = vmatprep.subr.bf16.mxu0 0
    %9783 = vmatpush2.bf16.msra.mxu0 %v7130
    %9784 = vmatprep.subr.bf16.mxu0 0
    %9785 = vmatpush2.bf16.msra.mxu0 %v7129
    %9786 = vmatprep.subr.bf16.mxu0 0
    %9787 = vmatpush2.bf16.msra.mxu0 %v7128
    %9788 = vmatprep.subr.bf16.mxu0 0
    %9789 = vmatpush2.bf16.msra.mxu0 %v7127
    %9790 = vmatprep.subr.bf16.mxu0 0
    %9791 = vmatpush2.bf16.msra.mxu0 %v7126
    %9792 = vmatprep.subr.bf16.mxu0 0
    %9793 = vmatpush2.bf16.msra.mxu0 %v7125
    %9794 = vmatprep.subr.bf16.mxu0 0
    %9795 = vmatpush2.bf16.msra.mxu0 %v7124
    %9796 = vmatprep.mubr.bf16.mxu0 %v2415
    %9797 = vmatmul.mubr.bf16.gmra.mxu0 %v2414
    %v9798 = vpop.f32.mrf.mxu0
    %v9799 = vadd.f32 %v9759, %v9798
    %v9800 = vpop.f32.mrf.mxu0
    %v9801 = vpop.f32.mrf.mxu0
    %v9802 = vpop.f32.mrf.mxu0
    %9803 = vdwg.mxu0
    %9804 = vmatprep.subr.bf16.mxu0 0
    %9805 = vmatpush1.bf16.msra.mxu0 %v7139
    %9806 = vmatprep.subr.bf16.mxu0 0
    %9807 = vmatpush1.bf16.msra.mxu0 %v7138
    %9808 = vmatprep.subr.bf16.mxu0 0
    %9809 = vmatpush1.bf16.msra.mxu0 %v7137
    %9810 = vmatprep.subr.bf16.mxu0 0
    %9811 = vmatpush1.bf16.msra.mxu0 %v7136
    %9812 = vmatprep.subr.bf16.mxu0 0
    %9813 = vmatpush1.bf16.msra.mxu0 %v7135
    %9814 = vmatprep.subr.bf16.mxu0 0
    %9815 = vmatpush1.bf16.msra.mxu0 %v7134
    %9816 = vmatprep.subr.bf16.mxu0 0
    %9817 = vmatpush1.bf16.msra.mxu0 %v7133
    %9818 = vmatprep.subr.bf16.mxu0 0
    %9819 = vmatpush1.bf16.msra.mxu0 %v7132
    %9820 = vmatprep.subr.bf16.mxu0 0
    %9821 = vmatpush2.bf16.msra.mxu0 %v7147
    %9822 = vmatprep.subr.bf16.mxu0 0
    %9823 = vmatpush2.bf16.msra.mxu0 %v7146
    %9824 = vmatprep.subr.bf16.mxu0 0
    %9825 = vmatpush2.bf16.msra.mxu0 %v7145
    %9826 = vmatprep.subr.bf16.mxu0 0
    %9827 = vmatpush2.bf16.msra.mxu0 %v7144
    %9828 = vmatprep.subr.bf16.mxu0 0
    %9829 = vmatpush2.bf16.msra.mxu0 %v7143
    %9830 = vmatprep.subr.bf16.mxu0 0
    %9831 = vmatpush2.bf16.msra.mxu0 %v7142
    %9832 = vmatprep.subr.bf16.mxu0 0
    %9833 = vmatpush2.bf16.msra.mxu0 %v7141
    %9834 = vmatprep.subr.bf16.mxu0 0
    %9835 = vmatpush2.bf16.msra.mxu0 %v7140
    %9836 = vmatprep.mubr.bf16.mxu0 %v2417
    %9837 = vmatmul.mubr.bf16.gmra.mxu0 %v2416
    %v9838 = vpop.f32.mrf.mxu0
    %v9839 = vadd.f32 %v9799, %v9838
    %v9840 = vpop.f32.mrf.mxu0
    %v9841 = vpop.f32.mrf.mxu0
    %v9842 = vpop.f32.mrf.mxu0
    %9843 = vdwg.mxu0
    %9844 = vmatprep.subr.bf16.mxu0 0
    %9845 = vmatpush1.bf16.msra.mxu0 %v7155
    %9846 = vmatprep.subr.bf16.mxu0 0
    %9847 = vmatpush1.bf16.msra.mxu0 %v7154
    %9848 = vmatprep.subr.bf16.mxu0 0
    %9849 = vmatpush1.bf16.msra.mxu0 %v7153
    %9850 = vmatprep.subr.bf16.mxu0 0
    %9851 = vmatpush1.bf16.msra.mxu0 %v7152
    %9852 = vmatprep.subr.bf16.mxu0 0
    %9853 = vmatpush1.bf16.msra.mxu0 %v7151
    %9854 = vmatprep.subr.bf16.mxu0 0
    %9855 = vmatpush1.bf16.msra.mxu0 %v7150
    %9856 = vmatprep.subr.bf16.mxu0 0
    %9857 = vmatpush1.bf16.msra.mxu0 %v7149
    %9858 = vmatprep.subr.bf16.mxu0 0
    %9859 = vmatpush1.bf16.msra.mxu0 %v7148
    %9860 = vmatprep.subr.bf16.mxu0 0
    %9861 = vmatpush2.bf16.msra.mxu0 %v7163
    %9862 = vmatprep.subr.bf16.mxu0 0
    %9863 = vmatpush2.bf16.msra.mxu0 %v7162
    %9864 = vmatprep.subr.bf16.mxu0 0
    %9865 = vmatpush2.bf16.msra.mxu0 %v7161
    %9866 = vmatprep.subr.bf16.mxu0 0
    %9867 = vmatpush2.bf16.msra.mxu0 %v7160
    %9868 = vmatprep.subr.bf16.mxu0 0
    %9869 = vmatpush2.bf16.msra.mxu0 %v7159
    %9870 = vmatprep.subr.bf16.mxu0 0
    %9871 = vmatpush2.bf16.msra.mxu0 %v7158
    %9872 = vmatprep.subr.bf16.mxu0 0
    %9873 = vmatpush2.bf16.msra.mxu0 %v7157
    %9874 = vmatprep.subr.bf16.mxu0 0
    %9875 = vmatpush2.bf16.msra.mxu0 %v7156
    %9876 = vmatprep.mubr.bf16.mxu0 %v2419
    %9877 = vmatmul.mubr.bf16.gmra.mxu0 %v2418
    %v9878 = vpop.f32.mrf.mxu0
    %v9879 = vadd.f32 %v9839, %v9878
    %v9880 = vpop.f32.mrf.mxu0
    %v9881 = vpop.f32.mrf.mxu0
    %v9882 = vpop.f32.mrf.mxu0
    %9883 = vdwg.mxu0
    %9884 = vmatprep.subr.bf16.mxu0 0
    %9885 = vmatpush1.bf16.msra.mxu0 %v7171
    %9886 = vmatprep.subr.bf16.mxu0 0
    %9887 = vmatpush1.bf16.msra.mxu0 %v7170
    %9888 = vmatprep.subr.bf16.mxu0 0
    %9889 = vmatpush1.bf16.msra.mxu0 %v7169
    %9890 = vmatprep.subr.bf16.mxu0 0
    %9891 = vmatpush1.bf16.msra.mxu0 %v7168
    %9892 = vmatprep.subr.bf16.mxu0 0
    %9893 = vmatpush1.bf16.msra.mxu0 %v7167
    %9894 = vmatprep.subr.bf16.mxu0 0
    %9895 = vmatpush1.bf16.msra.mxu0 %v7166
    %9896 = vmatprep.subr.bf16.mxu0 0
    %9897 = vmatpush1.bf16.msra.mxu0 %v7165
    %9898 = vmatprep.subr.bf16.mxu0 0
    %9899 = vmatpush1.bf16.msra.mxu0 %v7164
    %9900 = vmatprep.subr.bf16.mxu0 0
    %9901 = vmatpush2.bf16.msra.mxu0 %v7179
    %9902 = vmatprep.subr.bf16.mxu0 0
    %9903 = vmatpush2.bf16.msra.mxu0 %v7178
    %9904 = vmatprep.subr.bf16.mxu0 0
    %9905 = vmatpush2.bf16.msra.mxu0 %v7177
    %9906 = vmatprep.subr.bf16.mxu0 0
    %9907 = vmatpush2.bf16.msra.mxu0 %v7176
    %9908 = vmatprep.subr.bf16.mxu0 0
    %9909 = vmatpush2.bf16.msra.mxu0 %v7175
    %9910 = vmatprep.subr.bf16.mxu0 0
    %9911 = vmatpush2.bf16.msra.mxu0 %v7174
    %9912 = vmatprep.subr.bf16.mxu0 0
    %9913 = vmatpush2.bf16.msra.mxu0 %v7173
    %9914 = vmatprep.subr.bf16.mxu0 0
    %9915 = vmatpush2.bf16.msra.mxu0 %v7172
    %9916 = vmatprep.mubr.bf16.mxu0 %v2421
    %9917 = vmatmul.mubr.bf16.gmra.mxu0 %v2420
    %v9918 = vpop.f32.mrf.mxu0
    %v9919 = vadd.f32 %v9879, %v9918
    %v9920 = vpop.f32.mrf.mxu0
    %v9921 = vpop.f32.mrf.mxu0
    %v9922 = vpop.f32.mrf.mxu0
    %9923 = vdwg.mxu0
    %9924 = vmatprep.subr.bf16.mxu0 0
    %9925 = vmatpush1.bf16.msra.mxu0 %v7187
    %9926 = vmatprep.subr.bf16.mxu0 0
    %9927 = vmatpush1.bf16.msra.mxu0 %v7186
    %9928 = vmatprep.subr.bf16.mxu0 0
    %9929 = vmatpush1.bf16.msra.mxu0 %v7185
    %9930 = vmatprep.subr.bf16.mxu0 0
    %9931 = vmatpush1.bf16.msra.mxu0 %v7184
    %9932 = vmatprep.subr.bf16.mxu0 0
    %9933 = vmatpush1.bf16.msra.mxu0 %v7183
    %9934 = vmatprep.subr.bf16.mxu0 0
    %9935 = vmatpush1.bf16.msra.mxu0 %v7182
    %9936 = vmatprep.subr.bf16.mxu0 0
    %9937 = vmatpush1.bf16.msra.mxu0 %v7181
    %9938 = vmatprep.subr.bf16.mxu0 0
    %9939 = vmatpush1.bf16.msra.mxu0 %v7180
    %9940 = vmatprep.subr.bf16.mxu0 0
    %9941 = vmatpush2.bf16.msra.mxu0 %v7195
    %9942 = vmatprep.subr.bf16.mxu0 0
    %9943 = vmatpush2.bf16.msra.mxu0 %v7194
    %9944 = vmatprep.subr.bf16.mxu0 0
    %9945 = vmatpush2.bf16.msra.mxu0 %v7193
    %9946 = vmatprep.subr.bf16.mxu0 0
    %9947 = vmatpush2.bf16.msra.mxu0 %v7192
    %9948 = vmatprep.subr.bf16.mxu0 0
    %9949 = vmatpush2.bf16.msra.mxu0 %v7191
    %9950 = vmatprep.subr.bf16.mxu0 0
    %9951 = vmatpush2.bf16.msra.mxu0 %v7190
    %9952 = vmatprep.subr.bf16.mxu0 0
    %9953 = vmatpush2.bf16.msra.mxu0 %v7189
    %9954 = vmatprep.subr.bf16.mxu0 0
    %9955 = vmatpush2.bf16.msra.mxu0 %v7188
    %9956 = vmatprep.mubr.bf16.mxu0 %v2423
    %9957 = vmatmul.mubr.bf16.gmra.mxu0 %v2422
    %v9958 = vpop.f32.mrf.mxu0
    %v9959 = vadd.f32 %v9919, %v9958
    %v9960 = vpop.f32.mrf.mxu0
    %v9961 = vpop.f32.mrf.mxu0
    %v9962 = vpop.f32.mrf.mxu0
    %9963 = vdwg.mxu0
    %9964 = vmatprep.subr.bf16.mxu0 0
    %9965 = vmatpush1.bf16.msra.mxu0 %v7203
    %9966 = vmatprep.subr.bf16.mxu0 0
    %9967 = vmatpush1.bf16.msra.mxu0 %v7202
    %9968 = vmatprep.subr.bf16.mxu0 0
    %9969 = vmatpush1.bf16.msra.mxu0 %v7201
    %9970 = vmatprep.subr.bf16.mxu0 0
    %9971 = vmatpush1.bf16.msra.mxu0 %v7200
    %9972 = vmatprep.subr.bf16.mxu0 0
    %9973 = vmatpush1.bf16.msra.mxu0 %v7199
    %9974 = vmatprep.subr.bf16.mxu0 0
    %9975 = vmatpush1.bf16.msra.mxu0 %v7198
    %9976 = vmatprep.subr.bf16.mxu0 0
    %9977 = vmatpush1.bf16.msra.mxu0 %v7197
    %9978 = vmatprep.subr.bf16.mxu0 0
    %9979 = vmatpush1.bf16.msra.mxu0 %v7196
    %9980 = vmatprep.subr.bf16.mxu0 0
    %9981 = vmatpush2.bf16.msra.mxu0 %v7211
    %9982 = vmatprep.subr.bf16.mxu0 0
    %9983 = vmatpush2.bf16.msra.mxu0 %v7210
    %9984 = vmatprep.subr.bf16.mxu0 0
    %9985 = vmatpush2.bf16.msra.mxu0 %v7209
    %9986 = vmatprep.subr.bf16.mxu0 0
    %9987 = vmatpush2.bf16.msra.mxu0 %v7208
    %9988 = vmatprep.subr.bf16.mxu0 0
    %9989 = vmatpush2.bf16.msra.mxu0 %v7207
    %9990 = vmatprep.subr.bf16.mxu0 0
    %9991 = vmatpush2.bf16.msra.mxu0 %v7206
    %9992 = vmatprep.subr.bf16.mxu0 0
    %9993 = vmatpush2.bf16.msra.mxu0 %v7205
    %9994 = vmatprep.subr.bf16.mxu0 0
    %9995 = vmatpush2.bf16.msra.mxu0 %v7204
    %9996 = vmatprep.mubr.bf16.mxu0 %v2425
    %9997 = vmatmul.mubr.bf16.gmra.mxu0 %v2424
    %v9998 = vpop.f32.mrf.mxu0
    %v9999 = vadd.f32 %v9959, %v9998
    %v10000 = vpop.f32.mrf.mxu0
    %v10001 = vpop.f32.mrf.mxu0
    %v10002 = vpop.f32.mrf.mxu0
    %10003 = vdwg.mxu0
    %10004 = vmatprep.subr.bf16.mxu0 0
    %10005 = vmatpush1.bf16.msra.mxu0 %v7219
    %10006 = vmatprep.subr.bf16.mxu0 0
    %10007 = vmatpush1.bf16.msra.mxu0 %v7218
    %10008 = vmatprep.subr.bf16.mxu0 0
    %10009 = vmatpush1.bf16.msra.mxu0 %v7217
    %10010 = vmatprep.subr.bf16.mxu0 0
    %10011 = vmatpush1.bf16.msra.mxu0 %v7216
    %10012 = vmatprep.subr.bf16.mxu0 0
    %10013 = vmatpush1.bf16.msra.mxu0 %v7215
    %10014 = vmatprep.subr.bf16.mxu0 0
    %10015 = vmatpush1.bf16.msra.mxu0 %v7214
    %10016 = vmatprep.subr.bf16.mxu0 0
    %10017 = vmatpush1.bf16.msra.mxu0 %v7213
    %10018 = vmatprep.subr.bf16.mxu0 0
    %10019 = vmatpush1.bf16.msra.mxu0 %v7212
    %10020 = vmatprep.subr.bf16.mxu0 0
    %10021 = vmatpush2.bf16.msra.mxu0 %v7227
    %10022 = vmatprep.subr.bf16.mxu0 0
    %10023 = vmatpush2.bf16.msra.mxu0 %v7226
    %10024 = vmatprep.subr.bf16.mxu0 0
    %10025 = vmatpush2.bf16.msra.mxu0 %v7225
    %10026 = vmatprep.subr.bf16.mxu0 0
    %10027 = vmatpush2.bf16.msra.mxu0 %v7224
    %10028 = vmatprep.subr.bf16.mxu0 0
    %10029 = vmatpush2.bf16.msra.mxu0 %v7223
    %10030 = vmatprep.subr.bf16.mxu0 0
    %10031 = vmatpush2.bf16.msra.mxu0 %v7222
    %10032 = vmatprep.subr.bf16.mxu0 0
    %10033 = vmatpush2.bf16.msra.mxu0 %v7221
    %10034 = vmatprep.subr.bf16.mxu0 0
    %10035 = vmatpush2.bf16.msra.mxu0 %v7220
    %10036 = vmatprep.mubr.bf16.mxu0 %v2427
    %10037 = vmatmul.mubr.bf16.gmra.mxu0 %v2426
    %v10038 = vpop.f32.mrf.mxu0
    %v10039 = vadd.f32 %v9999, %v10038
    %v10040 = vpop.f32.mrf.mxu0
    %v10041 = vpop.f32.mrf.mxu0
    %v10042 = vpop.f32.mrf.mxu0
    %10043 = vdwg.mxu0
    %10044 = vmatprep.subr.bf16.mxu0 0
    %10045 = vmatpush1.bf16.msra.mxu0 %v7235
    %10046 = vmatprep.subr.bf16.mxu0 0
    %10047 = vmatpush1.bf16.msra.mxu0 %v7234
    %10048 = vmatprep.subr.bf16.mxu0 0
    %10049 = vmatpush1.bf16.msra.mxu0 %v7233
    %10050 = vmatprep.subr.bf16.mxu0 0
    %10051 = vmatpush1.bf16.msra.mxu0 %v7232
    %10052 = vmatprep.subr.bf16.mxu0 0
    %10053 = vmatpush1.bf16.msra.mxu0 %v7231
    %10054 = vmatprep.subr.bf16.mxu0 0
    %10055 = vmatpush1.bf16.msra.mxu0 %v7230
    %10056 = vmatprep.subr.bf16.mxu0 0
    %10057 = vmatpush1.bf16.msra.mxu0 %v7229
    %10058 = vmatprep.subr.bf16.mxu0 0
    %10059 = vmatpush1.bf16.msra.mxu0 %v7228
    %10060 = vmatprep.subr.bf16.mxu0 0
    %10061 = vmatpush2.bf16.msra.mxu0 %v7243
    %10062 = vmatprep.subr.bf16.mxu0 0
    %10063 = vmatpush2.bf16.msra.mxu0 %v7242
    %10064 = vmatprep.subr.bf16.mxu0 0
    %10065 = vmatpush2.bf16.msra.mxu0 %v7241
    %10066 = vmatprep.subr.bf16.mxu0 0
    %10067 = vmatpush2.bf16.msra.mxu0 %v7240
    %10068 = vmatprep.subr.bf16.mxu0 0
    %10069 = vmatpush2.bf16.msra.mxu0 %v7239
    %10070 = vmatprep.subr.bf16.mxu0 0
    %10071 = vmatpush2.bf16.msra.mxu0 %v7238
    %10072 = vmatprep.subr.bf16.mxu0 0
    %10073 = vmatpush2.bf16.msra.mxu0 %v7237
    %10074 = vmatprep.subr.bf16.mxu0 0
    %10075 = vmatpush2.bf16.msra.mxu0 %v7236
    %10076 = vmatprep.mubr.bf16.mxu0 %v2429
    %10077 = vmatmul.mubr.bf16.gmra.mxu0 %v2428
    %v10078 = vpop.f32.mrf.mxu0
    %v10079 = vadd.f32 %v10039, %v10078
    %v10080 = vpop.f32.mrf.mxu0
    %v10081 = vpop.f32.mrf.mxu0
    %v10082 = vpop.f32.mrf.mxu0
    %10083 = vdwg.mxu0
    %10084 = vmatprep.subr.bf16.mxu0 0
    %10085 = vmatpush1.bf16.msra.mxu0 %v7251
    %10086 = vmatprep.subr.bf16.mxu0 0
    %10087 = vmatpush1.bf16.msra.mxu0 %v7250
    %10088 = vmatprep.subr.bf16.mxu0 0
    %10089 = vmatpush1.bf16.msra.mxu0 %v7249
    %10090 = vmatprep.subr.bf16.mxu0 0
    %10091 = vmatpush1.bf16.msra.mxu0 %v7248
    %10092 = vmatprep.subr.bf16.mxu0 0
    %10093 = vmatpush1.bf16.msra.mxu0 %v7247
    %10094 = vmatprep.subr.bf16.mxu0 0
    %10095 = vmatpush1.bf16.msra.mxu0 %v7246
    %10096 = vmatprep.subr.bf16.mxu0 0
    %10097 = vmatpush1.bf16.msra.mxu0 %v7245
    %10098 = vmatprep.subr.bf16.mxu0 0
    %10099 = vmatpush1.bf16.msra.mxu0 %v7244
    %10100 = vmatprep.subr.bf16.mxu0 0
    %10101 = vmatpush2.bf16.msra.mxu0 %v7259
    %10102 = vmatprep.subr.bf16.mxu0 0
    %10103 = vmatpush2.bf16.msra.mxu0 %v7258
    %10104 = vmatprep.subr.bf16.mxu0 0
    %10105 = vmatpush2.bf16.msra.mxu0 %v7257
    %10106 = vmatprep.subr.bf16.mxu0 0
    %10107 = vmatpush2.bf16.msra.mxu0 %v7256
    %10108 = vmatprep.subr.bf16.mxu0 0
    %10109 = vmatpush2.bf16.msra.mxu0 %v7255
    %10110 = vmatprep.subr.bf16.mxu0 0
    %10111 = vmatpush2.bf16.msra.mxu0 %v7254
    %10112 = vmatprep.subr.bf16.mxu0 0
    %10113 = vmatpush2.bf16.msra.mxu0 %v7253
    %10114 = vmatprep.subr.bf16.mxu0 0
    %10115 = vmatpush2.bf16.msra.mxu0 %v7252
    %10116 = vmatprep.mubr.bf16.mxu0 %v2431
    %10117 = vmatmul.mubr.bf16.gmra.mxu0 %v2430
    %v10118 = vpop.f32.mrf.mxu0
    %v10119 = vadd.f32 %v10079, %v10118
    %v10120 = vpop.f32.mrf.mxu0
    %v10121 = vpop.f32.mrf.mxu0
    %v10122 = vpop.f32.mrf.mxu0
    %10123 = vdwg.mxu0
    %10124 = vmatprep.subr.bf16.mxu0 0
    %10125 = vmatpush1.bf16.msra.mxu0 %v7267
    %10126 = vmatprep.subr.bf16.mxu0 0
    %10127 = vmatpush1.bf16.msra.mxu0 %v7266
    %10128 = vmatprep.subr.bf16.mxu0 0
    %10129 = vmatpush1.bf16.msra.mxu0 %v7265
    %10130 = vmatprep.subr.bf16.mxu0 0
    %10131 = vmatpush1.bf16.msra.mxu0 %v7264
    %10132 = vmatprep.subr.bf16.mxu0 0
    %10133 = vmatpush1.bf16.msra.mxu0 %v7263
    %10134 = vmatprep.subr.bf16.mxu0 0
    %10135 = vmatpush1.bf16.msra.mxu0 %v7262
    %10136 = vmatprep.subr.bf16.mxu0 0
    %10137 = vmatpush1.bf16.msra.mxu0 %v7261
    %10138 = vmatprep.subr.bf16.mxu0 0
    %10139 = vmatpush1.bf16.msra.mxu0 %v7260
    %10140 = vmatprep.subr.bf16.mxu0 0
    %10141 = vmatpush2.bf16.msra.mxu0 %v7275
    %10142 = vmatprep.subr.bf16.mxu0 0
    %10143 = vmatpush2.bf16.msra.mxu0 %v7274
    %10144 = vmatprep.subr.bf16.mxu0 0
    %10145 = vmatpush2.bf16.msra.mxu0 %v7273
    %10146 = vmatprep.subr.bf16.mxu0 0
    %10147 = vmatpush2.bf16.msra.mxu0 %v7272
    %10148 = vmatprep.subr.bf16.mxu0 0
    %10149 = vmatpush2.bf16.msra.mxu0 %v7271
    %10150 = vmatprep.subr.bf16.mxu0 0
    %10151 = vmatpush2.bf16.msra.mxu0 %v7270
    %10152 = vmatprep.subr.bf16.mxu0 0
    %10153 = vmatpush2.bf16.msra.mxu0 %v7269
    %10154 = vmatprep.subr.bf16.mxu0 0
    %10155 = vmatpush2.bf16.msra.mxu0 %v7268
    %10156 = vmatprep.mubr.bf16.mxu0 %v2433
    %10157 = vmatmul.mubr.bf16.gmra.mxu0 %v2432
    %v10158 = vpop.f32.mrf.mxu0
    %v10159 = vadd.f32 %v10119, %v10158
    %v10160 = vpop.f32.mrf.mxu0
    %v10161 = vpop.f32.mrf.mxu0
    %v10162 = vpop.f32.mrf.mxu0
    %10163 = vdwg.mxu0
    %10164 = vmatprep.subr.bf16.mxu0 0
    %10165 = vmatpush1.bf16.msra.mxu0 %v7283
    %10166 = vmatprep.subr.bf16.mxu0 0
    %10167 = vmatpush1.bf16.msra.mxu0 %v7282
    %10168 = vmatprep.subr.bf16.mxu0 0
    %10169 = vmatpush1.bf16.msra.mxu0 %v7281
    %10170 = vmatprep.subr.bf16.mxu0 0
    %10171 = vmatpush1.bf16.msra.mxu0 %v7280
    %10172 = vmatprep.subr.bf16.mxu0 0
    %10173 = vmatpush1.bf16.msra.mxu0 %v7279
    %10174 = vmatprep.subr.bf16.mxu0 0
    %10175 = vmatpush1.bf16.msra.mxu0 %v7278
    %10176 = vmatprep.subr.bf16.mxu0 0
    %10177 = vmatpush1.bf16.msra.mxu0 %v7277
    %10178 = vmatprep.subr.bf16.mxu0 0
    %10179 = vmatpush1.bf16.msra.mxu0 %v7276
    %10180 = vmatprep.subr.bf16.mxu0 0
    %10181 = vmatpush2.bf16.msra.mxu0 %v7291
    %10182 = vmatprep.subr.bf16.mxu0 0
    %10183 = vmatpush2.bf16.msra.mxu0 %v7290
    %10184 = vmatprep.subr.bf16.mxu0 0
    %10185 = vmatpush2.bf16.msra.mxu0 %v7289
    %10186 = vmatprep.subr.bf16.mxu0 0
    %10187 = vmatpush2.bf16.msra.mxu0 %v7288
    %10188 = vmatprep.subr.bf16.mxu0 0
    %10189 = vmatpush2.bf16.msra.mxu0 %v7287
    %10190 = vmatprep.subr.bf16.mxu0 0
    %10191 = vmatpush2.bf16.msra.mxu0 %v7286
    %10192 = vmatprep.subr.bf16.mxu0 0
    %10193 = vmatpush2.bf16.msra.mxu0 %v7285
    %10194 = vmatprep.subr.bf16.mxu0 0
    %10195 = vmatpush2.bf16.msra.mxu0 %v7284
    %10196 = vmatprep.mubr.bf16.mxu0 %v2435
    %10197 = vmatmul.mubr.bf16.gmra.mxu0 %v2434
    %v10198 = vpop.f32.mrf.mxu0
    %v10199 = vadd.f32 %v10159, %v10198
    %v10200 = vpop.f32.mrf.mxu0
    %v10201 = vpop.f32.mrf.mxu0
    %v10202 = vpop.f32.mrf.mxu0
    %10203 = vdwg.mxu0
    %10204 = vmatprep.subr.bf16.mxu0 0
    %10205 = vmatpush1.bf16.msra.mxu0 %v7299
    %10206 = vmatprep.subr.bf16.mxu0 0
    %10207 = vmatpush1.bf16.msra.mxu0 %v7298
    %10208 = vmatprep.subr.bf16.mxu0 0
    %10209 = vmatpush1.bf16.msra.mxu0 %v7297
    %10210 = vmatprep.subr.bf16.mxu0 0
    %10211 = vmatpush1.bf16.msra.mxu0 %v7296
    %10212 = vmatprep.subr.bf16.mxu0 0
    %10213 = vmatpush1.bf16.msra.mxu0 %v7295
    %10214 = vmatprep.subr.bf16.mxu0 0
    %10215 = vmatpush1.bf16.msra.mxu0 %v7294
    %10216 = vmatprep.subr.bf16.mxu0 0
    %10217 = vmatpush1.bf16.msra.mxu0 %v7293
    %10218 = vmatprep.subr.bf16.mxu0 0
    %10219 = vmatpush1.bf16.msra.mxu0 %v7292
    %10220 = vmatprep.subr.bf16.mxu0 0
    %10221 = vmatpush2.bf16.msra.mxu0 %v7307
    %10222 = vmatprep.subr.bf16.mxu0 0
    %10223 = vmatpush2.bf16.msra.mxu0 %v7306
    %10224 = vmatprep.subr.bf16.mxu0 0
    %10225 = vmatpush2.bf16.msra.mxu0 %v7305
    %10226 = vmatprep.subr.bf16.mxu0 0
    %10227 = vmatpush2.bf16.msra.mxu0 %v7304
    %10228 = vmatprep.subr.bf16.mxu0 0
    %10229 = vmatpush2.bf16.msra.mxu0 %v7303
    %10230 = vmatprep.subr.bf16.mxu0 0
    %10231 = vmatpush2.bf16.msra.mxu0 %v7302
    %10232 = vmatprep.subr.bf16.mxu0 0
    %10233 = vmatpush2.bf16.msra.mxu0 %v7301
    %10234 = vmatprep.subr.bf16.mxu0 0
    %10235 = vmatpush2.bf16.msra.mxu0 %v7300
    %10236 = vmatprep.mubr.bf16.mxu0 %v2437
    %10237 = vmatmul.mubr.bf16.gmra.mxu0 %v2436
    %v10238 = vpop.f32.mrf.mxu0
    %v10239 = vadd.f32 %v10199, %v10238
    %v10240 = vpop.f32.mrf.mxu0
    %v10241 = vpop.f32.mrf.mxu0
    %v10242 = vpop.f32.mrf.mxu0
    %10243 = vdwg.mxu0
    %10244 = vmatprep.subr.bf16.mxu0 0
    %10245 = vmatpush1.bf16.msra.mxu0 %v7315
    %10246 = vmatprep.subr.bf16.mxu0 0
    %10247 = vmatpush1.bf16.msra.mxu0 %v7314
    %10248 = vmatprep.subr.bf16.mxu0 0
    %10249 = vmatpush1.bf16.msra.mxu0 %v7313
    %10250 = vmatprep.subr.bf16.mxu0 0
    %10251 = vmatpush1.bf16.msra.mxu0 %v7312
    %10252 = vmatprep.subr.bf16.mxu0 0
    %10253 = vmatpush1.bf16.msra.mxu0 %v7311
    %10254 = vmatprep.subr.bf16.mxu0 0
    %10255 = vmatpush1.bf16.msra.mxu0 %v7310
    %10256 = vmatprep.subr.bf16.mxu0 0
    %10257 = vmatpush1.bf16.msra.mxu0 %v7309
    %10258 = vmatprep.subr.bf16.mxu0 0
    %10259 = vmatpush1.bf16.msra.mxu0 %v7308
    %10260 = vmatprep.subr.bf16.mxu0 0
    %10261 = vmatpush2.bf16.msra.mxu0 %v7323
    %10262 = vmatprep.subr.bf16.mxu0 0
    %10263 = vmatpush2.bf16.msra.mxu0 %v7322
    %10264 = vmatprep.subr.bf16.mxu0 0
    %10265 = vmatpush2.bf16.msra.mxu0 %v7321
    %10266 = vmatprep.subr.bf16.mxu0 0
    %10267 = vmatpush2.bf16.msra.mxu0 %v7320
    %10268 = vmatprep.subr.bf16.mxu0 0
    %10269 = vmatpush2.bf16.msra.mxu0 %v7319
    %10270 = vmatprep.subr.bf16.mxu0 0
    %10271 = vmatpush2.bf16.msra.mxu0 %v7318
    %10272 = vmatprep.subr.bf16.mxu0 0
    %10273 = vmatpush2.bf16.msra.mxu0 %v7317
    %10274 = vmatprep.subr.bf16.mxu0 0
    %10275 = vmatpush2.bf16.msra.mxu0 %v7316
    %10276 = vmatprep.mubr.bf16.mxu0 %v2439
    %10277 = vmatmul.mubr.bf16.gmra.mxu0 %v2438
    %v10278 = vpop.f32.mrf.mxu0
    %v10279 = vadd.f32 %v10239, %v10278
    %v10280 = vpop.f32.mrf.mxu0
    %v10281 = vpop.f32.mrf.mxu0
    %v10282 = vpop.f32.mrf.mxu0
    %10283 = vdwg.mxu0
    %10284 = vmatprep.subr.bf16.mxu0 0
    %10285 = vmatpush1.bf16.msra.mxu0 %v7331
    %10286 = vmatprep.subr.bf16.mxu0 0
    %10287 = vmatpush1.bf16.msra.mxu0 %v7330
    %10288 = vmatprep.subr.bf16.mxu0 0
    %10289 = vmatpush1.bf16.msra.mxu0 %v7329
    %10290 = vmatprep.subr.bf16.mxu0 0
    %10291 = vmatpush1.bf16.msra.mxu0 %v7328
    %10292 = vmatprep.subr.bf16.mxu0 0
    %10293 = vmatpush1.bf16.msra.mxu0 %v7327
    %10294 = vmatprep.subr.bf16.mxu0 0
    %10295 = vmatpush1.bf16.msra.mxu0 %v7326
    %10296 = vmatprep.subr.bf16.mxu0 0
    %10297 = vmatpush1.bf16.msra.mxu0 %v7325
    %10298 = vmatprep.subr.bf16.mxu0 0
    %10299 = vmatpush1.bf16.msra.mxu0 %v7324
    %10300 = vmatprep.subr.bf16.mxu0 0
    %10301 = vmatpush2.bf16.msra.mxu0 %v7339
    %10302 = vmatprep.subr.bf16.mxu0 0
    %10303 = vmatpush2.bf16.msra.mxu0 %v7338
    %10304 = vmatprep.subr.bf16.mxu0 0
    %10305 = vmatpush2.bf16.msra.mxu0 %v7337
    %10306 = vmatprep.subr.bf16.mxu0 0
    %10307 = vmatpush2.bf16.msra.mxu0 %v7336
    %10308 = vmatprep.subr.bf16.mxu0 0
    %10309 = vmatpush2.bf16.msra.mxu0 %v7335
    %10310 = vmatprep.subr.bf16.mxu0 0
    %10311 = vmatpush2.bf16.msra.mxu0 %v7334
    %10312 = vmatprep.subr.bf16.mxu0 0
    %10313 = vmatpush2.bf16.msra.mxu0 %v7333
    %10314 = vmatprep.subr.bf16.mxu0 0
    %10315 = vmatpush2.bf16.msra.mxu0 %v7332
    %10316 = vmatprep.mubr.bf16.mxu0 %v2441
    %10317 = vmatmul.mubr.bf16.gmra.mxu0 %v2440
    %v10318 = vpop.f32.mrf.mxu0
    %v10319 = vadd.f32 %v10279, %v10318
    %v10320 = vpop.f32.mrf.mxu0
    %v10321 = vpop.f32.mrf.mxu0
    %v10322 = vpop.f32.mrf.mxu0
    %10323 = vdwg.mxu0
    %10324 = vmatprep.subr.bf16.mxu0 0
    %10325 = vmatpush1.bf16.msra.mxu0 %v7347
    %10326 = vmatprep.subr.bf16.mxu0 0
    %10327 = vmatpush1.bf16.msra.mxu0 %v7346
    %10328 = vmatprep.subr.bf16.mxu0 0
    %10329 = vmatpush1.bf16.msra.mxu0 %v7345
    %10330 = vmatprep.subr.bf16.mxu0 0
    %10331 = vmatpush1.bf16.msra.mxu0 %v7344
    %10332 = vmatprep.subr.bf16.mxu0 0
    %10333 = vmatpush1.bf16.msra.mxu0 %v7343
    %10334 = vmatprep.subr.bf16.mxu0 0
    %10335 = vmatpush1.bf16.msra.mxu0 %v7342
    %10336 = vmatprep.subr.bf16.mxu0 0
    %10337 = vmatpush1.bf16.msra.mxu0 %v7341
    %10338 = vmatprep.subr.bf16.mxu0 0
    %10339 = vmatpush1.bf16.msra.mxu0 %v7340
    %10340 = vmatprep.subr.bf16.mxu0 0
    %10341 = vmatpush2.bf16.msra.mxu0 %v7355
    %10342 = vmatprep.subr.bf16.mxu0 0
    %10343 = vmatpush2.bf16.msra.mxu0 %v7354
    %10344 = vmatprep.subr.bf16.mxu0 0
    %10345 = vmatpush2.bf16.msra.mxu0 %v7353
    %10346 = vmatprep.subr.bf16.mxu0 0
    %10347 = vmatpush2.bf16.msra.mxu0 %v7352
    %10348 = vmatprep.subr.bf16.mxu0 0
    %10349 = vmatpush2.bf16.msra.mxu0 %v7351
    %10350 = vmatprep.subr.bf16.mxu0 0
    %10351 = vmatpush2.bf16.msra.mxu0 %v7350
    %10352 = vmatprep.subr.bf16.mxu0 0
    %10353 = vmatpush2.bf16.msra.mxu0 %v7349
    %10354 = vmatprep.subr.bf16.mxu0 0
    %10355 = vmatpush2.bf16.msra.mxu0 %v7348
    %10356 = vmatprep.mubr.bf16.mxu0 %v2443
    %10357 = vmatmul.mubr.bf16.gmra.mxu0 %v2442
    %v10358 = vpop.f32.mrf.mxu0
    %v10359 = vadd.f32 %v10319, %v10358
    %v10360 = vpop.f32.mrf.mxu0
    %v10361 = vpop.f32.mrf.mxu0
    %v10362 = vpop.f32.mrf.mxu0
    %10363 = vdwg.mxu0
    %10364 = vmatprep.subr.bf16.mxu0 0
    %10365 = vmatpush1.bf16.msra.mxu0 %v7363
    %10366 = vmatprep.subr.bf16.mxu0 0
    %10367 = vmatpush1.bf16.msra.mxu0 %v7362
    %10368 = vmatprep.subr.bf16.mxu0 0
    %10369 = vmatpush1.bf16.msra.mxu0 %v7361
    %10370 = vmatprep.subr.bf16.mxu0 0
    %10371 = vmatpush1.bf16.msra.mxu0 %v7360
    %10372 = vmatprep.subr.bf16.mxu0 0
    %10373 = vmatpush1.bf16.msra.mxu0 %v7359
    %10374 = vmatprep.subr.bf16.mxu0 0
    %10375 = vmatpush1.bf16.msra.mxu0 %v7358
    %10376 = vmatprep.subr.bf16.mxu0 0
    %10377 = vmatpush1.bf16.msra.mxu0 %v7357
    %10378 = vmatprep.subr.bf16.mxu0 0
    %10379 = vmatpush1.bf16.msra.mxu0 %v7356
    %10380 = vmatprep.subr.bf16.mxu0 0
    %10381 = vmatpush2.bf16.msra.mxu0 %v7371
    %10382 = vmatprep.subr.bf16.mxu0 0
    %10383 = vmatpush2.bf16.msra.mxu0 %v7370
    %10384 = vmatprep.subr.bf16.mxu0 0
    %10385 = vmatpush2.bf16.msra.mxu0 %v7369
    %10386 = vmatprep.subr.bf16.mxu0 0
    %10387 = vmatpush2.bf16.msra.mxu0 %v7368
    %10388 = vmatprep.subr.bf16.mxu0 0
    %10389 = vmatpush2.bf16.msra.mxu0 %v7367
    %10390 = vmatprep.subr.bf16.mxu0 0
    %10391 = vmatpush2.bf16.msra.mxu0 %v7366
    %10392 = vmatprep.subr.bf16.mxu0 0
    %10393 = vmatpush2.bf16.msra.mxu0 %v7365
    %10394 = vmatprep.subr.bf16.mxu0 0
    %10395 = vmatpush2.bf16.msra.mxu0 %v7364
    %10396 = vmatprep.mubr.bf16.mxu0 %v2445
    %10397 = vmatmul.mubr.bf16.gmra.mxu0 %v2444
    %v10398 = vpop.f32.mrf.mxu0
    %v10399 = vadd.f32 %v10359, %v10398
    %v10400 = vpop.f32.mrf.mxu0
    %v10401 = vpop.f32.mrf.mxu0
    %v10402 = vpop.f32.mrf.mxu0
    %10403 = vdwg.mxu0
    %10404 = vmatprep.subr.bf16.mxu0 0
    %10405 = vmatpush1.bf16.msra.mxu0 %v7379
    %10406 = vmatprep.subr.bf16.mxu0 0
    %10407 = vmatpush1.bf16.msra.mxu0 %v7378
    %10408 = vmatprep.subr.bf16.mxu0 0
    %10409 = vmatpush1.bf16.msra.mxu0 %v7377
    %10410 = vmatprep.subr.bf16.mxu0 0
    %10411 = vmatpush1.bf16.msra.mxu0 %v7376
    %10412 = vmatprep.subr.bf16.mxu0 0
    %10413 = vmatpush1.bf16.msra.mxu0 %v7375
    %10414 = vmatprep.subr.bf16.mxu0 0
    %10415 = vmatpush1.bf16.msra.mxu0 %v7374
    %10416 = vmatprep.subr.bf16.mxu0 0
    %10417 = vmatpush1.bf16.msra.mxu0 %v7373
    %10418 = vmatprep.subr.bf16.mxu0 0
    %10419 = vmatpush1.bf16.msra.mxu0 %v7372
    %10420 = vmatprep.subr.bf16.mxu0 0
    %10421 = vmatpush2.bf16.msra.mxu0 %v7387
    %10422 = vmatprep.subr.bf16.mxu0 0
    %10423 = vmatpush2.bf16.msra.mxu0 %v7386
    %10424 = vmatprep.subr.bf16.mxu0 0
    %10425 = vmatpush2.bf16.msra.mxu0 %v7385
    %10426 = vmatprep.subr.bf16.mxu0 0
    %10427 = vmatpush2.bf16.msra.mxu0 %v7384
    %10428 = vmatprep.subr.bf16.mxu0 0
    %10429 = vmatpush2.bf16.msra.mxu0 %v7383
    %10430 = vmatprep.subr.bf16.mxu0 0
    %10431 = vmatpush2.bf16.msra.mxu0 %v7382
    %10432 = vmatprep.subr.bf16.mxu0 0
    %10433 = vmatpush2.bf16.msra.mxu0 %v7381
    %10434 = vmatprep.subr.bf16.mxu0 0
    %10435 = vmatpush2.bf16.msra.mxu0 %v7380
    %10436 = vmatprep.mubr.bf16.mxu0 %v2447
    %10437 = vmatmul.mubr.bf16.gmra.mxu0 %v2446
    %v10438 = vpop.f32.mrf.mxu0
    %v10439 = vadd.f32 %v10399, %v10438
    %v10440 = vpop.f32.mrf.mxu0
    %v10441 = vpop.f32.mrf.mxu0
    %v10442 = vpop.f32.mrf.mxu0
    %10443 = vdwg.mxu0
    %10444 = vmatprep.subr.bf16.mxu0 0
    %10445 = vmatpush1.bf16.msra.mxu0 %v7395
    %10446 = vmatprep.subr.bf16.mxu0 0
    %10447 = vmatpush1.bf16.msra.mxu0 %v7394
    %10448 = vmatprep.subr.bf16.mxu0 0
    %10449 = vmatpush1.bf16.msra.mxu0 %v7393
    %10450 = vmatprep.subr.bf16.mxu0 0
    %10451 = vmatpush1.bf16.msra.mxu0 %v7392
    %10452 = vmatprep.subr.bf16.mxu0 0
    %10453 = vmatpush1.bf16.msra.mxu0 %v7391
    %10454 = vmatprep.subr.bf16.mxu0 0
    %10455 = vmatpush1.bf16.msra.mxu0 %v7390
    %10456 = vmatprep.subr.bf16.mxu0 0
    %10457 = vmatpush1.bf16.msra.mxu0 %v7389
    %10458 = vmatprep.subr.bf16.mxu0 0
    %10459 = vmatpush1.bf16.msra.mxu0 %v7388
    %10460 = vmatprep.subr.bf16.mxu0 0
    %10461 = vmatpush2.bf16.msra.mxu0 %v7403
    %10462 = vmatprep.subr.bf16.mxu0 0
    %10463 = vmatpush2.bf16.msra.mxu0 %v7402
    %10464 = vmatprep.subr.bf16.mxu0 0
    %10465 = vmatpush2.bf16.msra.mxu0 %v7401
    %10466 = vmatprep.subr.bf16.mxu0 0
    %10467 = vmatpush2.bf16.msra.mxu0 %v7400
    %10468 = vmatprep.subr.bf16.mxu0 0
    %10469 = vmatpush2.bf16.msra.mxu0 %v7399
    %10470 = vmatprep.subr.bf16.mxu0 0
    %10471 = vmatpush2.bf16.msra.mxu0 %v7398
    %10472 = vmatprep.subr.bf16.mxu0 0
    %10473 = vmatpush2.bf16.msra.mxu0 %v7397
    %10474 = vmatprep.subr.bf16.mxu0 0
    %10475 = vmatpush2.bf16.msra.mxu0 %v7396
    %10476 = vmatprep.mubr.bf16.mxu0 %v2449
    %10477 = vmatmul.mubr.bf16.gmra.mxu0 %v2448
    %v10478 = vpop.f32.mrf.mxu0
    %v10479 = vadd.f32 %v10439, %v10478
    %v10480 = vpop.f32.mrf.mxu0
    %v10481 = vpop.f32.mrf.mxu0
    %v10482 = vpop.f32.mrf.mxu0
    %10483 = vdwg.mxu0
    %10484 = vmatprep.subr.bf16.mxu0 0
    %10485 = vmatpush1.bf16.msra.mxu0 %v7411
    %10486 = vmatprep.subr.bf16.mxu0 0
    %10487 = vmatpush1.bf16.msra.mxu0 %v7410
    %10488 = vmatprep.subr.bf16.mxu0 0
    %10489 = vmatpush1.bf16.msra.mxu0 %v7409
    %10490 = vmatprep.subr.bf16.mxu0 0
    %10491 = vmatpush1.bf16.msra.mxu0 %v7408
    %10492 = vmatprep.subr.bf16.mxu0 0
    %10493 = vmatpush1.bf16.msra.mxu0 %v7407
    %10494 = vmatprep.subr.bf16.mxu0 0
    %10495 = vmatpush1.bf16.msra.mxu0 %v7406
    %10496 = vmatprep.subr.bf16.mxu0 0
    %10497 = vmatpush1.bf16.msra.mxu0 %v7405
    %10498 = vmatprep.subr.bf16.mxu0 0
    %10499 = vmatpush1.bf16.msra.mxu0 %v7404
    %10500 = vmatprep.subr.bf16.mxu0 0
    %10501 = vmatpush2.bf16.msra.mxu0 %v7419
    %10502 = vmatprep.subr.bf16.mxu0 0
    %10503 = vmatpush2.bf16.msra.mxu0 %v7418
    %10504 = vmatprep.subr.bf16.mxu0 0
    %10505 = vmatpush2.bf16.msra.mxu0 %v7417
    %10506 = vmatprep.subr.bf16.mxu0 0
    %10507 = vmatpush2.bf16.msra.mxu0 %v7416
    %10508 = vmatprep.subr.bf16.mxu0 0
    %10509 = vmatpush2.bf16.msra.mxu0 %v7415
    %10510 = vmatprep.subr.bf16.mxu0 0
    %10511 = vmatpush2.bf16.msra.mxu0 %v7414
    %10512 = vmatprep.subr.bf16.mxu0 0
    %10513 = vmatpush2.bf16.msra.mxu0 %v7413
    %10514 = vmatprep.subr.bf16.mxu0 0
    %10515 = vmatpush2.bf16.msra.mxu0 %v7412
    %10516 = vmatprep.mubr.bf16.mxu0 %v2451
    %10517 = vmatmul.mubr.bf16.gmra.mxu0 %v2450
    %v10518 = vpop.f32.mrf.mxu0
    %v10519 = vadd.f32 %v10479, %v10518
    %v10520 = vpop.f32.mrf.mxu0
    %v10521 = vpop.f32.mrf.mxu0
    %v10522 = vpop.f32.mrf.mxu0
    %10523 = vdwg.mxu0
    %10524 = vmatprep.subr.bf16.mxu0 0
    %10525 = vmatpush1.bf16.msra.mxu0 %v7427
    %10526 = vmatprep.subr.bf16.mxu0 0
    %10527 = vmatpush1.bf16.msra.mxu0 %v7426
    %10528 = vmatprep.subr.bf16.mxu0 0
    %10529 = vmatpush1.bf16.msra.mxu0 %v7425
    %10530 = vmatprep.subr.bf16.mxu0 0
    %10531 = vmatpush1.bf16.msra.mxu0 %v7424
    %10532 = vmatprep.subr.bf16.mxu0 0
    %10533 = vmatpush1.bf16.msra.mxu0 %v7423
    %10534 = vmatprep.subr.bf16.mxu0 0
    %10535 = vmatpush1.bf16.msra.mxu0 %v7422
    %10536 = vmatprep.subr.bf16.mxu0 0
    %10537 = vmatpush1.bf16.msra.mxu0 %v7421
    %10538 = vmatprep.subr.bf16.mxu0 0
    %10539 = vmatpush1.bf16.msra.mxu0 %v7420
    %10540 = vmatprep.subr.bf16.mxu0 0
    %10541 = vmatpush2.bf16.msra.mxu0 %v7435
    %10542 = vmatprep.subr.bf16.mxu0 0
    %10543 = vmatpush2.bf16.msra.mxu0 %v7434
    %10544 = vmatprep.subr.bf16.mxu0 0
    %10545 = vmatpush2.bf16.msra.mxu0 %v7433
    %10546 = vmatprep.subr.bf16.mxu0 0
    %10547 = vmatpush2.bf16.msra.mxu0 %v7432
    %10548 = vmatprep.subr.bf16.mxu0 0
    %10549 = vmatpush2.bf16.msra.mxu0 %v7431
    %10550 = vmatprep.subr.bf16.mxu0 0
    %10551 = vmatpush2.bf16.msra.mxu0 %v7430
    %10552 = vmatprep.subr.bf16.mxu0 0
    %10553 = vmatpush2.bf16.msra.mxu0 %v7429
    %10554 = vmatprep.subr.bf16.mxu0 0
    %10555 = vmatpush2.bf16.msra.mxu0 %v7428
    %10556 = vmatprep.mubr.bf16.mxu0 %v2453
    %10557 = vmatmul.mubr.bf16.gmra.mxu0 %v2452
    %v10558 = vpop.f32.mrf.mxu0
    %v10559 = vadd.f32 %v10519, %v10558
    %v10560 = vpop.f32.mrf.mxu0
    %v10561 = vpop.f32.mrf.mxu0
    %v10562 = vpop.f32.mrf.mxu0
    %10563 = vdwg.mxu0
    %10564 = vmatprep.subr.bf16.mxu0 0
    %10565 = vmatpush1.bf16.msra.mxu0 %v7443
    %10566 = vmatprep.subr.bf16.mxu0 0
    %10567 = vmatpush1.bf16.msra.mxu0 %v7442
    %10568 = vmatprep.subr.bf16.mxu0 0
    %10569 = vmatpush1.bf16.msra.mxu0 %v7441
    %10570 = vmatprep.subr.bf16.mxu0 0
    %10571 = vmatpush1.bf16.msra.mxu0 %v7440
    %10572 = vmatprep.subr.bf16.mxu0 0
    %10573 = vmatpush1.bf16.msra.mxu0 %v7439
    %10574 = vmatprep.subr.bf16.mxu0 0
    %10575 = vmatpush1.bf16.msra.mxu0 %v7438
    %10576 = vmatprep.subr.bf16.mxu0 0
    %10577 = vmatpush1.bf16.msra.mxu0 %v7437
    %10578 = vmatprep.subr.bf16.mxu0 0
    %10579 = vmatpush1.bf16.msra.mxu0 %v7436
    %10580 = vmatprep.subr.bf16.mxu0 0
    %10581 = vmatpush2.bf16.msra.mxu0 %v7451
    %10582 = vmatprep.subr.bf16.mxu0 0
    %10583 = vmatpush2.bf16.msra.mxu0 %v7450
    %10584 = vmatprep.subr.bf16.mxu0 0
    %10585 = vmatpush2.bf16.msra.mxu0 %v7449
    %10586 = vmatprep.subr.bf16.mxu0 0
    %10587 = vmatpush2.bf16.msra.mxu0 %v7448
    %10588 = vmatprep.subr.bf16.mxu0 0
    %10589 = vmatpush2.bf16.msra.mxu0 %v7447
    %10590 = vmatprep.subr.bf16.mxu0 0
    %10591 = vmatpush2.bf16.msra.mxu0 %v7446
    %10592 = vmatprep.subr.bf16.mxu0 0
    %10593 = vmatpush2.bf16.msra.mxu0 %v7445
    %10594 = vmatprep.subr.bf16.mxu0 0
    %10595 = vmatpush2.bf16.msra.mxu0 %v7444
    %10596 = vmatprep.mubr.bf16.mxu0 %v2455
    %10597 = vmatmul.mubr.bf16.gmra.mxu0 %v2454
    %v10598 = vpop.f32.mrf.mxu0
    %v10599 = vadd.f32 %v10559, %v10598
    %v10600 = vpop.f32.mrf.mxu0
    %v10601 = vpop.f32.mrf.mxu0
    %v10602 = vpop.f32.mrf.mxu0
    %10603 = vdwg.mxu0
    %10604 = vmatprep.subr.bf16.mxu0 0
    %10605 = vmatpush1.bf16.msra.mxu0 %v7459
    %10606 = vmatprep.subr.bf16.mxu0 0
    %10607 = vmatpush1.bf16.msra.mxu0 %v7458
    %10608 = vmatprep.subr.bf16.mxu0 0
    %10609 = vmatpush1.bf16.msra.mxu0 %v7457
    %10610 = vmatprep.subr.bf16.mxu0 0
    %10611 = vmatpush1.bf16.msra.mxu0 %v7456
    %10612 = vmatprep.subr.bf16.mxu0 0
    %10613 = vmatpush1.bf16.msra.mxu0 %v7455
    %10614 = vmatprep.subr.bf16.mxu0 0
    %10615 = vmatpush1.bf16.msra.mxu0 %v7454
    %10616 = vmatprep.subr.bf16.mxu0 0
    %10617 = vmatpush1.bf16.msra.mxu0 %v7453
    %10618 = vmatprep.subr.bf16.mxu0 0
    %10619 = vmatpush1.bf16.msra.mxu0 %v7452
    %10620 = vmatprep.subr.bf16.mxu0 0
    %10621 = vmatpush2.bf16.msra.mxu0 %v7467
    %10622 = vmatprep.subr.bf16.mxu0 0
    %10623 = vmatpush2.bf16.msra.mxu0 %v7466
    %10624 = vmatprep.subr.bf16.mxu0 0
    %10625 = vmatpush2.bf16.msra.mxu0 %v7465
    %10626 = vmatprep.subr.bf16.mxu0 0
    %10627 = vmatpush2.bf16.msra.mxu0 %v7464
    %10628 = vmatprep.subr.bf16.mxu0 0
    %10629 = vmatpush2.bf16.msra.mxu0 %v7463
    %10630 = vmatprep.subr.bf16.mxu0 0
    %10631 = vmatpush2.bf16.msra.mxu0 %v7462
    %10632 = vmatprep.subr.bf16.mxu0 0
    %10633 = vmatpush2.bf16.msra.mxu0 %v7461
    %10634 = vmatprep.subr.bf16.mxu0 0
    %10635 = vmatpush2.bf16.msra.mxu0 %v7460
    %10636 = vmatprep.mubr.bf16.mxu0 %v2457
    %10637 = vmatmul.mubr.bf16.gmra.mxu0 %v2456
    %v10638 = vpop.f32.mrf.mxu0
    %v10639 = vadd.f32 %v10599, %v10638
    %v10640 = vpop.f32.mrf.mxu0
    %v10641 = vpop.f32.mrf.mxu0
    %v10642 = vpop.f32.mrf.mxu0
    %10643 = vdwg.mxu0
    %10644 = vmatprep.subr.bf16.mxu0 0
    %10645 = vmatpush1.bf16.msra.mxu0 %v7475
    %10646 = vmatprep.subr.bf16.mxu0 0
    %10647 = vmatpush1.bf16.msra.mxu0 %v7474
    %10648 = vmatprep.subr.bf16.mxu0 0
    %10649 = vmatpush1.bf16.msra.mxu0 %v7473
    %10650 = vmatprep.subr.bf16.mxu0 0
    %10651 = vmatpush1.bf16.msra.mxu0 %v7472
    %10652 = vmatprep.subr.bf16.mxu0 0
    %10653 = vmatpush1.bf16.msra.mxu0 %v7471
    %10654 = vmatprep.subr.bf16.mxu0 0
    %10655 = vmatpush1.bf16.msra.mxu0 %v7470
    %10656 = vmatprep.subr.bf16.mxu0 0
    %10657 = vmatpush1.bf16.msra.mxu0 %v7469
    %10658 = vmatprep.subr.bf16.mxu0 0
    %10659 = vmatpush1.bf16.msra.mxu0 %v7468
    %10660 = vmatprep.subr.bf16.mxu0 0
    %10661 = vmatpush2.bf16.msra.mxu0 %v7483
    %10662 = vmatprep.subr.bf16.mxu0 0
    %10663 = vmatpush2.bf16.msra.mxu0 %v7482
    %10664 = vmatprep.subr.bf16.mxu0 0
    %10665 = vmatpush2.bf16.msra.mxu0 %v7481
    %10666 = vmatprep.subr.bf16.mxu0 0
    %10667 = vmatpush2.bf16.msra.mxu0 %v7480
    %10668 = vmatprep.subr.bf16.mxu0 0
    %10669 = vmatpush2.bf16.msra.mxu0 %v7479
    %10670 = vmatprep.subr.bf16.mxu0 0
    %10671 = vmatpush2.bf16.msra.mxu0 %v7478
    %10672 = vmatprep.subr.bf16.mxu0 0
    %10673 = vmatpush2.bf16.msra.mxu0 %v7477
    %10674 = vmatprep.subr.bf16.mxu0 0
    %10675 = vmatpush2.bf16.msra.mxu0 %v7476
    %10676 = vmatprep.mubr.bf16.mxu0 %v2459
    %10677 = vmatmul.mubr.bf16.gmra.mxu0 %v2458
    %v10678 = vpop.f32.mrf.mxu0
    %v10679 = vadd.f32 %v10639, %v10678
    %v10680 = vpop.f32.mrf.mxu0
    %v10681 = vpop.f32.mrf.mxu0
    %v10682 = vpop.f32.mrf.mxu0
    %10683 = vdwg.mxu0
    %10684 = vmatprep.subr.bf16.mxu0 0
    %10685 = vmatpush1.bf16.msra.mxu0 %v7491
    %10686 = vmatprep.subr.bf16.mxu0 0
    %10687 = vmatpush1.bf16.msra.mxu0 %v7490
    %10688 = vmatprep.subr.bf16.mxu0 0
    %10689 = vmatpush1.bf16.msra.mxu0 %v7489
    %10690 = vmatprep.subr.bf16.mxu0 0
    %10691 = vmatpush1.bf16.msra.mxu0 %v7488
    %10692 = vmatprep.subr.bf16.mxu0 0
    %10693 = vmatpush1.bf16.msra.mxu0 %v7487
    %10694 = vmatprep.subr.bf16.mxu0 0
    %10695 = vmatpush1.bf16.msra.mxu0 %v7486
    %10696 = vmatprep.subr.bf16.mxu0 0
    %10697 = vmatpush1.bf16.msra.mxu0 %v7485
    %10698 = vmatprep.subr.bf16.mxu0 0
    %10699 = vmatpush1.bf16.msra.mxu0 %v7484
    %10700 = vmatprep.subr.bf16.mxu0 0
    %10701 = vmatpush2.bf16.msra.mxu0 %v7499
    %10702 = vmatprep.subr.bf16.mxu0 0
    %10703 = vmatpush2.bf16.msra.mxu0 %v7498
    %10704 = vmatprep.subr.bf16.mxu0 0
    %10705 = vmatpush2.bf16.msra.mxu0 %v7497
    %10706 = vmatprep.subr.bf16.mxu0 0
    %10707 = vmatpush2.bf16.msra.mxu0 %v7496
    %10708 = vmatprep.subr.bf16.mxu0 0
    %10709 = vmatpush2.bf16.msra.mxu0 %v7495
    %10710 = vmatprep.subr.bf16.mxu0 0
    %10711 = vmatpush2.bf16.msra.mxu0 %v7494
    %10712 = vmatprep.subr.bf16.mxu0 0
    %10713 = vmatpush2.bf16.msra.mxu0 %v7493
    %10714 = vmatprep.subr.bf16.mxu0 0
    %10715 = vmatpush2.bf16.msra.mxu0 %v7492
    %10716 = vmatprep.mubr.bf16.mxu0 %v2461
    %10717 = vmatmul.mubr.bf16.gmra.mxu0 %v2460
    %v10718 = vpop.f32.mrf.mxu0
    %v10719 = vadd.f32 %v10679, %v10718
    %v10720 = vpop.f32.mrf.mxu0
    %v10721 = vpop.f32.mrf.mxu0
    %v10722 = vpop.f32.mrf.mxu0
    %10723 = vdwg.mxu0
    %10724 = vmatprep.subr.bf16.mxu0 0
    %10725 = vmatpush1.bf16.msra.mxu0 %v7507
    %10726 = vmatprep.subr.bf16.mxu0 0
    %10727 = vmatpush1.bf16.msra.mxu0 %v7506
    %10728 = vmatprep.subr.bf16.mxu0 0
    %10729 = vmatpush1.bf16.msra.mxu0 %v7505
    %10730 = vmatprep.subr.bf16.mxu0 0
    %10731 = vmatpush1.bf16.msra.mxu0 %v7504
    %10732 = vmatprep.subr.bf16.mxu0 0
    %10733 = vmatpush1.bf16.msra.mxu0 %v7503
    %10734 = vmatprep.subr.bf16.mxu0 0
    %10735 = vmatpush1.bf16.msra.mxu0 %v7502
    %10736 = vmatprep.subr.bf16.mxu0 0
    %10737 = vmatpush1.bf16.msra.mxu0 %v7501
    %10738 = vmatprep.subr.bf16.mxu0 0
    %10739 = vmatpush1.bf16.msra.mxu0 %v7500
    %10740 = vmatprep.subr.bf16.mxu0 0
    %10741 = vmatpush2.bf16.msra.mxu0 %v7515
    %10742 = vmatprep.subr.bf16.mxu0 0
    %10743 = vmatpush2.bf16.msra.mxu0 %v7514
    %10744 = vmatprep.subr.bf16.mxu0 0
    %10745 = vmatpush2.bf16.msra.mxu0 %v7513
    %10746 = vmatprep.subr.bf16.mxu0 0
    %10747 = vmatpush2.bf16.msra.mxu0 %v7512
    %10748 = vmatprep.subr.bf16.mxu0 0
    %10749 = vmatpush2.bf16.msra.mxu0 %v7511
    %10750 = vmatprep.subr.bf16.mxu0 0
    %10751 = vmatpush2.bf16.msra.mxu0 %v7510
    %10752 = vmatprep.subr.bf16.mxu0 0
    %10753 = vmatpush2.bf16.msra.mxu0 %v7509
    %10754 = vmatprep.subr.bf16.mxu0 0
    %10755 = vmatpush2.bf16.msra.mxu0 %v7508
    %10756 = vmatprep.mubr.bf16.mxu0 %v2463
    %10757 = vmatmul.mubr.bf16.gmra.mxu0 %v2462
    %v10758 = vpop.f32.mrf.mxu0
    %v10759 = vadd.f32 %v10719, %v10758
    %v10760 = vpop.f32.mrf.mxu0
    %v10761 = vpop.f32.mrf.mxu0
    %v10762 = vpop.f32.mrf.mxu0
    %10763 = vdwg.mxu0
    %10764 = vmatprep.subr.bf16.mxu0 0
    %10765 = vmatpush1.bf16.msra.mxu0 %v7523
    %10766 = vmatprep.subr.bf16.mxu0 0
    %10767 = vmatpush1.bf16.msra.mxu0 %v7522
    %10768 = vmatprep.subr.bf16.mxu0 0
    %10769 = vmatpush1.bf16.msra.mxu0 %v7521
    %10770 = vmatprep.subr.bf16.mxu0 0
    %10771 = vmatpush1.bf16.msra.mxu0 %v7520
    %10772 = vmatprep.subr.bf16.mxu0 0
    %10773 = vmatpush1.bf16.msra.mxu0 %v7519
    %10774 = vmatprep.subr.bf16.mxu0 0
    %10775 = vmatpush1.bf16.msra.mxu0 %v7518
    %10776 = vmatprep.subr.bf16.mxu0 0
    %10777 = vmatpush1.bf16.msra.mxu0 %v7517
    %10778 = vmatprep.subr.bf16.mxu0 0
    %10779 = vmatpush1.bf16.msra.mxu0 %v7516
    %10780 = vmatprep.subr.bf16.mxu0 0
    %10781 = vmatpush2.bf16.msra.mxu0 %v7531
    %10782 = vmatprep.subr.bf16.mxu0 0
    %10783 = vmatpush2.bf16.msra.mxu0 %v7530
    %10784 = vmatprep.subr.bf16.mxu0 0
    %10785 = vmatpush2.bf16.msra.mxu0 %v7529
    %10786 = vmatprep.subr.bf16.mxu0 0
    %10787 = vmatpush2.bf16.msra.mxu0 %v7528
    %10788 = vmatprep.subr.bf16.mxu0 0
    %10789 = vmatpush2.bf16.msra.mxu0 %v7527
    %10790 = vmatprep.subr.bf16.mxu0 0
    %10791 = vmatpush2.bf16.msra.mxu0 %v7526
    %10792 = vmatprep.subr.bf16.mxu0 0
    %10793 = vmatpush2.bf16.msra.mxu0 %v7525
    %10794 = vmatprep.subr.bf16.mxu0 0
    %10795 = vmatpush2.bf16.msra.mxu0 %v7524
    %10796 = vmatprep.mubr.bf16.mxu0 %v2465
    %10797 = vmatmul.mubr.bf16.gmra.mxu0 %v2464
    %v10798 = vpop.f32.mrf.mxu0
    %v10799 = vadd.f32 %v10759, %v10798
    %v10800 = vpop.f32.mrf.mxu0
    %v10801 = vpop.f32.mrf.mxu0
    %v10802 = vpop.f32.mrf.mxu0
    %10803 = vdwg.mxu0
    %10804 = vmatprep.subr.bf16.mxu0 0
    %10805 = vmatpush1.bf16.msra.mxu0 %v7539
    %10806 = vmatprep.subr.bf16.mxu0 0
    %10807 = vmatpush1.bf16.msra.mxu0 %v7538
    %10808 = vmatprep.subr.bf16.mxu0 0
    %10809 = vmatpush1.bf16.msra.mxu0 %v7537
    %10810 = vmatprep.subr.bf16.mxu0 0
    %10811 = vmatpush1.bf16.msra.mxu0 %v7536
    %10812 = vmatprep.subr.bf16.mxu0 0
    %10813 = vmatpush1.bf16.msra.mxu0 %v7535
    %10814 = vmatprep.subr.bf16.mxu0 0
    %10815 = vmatpush1.bf16.msra.mxu0 %v7534
    %10816 = vmatprep.subr.bf16.mxu0 0
    %10817 = vmatpush1.bf16.msra.mxu0 %v7533
    %10818 = vmatprep.subr.bf16.mxu0 0
    %10819 = vmatpush1.bf16.msra.mxu0 %v7532
    %10820 = vmatprep.subr.bf16.mxu0 0
    %10821 = vmatpush2.bf16.msra.mxu0 %v7547
    %10822 = vmatprep.subr.bf16.mxu0 0
    %10823 = vmatpush2.bf16.msra.mxu0 %v7546
    %10824 = vmatprep.subr.bf16.mxu0 0
    %10825 = vmatpush2.bf16.msra.mxu0 %v7545
    %10826 = vmatprep.subr.bf16.mxu0 0
    %10827 = vmatpush2.bf16.msra.mxu0 %v7544
    %10828 = vmatprep.subr.bf16.mxu0 0
    %10829 = vmatpush2.bf16.msra.mxu0 %v7543
    %10830 = vmatprep.subr.bf16.mxu0 0
    %10831 = vmatpush2.bf16.msra.mxu0 %v7542
    %10832 = vmatprep.subr.bf16.mxu0 0
    %10833 = vmatpush2.bf16.msra.mxu0 %v7541
    %10834 = vmatprep.subr.bf16.mxu0 0
    %10835 = vmatpush2.bf16.msra.mxu0 %v7540
    %10836 = vmatprep.mubr.bf16.mxu0 %v2467
    %10837 = vmatmul.mubr.bf16.gmra.mxu0 %v2466
    %v10838 = vpop.f32.mrf.mxu0
    %v10839 = vadd.f32 %v10799, %v10838
    %v10840 = vpop.f32.mrf.mxu0
    %v10841 = vpop.f32.mrf.mxu0
    %v10842 = vpop.f32.mrf.mxu0
    %10843 = vdwg.mxu0
    %10844 = vmatprep.subr.bf16.mxu0 0
    %10845 = vmatpush1.bf16.msra.mxu0 %v7555
    %10846 = vmatprep.subr.bf16.mxu0 0
    %10847 = vmatpush1.bf16.msra.mxu0 %v7554
    %10848 = vmatprep.subr.bf16.mxu0 0
    %10849 = vmatpush1.bf16.msra.mxu0 %v7553
    %10850 = vmatprep.subr.bf16.mxu0 0
    %10851 = vmatpush1.bf16.msra.mxu0 %v7552
    %10852 = vmatprep.subr.bf16.mxu0 0
    %10853 = vmatpush1.bf16.msra.mxu0 %v7551
    %10854 = vmatprep.subr.bf16.mxu0 0
    %10855 = vmatpush1.bf16.msra.mxu0 %v7550
    %10856 = vmatprep.subr.bf16.mxu0 0
    %10857 = vmatpush1.bf16.msra.mxu0 %v7549
    %10858 = vmatprep.subr.bf16.mxu0 0
    %10859 = vmatpush1.bf16.msra.mxu0 %v7548
    %10860 = vmatprep.subr.bf16.mxu0 0
    %10861 = vmatpush2.bf16.msra.mxu0 %v7563
    %10862 = vmatprep.subr.bf16.mxu0 0
    %10863 = vmatpush2.bf16.msra.mxu0 %v7562
    %10864 = vmatprep.subr.bf16.mxu0 0
    %10865 = vmatpush2.bf16.msra.mxu0 %v7561
    %10866 = vmatprep.subr.bf16.mxu0 0
    %10867 = vmatpush2.bf16.msra.mxu0 %v7560
    %10868 = vmatprep.subr.bf16.mxu0 0
    %10869 = vmatpush2.bf16.msra.mxu0 %v7559
    %10870 = vmatprep.subr.bf16.mxu0 0
    %10871 = vmatpush2.bf16.msra.mxu0 %v7558
    %10872 = vmatprep.subr.bf16.mxu0 0
    %10873 = vmatpush2.bf16.msra.mxu0 %v7557
    %10874 = vmatprep.subr.bf16.mxu0 0
    %10875 = vmatpush2.bf16.msra.mxu0 %v7556
    %10876 = vmatprep.mubr.bf16.mxu0 %v2469
    %10877 = vmatmul.mubr.bf16.gmra.mxu0 %v2468
    %v10878 = vpop.f32.mrf.mxu0
    %v10879 = vadd.f32 %v10839, %v10878
    %v10880 = vpop.f32.mrf.mxu0
    %v10881 = vpop.f32.mrf.mxu0
    %v10882 = vpop.f32.mrf.mxu0
    %10883 = vdwg.mxu0
    %10884 = vmatprep.subr.bf16.mxu0 0
    %10885 = vmatpush1.bf16.msra.mxu0 %v7571
    %10886 = vmatprep.subr.bf16.mxu0 0
    %10887 = vmatpush1.bf16.msra.mxu0 %v7570
    %10888 = vmatprep.subr.bf16.mxu0 0
    %10889 = vmatpush1.bf16.msra.mxu0 %v7569
    %10890 = vmatprep.subr.bf16.mxu0 0
    %10891 = vmatpush1.bf16.msra.mxu0 %v7568
    %10892 = vmatprep.subr.bf16.mxu0 0
    %10893 = vmatpush1.bf16.msra.mxu0 %v7567
    %10894 = vmatprep.subr.bf16.mxu0 0
    %10895 = vmatpush1.bf16.msra.mxu0 %v7566
    %10896 = vmatprep.subr.bf16.mxu0 0
    %10897 = vmatpush1.bf16.msra.mxu0 %v7565
    %10898 = vmatprep.subr.bf16.mxu0 0
    %10899 = vmatpush1.bf16.msra.mxu0 %v7564
    %10900 = vmatprep.subr.bf16.mxu0 0
    %10901 = vmatpush2.bf16.msra.mxu0 %v7579
    %10902 = vmatprep.subr.bf16.mxu0 0
    %10903 = vmatpush2.bf16.msra.mxu0 %v7578
    %10904 = vmatprep.subr.bf16.mxu0 0
    %10905 = vmatpush2.bf16.msra.mxu0 %v7577
    %10906 = vmatprep.subr.bf16.mxu0 0
    %10907 = vmatpush2.bf16.msra.mxu0 %v7576
    %10908 = vmatprep.subr.bf16.mxu0 0
    %10909 = vmatpush2.bf16.msra.mxu0 %v7575
    %10910 = vmatprep.subr.bf16.mxu0 0
    %10911 = vmatpush2.bf16.msra.mxu0 %v7574
    %10912 = vmatprep.subr.bf16.mxu0 0
    %10913 = vmatpush2.bf16.msra.mxu0 %v7573
    %10914 = vmatprep.subr.bf16.mxu0 0
    %10915 = vmatpush2.bf16.msra.mxu0 %v7572
    %10916 = vmatprep.mubr.bf16.mxu0 %v2471
    %10917 = vmatmul.mubr.bf16.gmra.mxu0 %v2470
    %v10918 = vpop.f32.mrf.mxu0
    %v10919 = vadd.f32 %v10879, %v10918
    %v10920 = vpop.f32.mrf.mxu0
    %v10921 = vpop.f32.mrf.mxu0
    %v10922 = vpop.f32.mrf.mxu0
    %10923 = vdwg.mxu0
    %10924 = vmatprep.subr.bf16.mxu0 0
    %10925 = vmatpush1.bf16.msra.mxu0 %v7587
    %10926 = vmatprep.subr.bf16.mxu0 0
    %10927 = vmatpush1.bf16.msra.mxu0 %v7586
    %10928 = vmatprep.subr.bf16.mxu0 0
    %10929 = vmatpush1.bf16.msra.mxu0 %v7585
    %10930 = vmatprep.subr.bf16.mxu0 0
    %10931 = vmatpush1.bf16.msra.mxu0 %v7584
    %10932 = vmatprep.subr.bf16.mxu0 0
    %10933 = vmatpush1.bf16.msra.mxu0 %v7583
    %10934 = vmatprep.subr.bf16.mxu0 0
    %10935 = vmatpush1.bf16.msra.mxu0 %v7582
    %10936 = vmatprep.subr.bf16.mxu0 0
    %10937 = vmatpush1.bf16.msra.mxu0 %v7581
    %10938 = vmatprep.subr.bf16.mxu0 0
    %10939 = vmatpush1.bf16.msra.mxu0 %v7580
    %10940 = vmatprep.subr.bf16.mxu0 0
    %10941 = vmatpush2.bf16.msra.mxu0 %v7595
    %10942 = vmatprep.subr.bf16.mxu0 0
    %10943 = vmatpush2.bf16.msra.mxu0 %v7594
    %10944 = vmatprep.subr.bf16.mxu0 0
    %10945 = vmatpush2.bf16.msra.mxu0 %v7593
    %10946 = vmatprep.subr.bf16.mxu0 0
    %10947 = vmatpush2.bf16.msra.mxu0 %v7592
    %10948 = vmatprep.subr.bf16.mxu0 0
    %10949 = vmatpush2.bf16.msra.mxu0 %v7591
    %10950 = vmatprep.subr.bf16.mxu0 0
    %10951 = vmatpush2.bf16.msra.mxu0 %v7590
    %10952 = vmatprep.subr.bf16.mxu0 0
    %10953 = vmatpush2.bf16.msra.mxu0 %v7589
    %10954 = vmatprep.subr.bf16.mxu0 0
    %10955 = vmatpush2.bf16.msra.mxu0 %v7588
    %10956 = vmatprep.mubr.bf16.mxu0 %v2473
    %10957 = vmatmul.mubr.bf16.gmra.mxu0 %v2472
    %v10958 = vpop.f32.mrf.mxu0
    %v10959 = vadd.f32 %v10919, %v10958
    %v10960 = vpop.f32.mrf.mxu0
    %v10961 = vpop.f32.mrf.mxu0
    %v10962 = vpop.f32.mrf.mxu0
    %10963 = vdwg.mxu0
    %10964 = vmatprep.subr.bf16.mxu0 0
    %10965 = vmatpush1.bf16.msra.mxu0 %v7603
    %10966 = vmatprep.subr.bf16.mxu0 0
    %10967 = vmatpush1.bf16.msra.mxu0 %v7602
    %10968 = vmatprep.subr.bf16.mxu0 0
    %10969 = vmatpush1.bf16.msra.mxu0 %v7601
    %10970 = vmatprep.subr.bf16.mxu0 0
    %10971 = vmatpush1.bf16.msra.mxu0 %v7600
    %10972 = vmatprep.subr.bf16.mxu0 0
    %10973 = vmatpush1.bf16.msra.mxu0 %v7599
    %10974 = vmatprep.subr.bf16.mxu0 0
    %10975 = vmatpush1.bf16.msra.mxu0 %v7598
    %10976 = vmatprep.subr.bf16.mxu0 0
    %10977 = vmatpush1.bf16.msra.mxu0 %v7597
    %10978 = vmatprep.subr.bf16.mxu0 0
    %10979 = vmatpush1.bf16.msra.mxu0 %v7596
    %10980 = vmatprep.subr.bf16.mxu0 0
    %10981 = vmatpush2.bf16.msra.mxu0 %v7611
    %10982 = vmatprep.subr.bf16.mxu0 0
    %10983 = vmatpush2.bf16.msra.mxu0 %v7610
    %10984 = vmatprep.subr.bf16.mxu0 0
    %10985 = vmatpush2.bf16.msra.mxu0 %v7609
    %10986 = vmatprep.subr.bf16.mxu0 0
    %10987 = vmatpush2.bf16.msra.mxu0 %v7608
    %10988 = vmatprep.subr.bf16.mxu0 0
    %10989 = vmatpush2.bf16.msra.mxu0 %v7607
    %10990 = vmatprep.subr.bf16.mxu0 0
    %10991 = vmatpush2.bf16.msra.mxu0 %v7606
    %10992 = vmatprep.subr.bf16.mxu0 0
    %10993 = vmatpush2.bf16.msra.mxu0 %v7605
    %10994 = vmatprep.subr.bf16.mxu0 0
    %10995 = vmatpush2.bf16.msra.mxu0 %v7604
    %10996 = vmatprep.mubr.bf16.mxu0 %v2475
    %10997 = vmatmul.mubr.bf16.gmra.mxu0 %v2474
    %v10998 = vpop.f32.mrf.mxu0
    %v10999 = vadd.f32 %v10959, %v10998
    %v11000 = vpop.f32.mrf.mxu0
    %v11001 = vpop.f32.mrf.mxu0
    %v11002 = vpop.f32.mrf.mxu0
    %11003 = vdwg.mxu0
    %11004 = vmatprep.subr.bf16.mxu0 0
    %11005 = vmatpush1.bf16.msra.mxu0 %v7619
    %11006 = vmatprep.subr.bf16.mxu0 0
    %11007 = vmatpush1.bf16.msra.mxu0 %v7618
    %11008 = vmatprep.subr.bf16.mxu0 0
    %11009 = vmatpush1.bf16.msra.mxu0 %v7617
    %11010 = vmatprep.subr.bf16.mxu0 0
    %11011 = vmatpush1.bf16.msra.mxu0 %v7616
    %11012 = vmatprep.subr.bf16.mxu0 0
    %11013 = vmatpush1.bf16.msra.mxu0 %v7615
    %11014 = vmatprep.subr.bf16.mxu0 0
    %11015 = vmatpush1.bf16.msra.mxu0 %v7614
    %11016 = vmatprep.subr.bf16.mxu0 0
    %11017 = vmatpush1.bf16.msra.mxu0 %v7613
    %11018 = vmatprep.subr.bf16.mxu0 0
    %11019 = vmatpush1.bf16.msra.mxu0 %v7612
    %11020 = vmatprep.subr.bf16.mxu0 0
    %11021 = vmatpush2.bf16.msra.mxu0 %v7627
    %11022 = vmatprep.subr.bf16.mxu0 0
    %11023 = vmatpush2.bf16.msra.mxu0 %v7626
    %11024 = vmatprep.subr.bf16.mxu0 0
    %11025 = vmatpush2.bf16.msra.mxu0 %v7625
    %11026 = vmatprep.subr.bf16.mxu0 0
    %11027 = vmatpush2.bf16.msra.mxu0 %v7624
    %11028 = vmatprep.subr.bf16.mxu0 0
    %11029 = vmatpush2.bf16.msra.mxu0 %v7623
    %11030 = vmatprep.subr.bf16.mxu0 0
    %11031 = vmatpush2.bf16.msra.mxu0 %v7622
    %11032 = vmatprep.subr.bf16.mxu0 0
    %11033 = vmatpush2.bf16.msra.mxu0 %v7621
    %11034 = vmatprep.subr.bf16.mxu0 0
    %11035 = vmatpush2.bf16.msra.mxu0 %v7620
    %11036 = vmatprep.mubr.bf16.mxu0 %v2477
    %11037 = vmatmul.mubr.bf16.gmra.mxu0 %v2476
    %v11038 = vpop.f32.mrf.mxu0
    %v11039 = vadd.f32 %v10999, %v11038
    %v11040 = vpop.f32.mrf.mxu0
    %v11041 = vpop.f32.mrf.mxu0
    %v11042 = vpop.f32.mrf.mxu0
    %11043 = vdwg.mxu0
    %11044 = vmatprep.subr.bf16.mxu0 0
    %11045 = vmatpush1.bf16.msra.mxu0 %v7635
    %11046 = vmatprep.subr.bf16.mxu0 0
    %11047 = vmatpush1.bf16.msra.mxu0 %v7634
    %11048 = vmatprep.subr.bf16.mxu0 0
    %11049 = vmatpush1.bf16.msra.mxu0 %v7633
    %11050 = vmatprep.subr.bf16.mxu0 0
    %11051 = vmatpush1.bf16.msra.mxu0 %v7632
    %11052 = vmatprep.subr.bf16.mxu0 0
    %11053 = vmatpush1.bf16.msra.mxu0 %v7631
    %11054 = vmatprep.subr.bf16.mxu0 0
    %11055 = vmatpush1.bf16.msra.mxu0 %v7630
    %11056 = vmatprep.subr.bf16.mxu0 0
    %11057 = vmatpush1.bf16.msra.mxu0 %v7629
    %11058 = vmatprep.subr.bf16.mxu0 0
    %11059 = vmatpush1.bf16.msra.mxu0 %v7628
    %11060 = vmatprep.subr.bf16.mxu0 0
    %11061 = vmatpush2.bf16.msra.mxu0 %v7643
    %11062 = vmatprep.subr.bf16.mxu0 0
    %11063 = vmatpush2.bf16.msra.mxu0 %v7642
    %11064 = vmatprep.subr.bf16.mxu0 0
    %11065 = vmatpush2.bf16.msra.mxu0 %v7641
    %11066 = vmatprep.subr.bf16.mxu0 0
    %11067 = vmatpush2.bf16.msra.mxu0 %v7640
    %11068 = vmatprep.subr.bf16.mxu0 0
    %11069 = vmatpush2.bf16.msra.mxu0 %v7639
    %11070 = vmatprep.subr.bf16.mxu0 0
    %11071 = vmatpush2.bf16.msra.mxu0 %v7638
    %11072 = vmatprep.subr.bf16.mxu0 0
    %11073 = vmatpush2.bf16.msra.mxu0 %v7637
    %11074 = vmatprep.subr.bf16.mxu0 0
    %11075 = vmatpush2.bf16.msra.mxu0 %v7636
    %11076 = vmatprep.mubr.bf16.mxu0 %v2479
    %11077 = vmatmul.mubr.bf16.gmra.mxu0 %v2478
    %v11078 = vpop.f32.mrf.mxu0
    %v11079 = vadd.f32 %v11039, %v11078
    %v11080 = vpop.f32.mrf.mxu0
    %v11081 = vpop.f32.mrf.mxu0
    %v11082 = vpop.f32.mrf.mxu0
    %11083 = vdwg.mxu0
    %11084 = vmatprep.subr.bf16.mxu0 0
    %11085 = vmatpush1.bf16.msra.mxu0 %v7651
    %11086 = vmatprep.subr.bf16.mxu0 0
    %11087 = vmatpush1.bf16.msra.mxu0 %v7650
    %11088 = vmatprep.subr.bf16.mxu0 0
    %11089 = vmatpush1.bf16.msra.mxu0 %v7649
    %11090 = vmatprep.subr.bf16.mxu0 0
    %11091 = vmatpush1.bf16.msra.mxu0 %v7648
    %11092 = vmatprep.subr.bf16.mxu0 0
    %11093 = vmatpush1.bf16.msra.mxu0 %v7647
    %11094 = vmatprep.subr.bf16.mxu0 0
    %11095 = vmatpush1.bf16.msra.mxu0 %v7646
    %11096 = vmatprep.subr.bf16.mxu0 0
    %11097 = vmatpush1.bf16.msra.mxu0 %v7645
    %11098 = vmatprep.subr.bf16.mxu0 0
    %11099 = vmatpush1.bf16.msra.mxu0 %v7644
    %11100 = vmatprep.subr.bf16.mxu0 0
    %11101 = vmatpush2.bf16.msra.mxu0 %v7659
    %11102 = vmatprep.subr.bf16.mxu0 0
    %11103 = vmatpush2.bf16.msra.mxu0 %v7658
    %11104 = vmatprep.subr.bf16.mxu0 0
    %11105 = vmatpush2.bf16.msra.mxu0 %v7657
    %11106 = vmatprep.subr.bf16.mxu0 0
    %11107 = vmatpush2.bf16.msra.mxu0 %v7656
    %11108 = vmatprep.subr.bf16.mxu0 0
    %11109 = vmatpush2.bf16.msra.mxu0 %v7655
    %11110 = vmatprep.subr.bf16.mxu0 0
    %11111 = vmatpush2.bf16.msra.mxu0 %v7654
    %11112 = vmatprep.subr.bf16.mxu0 0
    %11113 = vmatpush2.bf16.msra.mxu0 %v7653
    %11114 = vmatprep.subr.bf16.mxu0 0
    %11115 = vmatpush2.bf16.msra.mxu0 %v7652
    %11116 = vmatprep.mubr.bf16.mxu0 %v2481
    %11117 = vmatmul.mubr.bf16.gmra.mxu0 %v2480
    %v11118 = vpop.f32.mrf.mxu0
    %v11119 = vadd.f32 %v11079, %v11118
    %v11120 = vpop.f32.mrf.mxu0
    %v11121 = vpop.f32.mrf.mxu0
    %v11122 = vpop.f32.mrf.mxu0
    %11123 = vdwg.mxu0
    %11124 = vmatprep.subr.bf16.mxu0 0
    %11125 = vmatpush1.bf16.msra.mxu0 %v7667
    %11126 = vmatprep.subr.bf16.mxu0 0
    %11127 = vmatpush1.bf16.msra.mxu0 %v7666
    %11128 = vmatprep.subr.bf16.mxu0 0
    %11129 = vmatpush1.bf16.msra.mxu0 %v7665
    %11130 = vmatprep.subr.bf16.mxu0 0
    %11131 = vmatpush1.bf16.msra.mxu0 %v7664
    %11132 = vmatprep.subr.bf16.mxu0 0
    %11133 = vmatpush1.bf16.msra.mxu0 %v7663
    %11134 = vmatprep.subr.bf16.mxu0 0
    %11135 = vmatpush1.bf16.msra.mxu0 %v7662
    %11136 = vmatprep.subr.bf16.mxu0 0
    %11137 = vmatpush1.bf16.msra.mxu0 %v7661
    %11138 = vmatprep.subr.bf16.mxu0 0
    %11139 = vmatpush1.bf16.msra.mxu0 %v7660
    %11140 = vmatprep.subr.bf16.mxu0 0
    %11141 = vmatpush2.bf16.msra.mxu0 %v7675
    %11142 = vmatprep.subr.bf16.mxu0 0
    %11143 = vmatpush2.bf16.msra.mxu0 %v7674
    %11144 = vmatprep.subr.bf16.mxu0 0
    %11145 = vmatpush2.bf16.msra.mxu0 %v7673
    %11146 = vmatprep.subr.bf16.mxu0 0
    %11147 = vmatpush2.bf16.msra.mxu0 %v7672
    %11148 = vmatprep.subr.bf16.mxu0 0
    %11149 = vmatpush2.bf16.msra.mxu0 %v7671
    %11150 = vmatprep.subr.bf16.mxu0 0
    %11151 = vmatpush2.bf16.msra.mxu0 %v7670
    %11152 = vmatprep.subr.bf16.mxu0 0
    %11153 = vmatpush2.bf16.msra.mxu0 %v7669
    %11154 = vmatprep.subr.bf16.mxu0 0
    %11155 = vmatpush2.bf16.msra.mxu0 %v7668
    %11156 = vmatprep.mubr.bf16.mxu0 %v2483
    %11157 = vmatmul.mubr.bf16.gmra.mxu0 %v2482
    %v11158 = vpop.f32.mrf.mxu0
    %v11159 = vadd.f32 %v11119, %v11158
    %v11160 = vpop.f32.mrf.mxu0
    %v11161 = vpop.f32.mrf.mxu0
    %v11162 = vpop.f32.mrf.mxu0
    %11163 = vdwg.mxu0
    %11164 = vmatprep.subr.bf16.mxu0 0
    %11165 = vmatpush1.bf16.msra.mxu0 %v7683
    %11166 = vmatprep.subr.bf16.mxu0 0
    %11167 = vmatpush1.bf16.msra.mxu0 %v7682
    %11168 = vmatprep.subr.bf16.mxu0 0
    %11169 = vmatpush1.bf16.msra.mxu0 %v7681
    %11170 = vmatprep.subr.bf16.mxu0 0
    %11171 = vmatpush1.bf16.msra.mxu0 %v7680
    %11172 = vmatprep.subr.bf16.mxu0 0
    %11173 = vmatpush1.bf16.msra.mxu0 %v7679
    %11174 = vmatprep.subr.bf16.mxu0 0
    %11175 = vmatpush1.bf16.msra.mxu0 %v7678
    %11176 = vmatprep.subr.bf16.mxu0 0
    %11177 = vmatpush1.bf16.msra.mxu0 %v7677
    %11178 = vmatprep.subr.bf16.mxu0 0
    %11179 = vmatpush1.bf16.msra.mxu0 %v7676
    %11180 = vmatprep.subr.bf16.mxu0 0
    %11181 = vmatpush2.bf16.msra.mxu0 %v7691
    %11182 = vmatprep.subr.bf16.mxu0 0
    %11183 = vmatpush2.bf16.msra.mxu0 %v7690
    %11184 = vmatprep.subr.bf16.mxu0 0
    %11185 = vmatpush2.bf16.msra.mxu0 %v7689
    %11186 = vmatprep.subr.bf16.mxu0 0
    %11187 = vmatpush2.bf16.msra.mxu0 %v7688
    %11188 = vmatprep.subr.bf16.mxu0 0
    %11189 = vmatpush2.bf16.msra.mxu0 %v7687
    %11190 = vmatprep.subr.bf16.mxu0 0
    %11191 = vmatpush2.bf16.msra.mxu0 %v7686
    %11192 = vmatprep.subr.bf16.mxu0 0
    %11193 = vmatpush2.bf16.msra.mxu0 %v7685
    %11194 = vmatprep.subr.bf16.mxu0 0
    %11195 = vmatpush2.bf16.msra.mxu0 %v7684
    %11196 = vmatprep.mubr.bf16.mxu0 %v2485
    %11197 = vmatmul.mubr.bf16.gmra.mxu0 %v2484
    %v11198 = vpop.f32.mrf.mxu0
    %v11199 = vadd.f32 %v11159, %v11198
    %v11200 = vpop.f32.mrf.mxu0
    %v11201 = vpop.f32.mrf.mxu0
    %v11202 = vpop.f32.mrf.mxu0
    %11203 = vdwg.mxu0
    %11204 = vmatprep.subr.bf16.mxu0 0
    %11205 = vmatpush1.bf16.msra.mxu0 %v7699
    %11206 = vmatprep.subr.bf16.mxu0 0
    %11207 = vmatpush1.bf16.msra.mxu0 %v7698
    %11208 = vmatprep.subr.bf16.mxu0 0
    %11209 = vmatpush1.bf16.msra.mxu0 %v7697
    %11210 = vmatprep.subr.bf16.mxu0 0
    %11211 = vmatpush1.bf16.msra.mxu0 %v7696
    %11212 = vmatprep.subr.bf16.mxu0 0
    %11213 = vmatpush1.bf16.msra.mxu0 %v7695
    %11214 = vmatprep.subr.bf16.mxu0 0
    %11215 = vmatpush1.bf16.msra.mxu0 %v7694
    %11216 = vmatprep.subr.bf16.mxu0 0
    %11217 = vmatpush1.bf16.msra.mxu0 %v7693
    %11218 = vmatprep.subr.bf16.mxu0 0
    %11219 = vmatpush1.bf16.msra.mxu0 %v7692
    %11220 = vmatprep.subr.bf16.mxu0 0
    %11221 = vmatpush2.bf16.msra.mxu0 %v7707
    %11222 = vmatprep.subr.bf16.mxu0 0
    %11223 = vmatpush2.bf16.msra.mxu0 %v7706
    %11224 = vmatprep.subr.bf16.mxu0 0
    %11225 = vmatpush2.bf16.msra.mxu0 %v7705
    %11226 = vmatprep.subr.bf16.mxu0 0
    %11227 = vmatpush2.bf16.msra.mxu0 %v7704
    %11228 = vmatprep.subr.bf16.mxu0 0
    %11229 = vmatpush2.bf16.msra.mxu0 %v7703
    %11230 = vmatprep.subr.bf16.mxu0 0
    %11231 = vmatpush2.bf16.msra.mxu0 %v7702
    %11232 = vmatprep.subr.bf16.mxu0 0
    %11233 = vmatpush2.bf16.msra.mxu0 %v7701
    %11234 = vmatprep.subr.bf16.mxu0 0
    %11235 = vmatpush2.bf16.msra.mxu0 %v7700
    %11236 = vmatprep.mubr.bf16.mxu0 %v2487
    %11237 = vmatmul.mubr.bf16.gmra.mxu0 %v2486
    %v11238 = vpop.f32.mrf.mxu0
    %v11239 = vadd.f32 %v11199, %v11238
    %v11240 = vpop.f32.mrf.mxu0
    %v11241 = vpop.f32.mrf.mxu0
    %v11242 = vpop.f32.mrf.mxu0
    %11243 = vdwg.mxu0
    %11244 = vmatprep.subr.bf16.mxu0 0
    %11245 = vmatpush1.bf16.msra.mxu0 %v7715
    %11246 = vmatprep.subr.bf16.mxu0 0
    %11247 = vmatpush1.bf16.msra.mxu0 %v7714
    %11248 = vmatprep.subr.bf16.mxu0 0
    %11249 = vmatpush1.bf16.msra.mxu0 %v7713
    %11250 = vmatprep.subr.bf16.mxu0 0
    %11251 = vmatpush1.bf16.msra.mxu0 %v7712
    %11252 = vmatprep.subr.bf16.mxu0 0
    %11253 = vmatpush1.bf16.msra.mxu0 %v7711
    %11254 = vmatprep.subr.bf16.mxu0 0
    %11255 = vmatpush1.bf16.msra.mxu0 %v7710
    %11256 = vmatprep.subr.bf16.mxu0 0
    %11257 = vmatpush1.bf16.msra.mxu0 %v7709
    %11258 = vmatprep.subr.bf16.mxu0 0
    %11259 = vmatpush1.bf16.msra.mxu0 %v7708
    %11260 = vmatprep.subr.bf16.mxu0 0
    %11261 = vmatpush2.bf16.msra.mxu0 %v7723
    %11262 = vmatprep.subr.bf16.mxu0 0
    %11263 = vmatpush2.bf16.msra.mxu0 %v7722
    %11264 = vmatprep.subr.bf16.mxu0 0
    %11265 = vmatpush2.bf16.msra.mxu0 %v7721
    %11266 = vmatprep.subr.bf16.mxu0 0
    %11267 = vmatpush2.bf16.msra.mxu0 %v7720
    %11268 = vmatprep.subr.bf16.mxu0 0
    %11269 = vmatpush2.bf16.msra.mxu0 %v7719
    %11270 = vmatprep.subr.bf16.mxu0 0
    %11271 = vmatpush2.bf16.msra.mxu0 %v7718
    %11272 = vmatprep.subr.bf16.mxu0 0
    %11273 = vmatpush2.bf16.msra.mxu0 %v7717
    %11274 = vmatprep.subr.bf16.mxu0 0
    %11275 = vmatpush2.bf16.msra.mxu0 %v7716
    %11276 = vmatprep.mubr.bf16.mxu0 %v2489
    %11277 = vmatmul.mubr.bf16.gmra.mxu0 %v2488
    %v11278 = vpop.f32.mrf.mxu0
    %v11279 = vadd.f32 %v11239, %v11278
    %v11280 = vpop.f32.mrf.mxu0
    %v11281 = vpop.f32.mrf.mxu0
    %v11282 = vpop.f32.mrf.mxu0
    %11283 = vdwg.mxu0
    %11284 = vmatprep.subr.bf16.mxu0 0
    %11285 = vmatpush1.bf16.msra.mxu0 %v7731
    %11286 = vmatprep.subr.bf16.mxu0 0
    %11287 = vmatpush1.bf16.msra.mxu0 %v7730
    %11288 = vmatprep.subr.bf16.mxu0 0
    %11289 = vmatpush1.bf16.msra.mxu0 %v7729
    %11290 = vmatprep.subr.bf16.mxu0 0
    %11291 = vmatpush1.bf16.msra.mxu0 %v7728
    %11292 = vmatprep.subr.bf16.mxu0 0
    %11293 = vmatpush1.bf16.msra.mxu0 %v7727
    %11294 = vmatprep.subr.bf16.mxu0 0
    %11295 = vmatpush1.bf16.msra.mxu0 %v7726
    %11296 = vmatprep.subr.bf16.mxu0 0
    %11297 = vmatpush1.bf16.msra.mxu0 %v7725
    %11298 = vmatprep.subr.bf16.mxu0 0
    %11299 = vmatpush1.bf16.msra.mxu0 %v7724
    %11300 = vmatprep.subr.bf16.mxu0 0
    %11301 = vmatpush2.bf16.msra.mxu0 %v7739
    %11302 = vmatprep.subr.bf16.mxu0 0
    %11303 = vmatpush2.bf16.msra.mxu0 %v7738
    %11304 = vmatprep.subr.bf16.mxu0 0
    %11305 = vmatpush2.bf16.msra.mxu0 %v7737
    %11306 = vmatprep.subr.bf16.mxu0 0
    %11307 = vmatpush2.bf16.msra.mxu0 %v7736
    %11308 = vmatprep.subr.bf16.mxu0 0
    %11309 = vmatpush2.bf16.msra.mxu0 %v7735
    %11310 = vmatprep.subr.bf16.mxu0 0
    %11311 = vmatpush2.bf16.msra.mxu0 %v7734
    %11312 = vmatprep.subr.bf16.mxu0 0
    %11313 = vmatpush2.bf16.msra.mxu0 %v7733
    %11314 = vmatprep.subr.bf16.mxu0 0
    %11315 = vmatpush2.bf16.msra.mxu0 %v7732
    %11316 = vmatprep.mubr.bf16.mxu0 %v2491
    %11317 = vmatmul.mubr.bf16.gmra.mxu0 %v2490
    %v11318 = vpop.f32.mrf.mxu0
    %v11319 = vadd.f32 %v11279, %v11318
    %v11320 = vpop.f32.mrf.mxu0
    %v11321 = vpop.f32.mrf.mxu0
    %v11322 = vpop.f32.mrf.mxu0
    %11323 = vdwg.mxu0
    %v11324 = vpack.c.bf16 %v11319, %v11319
    %11325 = vst [vmem:[#allocation8] sm:$0xf] %v11324
    // Predicated region
    $region26: #{tpu_custom_call.1} parent=1 // pred_check
      _
    $region27: #{tpu_custom_call.1} parent=1 // pred_check_branch
      %11327 = sbr.rel (0) target = $region29
    $region28: #{tpu_custom_call.1} parent=1 // pred_region
      %s11329 = ssub.s32 64, 64
      %11330 = vsyncadd [#allocation4], %s11329
      %s11332 = sshll.u32 [#allocation8], 4
      %s11333 = int_to_ptr.vmem [resolvable:$true] %s11332
      %11335 = dma.vmem_to_hbm [thread:$0]  %s11333, 64, %s3, [#allocation4]
    $region29: #{tpu_custom_call.1} parent=1 // pred_fallthru
      _
    // Predicated region
    $region30: #{tpu_custom_call.1} parent=1 // pred_check
      _
    $region31: #{tpu_custom_call.1} parent=1 // pred_check_branch
      %11337 = sbr.rel (0) target = $region33
    $region32: #{tpu_custom_call.1} parent=1 // pred_region
      %11338 = dma.done [#allocation4], 64
    $region33: #{tpu_custom_call.1} parent=1 // pred_fallthru
      _
    %11339 = vsyncpa [#allocation3], 1
    %11340 = vsyncpa [#allocation6], 1
    %11341 = vsyncpa [#allocation4], 1

</llo_original>
